<compile_context>
chip_gen: v6e
topology: v6e:2x2x1
jax: 0.10.0
libtpu: 0.0.40
codegen_flags: <defaults>
</compile_context>

<pallas_src>
import functools

import jax
import jax.numpy as jnp
from jax import lax
from jax.experimental import pallas as pl
from jax.experimental.pallas import tpu as pltpu


# ----------------------------- kernel helpers ------------------------------- #

def _shifted_rows(v, W, C):
    """Given v (TR, W, C), return (right, left) W-shifted copies with zero fill.

    right[:, c, :] = v[:, c-1, :]  (zero at c=0)    -> slab for dx = 0
    left [:, c, :] = v[:, c+1, :]  (zero at c=W-1)  -> slab for dx = 2
    """
    TR = v.shape[0]
    zcol = jnp.zeros((TR, 1, C), v.dtype)
    right = jnp.concatenate([zcol, v[:, : W - 1, :]], axis=1)
    left = jnp.concatenate([v[:, 1:, :], zcol], axis=1)
    return right, left


def _conv3x3_rows(slabs_ref, w_ref, r0, TR, W, C):
    """3x3 'same' conv for TR output rows, from dx-shifted padded slabs.

    slabs_ref: VMEM (3, H+2, W, Cin) bf16 with slabs_ref[dx, i, c] = x[i-1, c+dx-1]
    w_ref:     VMEM (9, Cin, Cout) bf16, tap (dy, dx) at index dy*3+dx
    returns (TR*W, Cout) float32 accumulator.
    """
    acc = jnp.zeros((TR * W, C), jnp.float32)
    for dy in range(3):
        for dx in range(3):
            patch = slabs_ref[dx, pl.ds(r0 + dy, TR)]          # (TR, W, C) bf16
            acc = acc + jnp.dot(
                patch.reshape(TR * W, C), w_ref[dy * 3 + dx],
                preferred_element_type=jnp.float32)
    return acc


# ----------------------------- fused kernel --------------------------------- #

def residual_block_kernel(x_ref, w1_ref, b1_ref, w2_ref, b2_ref, o_ref,
                          xs_ref, hs_ref, *, TR):
    """out = x + conv2(relu(conv1(x) + b1)) + b2   for one image (NHWC)."""
    _, H, W, C = o_ref.shape
    nblk = H // TR

    # Zero the padding rows (rows 0 and H+1 of every slab) every grid step.
    # Cheap, and stays correct when the batch axis is sharded across cores
    # (each core has its own scratch and may never see grid step 0).
    zrow = jnp.zeros((W, C), jnp.bfloat16)
    for s in (xs_ref, hs_ref):
        for dx in range(3):
            s[dx, 0] = zrow
            s[dx, H + 1] = zrow

    b1 = b1_ref[...]          # (1, C) f32
    b2 = b2_ref[...]          # (1, C) f32

    def build_xs(i, carry):
        r0 = pl.multiple_of(i * TR, TR)
        xb = x_ref[0, pl.ds(r0, TR)].astype(jnp.bfloat16)       # (TR, W, C)
        right, left = _shifted_rows(xb, W, C)
        xs_ref[1, pl.ds(1 + r0, TR)] = xb
        xs_ref[0, pl.ds(1 + r0, TR)] = right
        xs_ref[2, pl.ds(1 + r0, TR)] = left
        return carry

    def conv1_relu(i, carry):
        r0 = pl.multiple_of(i * TR, TR)
        acc = _conv3x3_rows(xs_ref, w1_ref, r0, TR, W, C)
        h = jnp.maximum(acc + b1, 0.0).reshape(TR, W, C).astype(jnp.bfloat16)
        right, left = _shifted_rows(h, W, C)
        hs_ref[1, pl.ds(1 + r0, TR)] = h
        hs_ref[0, pl.ds(1 + r0, TR)] = right
        hs_ref[2, pl.ds(1 + r0, TR)] = left
        return carry

    def conv2_add(i, carry):
        r0 = pl.multiple_of(i * TR, TR)
        acc = _conv3x3_rows(hs_ref, w2_ref, r0, TR, W, C)
        out = (acc + b2).reshape(TR, W, C) + x_ref[0, pl.ds(r0, TR)]   # f32
        o_ref[0, pl.ds(r0, TR)] = out.astype(o_ref.dtype)
        return carry

    unroll = nblk <= 8
    lax.fori_loop(0, nblk, build_xs, 0, unroll=unroll)
    lax.fori_loop(0, nblk, conv1_relu, 0, unroll=unroll)   # h fully in VMEM
    lax.fori_loop(0, nblk, conv2_add, 0, unroll=unroll)


# ----------------------------- wrapper --------------------------------------- #

def residual_block_nobn(x_nchw, w1, b1, w2, b2, *, row_block=None):
    """ResidualBlock_noBN forward.

    x_nchw: (N, C, H, W) float32
    w1, w2: (C, C, 3, 3) float32   (PyTorch OIHW)
    b1, b2: (C,) float32
    returns (N, C, H, W) float32
    """
    N, C, H, W = x_nchw.shape
    x = jnp.transpose(x_nchw, (0, 2, 3, 1)).astype(jnp.float32)       # NHWC

    def prep_w(w):  # OIHW -> (kh, kw, Cin, Cout) -> (9, Cin, Cout) bf16
        return jnp.transpose(w, (2, 3, 1, 0)).reshape(9, C, C).astype(jnp.bfloat16)

    w1k, w2k = prep_w(w1), prep_w(w2)
    b1k = b1.reshape(1, C).astype(jnp.float32)
    b2k = b2.reshape(1, C).astype(jnp.float32)

    # Row-block size: largest divisor of H with <= 128 matmul rows per block.
    if row_block is None:
        TR = 1
        for cand in range(1, H + 1):
            if H % cand == 0 and cand * W <= 128:
                TR = cand
    else:
        TR = row_block
    assert H % TR == 0

    grid_spec = pltpu.PrefetchScalarGridSpec(
        num_scalar_prefetch=0,
        grid=(N,),
        in_specs=[
            pl.BlockSpec((1, H, W, C), lambda n: (n, 0, 0, 0)),   # x (f32)
            pl.BlockSpec((9, C, C), lambda n: (0, 0, 0)),         # w1 (bf16)
            pl.BlockSpec((1, C), lambda n: (0, 0)),               # b1 (f32)
            pl.BlockSpec((9, C, C), lambda n: (0, 0, 0)),         # w2 (bf16)
            pl.BlockSpec((1, C), lambda n: (0, 0)),               # b2 (f32)
        ],
        out_specs=pl.BlockSpec((1, H, W, C), lambda n: (n, 0, 0, 0)),
        scratch_shapes=[
            pltpu.VMEM((3, H + 2, W, C), jnp.bfloat16),   # dx-shifted padded x
            pltpu.VMEM((3, H + 2, W, C), jnp.bfloat16),   # dx-shifted padded h
        ],
    )

    flops = int(N) * 2 * (2 * 9 * H * W * C * C)
    bytes_accessed = int(
        N * H * W * C * 4 * 2          # x read + out write (f32)
        + 2 * 9 * C * C * 2            # bf16 weights
        + 2 * C * 4)                   # biases

    out = pl.pallas_call(
        functools.partial(residual_block_kernel, TR=TR),
        out_shape=jax.ShapeDtypeStruct((N, H, W, C), jnp.float32),
        grid_spec=grid_spec,
        compiler_params=pltpu.CompilerParams(
            dimension_semantics=("parallel",)),      # megacore-shard the batch
        cost_estimate=pl.CostEstimate(
            flops=flops, transcendentals=0, bytes_accessed=bytes_accessed),
    )(x, w1k, b1k, w2k, b2k)

    return jnp.transpose(out, (0, 3, 1, 2))


# ----------------------------- main ------------------------------------------ #

if __name__ == "__main__":
    key = jax.random.PRNGKey(0)
    N, C, H, W = 2, 64, 16, 16   # nf=64 is the module default; small spatial dims

    k1, k2, kb1, kb2, kx = jax.random.split(key, 5)
    # kaiming_normal_(a=0, mode='fan_in') -> std = sqrt(2 / fan_in); fan_in = C*3*3
    std = (2.0 / (C * 3 * 3)) ** 0.5
    scale = 0.1
    w1 = jax.random.normal(k1, (C, C, 3, 3), jnp.float32) * std * scale
    w2 = jax.random.normal(k2, (C, C, 3, 3), jnp.float32) * std * scale
    # Module init zeroes biases; use small non-zero biases to exercise the path.
    b1 = jax.random.normal(kb1, (C,), jnp.float32) * 0.01
    b2 = jax.random.normal(kb2, (C,), jnp.float32) * 0.01
    x = jax.random.normal(kx, (N, C, H, W), jnp.float32)

    out = jax.block_until_ready(residual_block_nobn(x, w1, b1, w2, b2))

    # Pure-JAX f32 reference (same NCHW semantics as the PyTorch module).
    def conv_ref(a, w, b):
        y = lax.conv_general_dilated(
            a, w, window_strides=(1, 1), padding="SAME",
            dimension_numbers=("NCHW", "OIHW", "NCHW"))
        return y + b[None, :, None, None]

    ref = x + conv_ref(jax.nn.relu(conv_ref(x, w1, b1)), w2, b2)
    assert out.shape == (N, C, H, W)
    err = float(jnp.max(jnp.abs(out - ref)))
    # bf16 matmul inputs with f32 accumulation -> expect ~1e-3 absolute error.
    assert jnp.allclose(out, ref, atol=2e-2, rtol=2e-2), f"max abs err {err}"

    print("KERNEL_OK")
</pallas_src>

<mosaic_0001>
module attributes {stable_mosaic.version = 11 : i64} {
  func.func @residual_block_kernel(%arg0: i32, %arg1: memref<1x16x16x64xf32, #tpu.memory_space<vmem>>, %arg2: memref<9x64x64xbf16, #tpu.memory_space<vmem>>, %arg3: memref<1x64xf32, #tpu.memory_space<vmem>>, %arg4: memref<9x64x64xbf16, #tpu.memory_space<vmem>>, %arg5: memref<1x64xf32, #tpu.memory_space<vmem>>, %arg6: memref<1x16x16x64xf32, #tpu.memory_space<vmem>>, %arg7: memref<3x18x16x64xbf16, #tpu.memory_space<vmem>>, %arg8: memref<3x18x16x64xbf16, #tpu.memory_space<vmem>>) attributes {dimension_semantics = [#tpu.dimension_semantics<parallel>], iteration_bounds = array<i64: 2>, scalar_prefetch = 0 : i64, scratch_operands = 2 : i64, tpu.core_type = #tpu.core_type<tc>, window_params = [{transform_indices = @transform_0, window_bounds = array<i64: 1, 16, 16, 64>}, {pipeline_mode = #tpu.pipeline_mode<synchronous>, transform_indices = @transform_1, window_bounds = array<i64: 9, 64, 64>}, {pipeline_mode = #tpu.pipeline_mode<synchronous>, transform_indices = @transform_2, window_bounds = array<i64: 1, 64>}, {pipeline_mode = #tpu.pipeline_mode<synchronous>, transform_indices = @transform_3, window_bounds = array<i64: 9, 64, 64>}, {pipeline_mode = #tpu.pipeline_mode<synchronous>, transform_indices = @transform_4, window_bounds = array<i64: 1, 64>}, {transform_indices = @transform_5, window_bounds = array<i64: 1, 16, 16, 64>}]} {
    %cst = arith.constant 0.000000e+00 : bf16
    %0 = vector.broadcast %cst : bf16 to vector<16x64xbf16>
    %c0 = arith.constant 0 : index
    %c0_0 = arith.constant 0 : index
    %c0_1 = arith.constant 0 : index
    %c0_2 = arith.constant 0 : index
    %1 = vector.load %arg7[%c0, %c0_0, %c0_1, %c0_2] : memref<3x18x16x64xbf16, #tpu.memory_space<vmem>>, vector<1x1x16x64xbf16>
    %2 = vector.shape_cast %1 : vector<1x1x16x64xbf16> to vector<16x64xbf16>
    %3 = vector.shape_cast %0 : vector<16x64xbf16> to vector<1x1x16x64xbf16>
    tpu.vector_store %arg7[%c0, %c0_0, %c0_1, %c0_2], %3 {strides = array<i32>} : memref<3x18x16x64xbf16, #tpu.memory_space<vmem>>, vector<1x1x16x64xbf16>,
    %c0_3 = arith.constant 0 : index
    %c17 = arith.constant 17 : index
    %c0_4 = arith.constant 0 : index
    %c0_5 = arith.constant 0 : index
    %4 = vector.load %arg7[%c0_3, %c17, %c0_4, %c0_5] : memref<3x18x16x64xbf16, #tpu.memory_space<vmem>>, vector<1x1x16x64xbf16>
    %5 = vector.shape_cast %4 : vector<1x1x16x64xbf16> to vector<16x64xbf16>
    %6 = vector.shape_cast %0 : vector<16x64xbf16> to vector<1x1x16x64xbf16>
    tpu.vector_store %arg7[%c0_3, %c17, %c0_4, %c0_5], %6 {strides = array<i32>} : memref<3x18x16x64xbf16, #tpu.memory_space<vmem>>, vector<1x1x16x64xbf16>,
    %c1 = arith.constant 1 : index
    %c0_6 = arith.constant 0 : index
    %c0_7 = arith.constant 0 : index
    %c0_8 = arith.constant 0 : index
    %7 = vector.load %arg7[%c1, %c0_6, %c0_7, %c0_8] : memref<3x18x16x64xbf16, #tpu.memory_space<vmem>>, vector<1x1x16x64xbf16>
    %8 = vector.shape_cast %7 : vector<1x1x16x64xbf16> to vector<16x64xbf16>
    %9 = vector.shape_cast %0 : vector<16x64xbf16> to vector<1x1x16x64xbf16>
    tpu.vector_store %arg7[%c1, %c0_6, %c0_7, %c0_8], %9 {strides = array<i32>} : memref<3x18x16x64xbf16, #tpu.memory_space<vmem>>, vector<1x1x16x64xbf16>,
    %c1_9 = arith.constant 1 : index
    %c17_10 = arith.constant 17 : index
    %c0_11 = arith.constant 0 : index
    %c0_12 = arith.constant 0 : index
    %10 = vector.load %arg7[%c1_9, %c17_10, %c0_11, %c0_12] : memref<3x18x16x64xbf16, #tpu.memory_space<vmem>>, vector<1x1x16x64xbf16>
    %11 = vector.shape_cast %10 : vector<1x1x16x64xbf16> to vector<16x64xbf16>
    %12 = vector.shape_cast %0 : vector<16x64xbf16> to vector<1x1x16x64xbf16>
    tpu.vector_store %arg7[%c1_9, %c17_10, %c0_11, %c0_12], %12 {strides = array<i32>} : memref<3x18x16x64xbf16, #tpu.memory_space<vmem>>, vector<1x1x16x64xbf16>,
    %c2 = arith.constant 2 : index
    %c0_13 = arith.constant 0 : index
    %c0_14 = arith.constant 0 : index
    %c0_15 = arith.constant 0 : index
    %13 = vector.load %arg7[%c2, %c0_13, %c0_14, %c0_15] : memref<3x18x16x64xbf16, #tpu.memory_space<vmem>>, vector<1x1x16x64xbf16>
    %14 = vector.shape_cast %13 : vector<1x1x16x64xbf16> to vector<16x64xbf16>
    %15 = vector.shape_cast %0 : vector<16x64xbf16> to vector<1x1x16x64xbf16>
    tpu.vector_store %arg7[%c2, %c0_13, %c0_14, %c0_15], %15 {strides = array<i32>} : memref<3x18x16x64xbf16, #tpu.memory_space<vmem>>, vector<1x1x16x64xbf16>,
    %c2_16 = arith.constant 2 : index
    %c17_17 = arith.constant 17 : index
    %c0_18 = arith.constant 0 : index
    %c0_19 = arith.constant 0 : index
    %16 = vector.load %arg7[%c2_16, %c17_17, %c0_18, %c0_19] : memref<3x18x16x64xbf16, #tpu.memory_space<vmem>>, vector<1x1x16x64xbf16>
    %17 = vector.shape_cast %16 : vector<1x1x16x64xbf16> to vector<16x64xbf16>
    %18 = vector.shape_cast %0 : vector<16x64xbf16> to vector<1x1x16x64xbf16>
    tpu.vector_store %arg7[%c2_16, %c17_17, %c0_18, %c0_19], %18 {strides = array<i32>} : memref<3x18x16x64xbf16, #tpu.memory_space<vmem>>, vector<1x1x16x64xbf16>,
    %c0_20 = arith.constant 0 : index
    %c0_21 = arith.constant 0 : index
    %c0_22 = arith.constant 0 : index
    %c0_23 = arith.constant 0 : index
    %19 = vector.load %arg8[%c0_20, %c0_21, %c0_22, %c0_23] : memref<3x18x16x64xbf16, #tpu.memory_space<vmem>>, vector<1x1x16x64xbf16>
    %20 = vector.shape_cast %19 : vector<1x1x16x64xbf16> to vector<16x64xbf16>
    %21 = vector.shape_cast %0 : vector<16x64xbf16> to vector<1x1x16x64xbf16>
    tpu.vector_store %arg8[%c0_20, %c0_21, %c0_22, %c0_23], %21 {strides = array<i32>} : memref<3x18x16x64xbf16, #tpu.memory_space<vmem>>, vector<1x1x16x64xbf16>,
    %c0_24 = arith.constant 0 : index
    %c17_25 = arith.constant 17 : index
    %c0_26 = arith.constant 0 : index
    %c0_27 = arith.constant 0 : index
    %22 = vector.load %arg8[%c0_24, %c17_25, %c0_26, %c0_27] : memref<3x18x16x64xbf16, #tpu.memory_space<vmem>>, vector<1x1x16x64xbf16>
    %23 = vector.shape_cast %22 : vector<1x1x16x64xbf16> to vector<16x64xbf16>
    %24 = vector.shape_cast %0 : vector<16x64xbf16> to vector<1x1x16x64xbf16>
    tpu.vector_store %arg8[%c0_24, %c17_25, %c0_26, %c0_27], %24 {strides = array<i32>} : memref<3x18x16x64xbf16, #tpu.memory_space<vmem>>, vector<1x1x16x64xbf16>,
    %c1_28 = arith.constant 1 : index
    %c0_29 = arith.constant 0 : index
    %c0_30 = arith.constant 0 : index
    %c0_31 = arith.constant 0 : index
    %25 = vector.load %arg8[%c1_28, %c0_29, %c0_30, %c0_31] : memref<3x18x16x64xbf16, #tpu.memory_space<vmem>>, vector<1x1x16x64xbf16>
    %26 = vector.shape_cast %25 : vector<1x1x16x64xbf16> to vector<16x64xbf16>
    %27 = vector.shape_cast %0 : vector<16x64xbf16> to vector<1x1x16x64xbf16>
    tpu.vector_store %arg8[%c1_28, %c0_29, %c0_30, %c0_31], %27 {strides = array<i32>} : memref<3x18x16x64xbf16, #tpu.memory_space<vmem>>, vector<1x1x16x64xbf16>,
    %c1_32 = arith.constant 1 : index
    %c17_33 = arith.constant 17 : index
    %c0_34 = arith.constant 0 : index
    %c0_35 = arith.constant 0 : index
    %28 = vector.load %arg8[%c1_32, %c17_33, %c0_34, %c0_35] : memref<3x18x16x64xbf16, #tpu.memory_space<vmem>>, vector<1x1x16x64xbf16>
    %29 = vector.shape_cast %28 : vector<1x1x16x64xbf16> to vector<16x64xbf16>
    %30 = vector.shape_cast %0 : vector<16x64xbf16> to vector<1x1x16x64xbf16>
    tpu.vector_store %arg8[%c1_32, %c17_33, %c0_34, %c0_35], %30 {strides = array<i32>} : memref<3x18x16x64xbf16, #tpu.memory_space<vmem>>, vector<1x1x16x64xbf16>,
    %c2_36 = arith.constant 2 : index
    %c0_37 = arith.constant 0 : index
    %c0_38 = arith.constant 0 : index
    %c0_39 = arith.constant 0 : index
    %31 = vector.load %arg8[%c2_36, %c0_37, %c0_38, %c0_39] : memref<3x18x16x64xbf16, #tpu.memory_space<vmem>>, vector<1x1x16x64xbf16>
    %32 = vector.shape_cast %31 : vector<1x1x16x64xbf16> to vector<16x64xbf16>
    %33 = vector.shape_cast %0 : vector<16x64xbf16> to vector<1x1x16x64xbf16>
    tpu.vector_store %arg8[%c2_36, %c0_37, %c0_38, %c0_39], %33 {strides = array<i32>} : memref<3x18x16x64xbf16, #tpu.memory_space<vmem>>, vector<1x1x16x64xbf16>,
    %c2_40 = arith.constant 2 : index
    %c17_41 = arith.constant 17 : index
    %c0_42 = arith.constant 0 : index
    %c0_43 = arith.constant 0 : index
    %34 = vector.load %arg8[%c2_40, %c17_41, %c0_42, %c0_43] : memref<3x18x16x64xbf16, #tpu.memory_space<vmem>>, vector<1x1x16x64xbf16>
    %35 = vector.shape_cast %34 : vector<1x1x16x64xbf16> to vector<16x64xbf16>
    %36 = vector.shape_cast %0 : vector<16x64xbf16> to vector<1x1x16x64xbf16>
    tpu.vector_store %arg8[%c2_40, %c17_41, %c0_42, %c0_43], %36 {strides = array<i32>} : memref<3x18x16x64xbf16, #tpu.memory_space<vmem>>, vector<1x1x16x64xbf16>,
    %c0_44 = arith.constant 0 : index
    %c0_45 = arith.constant 0 : index
    %37 = vector.load %arg3[%c0_44, %c0_45] : memref<1x64xf32, #tpu.memory_space<vmem>>, vector<1x64xf32>
    %c0_46 = arith.constant 0 : index
    %c0_47 = arith.constant 0 : index
    %38 = vector.load %arg5[%c0_46, %c0_47] : memref<1x64xf32, #tpu.memory_space<vmem>>, vector<1x64xf32>
    %c0_i32 = arith.constant 0 : i32
    %c8_i32 = arith.constant 8 : i32
    %39 = arith.muli %c0_i32, %c8_i32 : i32
    %40 = tpu.assume_multiple %39, 8 : i32
    %c0_48 = arith.constant 0 : index
    %41 = arith.index_cast %40 : i32 to index
    %c0_49 = arith.constant 0 : index
    %c0_50 = arith.constant 0 : index
    %42 = vector.load %arg1[%c0_48, %41, %c0_49, %c0_50] : memref<1x16x16x64xf32, #tpu.memory_space<vmem>>, vector<1x8x16x64xf32>
    %43 = vector.shape_cast %42 : vector<1x8x16x64xf32> to vector<8x16x64xf32>
    %44 = arith.truncf %43 : vector<8x16x64xf32> to vector<8x16x64xbf16>
    %cst_51 = arith.constant 0.000000e+00 : bf16
    %45 = vector.broadcast %cst_51 : bf16 to vector<8x1x64xbf16>
    %46 = vector.extract_strided_slice %44 {offsets = [0, 0, 0], sizes = [8, 15, 64], strides = [1, 1, 1]} : vector<8x16x64xbf16> to vector<8x15x64xbf16>
    %47 = tpu.concatenate %45, %46 in 1 : vector<8x1x64xbf16>, vector<8x15x64xbf16> -> vector<8x16x64xbf16>
    %48 = vector.extract_strided_slice %44 {offsets = [0, 1, 0], sizes = [8, 15, 64], strides = [1, 1, 1]} : vector<8x16x64xbf16> to vector<8x15x64xbf16>
    %49 = tpu.concatenate %48, %45 in 1 : vector<8x15x64xbf16>, vector<8x1x64xbf16> -> vector<8x16x64xbf16>
    %c1_i32 = arith.constant 1 : i32
    %50 = arith.addi %c1_i32, %40 : i32
    %c1_52 = arith.constant 1 : index
    %51 = arith.index_cast %50 : i32 to index
    %c0_53 = arith.constant 0 : index
    %c0_54 = arith.constant 0 : index
    %52 = vector.load %arg7[%c1_52, %51, %c0_53, %c0_54] : memref<3x18x16x64xbf16, #tpu.memory_space<vmem>>, vector<1x8x16x64xbf16>
    %53 = vector.shape_cast %52 : vector<1x8x16x64xbf16> to vector<8x16x64xbf16>
    %54 = vector.shape_cast %44 : vector<8x16x64xbf16> to vector<1x8x16x64xbf16>
    tpu.vector_store %arg7[%c1_52, %51, %c0_53, %c0_54], %54 {strides = array<i32>} : memref<3x18x16x64xbf16, #tpu.memory_space<vmem>>, vector<1x8x16x64xbf16>,
    %c1_i32_55 = arith.constant 1 : i32
    %55 = arith.addi %c1_i32_55, %40 : i32
    %c0_56 = arith.constant 0 : index
    %56 = arith.index_cast %55 : i32 to index
    %c0_57 = arith.constant 0 : index
    %c0_58 = arith.constant 0 : index
    %57 = vector.load %arg7[%c0_56, %56, %c0_57, %c0_58] : memref<3x18x16x64xbf16, #tpu.memory_space<vmem>>, vector<1x8x16x64xbf16>
    %58 = vector.shape_cast %57 : vector<1x8x16x64xbf16> to vector<8x16x64xbf16>
    %59 = vector.shape_cast %47 : vector<8x16x64xbf16> to vector<1x8x16x64xbf16>
    tpu.vector_store %arg7[%c0_56, %56, %c0_57, %c0_58], %59 {strides = array<i32>} : memref<3x18x16x64xbf16, #tpu.memory_space<vmem>>, vector<1x8x16x64xbf16>,
    %c1_i32_59 = arith.constant 1 : i32
    %60 = arith.addi %c1_i32_59, %40 : i32
    %c2_60 = arith.constant 2 : index
    %61 = arith.index_cast %60 : i32 to index
    %c0_61 = arith.constant 0 : index
    %c0_62 = arith.constant 0 : index
    %62 = vector.load %arg7[%c2_60, %61, %c0_61, %c0_62] : memref<3x18x16x64xbf16, #tpu.memory_space<vmem>>, vector<1x8x16x64xbf16>
    %63 = vector.shape_cast %62 : vector<1x8x16x64xbf16> to vector<8x16x64xbf16>
    %64 = vector.shape_cast %49 : vector<8x16x64xbf16> to vector<1x8x16x64xbf16>
    tpu.vector_store %arg7[%c2_60, %61, %c0_61, %c0_62], %64 {strides = array<i32>} : memref<3x18x16x64xbf16, #tpu.memory_space<vmem>>, vector<1x8x16x64xbf16>,
    %c1_i32_63 = arith.constant 1 : i32
    %c8_i32_64 = arith.constant 8 : i32
    %65 = arith.muli %c1_i32_63, %c8_i32_64 : i32
    %66 = tpu.assume_multiple %65, 8 : i32
    %c0_65 = arith.constant 0 : index
    %67 = arith.index_cast %66 : i32 to index
    %c0_66 = arith.constant 0 : index
    %c0_67 = arith.constant 0 : index
    %68 = vector.load %arg1[%c0_65, %67, %c0_66, %c0_67] : memref<1x16x16x64xf32, #tpu.memory_space<vmem>>, vector<1x8x16x64xf32>
    %69 = vector.shape_cast %68 : vector<1x8x16x64xf32> to vector<8x16x64xf32>
    %70 = arith.truncf %69 : vector<8x16x64xf32> to vector<8x16x64xbf16>
    %cst_68 = arith.constant 0.000000e+00 : bf16
    %71 = vector.broadcast %cst_68 : bf16 to vector<8x1x64xbf16>
    %72 = vector.extract_strided_slice %70 {offsets = [0, 0, 0], sizes = [8, 15, 64], strides = [1, 1, 1]} : vector<8x16x64xbf16> to vector<8x15x64xbf16>
    %73 = tpu.concatenate %71, %72 in 1 : vector<8x1x64xbf16>, vector<8x15x64xbf16> -> vector<8x16x64xbf16>
    %74 = vector.extract_strided_slice %70 {offsets = [0, 1, 0], sizes = [8, 15, 64], strides = [1, 1, 1]} : vector<8x16x64xbf16> to vector<8x15x64xbf16>
    %75 = tpu.concatenate %74, %71 in 1 : vector<8x15x64xbf16>, vector<8x1x64xbf16> -> vector<8x16x64xbf16>
    %c1_i32_69 = arith.constant 1 : i32
    %76 = arith.addi %c1_i32_69, %66 : i32
    %c1_70 = arith.constant 1 : index
    %77 = arith.index_cast %76 : i32 to index
    %c0_71 = arith.constant 0 : index
    %c0_72 = arith.constant 0 : index
    %78 = vector.load %arg7[%c1_70, %77, %c0_71, %c0_72] : memref<3x18x16x64xbf16, #tpu.memory_space<vmem>>, vector<1x8x16x64xbf16>
    %79 = vector.shape_cast %78 : vector<1x8x16x64xbf16> to vector<8x16x64xbf16>
    %80 = vector.shape_cast %70 : vector<8x16x64xbf16> to vector<1x8x16x64xbf16>
    tpu.vector_store %arg7[%c1_70, %77, %c0_71, %c0_72], %80 {strides = array<i32>} : memref<3x18x16x64xbf16, #tpu.memory_space<vmem>>, vector<1x8x16x64xbf16>,
    %c1_i32_73 = arith.constant 1 : i32
    %81 = arith.addi %c1_i32_73, %66 : i32
    %c0_74 = arith.constant 0 : index
    %82 = arith.index_cast %81 : i32 to index
    %c0_75 = arith.constant 0 : index
    %c0_76 = arith.constant 0 : index
    %83 = vector.load %arg7[%c0_74, %82, %c0_75, %c0_76] : memref<3x18x16x64xbf16, #tpu.memory_space<vmem>>, vector<1x8x16x64xbf16>
    %84 = vector.shape_cast %83 : vector<1x8x16x64xbf16> to vector<8x16x64xbf16>
    %85 = vector.shape_cast %73 : vector<8x16x64xbf16> to vector<1x8x16x64xbf16>
    tpu.vector_store %arg7[%c0_74, %82, %c0_75, %c0_76], %85 {strides = array<i32>} : memref<3x18x16x64xbf16, #tpu.memory_space<vmem>>, vector<1x8x16x64xbf16>,
    %c1_i32_77 = arith.constant 1 : i32
    %86 = arith.addi %c1_i32_77, %66 : i32
    %c2_78 = arith.constant 2 : index
    %87 = arith.index_cast %86 : i32 to index
    %c0_79 = arith.constant 0 : index
    %c0_80 = arith.constant 0 : index
    %88 = vector.load %arg7[%c2_78, %87, %c0_79, %c0_80] : memref<3x18x16x64xbf16, #tpu.memory_space<vmem>>, vector<1x8x16x64xbf16>
    %89 = vector.shape_cast %88 : vector<1x8x16x64xbf16> to vector<8x16x64xbf16>
    %90 = vector.shape_cast %75 : vector<8x16x64xbf16> to vector<1x8x16x64xbf16>
    tpu.vector_store %arg7[%c2_78, %87, %c0_79, %c0_80], %90 {strides = array<i32>} : memref<3x18x16x64xbf16, #tpu.memory_space<vmem>>, vector<1x8x16x64xbf16>,
    %c2_i32 = arith.constant 2 : i32
    %c0_i32_81 = arith.constant 0 : i32
    %c8_i32_82 = arith.constant 8 : i32
    %91 = arith.muli %c0_i32_81, %c8_i32_82 : i32
    %92 = tpu.assume_multiple %91, 8 : i32
    %cst_83 = arith.constant 0.000000e+00 : f32
    %93 = vector.broadcast %cst_83 : f32 to vector<128x64xf32>
    %c0_i32_84 = arith.constant 0 : i32
    %94 = arith.addi %92, %c0_i32_84 : i32
    %c0_85 = arith.constant 0 : index
    %95 = arith.index_cast %94 : i32 to index
    %c0_86 = arith.constant 0 : index
    %c0_87 = arith.constant 0 : index
    %96 = vector.load %arg7[%c0_85, %95, %c0_86, %c0_87] : memref<3x18x16x64xbf16, #tpu.memory_space<vmem>>, vector<1x8x16x64xbf16>
    %97 = vector.shape_cast %96 : vector<1x8x16x64xbf16> to vector<8x16x64xbf16>
    %98 = vector.shape_cast %97 : vector<8x16x64xbf16> to vector<128x64xbf16>
    %c0_88 = arith.constant 0 : index
    %c0_89 = arith.constant 0 : index
    %c0_90 = arith.constant 0 : index
    %99 = vector.load %arg2[%c0_88, %c0_89, %c0_90] : memref<9x64x64xbf16, #tpu.memory_space<vmem>>, vector<1x64x64xbf16>
    %100 = vector.shape_cast %99 : vector<1x64x64xbf16> to vector<64x64xbf16>
    %cst_91 = arith.constant dense<0.000000e+00> : vector<128x64xf32>
    %101 = tpu.matmul %98, %100, %cst_91 {dimension_numbers = #tpu.dot_dimension_numbers<[1], [0], [0], [1], [0, 0, 1, 1], [], []>} : vector<128x64xbf16>, vector<64x64xbf16>, vector<128x64xf32> -> vector<128x64xf32>
    %102 = arith.addf %93, %101 : vector<128x64xf32>
    %c0_i32_92 = arith.constant 0 : i32
    %103 = arith.addi %92, %c0_i32_92 : i32
    %c1_93 = arith.constant 1 : index
    %104 = arith.index_cast %103 : i32 to index
    %c0_94 = arith.constant 0 : index
    %c0_95 = arith.constant 0 : index
    %105 = vector.load %arg7[%c1_93, %104, %c0_94, %c0_95] : memref<3x18x16x64xbf16, #tpu.memory_space<vmem>>, vector<1x8x16x64xbf16>
    %106 = vector.shape_cast %105 : vector<1x8x16x64xbf16> to vector<8x16x64xbf16>
    %107 = vector.shape_cast %106 : vector<8x16x64xbf16> to vector<128x64xbf16>
    %c1_96 = arith.constant 1 : index
    %c0_97 = arith.constant 0 : index
    %c0_98 = arith.constant 0 : index
    %108 = vector.load %arg2[%c1_96, %c0_97, %c0_98] : memref<9x64x64xbf16, #tpu.memory_space<vmem>>, vector<1x64x64xbf16>
    %109 = vector.shape_cast %108 : vector<1x64x64xbf16> to vector<64x64xbf16>
    %cst_99 = arith.constant dense<0.000000e+00> : vector<128x64xf32>
    %110 = tpu.matmul %107, %109, %cst_99 {dimension_numbers = #tpu.dot_dimension_numbers<[1], [0], [0], [1], [0, 0, 1, 1], [], []>} : vector<128x64xbf16>, vector<64x64xbf16>, vector<128x64xf32> -> vector<128x64xf32>
    %111 = arith.addf %102, %110 : vector<128x64xf32>
    %c0_i32_100 = arith.constant 0 : i32
    %112 = arith.addi %92, %c0_i32_100 : i32
    %c2_101 = arith.constant 2 : index
    %113 = arith.index_cast %112 : i32 to index
    %c0_102 = arith.constant 0 : index
    %c0_103 = arith.constant 0 : index
    %114 = vector.load %arg7[%c2_101, %113, %c0_102, %c0_103] : memref<3x18x16x64xbf16, #tpu.memory_space<vmem>>, vector<1x8x16x64xbf16>
    %115 = vector.shape_cast %114 : vector<1x8x16x64xbf16> to vector<8x16x64xbf16>
    %116 = vector.shape_cast %115 : vector<8x16x64xbf16> to vector<128x64xbf16>
    %c2_104 = arith.constant 2 : index
    %c0_105 = arith.constant 0 : index
    %c0_106 = arith.constant 0 : index
    %117 = vector.load %arg2[%c2_104, %c0_105, %c0_106] : memref<9x64x64xbf16, #tpu.memory_space<vmem>>, vector<1x64x64xbf16>
    %118 = vector.shape_cast %117 : vector<1x64x64xbf16> to vector<64x64xbf16>
    %cst_107 = arith.constant dense<0.000000e+00> : vector<128x64xf32>
    %119 = tpu.matmul %116, %118, %cst_107 {dimension_numbers = #tpu.dot_dimension_numbers<[1], [0], [0], [1], [0, 0, 1, 1], [], []>} : vector<128x64xbf16>, vector<64x64xbf16>, vector<128x64xf32> -> vector<128x64xf32>
    %120 = arith.addf %111, %119 : vector<128x64xf32>
    %c1_i32_108 = arith.constant 1 : i32
    %121 = arith.addi %92, %c1_i32_108 : i32
    %c0_109 = arith.constant 0 : index
    %122 = arith.index_cast %121 : i32 to index
    %c0_110 = arith.constant 0 : index
    %c0_111 = arith.constant 0 : index
    %123 = vector.load %arg7[%c0_109, %122, %c0_110, %c0_111] : memref<3x18x16x64xbf16, #tpu.memory_space<vmem>>, vector<1x8x16x64xbf16>
    %124 = vector.shape_cast %123 : vector<1x8x16x64xbf16> to vector<8x16x64xbf16>
    %125 = vector.shape_cast %124 : vector<8x16x64xbf16> to vector<128x64xbf16>
    %c3 = arith.constant 3 : index
    %c0_112 = arith.constant 0 : index
    %c0_113 = arith.constant 0 : index
    %126 = vector.load %arg2[%c3, %c0_112, %c0_113] : memref<9x64x64xbf16, #tpu.memory_space<vmem>>, vector<1x64x64xbf16>
    %127 = vector.shape_cast %126 : vector<1x64x64xbf16> to vector<64x64xbf16>
    %cst_114 = arith.constant dense<0.000000e+00> : vector<128x64xf32>
    %128 = tpu.matmul %125, %127, %cst_114 {dimension_numbers = #tpu.dot_dimension_numbers<[1], [0], [0], [1], [0, 0, 1, 1], [], []>} : vector<128x64xbf16>, vector<64x64xbf16>, vector<128x64xf32> -> vector<128x64xf32>
    %129 = arith.addf %120, %128 : vector<128x64xf32>
    %c1_i32_115 = arith.constant 1 : i32
    %130 = arith.addi %92, %c1_i32_115 : i32
    %c1_116 = arith.constant 1 : index
    %131 = arith.index_cast %130 : i32 to index
    %c0_117 = arith.constant 0 : index
    %c0_118 = arith.constant 0 : index
    %132 = vector.load %arg7[%c1_116, %131, %c0_117, %c0_118] : memref<3x18x16x64xbf16, #tpu.memory_space<vmem>>, vector<1x8x16x64xbf16>
    %133 = vector.shape_cast %132 : vector<1x8x16x64xbf16> to vector<8x16x64xbf16>
    %134 = vector.shape_cast %133 : vector<8x16x64xbf16> to vector<128x64xbf16>
    %c4 = arith.constant 4 : index
    %c0_119 = arith.constant 0 : index
    %c0_120 = arith.constant 0 : index
    %135 = vector.load %arg2[%c4, %c0_119, %c0_120] : memref<9x64x64xbf16, #tpu.memory_space<vmem>>, vector<1x64x64xbf16>
    %136 = vector.shape_cast %135 : vector<1x64x64xbf16> to vector<64x64xbf16>
    %cst_121 = arith.constant dense<0.000000e+00> : vector<128x64xf32>
    %137 = tpu.matmul %134, %136, %cst_121 {dimension_numbers = #tpu.dot_dimension_numbers<[1], [0], [0], [1], [0, 0, 1, 1], [], []>} : vector<128x64xbf16>, vector<64x64xbf16>, vector<128x64xf32> -> vector<128x64xf32>
    %138 = arith.addf %129, %137 : vector<128x64xf32>
    %c1_i32_122 = arith.constant 1 : i32
    %139 = arith.addi %92, %c1_i32_122 : i32
    %c2_123 = arith.constant 2 : index
    %140 = arith.index_cast %139 : i32 to index
    %c0_124 = arith.constant 0 : index
    %c0_125 = arith.constant 0 : index
    %141 = vector.load %arg7[%c2_123, %140, %c0_124, %c0_125] : memref<3x18x16x64xbf16, #tpu.memory_space<vmem>>, vector<1x8x16x64xbf16>
    %142 = vector.shape_cast %141 : vector<1x8x16x64xbf16> to vector<8x16x64xbf16>
    %143 = vector.shape_cast %142 : vector<8x16x64xbf16> to vector<128x64xbf16>
    %c5 = arith.constant 5 : index
    %c0_126 = arith.constant 0 : index
    %c0_127 = arith.constant 0 : index
    %144 = vector.load %arg2[%c5, %c0_126, %c0_127] : memref<9x64x64xbf16, #tpu.memory_space<vmem>>, vector<1x64x64xbf16>
    %145 = vector.shape_cast %144 : vector<1x64x64xbf16> to vector<64x64xbf16>
    %cst_128 = arith.constant dense<0.000000e+00> : vector<128x64xf32>
    %146 = tpu.matmul %143, %145, %cst_128 {dimension_numbers = #tpu.dot_dimension_numbers<[1], [0], [0], [1], [0, 0, 1, 1], [], []>} : vector<128x64xbf16>, vector<64x64xbf16>, vector<128x64xf32> -> vector<128x64xf32>
    %147 = arith.addf %138, %146 : vector<128x64xf32>
    %c2_i32_129 = arith.constant 2 : i32
    %148 = arith.addi %92, %c2_i32_129 : i32
    %c0_130 = arith.constant 0 : index
    %149 = arith.index_cast %148 : i32 to index
    %c0_131 = arith.constant 0 : index
    %c0_132 = arith.constant 0 : index
    %150 = vector.load %arg7[%c0_130, %149, %c0_131, %c0_132] : memref<3x18x16x64xbf16, #tpu.memory_space<vmem>>, vector<1x8x16x64xbf16>
    %151 = vector.shape_cast %150 : vector<1x8x16x64xbf16> to vector<8x16x64xbf16>
    %152 = vector.shape_cast %151 : vector<8x16x64xbf16> to vector<128x64xbf16>
    %c6 = arith.constant 6 : index
    %c0_133 = arith.constant 0 : index
    %c0_134 = arith.constant 0 : index
    %153 = vector.load %arg2[%c6, %c0_133, %c0_134] : memref<9x64x64xbf16, #tpu.memory_space<vmem>>, vector<1x64x64xbf16>
    %154 = vector.shape_cast %153 : vector<1x64x64xbf16> to vector<64x64xbf16>
    %cst_135 = arith.constant dense<0.000000e+00> : vector<128x64xf32>
    %155 = tpu.matmul %152, %154, %cst_135 {dimension_numbers = #tpu.dot_dimension_numbers<[1], [0], [0], [1], [0, 0, 1, 1], [], []>} : vector<128x64xbf16>, vector<64x64xbf16>, vector<128x64xf32> -> vector<128x64xf32>
    %156 = arith.addf %147, %155 : vector<128x64xf32>
    %c2_i32_136 = arith.constant 2 : i32
    %157 = arith.addi %92, %c2_i32_136 : i32
    %c1_137 = arith.constant 1 : index
    %158 = arith.index_cast %157 : i32 to index
    %c0_138 = arith.constant 0 : index
    %c0_139 = arith.constant 0 : index
    %159 = vector.load %arg7[%c1_137, %158, %c0_138, %c0_139] : memref<3x18x16x64xbf16, #tpu.memory_space<vmem>>, vector<1x8x16x64xbf16>
    %160 = vector.shape_cast %159 : vector<1x8x16x64xbf16> to vector<8x16x64xbf16>
    %161 = vector.shape_cast %160 : vector<8x16x64xbf16> to vector<128x64xbf16>
    %c7 = arith.constant 7 : index
    %c0_140 = arith.constant 0 : index
    %c0_141 = arith.constant 0 : index
    %162 = vector.load %arg2[%c7, %c0_140, %c0_141] : memref<9x64x64xbf16, #tpu.memory_space<vmem>>, vector<1x64x64xbf16>
    %163 = vector.shape_cast %162 : vector<1x64x64xbf16> to vector<64x64xbf16>
    %cst_142 = arith.constant dense<0.000000e+00> : vector<128x64xf32>
    %164 = tpu.matmul %161, %163, %cst_142 {dimension_numbers = #tpu.dot_dimension_numbers<[1], [0], [0], [1], [0, 0, 1, 1], [], []>} : vector<128x64xbf16>, vector<64x64xbf16>, vector<128x64xf32> -> vector<128x64xf32>
    %165 = arith.addf %156, %164 : vector<128x64xf32>
    %c2_i32_143 = arith.constant 2 : i32
    %166 = arith.addi %92, %c2_i32_143 : i32
    %c2_144 = arith.constant 2 : index
    %167 = arith.index_cast %166 : i32 to index
    %c0_145 = arith.constant 0 : index
    %c0_146 = arith.constant 0 : index
    %168 = vector.load %arg7[%c2_144, %167, %c0_145, %c0_146] : memref<3x18x16x64xbf16, #tpu.memory_space<vmem>>, vector<1x8x16x64xbf16>
    %169 = vector.shape_cast %168 : vector<1x8x16x64xbf16> to vector<8x16x64xbf16>
    %170 = vector.shape_cast %169 : vector<8x16x64xbf16> to vector<128x64xbf16>
    %c8 = arith.constant 8 : index
    %c0_147 = arith.constant 0 : index
    %c0_148 = arith.constant 0 : index
    %171 = vector.load %arg2[%c8, %c0_147, %c0_148] : memref<9x64x64xbf16, #tpu.memory_space<vmem>>, vector<1x64x64xbf16>
    %172 = vector.shape_cast %171 : vector<1x64x64xbf16> to vector<64x64xbf16>
    %cst_149 = arith.constant dense<0.000000e+00> : vector<128x64xf32>
    %173 = tpu.matmul %170, %172, %cst_149 {dimension_numbers = #tpu.dot_dimension_numbers<[1], [0], [0], [1], [0, 0, 1, 1], [], []>} : vector<128x64xbf16>, vector<64x64xbf16>, vector<128x64xf32> -> vector<128x64xf32>
    %174 = arith.addf %165, %173 : vector<128x64xf32>
    %175 = vector.broadcast %37 : vector<1x64xf32> to vector<128x64xf32>
    %176 = arith.addf %174, %175 : vector<128x64xf32>
    %cst_150 = arith.constant 0.000000e+00 : f32
    %177 = vector.broadcast %cst_150 : f32 to vector<128x64xf32>
    %178 = arith.maximumf %176, %177 : vector<128x64xf32>
    %179 = vector.shape_cast %178 : vector<128x64xf32> to vector<8x16x64xf32>
    %180 = arith.truncf %179 : vector<8x16x64xf32> to vector<8x16x64xbf16>
    %cst_151 = arith.constant 0.000000e+00 : bf16
    %181 = vector.broadcast %cst_151 : bf16 to vector<8x1x64xbf16>
    %182 = vector.extract_strided_slice %180 {offsets = [0, 0, 0], sizes = [8, 15, 64], strides = [1, 1, 1]} : vector<8x16x64xbf16> to vector<8x15x64xbf16>
    %183 = tpu.concatenate %181, %182 in 1 : vector<8x1x64xbf16>, vector<8x15x64xbf16> -> vector<8x16x64xbf16>
    %184 = vector.extract_strided_slice %180 {offsets = [0, 1, 0], sizes = [8, 15, 64], strides = [1, 1, 1]} : vector<8x16x64xbf16> to vector<8x15x64xbf16>
    %185 = tpu.concatenate %184, %181 in 1 : vector<8x15x64xbf16>, vector<8x1x64xbf16> -> vector<8x16x64xbf16>
    %c1_i32_152 = arith.constant 1 : i32
    %186 = arith.addi %c1_i32_152, %92 : i32
    %c1_153 = arith.constant 1 : index
    %187 = arith.index_cast %186 : i32 to index
    %c0_154 = arith.constant 0 : index
    %c0_155 = arith.constant 0 : index
    %188 = vector.load %arg8[%c1_153, %187, %c0_154, %c0_155] : memref<3x18x16x64xbf16, #tpu.memory_space<vmem>>, vector<1x8x16x64xbf16>
    %189 = vector.shape_cast %188 : vector<1x8x16x64xbf16> to vector<8x16x64xbf16>
    %190 = vector.shape_cast %180 : vector<8x16x64xbf16> to vector<1x8x16x64xbf16>
    tpu.vector_store %arg8[%c1_153, %187, %c0_154, %c0_155], %190 {strides = array<i32>} : memref<3x18x16x64xbf16, #tpu.memory_space<vmem>>, vector<1x8x16x64xbf16>,
    %c1_i32_156 = arith.constant 1 : i32
    %191 = arith.addi %c1_i32_156, %92 : i32
    %c0_157 = arith.constant 0 : index
    %192 = arith.index_cast %191 : i32 to index
    %c0_158 = arith.constant 0 : index
    %c0_159 = arith.constant 0 : index
    %193 = vector.load %arg8[%c0_157, %192, %c0_158, %c0_159] : memref<3x18x16x64xbf16, #tpu.memory_space<vmem>>, vector<1x8x16x64xbf16>
    %194 = vector.shape_cast %193 : vector<1x8x16x64xbf16> to vector<8x16x64xbf16>
    %195 = vector.shape_cast %183 : vector<8x16x64xbf16> to vector<1x8x16x64xbf16>
    tpu.vector_store %arg8[%c0_157, %192, %c0_158, %c0_159], %195 {strides = array<i32>} : memref<3x18x16x64xbf16, #tpu.memory_space<vmem>>, vector<1x8x16x64xbf16>,
    %c1_i32_160 = arith.constant 1 : i32
    %196 = arith.addi %c1_i32_160, %92 : i32
    %c2_161 = arith.constant 2 : index
    %197 = arith.index_cast %196 : i32 to index
    %c0_162 = arith.constant 0 : index
    %c0_163 = arith.constant 0 : index
    %198 = vector.load %arg8[%c2_161, %197, %c0_162, %c0_163] : memref<3x18x16x64xbf16, #tpu.memory_space<vmem>>, vector<1x8x16x64xbf16>
    %199 = vector.shape_cast %198 : vector<1x8x16x64xbf16> to vector<8x16x64xbf16>
    %200 = vector.shape_cast %185 : vector<8x16x64xbf16> to vector<1x8x16x64xbf16>
    tpu.vector_store %arg8[%c2_161, %197, %c0_162, %c0_163], %200 {strides = array<i32>} : memref<3x18x16x64xbf16, #tpu.memory_space<vmem>>, vector<1x8x16x64xbf16>,
    %c1_i32_164 = arith.constant 1 : i32
    %c8_i32_165 = arith.constant 8 : i32
    %201 = arith.muli %c1_i32_164, %c8_i32_165 : i32
    %202 = tpu.assume_multiple %201, 8 : i32
    %cst_166 = arith.constant 0.000000e+00 : f32
    %203 = vector.broadcast %cst_166 : f32 to vector<128x64xf32>
    %c0_i32_167 = arith.constant 0 : i32
    %204 = arith.addi %202, %c0_i32_167 : i32
    %c0_168 = arith.constant 0 : index
    %205 = arith.index_cast %204 : i32 to index
    %c0_169 = arith.constant 0 : index
    %c0_170 = arith.constant 0 : index
    %206 = vector.load %arg7[%c0_168, %205, %c0_169, %c0_170] : memref<3x18x16x64xbf16, #tpu.memory_space<vmem>>, vector<1x8x16x64xbf16>
    %207 = vector.shape_cast %206 : vector<1x8x16x64xbf16> to vector<8x16x64xbf16>
    %208 = vector.shape_cast %207 : vector<8x16x64xbf16> to vector<128x64xbf16>
    %c0_171 = arith.constant 0 : index
    %c0_172 = arith.constant 0 : index
    %c0_173 = arith.constant 0 : index
    %209 = vector.load %arg2[%c0_171, %c0_172, %c0_173] : memref<9x64x64xbf16, #tpu.memory_space<vmem>>, vector<1x64x64xbf16>
    %210 = vector.shape_cast %209 : vector<1x64x64xbf16> to vector<64x64xbf16>
    %cst_174 = arith.constant dense<0.000000e+00> : vector<128x64xf32>
    %211 = tpu.matmul %208, %210, %cst_174 {dimension_numbers = #tpu.dot_dimension_numbers<[1], [0], [0], [1], [0, 0, 1, 1], [], []>} : vector<128x64xbf16>, vector<64x64xbf16>, vector<128x64xf32> -> vector<128x64xf32>
    %212 = arith.addf %203, %211 : vector<128x64xf32>
    %c0_i32_175 = arith.constant 0 : i32
    %213 = arith.addi %202, %c0_i32_175 : i32
    %c1_176 = arith.constant 1 : index
    %214 = arith.index_cast %213 : i32 to index
    %c0_177 = arith.constant 0 : index
    %c0_178 = arith.constant 0 : index
    %215 = vector.load %arg7[%c1_176, %214, %c0_177, %c0_178] : memref<3x18x16x64xbf16, #tpu.memory_space<vmem>>, vector<1x8x16x64xbf16>
    %216 = vector.shape_cast %215 : vector<1x8x16x64xbf16> to vector<8x16x64xbf16>
    %217 = vector.shape_cast %216 : vector<8x16x64xbf16> to vector<128x64xbf16>
    %c1_179 = arith.constant 1 : index
    %c0_180 = arith.constant 0 : index
    %c0_181 = arith.constant 0 : index
    %218 = vector.load %arg2[%c1_179, %c0_180, %c0_181] : memref<9x64x64xbf16, #tpu.memory_space<vmem>>, vector<1x64x64xbf16>
    %219 = vector.shape_cast %218 : vector<1x64x64xbf16> to vector<64x64xbf16>
    %cst_182 = arith.constant dense<0.000000e+00> : vector<128x64xf32>
    %220 = tpu.matmul %217, %219, %cst_182 {dimension_numbers = #tpu.dot_dimension_numbers<[1], [0], [0], [1], [0, 0, 1, 1], [], []>} : vector<128x64xbf16>, vector<64x64xbf16>, vector<128x64xf32> -> vector<128x64xf32>
    %221 = arith.addf %212, %220 : vector<128x64xf32>
    %c0_i32_183 = arith.constant 0 : i32
    %222 = arith.addi %202, %c0_i32_183 : i32
    %c2_184 = arith.constant 2 : index
    %223 = arith.index_cast %222 : i32 to index
    %c0_185 = arith.constant 0 : index
    %c0_186 = arith.constant 0 : index
    %224 = vector.load %arg7[%c2_184, %223, %c0_185, %c0_186] : memref<3x18x16x64xbf16, #tpu.memory_space<vmem>>, vector<1x8x16x64xbf16>
    %225 = vector.shape_cast %224 : vector<1x8x16x64xbf16> to vector<8x16x64xbf16>
    %226 = vector.shape_cast %225 : vector<8x16x64xbf16> to vector<128x64xbf16>
    %c2_187 = arith.constant 2 : index
    %c0_188 = arith.constant 0 : index
    %c0_189 = arith.constant 0 : index
    %227 = vector.load %arg2[%c2_187, %c0_188, %c0_189] : memref<9x64x64xbf16, #tpu.memory_space<vmem>>, vector<1x64x64xbf16>
    %228 = vector.shape_cast %227 : vector<1x64x64xbf16> to vector<64x64xbf16>
    %cst_190 = arith.constant dense<0.000000e+00> : vector<128x64xf32>
    %229 = tpu.matmul %226, %228, %cst_190 {dimension_numbers = #tpu.dot_dimension_numbers<[1], [0], [0], [1], [0, 0, 1, 1], [], []>} : vector<128x64xbf16>, vector<64x64xbf16>, vector<128x64xf32> -> vector<128x64xf32>
    %230 = arith.addf %221, %229 : vector<128x64xf32>
    %c1_i32_191 = arith.constant 1 : i32
    %231 = arith.addi %202, %c1_i32_191 : i32
    %c0_192 = arith.constant 0 : index
    %232 = arith.index_cast %231 : i32 to index
    %c0_193 = arith.constant 0 : index
    %c0_194 = arith.constant 0 : index
    %233 = vector.load %arg7[%c0_192, %232, %c0_193, %c0_194] : memref<3x18x16x64xbf16, #tpu.memory_space<vmem>>, vector<1x8x16x64xbf16>
    %234 = vector.shape_cast %233 : vector<1x8x16x64xbf16> to vector<8x16x64xbf16>
    %235 = vector.shape_cast %234 : vector<8x16x64xbf16> to vector<128x64xbf16>
    %c3_195 = arith.constant 3 : index
    %c0_196 = arith.constant 0 : index
    %c0_197 = arith.constant 0 : index
    %236 = vector.load %arg2[%c3_195, %c0_196, %c0_197] : memref<9x64x64xbf16, #tpu.memory_space<vmem>>, vector<1x64x64xbf16>
    %237 = vector.shape_cast %236 : vector<1x64x64xbf16> to vector<64x64xbf16>
    %cst_198 = arith.constant dense<0.000000e+00> : vector<128x64xf32>
    %238 = tpu.matmul %235, %237, %cst_198 {dimension_numbers = #tpu.dot_dimension_numbers<[1], [0], [0], [1], [0, 0, 1, 1], [], []>} : vector<128x64xbf16>, vector<64x64xbf16>, vector<128x64xf32> -> vector<128x64xf32>
    %239 = arith.addf %230, %238 : vector<128x64xf32>
    %c1_i32_199 = arith.constant 1 : i32
    %240 = arith.addi %202, %c1_i32_199 : i32
    %c1_200 = arith.constant 1 : index
    %241 = arith.index_cast %240 : i32 to index
    %c0_201 = arith.constant 0 : index
    %c0_202 = arith.constant 0 : index
    %242 = vector.load %arg7[%c1_200, %241, %c0_201, %c0_202] : memref<3x18x16x64xbf16, #tpu.memory_space<vmem>>, vector<1x8x16x64xbf16>
    %243 = vector.shape_cast %242 : vector<1x8x16x64xbf16> to vector<8x16x64xbf16>
    %244 = vector.shape_cast %243 : vector<8x16x64xbf16> to vector<128x64xbf16>
    %c4_203 = arith.constant 4 : index
    %c0_204 = arith.constant 0 : index
    %c0_205 = arith.constant 0 : index
    %245 = vector.load %arg2[%c4_203, %c0_204, %c0_205] : memref<9x64x64xbf16, #tpu.memory_space<vmem>>, vector<1x64x64xbf16>
    %246 = vector.shape_cast %245 : vector<1x64x64xbf16> to vector<64x64xbf16>
    %cst_206 = arith.constant dense<0.000000e+00> : vector<128x64xf32>
    %247 = tpu.matmul %244, %246, %cst_206 {dimension_numbers = #tpu.dot_dimension_numbers<[1], [0], [0], [1], [0, 0, 1, 1], [], []>} : vector<128x64xbf16>, vector<64x64xbf16>, vector<128x64xf32> -> vector<128x64xf32>
    %248 = arith.addf %239, %247 : vector<128x64xf32>
    %c1_i32_207 = arith.constant 1 : i32
    %249 = arith.addi %202, %c1_i32_207 : i32
    %c2_208 = arith.constant 2 : index
    %250 = arith.index_cast %249 : i32 to index
    %c0_209 = arith.constant 0 : index
    %c0_210 = arith.constant 0 : index
    %251 = vector.load %arg7[%c2_208, %250, %c0_209, %c0_210] : memref<3x18x16x64xbf16, #tpu.memory_space<vmem>>, vector<1x8x16x64xbf16>
    %252 = vector.shape_cast %251 : vector<1x8x16x64xbf16> to vector<8x16x64xbf16>
    %253 = vector.shape_cast %252 : vector<8x16x64xbf16> to vector<128x64xbf16>
    %c5_211 = arith.constant 5 : index
    %c0_212 = arith.constant 0 : index
    %c0_213 = arith.constant 0 : index
    %254 = vector.load %arg2[%c5_211, %c0_212, %c0_213] : memref<9x64x64xbf16, #tpu.memory_space<vmem>>, vector<1x64x64xbf16>
    %255 = vector.shape_cast %254 : vector<1x64x64xbf16> to vector<64x64xbf16>
    %cst_214 = arith.constant dense<0.000000e+00> : vector<128x64xf32>
    %256 = tpu.matmul %253, %255, %cst_214 {dimension_numbers = #tpu.dot_dimension_numbers<[1], [0], [0], [1], [0, 0, 1, 1], [], []>} : vector<128x64xbf16>, vector<64x64xbf16>, vector<128x64xf32> -> vector<128x64xf32>
    %257 = arith.addf %248, %256 : vector<128x64xf32>
    %c2_i32_215 = arith.constant 2 : i32
    %258 = arith.addi %202, %c2_i32_215 : i32
    %c0_216 = arith.constant 0 : index
    %259 = arith.index_cast %258 : i32 to index
    %c0_217 = arith.constant 0 : index
    %c0_218 = arith.constant 0 : index
    %260 = vector.load %arg7[%c0_216, %259, %c0_217, %c0_218] : memref<3x18x16x64xbf16, #tpu.memory_space<vmem>>, vector<1x8x16x64xbf16>
    %261 = vector.shape_cast %260 : vector<1x8x16x64xbf16> to vector<8x16x64xbf16>
    %262 = vector.shape_cast %261 : vector<8x16x64xbf16> to vector<128x64xbf16>
    %c6_219 = arith.constant 6 : index
    %c0_220 = arith.constant 0 : index
    %c0_221 = arith.constant 0 : index
    %263 = vector.load %arg2[%c6_219, %c0_220, %c0_221] : memref<9x64x64xbf16, #tpu.memory_space<vmem>>, vector<1x64x64xbf16>
    %264 = vector.shape_cast %263 : vector<1x64x64xbf16> to vector<64x64xbf16>
    %cst_222 = arith.constant dense<0.000000e+00> : vector<128x64xf32>
    %265 = tpu.matmul %262, %264, %cst_222 {dimension_numbers = #tpu.dot_dimension_numbers<[1], [0], [0], [1], [0, 0, 1, 1], [], []>} : vector<128x64xbf16>, vector<64x64xbf16>, vector<128x64xf32> -> vector<128x64xf32>
    %266 = arith.addf %257, %265 : vector<128x64xf32>
    %c2_i32_223 = arith.constant 2 : i32
    %267 = arith.addi %202, %c2_i32_223 : i32
    %c1_224 = arith.constant 1 : index
    %268 = arith.index_cast %267 : i32 to index
    %c0_225 = arith.constant 0 : index
    %c0_226 = arith.constant 0 : index
    %269 = vector.load %arg7[%c1_224, %268, %c0_225, %c0_226] : memref<3x18x16x64xbf16, #tpu.memory_space<vmem>>, vector<1x8x16x64xbf16>
    %270 = vector.shape_cast %269 : vector<1x8x16x64xbf16> to vector<8x16x64xbf16>
    %271 = vector.shape_cast %270 : vector<8x16x64xbf16> to vector<128x64xbf16>
    %c7_227 = arith.constant 7 : index
    %c0_228 = arith.constant 0 : index
    %c0_229 = arith.constant 0 : index
    %272 = vector.load %arg2[%c7_227, %c0_228, %c0_229] : memref<9x64x64xbf16, #tpu.memory_space<vmem>>, vector<1x64x64xbf16>
    %273 = vector.shape_cast %272 : vector<1x64x64xbf16> to vector<64x64xbf16>
    %cst_230 = arith.constant dense<0.000000e+00> : vector<128x64xf32>
    %274 = tpu.matmul %271, %273, %cst_230 {dimension_numbers = #tpu.dot_dimension_numbers<[1], [0], [0], [1], [0, 0, 1, 1], [], []>} : vector<128x64xbf16>, vector<64x64xbf16>, vector<128x64xf32> -> vector<128x64xf32>
    %275 = arith.addf %266, %274 : vector<128x64xf32>
    %c2_i32_231 = arith.constant 2 : i32
    %276 = arith.addi %202, %c2_i32_231 : i32
    %c2_232 = arith.constant 2 : index
    %277 = arith.index_cast %276 : i32 to index
    %c0_233 = arith.constant 0 : index
    %c0_234 = arith.constant 0 : index
    %278 = vector.load %arg7[%c2_232, %277, %c0_233, %c0_234] : memref<3x18x16x64xbf16, #tpu.memory_space<vmem>>, vector<1x8x16x64xbf16>
    %279 = vector.shape_cast %278 : vector<1x8x16x64xbf16> to vector<8x16x64xbf16>
    %280 = vector.shape_cast %279 : vector<8x16x64xbf16> to vector<128x64xbf16>
    %c8_235 = arith.constant 8 : index
    %c0_236 = arith.constant 0 : index
    %c0_237 = arith.constant 0 : index
    %281 = vector.load %arg2[%c8_235, %c0_236, %c0_237] : memref<9x64x64xbf16, #tpu.memory_space<vmem>>, vector<1x64x64xbf16>
    %282 = vector.shape_cast %281 : vector<1x64x64xbf16> to vector<64x64xbf16>
    %cst_238 = arith.constant dense<0.000000e+00> : vector<128x64xf32>
    %283 = tpu.matmul %280, %282, %cst_238 {dimension_numbers = #tpu.dot_dimension_numbers<[1], [0], [0], [1], [0, 0, 1, 1], [], []>} : vector<128x64xbf16>, vector<64x64xbf16>, vector<128x64xf32> -> vector<128x64xf32>
    %284 = arith.addf %275, %283 : vector<128x64xf32>
    %285 = vector.broadcast %37 : vector<1x64xf32> to vector<128x64xf32>
    %286 = arith.addf %284, %285 : vector<128x64xf32>
    %cst_239 = arith.constant 0.000000e+00 : f32
    %287 = vector.broadcast %cst_239 : f32 to vector<128x64xf32>
    %288 = arith.maximumf %286, %287 : vector<128x64xf32>
    %289 = vector.shape_cast %288 : vector<128x64xf32> to vector<8x16x64xf32>
    %290 = arith.truncf %289 : vector<8x16x64xf32> to vector<8x16x64xbf16>
    %cst_240 = arith.constant 0.000000e+00 : bf16
    %291 = vector.broadcast %cst_240 : bf16 to vector<8x1x64xbf16>
    %292 = vector.extract_strided_slice %290 {offsets = [0, 0, 0], sizes = [8, 15, 64], strides = [1, 1, 1]} : vector<8x16x64xbf16> to vector<8x15x64xbf16>
    %293 = tpu.concatenate %291, %292 in 1 : vector<8x1x64xbf16>, vector<8x15x64xbf16> -> vector<8x16x64xbf16>
    %294 = vector.extract_strided_slice %290 {offsets = [0, 1, 0], sizes = [8, 15, 64], strides = [1, 1, 1]} : vector<8x16x64xbf16> to vector<8x15x64xbf16>
    %295 = tpu.concatenate %294, %291 in 1 : vector<8x15x64xbf16>, vector<8x1x64xbf16> -> vector<8x16x64xbf16>
    %c1_i32_241 = arith.constant 1 : i32
    %296 = arith.addi %c1_i32_241, %202 : i32
    %c1_242 = arith.constant 1 : index
    %297 = arith.index_cast %296 : i32 to index
    %c0_243 = arith.constant 0 : index
    %c0_244 = arith.constant 0 : index
    %298 = vector.load %arg8[%c1_242, %297, %c0_243, %c0_244] : memref<3x18x16x64xbf16, #tpu.memory_space<vmem>>, vector<1x8x16x64xbf16>
    %299 = vector.shape_cast %298 : vector<1x8x16x64xbf16> to vector<8x16x64xbf16>
    %300 = vector.shape_cast %290 : vector<8x16x64xbf16> to vector<1x8x16x64xbf16>
    tpu.vector_store %arg8[%c1_242, %297, %c0_243, %c0_244], %300 {strides = array<i32>} : memref<3x18x16x64xbf16, #tpu.memory_space<vmem>>, vector<1x8x16x64xbf16>,
    %c1_i32_245 = arith.constant 1 : i32
    %301 = arith.addi %c1_i32_245, %202 : i32
    %c0_246 = arith.constant 0 : index
    %302 = arith.index_cast %301 : i32 to index
    %c0_247 = arith.constant 0 : index
    %c0_248 = arith.constant 0 : index
    %303 = vector.load %arg8[%c0_246, %302, %c0_247, %c0_248] : memref<3x18x16x64xbf16, #tpu.memory_space<vmem>>, vector<1x8x16x64xbf16>
    %304 = vector.shape_cast %303 : vector<1x8x16x64xbf16> to vector<8x16x64xbf16>
    %305 = vector.shape_cast %293 : vector<8x16x64xbf16> to vector<1x8x16x64xbf16>
    tpu.vector_store %arg8[%c0_246, %302, %c0_247, %c0_248], %305 {strides = array<i32>} : memref<3x18x16x64xbf16, #tpu.memory_space<vmem>>, vector<1x8x16x64xbf16>,
    %c1_i32_249 = arith.constant 1 : i32
    %306 = arith.addi %c1_i32_249, %202 : i32
    %c2_250 = arith.constant 2 : index
    %307 = arith.index_cast %306 : i32 to index
    %c0_251 = arith.constant 0 : index
    %c0_252 = arith.constant 0 : index
    %308 = vector.load %arg8[%c2_250, %307, %c0_251, %c0_252] : memref<3x18x16x64xbf16, #tpu.memory_space<vmem>>, vector<1x8x16x64xbf16>
    %309 = vector.shape_cast %308 : vector<1x8x16x64xbf16> to vector<8x16x64xbf16>
    %310 = vector.shape_cast %295 : vector<8x16x64xbf16> to vector<1x8x16x64xbf16>
    tpu.vector_store %arg8[%c2_250, %307, %c0_251, %c0_252], %310 {strides = array<i32>} : memref<3x18x16x64xbf16, #tpu.memory_space<vmem>>, vector<1x8x16x64xbf16>,
    %c2_i32_253 = arith.constant 2 : i32
    %c0_i32_254 = arith.constant 0 : i32
    %c8_i32_255 = arith.constant 8 : i32
    %311 = arith.muli %c0_i32_254, %c8_i32_255 : i32
    %312 = tpu.assume_multiple %311, 8 : i32
    %cst_256 = arith.constant 0.000000e+00 : f32
    %313 = vector.broadcast %cst_256 : f32 to vector<128x64xf32>
    %c0_i32_257 = arith.constant 0 : i32
    %314 = arith.addi %312, %c0_i32_257 : i32
    %c0_258 = arith.constant 0 : index
    %315 = arith.index_cast %314 : i32 to index
    %c0_259 = arith.constant 0 : index
    %c0_260 = arith.constant 0 : index
    %316 = vector.load %arg8[%c0_258, %315, %c0_259, %c0_260] : memref<3x18x16x64xbf16, #tpu.memory_space<vmem>>, vector<1x8x16x64xbf16>
    %317 = vector.shape_cast %316 : vector<1x8x16x64xbf16> to vector<8x16x64xbf16>
    %318 = vector.shape_cast %317 : vector<8x16x64xbf16> to vector<128x64xbf16>
    %c0_261 = arith.constant 0 : index
    %c0_262 = arith.constant 0 : index
    %c0_263 = arith.constant 0 : index
    %319 = vector.load %arg4[%c0_261, %c0_262, %c0_263] : memref<9x64x64xbf16, #tpu.memory_space<vmem>>, vector<1x64x64xbf16>
    %320 = vector.shape_cast %319 : vector<1x64x64xbf16> to vector<64x64xbf16>
    %cst_264 = arith.constant dense<0.000000e+00> : vector<128x64xf32>
    %321 = tpu.matmul %318, %320, %cst_264 {dimension_numbers = #tpu.dot_dimension_numbers<[1], [0], [0], [1], [0, 0, 1, 1], [], []>} : vector<128x64xbf16>, vector<64x64xbf16>, vector<128x64xf32> -> vector<128x64xf32>
    %322 = arith.addf %313, %321 : vector<128x64xf32>
    %c0_i32_265 = arith.constant 0 : i32
    %323 = arith.addi %312, %c0_i32_265 : i32
    %c1_266 = arith.constant 1 : index
    %324 = arith.index_cast %323 : i32 to index
    %c0_267 = arith.constant 0 : index
    %c0_268 = arith.constant 0 : index
    %325 = vector.load %arg8[%c1_266, %324, %c0_267, %c0_268] : memref<3x18x16x64xbf16, #tpu.memory_space<vmem>>, vector<1x8x16x64xbf16>
    %326 = vector.shape_cast %325 : vector<1x8x16x64xbf16> to vector<8x16x64xbf16>
    %327 = vector.shape_cast %326 : vector<8x16x64xbf16> to vector<128x64xbf16>
    %c1_269 = arith.constant 1 : index
    %c0_270 = arith.constant 0 : index
    %c0_271 = arith.constant 0 : index
    %328 = vector.load %arg4[%c1_269, %c0_270, %c0_271] : memref<9x64x64xbf16, #tpu.memory_space<vmem>>, vector<1x64x64xbf16>
    %329 = vector.shape_cast %328 : vector<1x64x64xbf16> to vector<64x64xbf16>
    %cst_272 = arith.constant dense<0.000000e+00> : vector<128x64xf32>
    %330 = tpu.matmul %327, %329, %cst_272 {dimension_numbers = #tpu.dot_dimension_numbers<[1], [0], [0], [1], [0, 0, 1, 1], [], []>} : vector<128x64xbf16>, vector<64x64xbf16>, vector<128x64xf32> -> vector<128x64xf32>
    %331 = arith.addf %322, %330 : vector<128x64xf32>
    %c0_i32_273 = arith.constant 0 : i32
    %332 = arith.addi %312, %c0_i32_273 : i32
    %c2_274 = arith.constant 2 : index
    %333 = arith.index_cast %332 : i32 to index
    %c0_275 = arith.constant 0 : index
    %c0_276 = arith.constant 0 : index
    %334 = vector.load %arg8[%c2_274, %333, %c0_275, %c0_276] : memref<3x18x16x64xbf16, #tpu.memory_space<vmem>>, vector<1x8x16x64xbf16>
    %335 = vector.shape_cast %334 : vector<1x8x16x64xbf16> to vector<8x16x64xbf16>
    %336 = vector.shape_cast %335 : vector<8x16x64xbf16> to vector<128x64xbf16>
    %c2_277 = arith.constant 2 : index
    %c0_278 = arith.constant 0 : index
    %c0_279 = arith.constant 0 : index
    %337 = vector.load %arg4[%c2_277, %c0_278, %c0_279] : memref<9x64x64xbf16, #tpu.memory_space<vmem>>, vector<1x64x64xbf16>
    %338 = vector.shape_cast %337 : vector<1x64x64xbf16> to vector<64x64xbf16>
    %cst_280 = arith.constant dense<0.000000e+00> : vector<128x64xf32>
    %339 = tpu.matmul %336, %338, %cst_280 {dimension_numbers = #tpu.dot_dimension_numbers<[1], [0], [0], [1], [0, 0, 1, 1], [], []>} : vector<128x64xbf16>, vector<64x64xbf16>, vector<128x64xf32> -> vector<128x64xf32>
    %340 = arith.addf %331, %339 : vector<128x64xf32>
    %c1_i32_281 = arith.constant 1 : i32
    %341 = arith.addi %312, %c1_i32_281 : i32
    %c0_282 = arith.constant 0 : index
    %342 = arith.index_cast %341 : i32 to index
    %c0_283 = arith.constant 0 : index
    %c0_284 = arith.constant 0 : index
    %343 = vector.load %arg8[%c0_282, %342, %c0_283, %c0_284] : memref<3x18x16x64xbf16, #tpu.memory_space<vmem>>, vector<1x8x16x64xbf16>
    %344 = vector.shape_cast %343 : vector<1x8x16x64xbf16> to vector<8x16x64xbf16>
    %345 = vector.shape_cast %344 : vector<8x16x64xbf16> to vector<128x64xbf16>
    %c3_285 = arith.constant 3 : index
    %c0_286 = arith.constant 0 : index
    %c0_287 = arith.constant 0 : index
    %346 = vector.load %arg4[%c3_285, %c0_286, %c0_287] : memref<9x64x64xbf16, #tpu.memory_space<vmem>>, vector<1x64x64xbf16>
    %347 = vector.shape_cast %346 : vector<1x64x64xbf16> to vector<64x64xbf16>
    %cst_288 = arith.constant dense<0.000000e+00> : vector<128x64xf32>
    %348 = tpu.matmul %345, %347, %cst_288 {dimension_numbers = #tpu.dot_dimension_numbers<[1], [0], [0], [1], [0, 0, 1, 1], [], []>} : vector<128x64xbf16>, vector<64x64xbf16>, vector<128x64xf32> -> vector<128x64xf32>
    %349 = arith.addf %340, %348 : vector<128x64xf32>
    %c1_i32_289 = arith.constant 1 : i32
    %350 = arith.addi %312, %c1_i32_289 : i32
    %c1_290 = arith.constant 1 : index
    %351 = arith.index_cast %350 : i32 to index
    %c0_291 = arith.constant 0 : index
    %c0_292 = arith.constant 0 : index
    %352 = vector.load %arg8[%c1_290, %351, %c0_291, %c0_292] : memref<3x18x16x64xbf16, #tpu.memory_space<vmem>>, vector<1x8x16x64xbf16>
    %353 = vector.shape_cast %352 : vector<1x8x16x64xbf16> to vector<8x16x64xbf16>
    %354 = vector.shape_cast %353 : vector<8x16x64xbf16> to vector<128x64xbf16>
    %c4_293 = arith.constant 4 : index
    %c0_294 = arith.constant 0 : index
    %c0_295 = arith.constant 0 : index
    %355 = vector.load %arg4[%c4_293, %c0_294, %c0_295] : memref<9x64x64xbf16, #tpu.memory_space<vmem>>, vector<1x64x64xbf16>
    %356 = vector.shape_cast %355 : vector<1x64x64xbf16> to vector<64x64xbf16>
    %cst_296 = arith.constant dense<0.000000e+00> : vector<128x64xf32>
    %357 = tpu.matmul %354, %356, %cst_296 {dimension_numbers = #tpu.dot_dimension_numbers<[1], [0], [0], [1], [0, 0, 1, 1], [], []>} : vector<128x64xbf16>, vector<64x64xbf16>, vector<128x64xf32> -> vector<128x64xf32>
    %358 = arith.addf %349, %357 : vector<128x64xf32>
    %c1_i32_297 = arith.constant 1 : i32
    %359 = arith.addi %312, %c1_i32_297 : i32
    %c2_298 = arith.constant 2 : index
    %360 = arith.index_cast %359 : i32 to index
    %c0_299 = arith.constant 0 : index
    %c0_300 = arith.constant 0 : index
    %361 = vector.load %arg8[%c2_298, %360, %c0_299, %c0_300] : memref<3x18x16x64xbf16, #tpu.memory_space<vmem>>, vector<1x8x16x64xbf16>
    %362 = vector.shape_cast %361 : vector<1x8x16x64xbf16> to vector<8x16x64xbf16>
    %363 = vector.shape_cast %362 : vector<8x16x64xbf16> to vector<128x64xbf16>
    %c5_301 = arith.constant 5 : index
    %c0_302 = arith.constant 0 : index
    %c0_303 = arith.constant 0 : index
    %364 = vector.load %arg4[%c5_301, %c0_302, %c0_303] : memref<9x64x64xbf16, #tpu.memory_space<vmem>>, vector<1x64x64xbf16>
    %365 = vector.shape_cast %364 : vector<1x64x64xbf16> to vector<64x64xbf16>
    %cst_304 = arith.constant dense<0.000000e+00> : vector<128x64xf32>
    %366 = tpu.matmul %363, %365, %cst_304 {dimension_numbers = #tpu.dot_dimension_numbers<[1], [0], [0], [1], [0, 0, 1, 1], [], []>} : vector<128x64xbf16>, vector<64x64xbf16>, vector<128x64xf32> -> vector<128x64xf32>
    %367 = arith.addf %358, %366 : vector<128x64xf32>
    %c2_i32_305 = arith.constant 2 : i32
    %368 = arith.addi %312, %c2_i32_305 : i32
    %c0_306 = arith.constant 0 : index
    %369 = arith.index_cast %368 : i32 to index
    %c0_307 = arith.constant 0 : index
    %c0_308 = arith.constant 0 : index
    %370 = vector.load %arg8[%c0_306, %369, %c0_307, %c0_308] : memref<3x18x16x64xbf16, #tpu.memory_space<vmem>>, vector<1x8x16x64xbf16>
    %371 = vector.shape_cast %370 : vector<1x8x16x64xbf16> to vector<8x16x64xbf16>
    %372 = vector.shape_cast %371 : vector<8x16x64xbf16> to vector<128x64xbf16>
    %c6_309 = arith.constant 6 : index
    %c0_310 = arith.constant 0 : index
    %c0_311 = arith.constant 0 : index
    %373 = vector.load %arg4[%c6_309, %c0_310, %c0_311] : memref<9x64x64xbf16, #tpu.memory_space<vmem>>, vector<1x64x64xbf16>
    %374 = vector.shape_cast %373 : vector<1x64x64xbf16> to vector<64x64xbf16>
    %cst_312 = arith.constant dense<0.000000e+00> : vector<128x64xf32>
    %375 = tpu.matmul %372, %374, %cst_312 {dimension_numbers = #tpu.dot_dimension_numbers<[1], [0], [0], [1], [0, 0, 1, 1], [], []>} : vector<128x64xbf16>, vector<64x64xbf16>, vector<128x64xf32> -> vector<128x64xf32>
    %376 = arith.addf %367, %375 : vector<128x64xf32>
    %c2_i32_313 = arith.constant 2 : i32
    %377 = arith.addi %312, %c2_i32_313 : i32
    %c1_314 = arith.constant 1 : index
    %378 = arith.index_cast %377 : i32 to index
    %c0_315 = arith.constant 0 : index
    %c0_316 = arith.constant 0 : index
    %379 = vector.load %arg8[%c1_314, %378, %c0_315, %c0_316] : memref<3x18x16x64xbf16, #tpu.memory_space<vmem>>, vector<1x8x16x64xbf16>
    %380 = vector.shape_cast %379 : vector<1x8x16x64xbf16> to vector<8x16x64xbf16>
    %381 = vector.shape_cast %380 : vector<8x16x64xbf16> to vector<128x64xbf16>
    %c7_317 = arith.constant 7 : index
    %c0_318 = arith.constant 0 : index
    %c0_319 = arith.constant 0 : index
    %382 = vector.load %arg4[%c7_317, %c0_318, %c0_319] : memref<9x64x64xbf16, #tpu.memory_space<vmem>>, vector<1x64x64xbf16>
    %383 = vector.shape_cast %382 : vector<1x64x64xbf16> to vector<64x64xbf16>
    %cst_320 = arith.constant dense<0.000000e+00> : vector<128x64xf32>
    %384 = tpu.matmul %381, %383, %cst_320 {dimension_numbers = #tpu.dot_dimension_numbers<[1], [0], [0], [1], [0, 0, 1, 1], [], []>} : vector<128x64xbf16>, vector<64x64xbf16>, vector<128x64xf32> -> vector<128x64xf32>
    %385 = arith.addf %376, %384 : vector<128x64xf32>
    %c2_i32_321 = arith.constant 2 : i32
    %386 = arith.addi %312, %c2_i32_321 : i32
    %c2_322 = arith.constant 2 : index
    %387 = arith.index_cast %386 : i32 to index
    %c0_323 = arith.constant 0 : index
    %c0_324 = arith.constant 0 : index
    %388 = vector.load %arg8[%c2_322, %387, %c0_323, %c0_324] : memref<3x18x16x64xbf16, #tpu.memory_space<vmem>>, vector<1x8x16x64xbf16>
    %389 = vector.shape_cast %388 : vector<1x8x16x64xbf16> to vector<8x16x64xbf16>
    %390 = vector.shape_cast %389 : vector<8x16x64xbf16> to vector<128x64xbf16>
    %c8_325 = arith.constant 8 : index
    %c0_326 = arith.constant 0 : index
    %c0_327 = arith.constant 0 : index
    %391 = vector.load %arg4[%c8_325, %c0_326, %c0_327] : memref<9x64x64xbf16, #tpu.memory_space<vmem>>, vector<1x64x64xbf16>
    %392 = vector.shape_cast %391 : vector<1x64x64xbf16> to vector<64x64xbf16>
    %cst_328 = arith.constant dense<0.000000e+00> : vector<128x64xf32>
    %393 = tpu.matmul %390, %392, %cst_328 {dimension_numbers = #tpu.dot_dimension_numbers<[1], [0], [0], [1], [0, 0, 1, 1], [], []>} : vector<128x64xbf16>, vector<64x64xbf16>, vector<128x64xf32> -> vector<128x64xf32>
    %394 = arith.addf %385, %393 : vector<128x64xf32>
    %395 = vector.broadcast %38 : vector<1x64xf32> to vector<128x64xf32>
    %396 = arith.addf %394, %395 : vector<128x64xf32>
    %397 = vector.shape_cast %396 : vector<128x64xf32> to vector<8x16x64xf32>
    %c0_329 = arith.constant 0 : index
    %398 = arith.index_cast %312 : i32 to index
    %c0_330 = arith.constant 0 : index
    %c0_331 = arith.constant 0 : index
    %399 = vector.load %arg1[%c0_329, %398, %c0_330, %c0_331] : memref<1x16x16x64xf32, #tpu.memory_space<vmem>>, vector<1x8x16x64xf32>
    %400 = vector.shape_cast %399 : vector<1x8x16x64xf32> to vector<8x16x64xf32>
    %401 = arith.addf %397, %400 : vector<8x16x64xf32>
    %c0_332 = arith.constant 0 : index
    %402 = arith.index_cast %312 : i32 to index
    %c0_333 = arith.constant 0 : index
    %c0_334 = arith.constant 0 : index
    %403 = vector.load %arg6[%c0_332, %402, %c0_333, %c0_334] : memref<1x16x16x64xf32, #tpu.memory_space<vmem>>, vector<1x8x16x64xf32>
    %404 = vector.shape_cast %403 : vector<1x8x16x64xf32> to vector<8x16x64xf32>
    %405 = vector.shape_cast %401 : vector<8x16x64xf32> to vector<1x8x16x64xf32>
    tpu.vector_store %arg6[%c0_332, %402, %c0_333, %c0_334], %405 {strides = array<i32>} : memref<1x16x16x64xf32, #tpu.memory_space<vmem>>, vector<1x8x16x64xf32>,
    %c1_i32_335 = arith.constant 1 : i32
    %c8_i32_336 = arith.constant 8 : i32
    %406 = arith.muli %c1_i32_335, %c8_i32_336 : i32
    %407 = tpu.assume_multiple %406, 8 : i32
    %cst_337 = arith.constant 0.000000e+00 : f32
    %408 = vector.broadcast %cst_337 : f32 to vector<128x64xf32>
    %c0_i32_338 = arith.constant 0 : i32
    %409 = arith.addi %407, %c0_i32_338 : i32
    %c0_339 = arith.constant 0 : index
    %410 = arith.index_cast %409 : i32 to index
    %c0_340 = arith.constant 0 : index
    %c0_341 = arith.constant 0 : index
    %411 = vector.load %arg8[%c0_339, %410, %c0_340, %c0_341] : memref<3x18x16x64xbf16, #tpu.memory_space<vmem>>, vector<1x8x16x64xbf16>
    %412 = vector.shape_cast %411 : vector<1x8x16x64xbf16> to vector<8x16x64xbf16>
    %413 = vector.shape_cast %412 : vector<8x16x64xbf16> to vector<128x64xbf16>
    %c0_342 = arith.constant 0 : index
    %c0_343 = arith.constant 0 : index
    %c0_344 = arith.constant 0 : index
    %414 = vector.load %arg4[%c0_342, %c0_343, %c0_344] : memref<9x64x64xbf16, #tpu.memory_space<vmem>>, vector<1x64x64xbf16>
    %415 = vector.shape_cast %414 : vector<1x64x64xbf16> to vector<64x64xbf16>
    %cst_345 = arith.constant dense<0.000000e+00> : vector<128x64xf32>
    %416 = tpu.matmul %413, %415, %cst_345 {dimension_numbers = #tpu.dot_dimension_numbers<[1], [0], [0], [1], [0, 0, 1, 1], [], []>} : vector<128x64xbf16>, vector<64x64xbf16>, vector<128x64xf32> -> vector<128x64xf32>
    %417 = arith.addf %408, %416 : vector<128x64xf32>
    %c0_i32_346 = arith.constant 0 : i32
    %418 = arith.addi %407, %c0_i32_346 : i32
    %c1_347 = arith.constant 1 : index
    %419 = arith.index_cast %418 : i32 to index
    %c0_348 = arith.constant 0 : index
    %c0_349 = arith.constant 0 : index
    %420 = vector.load %arg8[%c1_347, %419, %c0_348, %c0_349] : memref<3x18x16x64xbf16, #tpu.memory_space<vmem>>, vector<1x8x16x64xbf16>
    %421 = vector.shape_cast %420 : vector<1x8x16x64xbf16> to vector<8x16x64xbf16>
    %422 = vector.shape_cast %421 : vector<8x16x64xbf16> to vector<128x64xbf16>
    %c1_350 = arith.constant 1 : index
    %c0_351 = arith.constant 0 : index
    %c0_352 = arith.constant 0 : index
    %423 = vector.load %arg4[%c1_350, %c0_351, %c0_352] : memref<9x64x64xbf16, #tpu.memory_space<vmem>>, vector<1x64x64xbf16>
    %424 = vector.shape_cast %423 : vector<1x64x64xbf16> to vector<64x64xbf16>
    %cst_353 = arith.constant dense<0.000000e+00> : vector<128x64xf32>
    %425 = tpu.matmul %422, %424, %cst_353 {dimension_numbers = #tpu.dot_dimension_numbers<[1], [0], [0], [1], [0, 0, 1, 1], [], []>} : vector<128x64xbf16>, vector<64x64xbf16>, vector<128x64xf32> -> vector<128x64xf32>
    %426 = arith.addf %417, %425 : vector<128x64xf32>
    %c0_i32_354 = arith.constant 0 : i32
    %427 = arith.addi %407, %c0_i32_354 : i32
    %c2_355 = arith.constant 2 : index
    %428 = arith.index_cast %427 : i32 to index
    %c0_356 = arith.constant 0 : index
    %c0_357 = arith.constant 0 : index
    %429 = vector.load %arg8[%c2_355, %428, %c0_356, %c0_357] : memref<3x18x16x64xbf16, #tpu.memory_space<vmem>>, vector<1x8x16x64xbf16>
    %430 = vector.shape_cast %429 : vector<1x8x16x64xbf16> to vector<8x16x64xbf16>
    %431 = vector.shape_cast %430 : vector<8x16x64xbf16> to vector<128x64xbf16>
    %c2_358 = arith.constant 2 : index
    %c0_359 = arith.constant 0 : index
    %c0_360 = arith.constant 0 : index
    %432 = vector.load %arg4[%c2_358, %c0_359, %c0_360] : memref<9x64x64xbf16, #tpu.memory_space<vmem>>, vector<1x64x64xbf16>
    %433 = vector.shape_cast %432 : vector<1x64x64xbf16> to vector<64x64xbf16>
    %cst_361 = arith.constant dense<0.000000e+00> : vector<128x64xf32>
    %434 = tpu.matmul %431, %433, %cst_361 {dimension_numbers = #tpu.dot_dimension_numbers<[1], [0], [0], [1], [0, 0, 1, 1], [], []>} : vector<128x64xbf16>, vector<64x64xbf16>, vector<128x64xf32> -> vector<128x64xf32>
    %435 = arith.addf %426, %434 : vector<128x64xf32>
    %c1_i32_362 = arith.constant 1 : i32
    %436 = arith.addi %407, %c1_i32_362 : i32
    %c0_363 = arith.constant 0 : index
    %437 = arith.index_cast %436 : i32 to index
    %c0_364 = arith.constant 0 : index
    %c0_365 = arith.constant 0 : index
    %438 = vector.load %arg8[%c0_363, %437, %c0_364, %c0_365] : memref<3x18x16x64xbf16, #tpu.memory_space<vmem>>, vector<1x8x16x64xbf16>
    %439 = vector.shape_cast %438 : vector<1x8x16x64xbf16> to vector<8x16x64xbf16>
    %440 = vector.shape_cast %439 : vector<8x16x64xbf16> to vector<128x64xbf16>
    %c3_366 = arith.constant 3 : index
    %c0_367 = arith.constant 0 : index
    %c0_368 = arith.constant 0 : index
    %441 = vector.load %arg4[%c3_366, %c0_367, %c0_368] : memref<9x64x64xbf16, #tpu.memory_space<vmem>>, vector<1x64x64xbf16>
    %442 = vector.shape_cast %441 : vector<1x64x64xbf16> to vector<64x64xbf16>
    %cst_369 = arith.constant dense<0.000000e+00> : vector<128x64xf32>
    %443 = tpu.matmul %440, %442, %cst_369 {dimension_numbers = #tpu.dot_dimension_numbers<[1], [0], [0], [1], [0, 0, 1, 1], [], []>} : vector<128x64xbf16>, vector<64x64xbf16>, vector<128x64xf32> -> vector<128x64xf32>
    %444 = arith.addf %435, %443 : vector<128x64xf32>
    %c1_i32_370 = arith.constant 1 : i32
    %445 = arith.addi %407, %c1_i32_370 : i32
    %c1_371 = arith.constant 1 : index
    %446 = arith.index_cast %445 : i32 to index
    %c0_372 = arith.constant 0 : index
    %c0_373 = arith.constant 0 : index
    %447 = vector.load %arg8[%c1_371, %446, %c0_372, %c0_373] : memref<3x18x16x64xbf16, #tpu.memory_space<vmem>>, vector<1x8x16x64xbf16>
    %448 = vector.shape_cast %447 : vector<1x8x16x64xbf16> to vector<8x16x64xbf16>
    %449 = vector.shape_cast %448 : vector<8x16x64xbf16> to vector<128x64xbf16>
    %c4_374 = arith.constant 4 : index
    %c0_375 = arith.constant 0 : index
    %c0_376 = arith.constant 0 : index
    %450 = vector.load %arg4[%c4_374, %c0_375, %c0_376] : memref<9x64x64xbf16, #tpu.memory_space<vmem>>, vector<1x64x64xbf16>
    %451 = vector.shape_cast %450 : vector<1x64x64xbf16> to vector<64x64xbf16>
    %cst_377 = arith.constant dense<0.000000e+00> : vector<128x64xf32>
    %452 = tpu.matmul %449, %451, %cst_377 {dimension_numbers = #tpu.dot_dimension_numbers<[1], [0], [0], [1], [0, 0, 1, 1], [], []>} : vector<128x64xbf16>, vector<64x64xbf16>, vector<128x64xf32> -> vector<128x64xf32>
    %453 = arith.addf %444, %452 : vector<128x64xf32>
    %c1_i32_378 = arith.constant 1 : i32
    %454 = arith.addi %407, %c1_i32_378 : i32
    %c2_379 = arith.constant 2 : index
    %455 = arith.index_cast %454 : i32 to index
    %c0_380 = arith.constant 0 : index
    %c0_381 = arith.constant 0 : index
    %456 = vector.load %arg8[%c2_379, %455, %c0_380, %c0_381] : memref<3x18x16x64xbf16, #tpu.memory_space<vmem>>, vector<1x8x16x64xbf16>
    %457 = vector.shape_cast %456 : vector<1x8x16x64xbf16> to vector<8x16x64xbf16>
    %458 = vector.shape_cast %457 : vector<8x16x64xbf16> to vector<128x64xbf16>
    %c5_382 = arith.constant 5 : index
    %c0_383 = arith.constant 0 : index
    %c0_384 = arith.constant 0 : index
    %459 = vector.load %arg4[%c5_382, %c0_383, %c0_384] : memref<9x64x64xbf16, #tpu.memory_space<vmem>>, vector<1x64x64xbf16>
    %460 = vector.shape_cast %459 : vector<1x64x64xbf16> to vector<64x64xbf16>
    %cst_385 = arith.constant dense<0.000000e+00> : vector<128x64xf32>
    %461 = tpu.matmul %458, %460, %cst_385 {dimension_numbers = #tpu.dot_dimension_numbers<[1], [0], [0], [1], [0, 0, 1, 1], [], []>} : vector<128x64xbf16>, vector<64x64xbf16>, vector<128x64xf32> -> vector<128x64xf32>
    %462 = arith.addf %453, %461 : vector<128x64xf32>
    %c2_i32_386 = arith.constant 2 : i32
    %463 = arith.addi %407, %c2_i32_386 : i32
    %c0_387 = arith.constant 0 : index
    %464 = arith.index_cast %463 : i32 to index
    %c0_388 = arith.constant 0 : index
    %c0_389 = arith.constant 0 : index
    %465 = vector.load %arg8[%c0_387, %464, %c0_388, %c0_389] : memref<3x18x16x64xbf16, #tpu.memory_space<vmem>>, vector<1x8x16x64xbf16>
    %466 = vector.shape_cast %465 : vector<1x8x16x64xbf16> to vector<8x16x64xbf16>
    %467 = vector.shape_cast %466 : vector<8x16x64xbf16> to vector<128x64xbf16>
    %c6_390 = arith.constant 6 : index
    %c0_391 = arith.constant 0 : index
    %c0_392 = arith.constant 0 : index
    %468 = vector.load %arg4[%c6_390, %c0_391, %c0_392] : memref<9x64x64xbf16, #tpu.memory_space<vmem>>, vector<1x64x64xbf16>
    %469 = vector.shape_cast %468 : vector<1x64x64xbf16> to vector<64x64xbf16>
    %cst_393 = arith.constant dense<0.000000e+00> : vector<128x64xf32>
    %470 = tpu.matmul %467, %469, %cst_393 {dimension_numbers = #tpu.dot_dimension_numbers<[1], [0], [0], [1], [0, 0, 1, 1], [], []>} : vector<128x64xbf16>, vector<64x64xbf16>, vector<128x64xf32> -> vector<128x64xf32>
    %471 = arith.addf %462, %470 : vector<128x64xf32>
    %c2_i32_394 = arith.constant 2 : i32
    %472 = arith.addi %407, %c2_i32_394 : i32
    %c1_395 = arith.constant 1 : index
    %473 = arith.index_cast %472 : i32 to index
    %c0_396 = arith.constant 0 : index
    %c0_397 = arith.constant 0 : index
    %474 = vector.load %arg8[%c1_395, %473, %c0_396, %c0_397] : memref<3x18x16x64xbf16, #tpu.memory_space<vmem>>, vector<1x8x16x64xbf16>
    %475 = vector.shape_cast %474 : vector<1x8x16x64xbf16> to vector<8x16x64xbf16>
    %476 = vector.shape_cast %475 : vector<8x16x64xbf16> to vector<128x64xbf16>
    %c7_398 = arith.constant 7 : index
    %c0_399 = arith.constant 0 : index
    %c0_400 = arith.constant 0 : index
    %477 = vector.load %arg4[%c7_398, %c0_399, %c0_400] : memref<9x64x64xbf16, #tpu.memory_space<vmem>>, vector<1x64x64xbf16>
    %478 = vector.shape_cast %477 : vector<1x64x64xbf16> to vector<64x64xbf16>
    %cst_401 = arith.constant dense<0.000000e+00> : vector<128x64xf32>
    %479 = tpu.matmul %476, %478, %cst_401 {dimension_numbers = #tpu.dot_dimension_numbers<[1], [0], [0], [1], [0, 0, 1, 1], [], []>} : vector<128x64xbf16>, vector<64x64xbf16>, vector<128x64xf32> -> vector<128x64xf32>
    %480 = arith.addf %471, %479 : vector<128x64xf32>
    %c2_i32_402 = arith.constant 2 : i32
    %481 = arith.addi %407, %c2_i32_402 : i32
    %c2_403 = arith.constant 2 : index
    %482 = arith.index_cast %481 : i32 to index
    %c0_404 = arith.constant 0 : index
    %c0_405 = arith.constant 0 : index
    %483 = vector.load %arg8[%c2_403, %482, %c0_404, %c0_405] : memref<3x18x16x64xbf16, #tpu.memory_space<vmem>>, vector<1x8x16x64xbf16>
    %484 = vector.shape_cast %483 : vector<1x8x16x64xbf16> to vector<8x16x64xbf16>
    %485 = vector.shape_cast %484 : vector<8x16x64xbf16> to vector<128x64xbf16>
    %c8_406 = arith.constant 8 : index
    %c0_407 = arith.constant 0 : index
    %c0_408 = arith.constant 0 : index
    %486 = vector.load %arg4[%c8_406, %c0_407, %c0_408] : memref<9x64x64xbf16, #tpu.memory_space<vmem>>, vector<1x64x64xbf16>
    %487 = vector.shape_cast %486 : vector<1x64x64xbf16> to vector<64x64xbf16>
    %cst_409 = arith.constant dense<0.000000e+00> : vector<128x64xf32>
    %488 = tpu.matmul %485, %487, %cst_409 {dimension_numbers = #tpu.dot_dimension_numbers<[1], [0], [0], [1], [0, 0, 1, 1], [], []>} : vector<128x64xbf16>, vector<64x64xbf16>, vector<128x64xf32> -> vector<128x64xf32>
    %489 = arith.addf %480, %488 : vector<128x64xf32>
    %490 = vector.broadcast %38 : vector<1x64xf32> to vector<128x64xf32>
    %491 = arith.addf %489, %490 : vector<128x64xf32>
    %492 = vector.shape_cast %491 : vector<128x64xf32> to vector<8x16x64xf32>
    %c0_410 = arith.constant 0 : index
    %493 = arith.index_cast %407 : i32 to index
    %c0_411 = arith.constant 0 : index
    %c0_412 = arith.constant 0 : index
    %494 = vector.load %arg1[%c0_410, %493, %c0_411, %c0_412] : memref<1x16x16x64xf32, #tpu.memory_space<vmem>>, vector<1x8x16x64xf32>
    %495 = vector.shape_cast %494 : vector<1x8x16x64xf32> to vector<8x16x64xf32>
    %496 = arith.addf %492, %495 : vector<8x16x64xf32>
    %c0_413 = arith.constant 0 : index
    %497 = arith.index_cast %407 : i32 to index
    %c0_414 = arith.constant 0 : index
    %c0_415 = arith.constant 0 : index
    %498 = vector.load %arg6[%c0_413, %497, %c0_414, %c0_415] : memref<1x16x16x64xf32, #tpu.memory_space<vmem>>, vector<1x8x16x64xf32>
    %499 = vector.shape_cast %498 : vector<1x8x16x64xf32> to vector<8x16x64xf32>
    %500 = vector.shape_cast %496 : vector<8x16x64xf32> to vector<1x8x16x64xf32>
    tpu.vector_store %arg6[%c0_413, %497, %c0_414, %c0_415], %500 {strides = array<i32>} : memref<1x16x16x64xf32, #tpu.memory_space<vmem>>, vector<1x8x16x64xf32>,
    %c2_i32_416 = arith.constant 2 : i32
    return
  }
  func.func @transform_0(%arg0: i32) -> (i32, i32, i32, i32) {
    %c0_i32 = arith.constant 0 : i32
    %c0_i32_0 = arith.constant 0 : i32
    %c0_i32_1 = arith.constant 0 : i32
    %c0_i32_2 = arith.constant 0 : i32
    return %arg0, %c0_i32, %c0_i32_0, %c0_i32_1 : i32, i32, i32, i32
  }
  func.func @transform_1(%arg0: i32) -> (i32, i32, i32) {
    %c0_i32 = arith.constant 0 : i32
    %c0_i32_0 = arith.constant 0 : i32
    %c0_i32_1 = arith.constant 0 : i32
    %c0_i32_2 = arith.constant 0 : i32
    return %c0_i32, %c0_i32_0, %c0_i32_1 : i32, i32, i32
  }
  func.func @transform_2(%arg0: i32) -> (i32, i32) {
    %c0_i32 = arith.constant 0 : i32
    %c0_i32_0 = arith.constant 0 : i32
    %c0_i32_1 = arith.constant 0 : i32
    return %c0_i32, %c0_i32_0 : i32, i32
  }
  func.func @transform_3(%arg0: i32) -> (i32, i32, i32) {
    %c0_i32 = arith.constant 0 : i32
    %c0_i32_0 = arith.constant 0 : i32
    %c0_i32_1 = arith.constant 0 : i32
    %c0_i32_2 = arith.constant 0 : i32
    return %c0_i32, %c0_i32_0, %c0_i32_1 : i32, i32, i32
  }
  func.func @transform_4(%arg0: i32) -> (i32, i32) {
    %c0_i32 = arith.constant 0 : i32
    %c0_i32_0 = arith.constant 0 : i32
    %c0_i32_1 = arith.constant 0 : i32
    return %c0_i32, %c0_i32_0 : i32, i32
  }
  func.func @transform_5(%arg0: i32) -> (i32, i32, i32, i32) {
    %c0_i32 = arith.constant 0 : i32
    %c0_i32_0 = arith.constant 0 : i32
    %c0_i32_1 = arith.constant 0 : i32
    %c0_i32_2 = arith.constant 0 : i32
    return %arg0, %c0_i32, %c0_i32_0, %c0_i32_1 : i32, i32, i32, i32
  }
}

</mosaic_0001>

<llo_original>
// kernel: tpu_custom_call.1
$region0: #{tpu_custom_call.1}
  #allocation0 [shape = 'u32[]', space=smem, size = 0x4, offset = 0x4, fixed_abs, tag = 'smem constant byte address 0x4 - core index']
  #allocation1 [shape = 'u32[144,128]{1,0:T(1,128)}', space=vmem, size = 0x12000, scoped, tag = 'internal scratch']
  #allocation2 [shape = 'bf16[3,18,16,64]{3,2,1,0:T(8,128)(2,1)}', space=vmem, size = 0x36000, scoped, tag = 'scratch operand']
  #allocation3 [shape = 'bf16[3,18,16,64]{3,2,1,0:T(8,128)(2,1)}', space=vmem, size = 0x36000, scoped, tag = 'scratch operand']
  %s0 = inlined_call_operand.hbm [shape: f32[2,16,16,64], index: 0, kind: input, shape index: {}]
  %s1 = inlined_call_operand.hbm [shape: bf16[9,64,64], index: 1, kind: input, shape index: {}]
  %s2 = inlined_call_operand.vmem [shape: f32[1,64], index: 2, kind: input, shape index: {}]
  %s3 = inlined_call_operand.hbm [shape: bf16[9,64,64], index: 3, kind: input, shape index: {}]
  %s4 = inlined_call_operand.vmem [shape: f32[1,64], index: 4, kind: input, shape index: {}]
  %s5 = inlined_call_operand.hbm [shape: f32[2,16,16,64], index: 5, kind: output, shape index: {}]
  %s6 = sld [smem:[#allocation0]]
  $region65: #{tpu_custom_call.1} parent=0
    _
  %s8 = ssub.s32 1, %s6
  %s9 = scalar_select 0, %s8, %s6
  $region1: #{tpu_custom_call.1} parent=0
    #allocation4 [shape = 'u8[262144]{0}', space=vmem, size = 0x40000, scoped, tag = 'input window, operand 0']
    #allocation5 [shape = 's32[2]{0}', space=sflag, size = 0x8, scoped, tag = 'scoped memory for tpu_custom_call.1']
    #allocation6 [shape = 's32[2]{0}', space=sflag, size = 0x8, scoped, tag = 'scoped memory for tpu_custom_call.1']
    #allocation7 [shape = 'u8[147456]{0}', space=vmem, size = 0x24000, scoped, tag = 'input window, operand 1, single buffered']
    #allocation8 [shape = 's32[1]{0}', space=sflag, size = 0x4, scoped, tag = 'scoped memory for tpu_custom_call.1']
    #allocation9 [shape = 'u8[147456]{0}', space=vmem, size = 0x24000, scoped, tag = 'input window, operand 3, single buffered']
    #allocation10 [shape = 'u8[262144]{0}', space=vmem, size = 0x40000, scoped, tag = 'output window, operand 0']
    %10 = vsyncpa [#allocation5], 0
    %s11 = scalar_lea.sflag [#allocation5], 1
    %12 = vsyncpa %s11, 0
    %13 = vsyncpa [#allocation8], 0
    %14 = vsyncpa [#allocation6], 0
    %s15 = scalar_lea.sflag [#allocation6], 1
    %16 = vsyncpa %s15, 0
    loop: start=0, step=1, limit=4
    $region2: #{tpu_custom_call.1} parent=1 // loop_pre_header
      _
    $region3: #{tpu_custom_call.1} parent=1 // loop_header
      %s18 = sphi 0, %s22
      %p19 = scmp.ge.s32.totalorder %s18, 4
      %s28 = sphi 0, %s30
      %s31 = sphi 0, %s28
      %s32 = sphi 0, %s31
      %s48 = sphi 0, %s32
      %s52 = sphi 0, %s52
      %s54 = sphi 0, %s52
      %s55 = sphi 0, %s54
      %s69 = sphi 0, %s55
      %s73 = sphi 0, %s73
      %s75 = sphi 0, %s73
      %s76 = sphi 0, %s75
      %s90 = sphi 0, %s76
      %s94 = sphi 0, %s94
      %s96 = sphi 0, %s94
      %s97 = sphi 0, %s96
      %s111 = sphi 0, %s97
      %s115 = sphi 0, %s115
      %s117 = sphi 0, %s115
      %s118 = sphi 0, %s117
      %s132 = sphi 0, %s118
      %s138 = sphi 0, %s140
      %s141 = sphi 0, %s138
      %s142 = sphi 0, %s141
      %s158 = sphi 0, %s142
    $region4: #{tpu_custom_call.1} parent=1 // loop_header_branch
      %21 = sbr.rel (%p19) target = $region8
    $region5: #{tpu_custom_call.1} parent=1 // loop_body
      %s23 = ssub.s32 %s18, 1
      %s24 = ssub.s32 %s18, 2
      %s25 = sadd.s32 %s18, 1
      %s26 = ssub.s32 %s18, %s25
      %p27 = scmp.eq.s32.totalorder %s26, 0
      %s29 = sadd.s32 %s28, 1
      %s30 = scalar_select %p27, %s28, %s29
      %p33 = pneg %p27
      %p34 = scmp.eq.s32.totalorder %s18, 1
      %p35 = por %p33, %p34
      %p36 = scmp.ne.s32.totalorder %s28, %s31
      %p37 = scmp.eq.s32.totalorder %s18, 0
      %p38 = por %p36, %p37
      %p39 = scmp.ne.s32.totalorder %s28, %s31
      %p40 = scmp.eq.s32.totalorder %s23, 1
      %p41 = por %p39, %p40
      %p42 = scmp.ne.s32.totalorder %s31, %s32
      %p43 = scmp.eq.s32.totalorder %s23, 0
      %p44 = por %p42, %p43
      %p45 = scmp.ne.s32.totalorder %s31, %s32
      %p46 = scmp.eq.s32.totalorder %s24, 1
      %p47 = por %p45, %p46
      %p49 = scmp.ne.s32.totalorder %s32, %s48
      %p50 = scmp.eq.s32.totalorder %s24, 0
      %p51 = por %p49, %p50
      %s53 = sadd.s32 %s52, 1
      %p56 = scmp.eq.s32.totalorder %s18, 1
      %p57 = scmp.ne.s32.totalorder %s52, %s54
      %p58 = scmp.eq.s32.totalorder %s18, 0
      %p59 = por %p57, %p58
      %p60 = scmp.ne.s32.totalorder %s52, %s54
      %p61 = scmp.eq.s32.totalorder %s23, 1
      %p62 = por %p60, %p61
      %p63 = scmp.ne.s32.totalorder %s54, %s55
      %p64 = scmp.eq.s32.totalorder %s23, 0
      %p65 = por %p63, %p64
      %p66 = scmp.ne.s32.totalorder %s54, %s55
      %p67 = scmp.eq.s32.totalorder %s24, 1
      %p68 = por %p66, %p67
      %p70 = scmp.ne.s32.totalorder %s55, %s69
      %p71 = scmp.eq.s32.totalorder %s24, 0
      %p72 = por %p70, %p71
      %s74 = sadd.s32 %s73, 1
      %p77 = scmp.eq.s32.totalorder %s18, 1
      %p78 = scmp.ne.s32.totalorder %s73, %s75
      %p79 = scmp.eq.s32.totalorder %s18, 0
      %p80 = por %p78, %p79
      %p81 = scmp.ne.s32.totalorder %s73, %s75
      %p82 = scmp.eq.s32.totalorder %s23, 1
      %p83 = por %p81, %p82
      %p84 = scmp.ne.s32.totalorder %s75, %s76
      %p85 = scmp.eq.s32.totalorder %s23, 0
      %p86 = por %p84, %p85
      %p87 = scmp.ne.s32.totalorder %s75, %s76
      %p88 = scmp.eq.s32.totalorder %s24, 1
      %p89 = por %p87, %p88
      %p91 = scmp.ne.s32.totalorder %s76, %s90
      %p92 = scmp.eq.s32.totalorder %s24, 0
      %p93 = por %p91, %p92
      %s95 = sadd.s32 %s94, 1
      %p98 = scmp.eq.s32.totalorder %s18, 1
      %p99 = scmp.ne.s32.totalorder %s94, %s96
      %p100 = scmp.eq.s32.totalorder %s18, 0
      %p101 = por %p99, %p100
      %p102 = scmp.ne.s32.totalorder %s94, %s96
      %p103 = scmp.eq.s32.totalorder %s23, 1
      %p104 = por %p102, %p103
      %p105 = scmp.ne.s32.totalorder %s96, %s97
      %p106 = scmp.eq.s32.totalorder %s23, 0
      %p107 = por %p105, %p106
      %p108 = scmp.ne.s32.totalorder %s96, %s97
      %p109 = scmp.eq.s32.totalorder %s24, 1
      %p110 = por %p108, %p109
      %p112 = scmp.ne.s32.totalorder %s97, %s111
      %p113 = scmp.eq.s32.totalorder %s24, 0
      %p114 = por %p112, %p113
      %s116 = sadd.s32 %s115, 1
      %p119 = scmp.eq.s32.totalorder %s18, 1
      %p120 = scmp.ne.s32.totalorder %s115, %s117
      %p121 = scmp.eq.s32.totalorder %s18, 0
      %p122 = por %p120, %p121
      %p123 = scmp.ne.s32.totalorder %s115, %s117
      %p124 = scmp.eq.s32.totalorder %s23, 1
      %p125 = por %p123, %p124
      %p126 = scmp.ne.s32.totalorder %s117, %s118
      %p127 = scmp.eq.s32.totalorder %s23, 0
      %p128 = por %p126, %p127
      %p129 = scmp.ne.s32.totalorder %s117, %s118
      %p130 = scmp.eq.s32.totalorder %s24, 1
      %p131 = por %p129, %p130
      %p133 = scmp.ne.s32.totalorder %s118, %s132
      %p134 = scmp.eq.s32.totalorder %s24, 0
      %p135 = por %p133, %p134
      %s136 = ssub.s32 %s18, %s25
      %p137 = scmp.eq.s32.totalorder %s136, 0
      %s139 = sadd.s32 %s138, 1
      %s140 = scalar_select %p137, %s138, %s139
      %p143 = pneg %p137
      %p144 = scmp.eq.s32.totalorder %s18, 1
      %p145 = por %p143, %p144
      %p146 = scmp.ne.s32.totalorder %s138, %s141
      %p147 = scmp.eq.s32.totalorder %s18, 0
      %p148 = por %p146, %p147
      %p149 = scmp.ne.s32.totalorder %s138, %s141
      %p150 = scmp.eq.s32.totalorder %s23, 1
      %p151 = por %p149, %p150
      %p152 = scmp.ne.s32.totalorder %s141, %s142
      %p153 = scmp.eq.s32.totalorder %s23, 0
      %p154 = por %p152, %p153
      %p155 = scmp.ne.s32.totalorder %s141, %s142
      %p156 = scmp.eq.s32.totalorder %s24, 1
      %p157 = por %p155, %p156
      %p159 = scmp.ne.s32.totalorder %s142, %s158
      %p160 = scmp.eq.s32.totalorder %s24, 0
      %p161 = por %p159, %p160
      %p162 = scmp.le.s32.totalorder 1, %s18
      %p163 = scmp.lt.s32.totalorder %s18, 3
      %p164 = pnand %p162, %p163
      %p165 = pneg %p164
      // Predicated region
      $region9: #{tpu_custom_call.1} parent=5 // pred_check
        _
      $region10: #{tpu_custom_call.1} parent=5 // pred_check_branch
        %167 = sbr.rel (%p164) target = $region12
      $region11: #{tpu_custom_call.1} parent=5 // pred_region
        %s168 = ssub.s32 %s18, 1
        // Predicated region
        $region13: #{tpu_custom_call.1} parent=11 // pred_check
          %p169 = pneg %p65
        $region14: #{tpu_custom_call.1} parent=11 // pred_check_branch
          %171 = sbr.rel (%p169) target = $region16
        $region15: #{tpu_custom_call.1} parent=11 // pred_region
          %s173 = ssub.s32 4608, 4608
          %174 = vsyncadd [#allocation8], %s173
          %s175 = sshll.u32 [#allocation7], 4
          %s176 = int_to_ptr.vmem [resolvable:$true] %s175
          %181 = dma.hbm_to_vmem [thread:$0]  %s1, 4608, %s176, [#allocation8], 64, 64, 4
        $region16: #{tpu_custom_call.1} parent=11 // pred_fallthru
          _
        // Predicated region
        $region17: #{tpu_custom_call.1} parent=11 // pred_check
          %p182 = pneg %p86
        $region18: #{tpu_custom_call.1} parent=11 // pred_check_branch
          %184 = sbr.rel (%p182) target = $region20
        $region19: #{tpu_custom_call.1} parent=11 // pred_region
          _
        $region20: #{tpu_custom_call.1} parent=11 // pred_fallthru
          _
        // Predicated region
        $region21: #{tpu_custom_call.1} parent=11 // pred_check
          %p185 = pneg %p107
        $region22: #{tpu_custom_call.1} parent=11 // pred_check_branch
          %187 = sbr.rel (%p185) target = $region24
        $region23: #{tpu_custom_call.1} parent=11 // pred_region
          %s189 = ssub.s32 4608, 4608
          %190 = vsyncadd [#allocation8], %s189
          %s191 = sshll.u32 [#allocation9], 4
          %s192 = int_to_ptr.vmem [resolvable:$true] %s191
          %197 = dma.hbm_to_vmem [thread:$0]  %s3, 4608, %s192, [#allocation8], 64, 64, 4
        $region24: #{tpu_custom_call.1} parent=11 // pred_fallthru
          _
        // Predicated region
        $region25: #{tpu_custom_call.1} parent=11 // pred_check
          %p198 = pneg %p128
        $region26: #{tpu_custom_call.1} parent=11 // pred_check_branch
          %200 = sbr.rel (%p198) target = $region28
        $region27: #{tpu_custom_call.1} parent=11 // pred_region
          _
        $region28: #{tpu_custom_call.1} parent=11 // pred_fallthru
          _
      $region12: #{tpu_custom_call.1} parent=5 // pred_fallthru
        _
      %p201 = scmp.lt.s32.totalorder %s18, 2
      // Predicated region
      $region29: #{tpu_custom_call.1} parent=5 // pred_check
        %p202 = pneg %p201
      $region30: #{tpu_custom_call.1} parent=5 // pred_check_branch
        %204 = sbr.rel (%p202) target = $region32
      $region31: #{tpu_custom_call.1} parent=5 // pred_region
        // Predicated region
        $region33: #{tpu_custom_call.1} parent=31 // pred_check
          %p205 = pneg %p38
        $region34: #{tpu_custom_call.1} parent=31 // pred_check_branch
          %207 = sbr.rel (%p205) target = $region36
        $region35: #{tpu_custom_call.1} parent=31 // pred_region
          %s208 = sand.u32 %s28, 1
          %s209 = scalar_lea.sflag [#allocation5], %s208
          %s210 = sand.u32 %s28, 1
          %s211 = smul.addr %s210, 256
          %s212 = scalar_lea.vmem [#allocation4], %s211
          %s214 = ssub.s32 4096, 4096
          %215 = vsyncadd %s209, %s214
          %s216 = smul.addr %s18, 32
          %s217 = smul.addr %s216, 128
          %s218 = scalar_lea.hbm %s0, %s217
          %s219 = sshll.u32 %s212, 4
          %s220 = int_to_ptr.vmem [resolvable:$true] %s219
          %225 = dma.hbm_to_vmem [thread:$0]  %s218, 4096, %s220, %s209, 128, 128, 8
        $region36: #{tpu_custom_call.1} parent=31 // pred_fallthru
          _
      $region32: #{tpu_custom_call.1} parent=5 // pred_fallthru
        _
      %p226 = scmp.le.s32.totalorder 1, %s18
      %p227 = scmp.lt.s32.totalorder %s18, 3
      %p228 = pnand %p226, %p227
      %p229 = pneg %p228
      // Predicated region
      $region37: #{tpu_custom_call.1} parent=5 // pred_check
        _
      $region38: #{tpu_custom_call.1} parent=5 // pred_check_branch
        %231 = sbr.rel (%p228) target = $region40
      $region39: #{tpu_custom_call.1} parent=5 // pred_region
        %s232 = ssub.s32 %s18, 1
        %s233 = sand.u32 %s31, 1
        %s234 = scalar_lea.sflag [#allocation5], %s233
        %s235 = sand.u32 %s31, 1
        %s236 = smul.addr %s235, 256
        %s237 = scalar_lea.vmem [#allocation4], %s236
        // Predicated region
        $region41: #{tpu_custom_call.1} parent=39 // pred_check
          %p238 = pneg %p44
        $region42: #{tpu_custom_call.1} parent=39 // pred_check_branch
          %240 = sbr.rel (%p238) target = $region44
        $region43: #{tpu_custom_call.1} parent=39 // pred_region
          %241 = dma.done %s234, 4096
        $region44: #{tpu_custom_call.1} parent=39 // pred_fallthru
          _
        // Predicated region
        $region45: #{tpu_custom_call.1} parent=39 // pred_check
          %p242 = pneg %p65
        $region46: #{tpu_custom_call.1} parent=39 // pred_check_branch
          %244 = sbr.rel (%p242) target = $region48
        $region47: #{tpu_custom_call.1} parent=39 // pred_region
          %245 = dma.done [#allocation8], 4608
        $region48: #{tpu_custom_call.1} parent=39 // pred_fallthru
          _
        // Predicated region
        $region49: #{tpu_custom_call.1} parent=39 // pred_check
          %p246 = pneg %p107
        $region50: #{tpu_custom_call.1} parent=39 // pred_check_branch
          %248 = sbr.rel (%p246) target = $region52
        $region51: #{tpu_custom_call.1} parent=39 // pred_region
          %249 = dma.done [#allocation8], 4608
        $region52: #{tpu_custom_call.1} parent=39 // pred_fallthru
          _
        %s250 = sand.u32 %s31, 1
        %s251 = scalar_lea.sflag [#allocation5], %s250
        %s252 = sand.u32 %s31, 1
        %s253 = smul.addr %s252, 256
        %s254 = scalar_lea.vmem [#allocation4], %s253
        %p255 = pneg %p44
        %p256 = pneg %p41
        %p257 = pneg %p65
        %p258 = pneg %p62
        %p259 = pneg %p86
        %p260 = pneg %p83
        %p261 = pneg %p107
        %p262 = pneg %p104
        %p263 = pneg %p128
        %p264 = pneg %p125
        %p265 = pneg %p154
        %p266 = pneg %p151
        %s267 = sand.u32 %s141, 1
        %s268 = scalar_lea.sflag [#allocation6], %s267
        %s269 = sand.u32 %s141, 1
        %s270 = smul.addr %s269, 256
        %s271 = scalar_lea.vmem [#allocation10], %s270
        %vm273 = vcmask 519168
        %274 = vst.msk [vmem:[#allocation2] sm:$0xf] %vm273, 0
        %275 = vst.msk [vmem:[#allocation2 + $0x4] sm:$0xf] %vm273, 0
        %s276 = scalar_lea.vmem [#allocation2], 136
        %277 = vst.msk [vmem:[%s276] sm:$0xf] %vm273, 0
        %278 = vst.msk [vmem:[%s276 + $0x4] sm:$0xf] %vm273, 0
        %s279 = scalar_lea.vmem [#allocation2], 144
        %280 = vst.msk [vmem:[%s279] sm:$0xf] %vm273, 0
        %281 = vst.msk [vmem:[%s279 + $0x4] sm:$0xf] %vm273, 0
        %s282 = scalar_lea.vmem [#allocation2], 280
        %283 = vst.msk [vmem:[%s282] sm:$0xf] %vm273, 0
        %284 = vst.msk [vmem:[%s282 + $0x4] sm:$0xf] %vm273, 0
        %s285 = scalar_lea.vmem [#allocation2], 288
        %286 = vst.msk [vmem:[%s285] sm:$0xf] %vm273, 0
        %287 = vst.msk [vmem:[%s285 + $0x4] sm:$0xf] %vm273, 0
        %s288 = scalar_lea.vmem [#allocation2], 424
        %289 = vst.msk [vmem:[%s288] sm:$0xf] %vm273, 0
        %290 = vst.msk [vmem:[%s288 + $0x4] sm:$0xf] %vm273, 0
        %291 = vst.msk [vmem:[#allocation3] sm:$0xf] %vm273, 0
        %292 = vst.msk [vmem:[#allocation3 + $0x4] sm:$0xf] %vm273, 0
        %s293 = scalar_lea.vmem [#allocation3], 136
        %294 = vst.msk [vmem:[%s293] sm:$0xf] %vm273, 0
        %295 = vst.msk [vmem:[%s293 + $0x4] sm:$0xf] %vm273, 0
        %s296 = scalar_lea.vmem [#allocation3], 144
        %297 = vst.msk [vmem:[%s296] sm:$0xf] %vm273, 0
        %298 = vst.msk [vmem:[%s296 + $0x4] sm:$0xf] %vm273, 0
        %s299 = scalar_lea.vmem [#allocation3], 280
        %300 = vst.msk [vmem:[%s299] sm:$0xf] %vm273, 0
        %301 = vst.msk [vmem:[%s299 + $0x4] sm:$0xf] %vm273, 0
        %s302 = scalar_lea.vmem [#allocation3], 288
        %303 = vst.msk [vmem:[%s302] sm:$0xf] %vm273, 0
        %304 = vst.msk [vmem:[%s302 + $0x4] sm:$0xf] %vm273, 0
        %s305 = scalar_lea.vmem [#allocation3], 424
        %306 = vst.msk [vmem:[%s305] sm:$0xf] %vm273, 0
        %307 = vst.msk [vmem:[%s305 + $0x4] sm:$0xf] %vm273, 0
        %v308 = vld [vmem:[%s2] sm:$0x1]
        %v309 = vld [vmem:[%s4] sm:$0x1]
        %s310 = smul.u32 0, 16
        %s311 = scalar_lea.vmem %s237, %s310 [#allocation4]
        %v312 = vld [vmem:[%s311] sm:$0xff]
        %v313 = vld [vmem:[%s311 + $0x8] sm:$0xff]
        %v314 = vld [vmem:[%s311 + $0x10] sm:$0xff]
        %v315 = vld [vmem:[%s311 + $0x18] sm:$0xff]
        %v316 = vld [vmem:[%s311 + $0x20] sm:$0xff]
        %v317 = vld [vmem:[%s311 + $0x28] sm:$0xff]
        %v318 = vld [vmem:[%s311 + $0x30] sm:$0xff]
        %v319 = vld [vmem:[%s311 + $0x38] sm:$0xff]
        %v320 = vld [vmem:[%s311 + $0x40] sm:$0xff]
        %v321 = vld [vmem:[%s311 + $0x48] sm:$0xff]
        %v322 = vld [vmem:[%s311 + $0x50] sm:$0xff]
        %v323 = vld [vmem:[%s311 + $0x58] sm:$0xff]
        %v324 = vld [vmem:[%s311 + $0x60] sm:$0xff]
        %v325 = vld [vmem:[%s311 + $0x68] sm:$0xff]
        %v326 = vld [vmem:[%s311 + $0x70] sm:$0xff]
        %v327 = vld [vmem:[%s311 + $0x78] sm:$0xff]
        %v328 = vpack.c.bf16 %v313, %v312
        %v329 = vpack.c.bf16 %v315, %v314
        %v330 = vpack.c.bf16 %v317, %v316
        %v331 = vpack.c.bf16 %v319, %v318
        %v332 = vpack.c.bf16 %v321, %v320
        %v333 = vpack.c.bf16 %v323, %v322
        %v334 = vpack.c.bf16 %v325, %v324
        %v335 = vpack.c.bf16 %v327, %v326
        %v337 = vshrl.u32 %v328, 16
        %v339 = vrot.slane %v337, 7
        %v340 = vshll.u32 %v328, 16
        %v342 = vor.u32 %v339, %v340
        %v344 = vshrl.u32 %v329, 16
        %v346 = vrot.slane %v344, 7
        %v347 = vshll.u32 %v329, 16
        %v349 = vor.u32 %v346, %v347
        %v351 = vshrl.u32 %v330, 16
        %v353 = vrot.slane %v351, 7
        %v354 = vshll.u32 %v330, 16
        %v356 = vor.u32 %v353, %v354
        %v358 = vshrl.u32 %v331, 16
        %v360 = vrot.slane %v358, 7
        %v361 = vshll.u32 %v331, 16
        %v363 = vor.u32 %v360, %v361
        %v365 = vshrl.u32 %v332, 16
        %v367 = vrot.slane %v365, 7
        %v368 = vshll.u32 %v332, 16
        %v370 = vor.u32 %v367, %v368
        %v372 = vshrl.u32 %v333, 16
        %v374 = vrot.slane %v372, 7
        %v375 = vshll.u32 %v333, 16
        %v377 = vor.u32 %v374, %v375
        %v379 = vshrl.u32 %v334, 16
        %v381 = vrot.slane %v379, 7
        %v382 = vshll.u32 %v334, 16
        %v384 = vor.u32 %v381, %v382
        %v386 = vshrl.u32 %v335, 16
        %v388 = vrot.slane %v386, 7
        %v389 = vshll.u32 %v335, 16
        %v391 = vor.u32 %v388, %v389
        %vm400 = vcmask 1040384
        %vm401 = vsmask.f32 256
        %vm402 = vmand %vm400, %vm401
        %v403 = vsel %vm402, 0, %v342
        %v404 = vsel %vm402, 0, %v349
        %v405 = vsel %vm402, 0, %v356
        %v406 = vsel %vm402, 0, %v363
        %v407 = vsel %vm402, 0, %v370
        %v408 = vsel %vm402, 0, %v377
        %v409 = vsel %vm402, 0, %v384
        %v410 = vsel %vm402, 0, %v391
        %v411 = vrot.slane %v340, 1
        %v412 = vor.u32 %v337, %v411
        %v413 = vrot.slane %v347, 1
        %v414 = vor.u32 %v344, %v413
        %v415 = vrot.slane %v354, 1
        %v416 = vor.u32 %v351, %v415
        %v417 = vrot.slane %v361, 1
        %v418 = vor.u32 %v358, %v417
        %v419 = vrot.slane %v368, 1
        %v420 = vor.u32 %v365, %v419
        %v421 = vrot.slane %v375, 1
        %v422 = vor.u32 %v372, %v421
        %v423 = vrot.slane %v382, 1
        %v424 = vor.u32 %v379, %v423
        %v425 = vrot.slane %v389, 1
        %v426 = vor.u32 %v386, %v425
        %vm435 = vcmask 1047552
        %vm436 = vsmask.f32 7424
        %vm437 = vmand %vm435, %vm436
        %v438 = vsel %vm437, %v412, 0
        %v439 = vsel %vm437, %v414, 0
        %v440 = vsel %vm437, %v416, 0
        %v441 = vsel %vm437, %v418, 0
        %v442 = vsel %vm437, %v420, 0
        %v443 = vsel %vm437, %v422, 0
        %v444 = vsel %vm437, %v424, 0
        %v445 = vsel %vm437, %v426, 0
        %s446 = sadd.s32 0, 1
        %v455 = vunpack.c.l.b16 %v328
        %v456 = vunpack.c.h.b16 %v328
        %v457 = vunpack.c.l.b16 %v329
        %v458 = vunpack.c.h.b16 %v329
        %v459 = vunpack.c.l.b16 %v330
        %v460 = vunpack.c.h.b16 %v330
        %v461 = vunpack.c.l.b16 %v331
        %v462 = vunpack.c.h.b16 %v331
        %v463 = vunpack.c.l.b16 %v332
        %v464 = vunpack.c.h.b16 %v332
        %v465 = vunpack.c.l.b16 %v333
        %v466 = vunpack.c.h.b16 %v333
        %v467 = vunpack.c.l.b16 %v334
        %v468 = vunpack.c.h.b16 %v334
        %v469 = vunpack.c.l.b16 %v335
        %v470 = vunpack.c.h.b16 %v335
        %v471 = vpack.c.b16 %v455, %v455
        %v472 = vpack.c.b16 %v456, %v456
        %v473 = vpack.c.b16 %v457, %v457
        %v474 = vpack.c.b16 %v458, %v458
        %v475 = vpack.c.b16 %v459, %v459
        %v476 = vpack.c.b16 %v460, %v460
        %v477 = vpack.c.b16 %v461, %v461
        %v478 = vpack.c.b16 %v462, %v462
        %v479 = vpack.c.b16 %v463, %v463
        %v480 = vpack.c.b16 %v464, %v464
        %v481 = vpack.c.b16 %v465, %v465
        %v482 = vpack.c.b16 %v466, %v466
        %v483 = vpack.c.b16 %v467, %v467
        %v484 = vpack.c.b16 %v468, %v468
        %v485 = vpack.c.b16 %v469, %v469
        %v486 = vpack.c.b16 %v470, %v470
        %s503 = smul.u32 %s446, 2
        %s504 = sadd.s32 %s503, 36
        %s505 = smul.addr %s504, 4
        %s506 = scalar_lea.vmem [#allocation2], %s505
        %507 = vst.msk [vmem:[%s506] sm:$0xf] %vm273, %v471
        %508 = vst.msk [vmem:[%s506 + $0x4] sm:$0xf] %vm273, %v472
        %509 = vst.msk [vmem:[%s506 + $0x8] sm:$0xf] %vm273, %v473
        %510 = vst.msk [vmem:[%s506 + $0xc] sm:$0xf] %vm273, %v474
        %511 = vst.msk [vmem:[%s506 + $0x10] sm:$0xf] %vm273, %v475
        %512 = vst.msk [vmem:[%s506 + $0x14] sm:$0xf] %vm273, %v476
        %513 = vst.msk [vmem:[%s506 + $0x18] sm:$0xf] %vm273, %v477
        %514 = vst.msk [vmem:[%s506 + $0x1c] sm:$0xf] %vm273, %v478
        %515 = vst.msk [vmem:[%s506 + $0x20] sm:$0xf] %vm273, %v479
        %516 = vst.msk [vmem:[%s506 + $0x24] sm:$0xf] %vm273, %v480
        %517 = vst.msk [vmem:[%s506 + $0x28] sm:$0xf] %vm273, %v481
        %518 = vst.msk [vmem:[%s506 + $0x2c] sm:$0xf] %vm273, %v482
        %519 = vst.msk [vmem:[%s506 + $0x30] sm:$0xf] %vm273, %v483
        %520 = vst.msk [vmem:[%s506 + $0x34] sm:$0xf] %vm273, %v484
        %521 = vst.msk [vmem:[%s506 + $0x38] sm:$0xf] %vm273, %v485
        %522 = vst.msk [vmem:[%s506 + $0x3c] sm:$0xf] %vm273, %v486
        %v531 = vunpack.c.l.b16 %v403
        %v532 = vunpack.c.h.b16 %v403
        %v533 = vunpack.c.l.b16 %v404
        %v534 = vunpack.c.h.b16 %v404
        %v535 = vunpack.c.l.b16 %v405
        %v536 = vunpack.c.h.b16 %v405
        %v537 = vunpack.c.l.b16 %v406
        %v538 = vunpack.c.h.b16 %v406
        %v539 = vunpack.c.l.b16 %v407
        %v540 = vunpack.c.h.b16 %v407
        %v541 = vunpack.c.l.b16 %v408
        %v542 = vunpack.c.h.b16 %v408
        %v543 = vunpack.c.l.b16 %v409
        %v544 = vunpack.c.h.b16 %v409
        %v545 = vunpack.c.l.b16 %v410
        %v546 = vunpack.c.h.b16 %v410
        %v547 = vpack.c.b16 %v531, %v531
        %v548 = vpack.c.b16 %v532, %v532
        %v549 = vpack.c.b16 %v533, %v533
        %v550 = vpack.c.b16 %v534, %v534
        %v551 = vpack.c.b16 %v535, %v535
        %v552 = vpack.c.b16 %v536, %v536
        %v553 = vpack.c.b16 %v537, %v537
        %v554 = vpack.c.b16 %v538, %v538
        %v555 = vpack.c.b16 %v539, %v539
        %v556 = vpack.c.b16 %v540, %v540
        %v557 = vpack.c.b16 %v541, %v541
        %v558 = vpack.c.b16 %v542, %v542
        %v559 = vpack.c.b16 %v543, %v543
        %v560 = vpack.c.b16 %v544, %v544
        %v561 = vpack.c.b16 %v545, %v545
        %v562 = vpack.c.b16 %v546, %v546
        %s579 = smul.addr %s503, 4
        %s580 = scalar_lea.vmem [#allocation2], %s579
        %581 = vst.msk [vmem:[%s580] sm:$0xf] %vm273, %v547
        %582 = vst.msk [vmem:[%s580 + $0x4] sm:$0xf] %vm273, %v548
        %583 = vst.msk [vmem:[%s580 + $0x8] sm:$0xf] %vm273, %v549
        %584 = vst.msk [vmem:[%s580 + $0xc] sm:$0xf] %vm273, %v550
        %585 = vst.msk [vmem:[%s580 + $0x10] sm:$0xf] %vm273, %v551
        %586 = vst.msk [vmem:[%s580 + $0x14] sm:$0xf] %vm273, %v552
        %587 = vst.msk [vmem:[%s580 + $0x18] sm:$0xf] %vm273, %v553
        %588 = vst.msk [vmem:[%s580 + $0x1c] sm:$0xf] %vm273, %v554
        %589 = vst.msk [vmem:[%s580 + $0x20] sm:$0xf] %vm273, %v555
        %590 = vst.msk [vmem:[%s580 + $0x24] sm:$0xf] %vm273, %v556
        %591 = vst.msk [vmem:[%s580 + $0x28] sm:$0xf] %vm273, %v557
        %592 = vst.msk [vmem:[%s580 + $0x2c] sm:$0xf] %vm273, %v558
        %593 = vst.msk [vmem:[%s580 + $0x30] sm:$0xf] %vm273, %v559
        %594 = vst.msk [vmem:[%s580 + $0x34] sm:$0xf] %vm273, %v560
        %595 = vst.msk [vmem:[%s580 + $0x38] sm:$0xf] %vm273, %v561
        %596 = vst.msk [vmem:[%s580 + $0x3c] sm:$0xf] %vm273, %v562
        %v605 = vunpack.c.l.b16 %v438
        %v606 = vunpack.c.h.b16 %v438
        %v607 = vunpack.c.l.b16 %v439
        %v608 = vunpack.c.h.b16 %v439
        %v609 = vunpack.c.l.b16 %v440
        %v610 = vunpack.c.h.b16 %v440
        %v611 = vunpack.c.l.b16 %v441
        %v612 = vunpack.c.h.b16 %v441
        %v613 = vunpack.c.l.b16 %v442
        %v614 = vunpack.c.h.b16 %v442
        %v615 = vunpack.c.l.b16 %v443
        %v616 = vunpack.c.h.b16 %v443
        %v617 = vunpack.c.l.b16 %v444
        %v618 = vunpack.c.h.b16 %v444
        %v619 = vunpack.c.l.b16 %v445
        %v620 = vunpack.c.h.b16 %v445
        %v621 = vpack.c.b16 %v605, %v605
        %v622 = vpack.c.b16 %v606, %v606
        %v623 = vpack.c.b16 %v607, %v607
        %v624 = vpack.c.b16 %v608, %v608
        %v625 = vpack.c.b16 %v609, %v609
        %v626 = vpack.c.b16 %v610, %v610
        %v627 = vpack.c.b16 %v611, %v611
        %v628 = vpack.c.b16 %v612, %v612
        %v629 = vpack.c.b16 %v613, %v613
        %v630 = vpack.c.b16 %v614, %v614
        %v631 = vpack.c.b16 %v615, %v615
        %v632 = vpack.c.b16 %v616, %v616
        %v633 = vpack.c.b16 %v617, %v617
        %v634 = vpack.c.b16 %v618, %v618
        %v635 = vpack.c.b16 %v619, %v619
        %v636 = vpack.c.b16 %v620, %v620
        %s653 = sadd.s32 %s503, 72
        %s654 = smul.addr %s653, 4
        %s655 = scalar_lea.vmem [#allocation2], %s654
        %656 = vst.msk [vmem:[%s655] sm:$0xf] %vm273, %v621
        %657 = vst.msk [vmem:[%s655 + $0x4] sm:$0xf] %vm273, %v622
        %658 = vst.msk [vmem:[%s655 + $0x8] sm:$0xf] %vm273, %v623
        %659 = vst.msk [vmem:[%s655 + $0xc] sm:$0xf] %vm273, %v624
        %660 = vst.msk [vmem:[%s655 + $0x10] sm:$0xf] %vm273, %v625
        %661 = vst.msk [vmem:[%s655 + $0x14] sm:$0xf] %vm273, %v626
        %662 = vst.msk [vmem:[%s655 + $0x18] sm:$0xf] %vm273, %v627
        %663 = vst.msk [vmem:[%s655 + $0x1c] sm:$0xf] %vm273, %v628
        %664 = vst.msk [vmem:[%s655 + $0x20] sm:$0xf] %vm273, %v629
        %665 = vst.msk [vmem:[%s655 + $0x24] sm:$0xf] %vm273, %v630
        %666 = vst.msk [vmem:[%s655 + $0x28] sm:$0xf] %vm273, %v631
        %667 = vst.msk [vmem:[%s655 + $0x2c] sm:$0xf] %vm273, %v632
        %668 = vst.msk [vmem:[%s655 + $0x30] sm:$0xf] %vm273, %v633
        %669 = vst.msk [vmem:[%s655 + $0x34] sm:$0xf] %vm273, %v634
        %670 = vst.msk [vmem:[%s655 + $0x38] sm:$0xf] %vm273, %v635
        %671 = vst.msk [vmem:[%s655 + $0x3c] sm:$0xf] %vm273, %v636
        %s672 = smul.u32 8, 16
        %s673 = scalar_lea.vmem %s237, %s672 [#allocation4]
        %v674 = vld [vmem:[%s673] sm:$0xff]
        %v675 = vld [vmem:[%s673 + $0x8] sm:$0xff]
        %v676 = vld [vmem:[%s673 + $0x10] sm:$0xff]
        %v677 = vld [vmem:[%s673 + $0x18] sm:$0xff]
        %v678 = vld [vmem:[%s673 + $0x20] sm:$0xff]
        %v679 = vld [vmem:[%s673 + $0x28] sm:$0xff]
        %v680 = vld [vmem:[%s673 + $0x30] sm:$0xff]
        %v681 = vld [vmem:[%s673 + $0x38] sm:$0xff]
        %v682 = vld [vmem:[%s673 + $0x40] sm:$0xff]
        %v683 = vld [vmem:[%s673 + $0x48] sm:$0xff]
        %v684 = vld [vmem:[%s673 + $0x50] sm:$0xff]
        %v685 = vld [vmem:[%s673 + $0x58] sm:$0xff]
        %v686 = vld [vmem:[%s673 + $0x60] sm:$0xff]
        %v687 = vld [vmem:[%s673 + $0x68] sm:$0xff]
        %v688 = vld [vmem:[%s673 + $0x70] sm:$0xff]
        %v689 = vld [vmem:[%s673 + $0x78] sm:$0xff]
        %v690 = vpack.c.bf16 %v675, %v674
        %v691 = vpack.c.bf16 %v677, %v676
        %v692 = vpack.c.bf16 %v679, %v678
        %v693 = vpack.c.bf16 %v681, %v680
        %v694 = vpack.c.bf16 %v683, %v682
        %v695 = vpack.c.bf16 %v685, %v684
        %v696 = vpack.c.bf16 %v687, %v686
        %v697 = vpack.c.bf16 %v689, %v688
        %v699 = vshrl.u32 %v690, 16
        %v701 = vrot.slane %v699, 7
        %v702 = vshll.u32 %v690, 16
        %v704 = vor.u32 %v701, %v702
        %v706 = vshrl.u32 %v691, 16
        %v708 = vrot.slane %v706, 7
        %v709 = vshll.u32 %v691, 16
        %v711 = vor.u32 %v708, %v709
        %v713 = vshrl.u32 %v692, 16
        %v715 = vrot.slane %v713, 7
        %v716 = vshll.u32 %v692, 16
        %v718 = vor.u32 %v715, %v716
        %v720 = vshrl.u32 %v693, 16
        %v722 = vrot.slane %v720, 7
        %v723 = vshll.u32 %v693, 16
        %v725 = vor.u32 %v722, %v723
        %v727 = vshrl.u32 %v694, 16
        %v729 = vrot.slane %v727, 7
        %v730 = vshll.u32 %v694, 16
        %v732 = vor.u32 %v729, %v730
        %v734 = vshrl.u32 %v695, 16
        %v736 = vrot.slane %v734, 7
        %v737 = vshll.u32 %v695, 16
        %v739 = vor.u32 %v736, %v737
        %v741 = vshrl.u32 %v696, 16
        %v743 = vrot.slane %v741, 7
        %v744 = vshll.u32 %v696, 16
        %v746 = vor.u32 %v743, %v744
        %v748 = vshrl.u32 %v697, 16
        %v750 = vrot.slane %v748, 7
        %v751 = vshll.u32 %v697, 16
        %v753 = vor.u32 %v750, %v751
        %v762 = vsel %vm402, 0, %v704
        %v763 = vsel %vm402, 0, %v711
        %v764 = vsel %vm402, 0, %v718
        %v765 = vsel %vm402, 0, %v725
        %v766 = vsel %vm402, 0, %v732
        %v767 = vsel %vm402, 0, %v739
        %v768 = vsel %vm402, 0, %v746
        %v769 = vsel %vm402, 0, %v753
        %v770 = vrot.slane %v702, 1
        %v771 = vor.u32 %v699, %v770
        %v772 = vrot.slane %v709, 1
        %v773 = vor.u32 %v706, %v772
        %v774 = vrot.slane %v716, 1
        %v775 = vor.u32 %v713, %v774
        %v776 = vrot.slane %v723, 1
        %v777 = vor.u32 %v720, %v776
        %v778 = vrot.slane %v730, 1
        %v779 = vor.u32 %v727, %v778
        %v780 = vrot.slane %v737, 1
        %v781 = vor.u32 %v734, %v780
        %v782 = vrot.slane %v744, 1
        %v783 = vor.u32 %v741, %v782
        %v784 = vrot.slane %v751, 1
        %v785 = vor.u32 %v748, %v784
        %v794 = vsel %vm437, %v771, 0
        %v795 = vsel %vm437, %v773, 0
        %v796 = vsel %vm437, %v775, 0
        %v797 = vsel %vm437, %v777, 0
        %v798 = vsel %vm437, %v779, 0
        %v799 = vsel %vm437, %v781, 0
        %v800 = vsel %vm437, %v783, 0
        %v801 = vsel %vm437, %v785, 0
        %s802 = sadd.s32 8, 1
        %v811 = vunpack.c.l.b16 %v690
        %v812 = vunpack.c.h.b16 %v690
        %v813 = vunpack.c.l.b16 %v691
        %v814 = vunpack.c.h.b16 %v691
        %v815 = vunpack.c.l.b16 %v692
        %v816 = vunpack.c.h.b16 %v692
        %v817 = vunpack.c.l.b16 %v693
        %v818 = vunpack.c.h.b16 %v693
        %v819 = vunpack.c.l.b16 %v694
        %v820 = vunpack.c.h.b16 %v694
        %v821 = vunpack.c.l.b16 %v695
        %v822 = vunpack.c.h.b16 %v695
        %v823 = vunpack.c.l.b16 %v696
        %v824 = vunpack.c.h.b16 %v696
        %v825 = vunpack.c.l.b16 %v697
        %v826 = vunpack.c.h.b16 %v697
        %v827 = vpack.c.b16 %v811, %v811
        %v828 = vpack.c.b16 %v812, %v812
        %v829 = vpack.c.b16 %v813, %v813
        %v830 = vpack.c.b16 %v814, %v814
        %v831 = vpack.c.b16 %v815, %v815
        %v832 = vpack.c.b16 %v816, %v816
        %v833 = vpack.c.b16 %v817, %v817
        %v834 = vpack.c.b16 %v818, %v818
        %v835 = vpack.c.b16 %v819, %v819
        %v836 = vpack.c.b16 %v820, %v820
        %v837 = vpack.c.b16 %v821, %v821
        %v838 = vpack.c.b16 %v822, %v822
        %v839 = vpack.c.b16 %v823, %v823
        %v840 = vpack.c.b16 %v824, %v824
        %v841 = vpack.c.b16 %v825, %v825
        %v842 = vpack.c.b16 %v826, %v826
        %s859 = smul.u32 %s802, 2
        %s860 = sadd.s32 %s859, 36
        %s861 = smul.addr %s860, 4
        %s862 = scalar_lea.vmem [#allocation2], %s861
        %863 = vst.msk [vmem:[%s862] sm:$0xf] %vm273, %v827
        %864 = vst.msk [vmem:[%s862 + $0x4] sm:$0xf] %vm273, %v828
        %865 = vst.msk [vmem:[%s862 + $0x8] sm:$0xf] %vm273, %v829
        %866 = vst.msk [vmem:[%s862 + $0xc] sm:$0xf] %vm273, %v830
        %867 = vst.msk [vmem:[%s862 + $0x10] sm:$0xf] %vm273, %v831
        %868 = vst.msk [vmem:[%s862 + $0x14] sm:$0xf] %vm273, %v832
        %869 = vst.msk [vmem:[%s862 + $0x18] sm:$0xf] %vm273, %v833
        %870 = vst.msk [vmem:[%s862 + $0x1c] sm:$0xf] %vm273, %v834
        %871 = vst.msk [vmem:[%s862 + $0x20] sm:$0xf] %vm273, %v835
        %872 = vst.msk [vmem:[%s862 + $0x24] sm:$0xf] %vm273, %v836
        %873 = vst.msk [vmem:[%s862 + $0x28] sm:$0xf] %vm273, %v837
        %874 = vst.msk [vmem:[%s862 + $0x2c] sm:$0xf] %vm273, %v838
        %875 = vst.msk [vmem:[%s862 + $0x30] sm:$0xf] %vm273, %v839
        %876 = vst.msk [vmem:[%s862 + $0x34] sm:$0xf] %vm273, %v840
        %877 = vst.msk [vmem:[%s862 + $0x38] sm:$0xf] %vm273, %v841
        %878 = vst.msk [vmem:[%s862 + $0x3c] sm:$0xf] %vm273, %v842
        %v887 = vunpack.c.l.b16 %v762
        %v888 = vunpack.c.h.b16 %v762
        %v889 = vunpack.c.l.b16 %v763
        %v890 = vunpack.c.h.b16 %v763
        %v891 = vunpack.c.l.b16 %v764
        %v892 = vunpack.c.h.b16 %v764
        %v893 = vunpack.c.l.b16 %v765
        %v894 = vunpack.c.h.b16 %v765
        %v895 = vunpack.c.l.b16 %v766
        %v896 = vunpack.c.h.b16 %v766
        %v897 = vunpack.c.l.b16 %v767
        %v898 = vunpack.c.h.b16 %v767
        %v899 = vunpack.c.l.b16 %v768
        %v900 = vunpack.c.h.b16 %v768
        %v901 = vunpack.c.l.b16 %v769
        %v902 = vunpack.c.h.b16 %v769
        %v903 = vpack.c.b16 %v887, %v887
        %v904 = vpack.c.b16 %v888, %v888
        %v905 = vpack.c.b16 %v889, %v889
        %v906 = vpack.c.b16 %v890, %v890
        %v907 = vpack.c.b16 %v891, %v891
        %v908 = vpack.c.b16 %v892, %v892
        %v909 = vpack.c.b16 %v893, %v893
        %v910 = vpack.c.b16 %v894, %v894
        %v911 = vpack.c.b16 %v895, %v895
        %v912 = vpack.c.b16 %v896, %v896
        %v913 = vpack.c.b16 %v897, %v897
        %v914 = vpack.c.b16 %v898, %v898
        %v915 = vpack.c.b16 %v899, %v899
        %v916 = vpack.c.b16 %v900, %v900
        %v917 = vpack.c.b16 %v901, %v901
        %v918 = vpack.c.b16 %v902, %v902
        %s935 = smul.addr %s859, 4
        %s936 = scalar_lea.vmem [#allocation2], %s935
        %937 = vst.msk [vmem:[%s936] sm:$0xf] %vm273, %v903
        %938 = vst.msk [vmem:[%s936 + $0x4] sm:$0xf] %vm273, %v904
        %939 = vst.msk [vmem:[%s936 + $0x8] sm:$0xf] %vm273, %v905
        %940 = vst.msk [vmem:[%s936 + $0xc] sm:$0xf] %vm273, %v906
        %941 = vst.msk [vmem:[%s936 + $0x10] sm:$0xf] %vm273, %v907
        %942 = vst.msk [vmem:[%s936 + $0x14] sm:$0xf] %vm273, %v908
        %943 = vst.msk [vmem:[%s936 + $0x18] sm:$0xf] %vm273, %v909
        %944 = vst.msk [vmem:[%s936 + $0x1c] sm:$0xf] %vm273, %v910
        %945 = vst.msk [vmem:[%s936 + $0x20] sm:$0xf] %vm273, %v911
        %946 = vst.msk [vmem:[%s936 + $0x24] sm:$0xf] %vm273, %v912
        %947 = vst.msk [vmem:[%s936 + $0x28] sm:$0xf] %vm273, %v913
        %948 = vst.msk [vmem:[%s936 + $0x2c] sm:$0xf] %vm273, %v914
        %949 = vst.msk [vmem:[%s936 + $0x30] sm:$0xf] %vm273, %v915
        %950 = vst.msk [vmem:[%s936 + $0x34] sm:$0xf] %vm273, %v916
        %951 = vst.msk [vmem:[%s936 + $0x38] sm:$0xf] %vm273, %v917
        %952 = vst.msk [vmem:[%s936 + $0x3c] sm:$0xf] %vm273, %v918
        %v961 = vunpack.c.l.b16 %v794
        %v962 = vunpack.c.h.b16 %v794
        %v963 = vunpack.c.l.b16 %v795
        %v964 = vunpack.c.h.b16 %v795
        %v965 = vunpack.c.l.b16 %v796
        %v966 = vunpack.c.h.b16 %v796
        %v967 = vunpack.c.l.b16 %v797
        %v968 = vunpack.c.h.b16 %v797
        %v969 = vunpack.c.l.b16 %v798
        %v970 = vunpack.c.h.b16 %v798
        %v971 = vunpack.c.l.b16 %v799
        %v972 = vunpack.c.h.b16 %v799
        %v973 = vunpack.c.l.b16 %v800
        %v974 = vunpack.c.h.b16 %v800
        %v975 = vunpack.c.l.b16 %v801
        %v976 = vunpack.c.h.b16 %v801
        %v977 = vpack.c.b16 %v961, %v961
        %v978 = vpack.c.b16 %v962, %v962
        %v979 = vpack.c.b16 %v963, %v963
        %v980 = vpack.c.b16 %v964, %v964
        %v981 = vpack.c.b16 %v965, %v965
        %v982 = vpack.c.b16 %v966, %v966
        %v983 = vpack.c.b16 %v967, %v967
        %v984 = vpack.c.b16 %v968, %v968
        %v985 = vpack.c.b16 %v969, %v969
        %v986 = vpack.c.b16 %v970, %v970
        %v987 = vpack.c.b16 %v971, %v971
        %v988 = vpack.c.b16 %v972, %v972
        %v989 = vpack.c.b16 %v973, %v973
        %v990 = vpack.c.b16 %v974, %v974
        %v991 = vpack.c.b16 %v975, %v975
        %v992 = vpack.c.b16 %v976, %v976
        %s1009 = sadd.s32 %s859, 72
        %s1010 = smul.addr %s1009, 4
        %s1011 = scalar_lea.vmem [#allocation2], %s1010
        %1012 = vst.msk [vmem:[%s1011] sm:$0xf] %vm273, %v977
        %1013 = vst.msk [vmem:[%s1011 + $0x4] sm:$0xf] %vm273, %v978
        %1014 = vst.msk [vmem:[%s1011 + $0x8] sm:$0xf] %vm273, %v979
        %1015 = vst.msk [vmem:[%s1011 + $0xc] sm:$0xf] %vm273, %v980
        %1016 = vst.msk [vmem:[%s1011 + $0x10] sm:$0xf] %vm273, %v981
        %1017 = vst.msk [vmem:[%s1011 + $0x14] sm:$0xf] %vm273, %v982
        %1018 = vst.msk [vmem:[%s1011 + $0x18] sm:$0xf] %vm273, %v983
        %1019 = vst.msk [vmem:[%s1011 + $0x1c] sm:$0xf] %vm273, %v984
        %1020 = vst.msk [vmem:[%s1011 + $0x20] sm:$0xf] %vm273, %v985
        %1021 = vst.msk [vmem:[%s1011 + $0x24] sm:$0xf] %vm273, %v986
        %1022 = vst.msk [vmem:[%s1011 + $0x28] sm:$0xf] %vm273, %v987
        %1023 = vst.msk [vmem:[%s1011 + $0x2c] sm:$0xf] %vm273, %v988
        %1024 = vst.msk [vmem:[%s1011 + $0x30] sm:$0xf] %vm273, %v989
        %1025 = vst.msk [vmem:[%s1011 + $0x34] sm:$0xf] %vm273, %v990
        %1026 = vst.msk [vmem:[%s1011 + $0x38] sm:$0xf] %vm273, %v991
        %1027 = vst.msk [vmem:[%s1011 + $0x3c] sm:$0xf] %vm273, %v992
        %s1028 = smul.u32 0, 2
        %s1029 = smul.addr %s1028, 4
        %s1030 = scalar_lea.vmem [#allocation2], %s1029
        %v1031 = vld [vmem:[%s1030] sm:$0xf]
        %v1032 = vld [vmem:[%s1030 + $0x4] sm:$0xf]
        %v1033 = vld [vmem:[%s1030 + $0x8] sm:$0xf]
        %v1034 = vld [vmem:[%s1030 + $0xc] sm:$0xf]
        %v1035 = vld [vmem:[%s1030 + $0x10] sm:$0xf]
        %v1036 = vld [vmem:[%s1030 + $0x14] sm:$0xf]
        %v1037 = vld [vmem:[%s1030 + $0x18] sm:$0xf]
        %v1038 = vld [vmem:[%s1030 + $0x1c] sm:$0xf]
        %v1039 = vld [vmem:[%s1030 + $0x20] sm:$0xf]
        %v1040 = vld [vmem:[%s1030 + $0x24] sm:$0xf]
        %v1041 = vld [vmem:[%s1030 + $0x28] sm:$0xf]
        %v1042 = vld [vmem:[%s1030 + $0x2c] sm:$0xf]
        %v1043 = vld [vmem:[%s1030 + $0x30] sm:$0xf]
        %v1044 = vld [vmem:[%s1030 + $0x34] sm:$0xf]
        %v1045 = vld [vmem:[%s1030 + $0x38] sm:$0xf]
        %v1046 = vld [vmem:[%s1030 + $0x3c] sm:$0xf]
        %v1047 = vld [vmem:[#allocation7] sm:$0xf]
        %v1048 = vld [vmem:[#allocation7 + $0x4] sm:$0xf]
        %v1049 = vld [vmem:[#allocation7 + $0x8] sm:$0xf]
        %v1050 = vld [vmem:[#allocation7 + $0xc] sm:$0xf]
        %v1051 = vld [vmem:[#allocation7 + $0x10] sm:$0xf]
        %v1052 = vld [vmem:[#allocation7 + $0x14] sm:$0xf]
        %v1053 = vld [vmem:[#allocation7 + $0x18] sm:$0xf]
        %v1054 = vld [vmem:[#allocation7 + $0x1c] sm:$0xf]
        %s1055 = sadd.s32 %s1028, 36
        %s1056 = smul.addr %s1055, 4
        %s1057 = scalar_lea.vmem [#allocation2], %s1056
        %v1058 = vld [vmem:[%s1057] sm:$0xf]
        %v1059 = vld [vmem:[%s1057 + $0x4] sm:$0xf]
        %v1060 = vld [vmem:[%s1057 + $0x8] sm:$0xf]
        %v1061 = vld [vmem:[%s1057 + $0xc] sm:$0xf]
        %v1062 = vld [vmem:[%s1057 + $0x10] sm:$0xf]
        %v1063 = vld [vmem:[%s1057 + $0x14] sm:$0xf]
        %v1064 = vld [vmem:[%s1057 + $0x18] sm:$0xf]
        %v1065 = vld [vmem:[%s1057 + $0x1c] sm:$0xf]
        %v1066 = vld [vmem:[%s1057 + $0x20] sm:$0xf]
        %v1067 = vld [vmem:[%s1057 + $0x24] sm:$0xf]
        %v1068 = vld [vmem:[%s1057 + $0x28] sm:$0xf]
        %v1069 = vld [vmem:[%s1057 + $0x2c] sm:$0xf]
        %v1070 = vld [vmem:[%s1057 + $0x30] sm:$0xf]
        %v1071 = vld [vmem:[%s1057 + $0x34] sm:$0xf]
        %v1072 = vld [vmem:[%s1057 + $0x38] sm:$0xf]
        %v1073 = vld [vmem:[%s1057 + $0x3c] sm:$0xf]
        %s1074 = scalar_lea.vmem [#allocation7], 32
        %v1075 = vld [vmem:[%s1074] sm:$0xf]
        %v1076 = vld [vmem:[%s1074 + $0x4] sm:$0xf]
        %v1077 = vld [vmem:[%s1074 + $0x8] sm:$0xf]
        %v1078 = vld [vmem:[%s1074 + $0xc] sm:$0xf]
        %v1079 = vld [vmem:[%s1074 + $0x10] sm:$0xf]
        %v1080 = vld [vmem:[%s1074 + $0x14] sm:$0xf]
        %v1081 = vld [vmem:[%s1074 + $0x18] sm:$0xf]
        %v1082 = vld [vmem:[%s1074 + $0x1c] sm:$0xf]
        %v1099 = vunpack.c.l.b16 %v1058
        %v1100 = vunpack.c.l.b16 %v1059
        %v1101 = vunpack.c.l.b16 %v1060
        %v1102 = vunpack.c.l.b16 %v1061
        %v1103 = vunpack.c.l.b16 %v1062
        %v1104 = vunpack.c.l.b16 %v1063
        %v1105 = vunpack.c.l.b16 %v1064
        %v1106 = vunpack.c.l.b16 %v1065
        %v1107 = vunpack.c.l.b16 %v1066
        %v1108 = vunpack.c.l.b16 %v1067
        %v1109 = vunpack.c.l.b16 %v1068
        %v1110 = vunpack.c.l.b16 %v1069
        %v1111 = vunpack.c.l.b16 %v1070
        %v1112 = vunpack.c.l.b16 %v1071
        %v1113 = vunpack.c.l.b16 %v1072
        %v1114 = vunpack.c.l.b16 %v1073
        %v1115 = vpack.c.b16 %v1100, %v1099
        %v1116 = vpack.c.b16 %v1102, %v1101
        %v1117 = vpack.c.b16 %v1104, %v1103
        %v1118 = vpack.c.b16 %v1106, %v1105
        %v1119 = vpack.c.b16 %v1108, %v1107
        %v1120 = vpack.c.b16 %v1110, %v1109
        %v1121 = vpack.c.b16 %v1112, %v1111
        %v1122 = vpack.c.b16 %v1114, %v1113
        %v1131 = vunpack.c.l.b16 %v1075
        %v1132 = vunpack.c.l.b16 %v1076
        %v1133 = vunpack.c.l.b16 %v1077
        %v1134 = vunpack.c.l.b16 %v1078
        %v1135 = vunpack.c.l.b16 %v1079
        %v1136 = vunpack.c.l.b16 %v1080
        %v1137 = vunpack.c.l.b16 %v1081
        %v1138 = vunpack.c.l.b16 %v1082
        %v1139 = vpack.c.b16 %v1132, %v1131
        %v1140 = vpack.c.b16 %v1134, %v1133
        %v1141 = vpack.c.b16 %v1136, %v1135
        %v1142 = vpack.c.b16 %v1138, %v1137
        %vm1147 = vcmask 523264
        %v1149 = vsel %vm1147, %v1115, 0
        %v1152 = vsel %vm1147, %v1116, 0
        %v1155 = vsel %vm1147, %v1117, 0
        %v1158 = vsel %vm1147, %v1118, 0
        %v1161 = vsel %vm1147, %v1119, 0
        %v1164 = vsel %vm1147, %v1120, 0
        %v1167 = vsel %vm1147, %v1121, 0
        %v1170 = vsel %vm1147, %v1122, 0
        %1172 = vmatprep.subr.bf16.mxu0 0
        %1173 = vmatpush1.bf16.msra.mxu0 0
        %1174 = vmatprep.subr.bf16.mxu0 0
        %1175 = vmatpush1.bf16.msra.mxu0 0
        %1176 = vmatprep.subr.bf16.mxu0 0
        %1177 = vmatpush1.bf16.msra.mxu0 0
        %1178 = vmatprep.subr.bf16.mxu0 0
        %1179 = vmatpush1.bf16.msra.mxu0 0
        %1180 = vmatprep.subr.bf16.mxu0 0
        %1181 = vmatpush1.bf16.msra.mxu0 %v1142
        %1182 = vmatprep.subr.bf16.mxu0 0
        %1183 = vmatpush1.bf16.msra.mxu0 %v1141
        %1184 = vmatprep.subr.bf16.mxu0 0
        %1185 = vmatpush1.bf16.msra.mxu0 %v1140
        %1186 = vmatprep.subr.bf16.mxu0 0
        %1187 = vmatpush1.bf16.msra.mxu0 %v1139
        %1188 = vmatprep.subr.bf16.mxu0 0
        %1189 = vmatpush2.bf16.msra.mxu0 0
        %1190 = vmatprep.subr.bf16.mxu0 0
        %1191 = vmatpush2.bf16.msra.mxu0 0
        %1192 = vmatprep.subr.bf16.mxu0 0
        %1193 = vmatpush2.bf16.msra.mxu0 0
        %1194 = vmatprep.subr.bf16.mxu0 0
        %1195 = vmatpush2.bf16.msra.mxu0 0
        %1196 = vmatprep.subr.bf16.mxu0 0
        %1197 = vmatpush2.bf16.msra.mxu0 0
        %1198 = vmatprep.subr.bf16.mxu0 0
        %1199 = vmatpush2.bf16.msra.mxu0 0
        %1200 = vmatprep.subr.bf16.mxu0 0
        %1201 = vmatpush2.bf16.msra.mxu0 0
        %1202 = vmatprep.subr.bf16.mxu0 0
        %1203 = vmatpush2.bf16.msra.mxu0 0
        %1204 = vmatprep.mubr.bf16.mxu0 0
        %1205 = vmatmul.mubr.bf16.gmra.mxu0 %v1149
        %v1206 = vpop.f32.mrf.mxu0
        %v1207 = vadd.f32 0.0, %v1206
        %v1208 = vpop.f32.mrf.mxu0
        %v1209 = vpop.f32.mrf.mxu0
        %v1210 = vadd.f32 0.0, %v1209
        %v1211 = vpop.f32.mrf.mxu0
        %1212 = vmatprep.mubr.bf16.mxu0 0
        %1213 = vmatmul.mubr.bf16.gmra.mxu0 %v1152
        %v1214 = vpop.f32.mrf.mxu0
        %v1215 = vadd.f32 0.0, %v1214
        %v1216 = vpop.f32.mrf.mxu0
        %v1217 = vpop.f32.mrf.mxu0
        %v1218 = vadd.f32 0.0, %v1217
        %v1219 = vpop.f32.mrf.mxu0
        %1220 = vmatprep.mubr.bf16.mxu0 0
        %1221 = vmatmul.mubr.bf16.gmra.mxu0 %v1155
        %v1222 = vpop.f32.mrf.mxu0
        %v1223 = vadd.f32 0.0, %v1222
        %v1224 = vpop.f32.mrf.mxu0
        %v1225 = vpop.f32.mrf.mxu0
        %v1226 = vadd.f32 0.0, %v1225
        %v1227 = vpop.f32.mrf.mxu0
        %1228 = vmatprep.mubr.bf16.mxu0 0
        %1229 = vmatmul.mubr.bf16.gmra.mxu0 %v1158
        %v1230 = vpop.f32.mrf.mxu0
        %v1231 = vadd.f32 0.0, %v1230
        %v1232 = vpop.f32.mrf.mxu0
        %v1233 = vpop.f32.mrf.mxu0
        %v1234 = vadd.f32 0.0, %v1233
        %v1235 = vpop.f32.mrf.mxu0
        %1236 = vmatprep.mubr.bf16.mxu0 0
        %1237 = vmatmul.mubr.bf16.gmra.mxu0 %v1161
        %v1238 = vpop.f32.mrf.mxu0
        %v1239 = vadd.f32 0.0, %v1238
        %v1240 = vpop.f32.mrf.mxu0
        %v1241 = vpop.f32.mrf.mxu0
        %v1242 = vadd.f32 0.0, %v1241
        %v1243 = vpop.f32.mrf.mxu0
        %1244 = vmatprep.mubr.bf16.mxu0 0
        %1245 = vmatmul.mubr.bf16.gmra.mxu0 %v1164
        %v1246 = vpop.f32.mrf.mxu0
        %v1247 = vadd.f32 0.0, %v1246
        %v1248 = vpop.f32.mrf.mxu0
        %v1249 = vpop.f32.mrf.mxu0
        %v1250 = vadd.f32 0.0, %v1249
        %v1251 = vpop.f32.mrf.mxu0
        %1252 = vmatprep.mubr.bf16.mxu0 0
        %1253 = vmatmul.mubr.bf16.gmra.mxu0 %v1167
        %v1254 = vpop.f32.mrf.mxu0
        %v1255 = vadd.f32 0.0, %v1254
        %v1256 = vpop.f32.mrf.mxu0
        %v1257 = vpop.f32.mrf.mxu0
        %v1258 = vadd.f32 0.0, %v1257
        %v1259 = vpop.f32.mrf.mxu0
        %1260 = vmatprep.mubr.bf16.mxu0 0
        %1261 = vmatmul.mubr.bf16.gmra.mxu0 %v1170
        %v1262 = vpop.f32.mrf.mxu0
        %v1263 = vadd.f32 0.0, %v1262
        %v1264 = vpop.f32.mrf.mxu0
        %v1265 = vpop.f32.mrf.mxu0
        %v1266 = vadd.f32 0.0, %v1265
        %v1267 = vpop.f32.mrf.mxu0
        %1268 = vdwg.mxu0
        %v1285 = vunpack.c.l.b16 %v1031
        %v1286 = vunpack.c.l.b16 %v1032
        %v1287 = vunpack.c.l.b16 %v1033
        %v1288 = vunpack.c.l.b16 %v1034
        %v1289 = vunpack.c.l.b16 %v1035
        %v1290 = vunpack.c.l.b16 %v1036
        %v1291 = vunpack.c.l.b16 %v1037
        %v1292 = vunpack.c.l.b16 %v1038
        %v1293 = vunpack.c.l.b16 %v1039
        %v1294 = vunpack.c.l.b16 %v1040
        %v1295 = vunpack.c.l.b16 %v1041
        %v1296 = vunpack.c.l.b16 %v1042
        %v1297 = vunpack.c.l.b16 %v1043
        %v1298 = vunpack.c.l.b16 %v1044
        %v1299 = vunpack.c.l.b16 %v1045
        %v1300 = vunpack.c.l.b16 %v1046
        %v1301 = vpack.c.b16 %v1286, %v1285
        %v1302 = vpack.c.b16 %v1288, %v1287
        %v1303 = vpack.c.b16 %v1290, %v1289
        %v1304 = vpack.c.b16 %v1292, %v1291
        %v1305 = vpack.c.b16 %v1294, %v1293
        %v1306 = vpack.c.b16 %v1296, %v1295
        %v1307 = vpack.c.b16 %v1298, %v1297
        %v1308 = vpack.c.b16 %v1300, %v1299
        %v1317 = vunpack.c.l.b16 %v1047
        %v1318 = vunpack.c.l.b16 %v1048
        %v1319 = vunpack.c.l.b16 %v1049
        %v1320 = vunpack.c.l.b16 %v1050
        %v1321 = vunpack.c.l.b16 %v1051
        %v1322 = vunpack.c.l.b16 %v1052
        %v1323 = vunpack.c.l.b16 %v1053
        %v1324 = vunpack.c.l.b16 %v1054
        %v1325 = vpack.c.b16 %v1318, %v1317
        %v1326 = vpack.c.b16 %v1320, %v1319
        %v1327 = vpack.c.b16 %v1322, %v1321
        %v1328 = vpack.c.b16 %v1324, %v1323
        %v1334 = vsel %vm1147, %v1301, 0
        %v1337 = vsel %vm1147, %v1302, 0
        %v1340 = vsel %vm1147, %v1303, 0
        %v1343 = vsel %vm1147, %v1304, 0
        %v1346 = vsel %vm1147, %v1305, 0
        %v1349 = vsel %vm1147, %v1306, 0
        %v1352 = vsel %vm1147, %v1307, 0
        %v1355 = vsel %vm1147, %v1308, 0
        %1357 = vmatprep.subr.bf16.mxu0 0
        %1358 = vmatpush1.bf16.msra.mxu0 0
        %1359 = vmatprep.subr.bf16.mxu0 0
        %1360 = vmatpush1.bf16.msra.mxu0 0
        %1361 = vmatprep.subr.bf16.mxu0 0
        %1362 = vmatpush1.bf16.msra.mxu0 0
        %1363 = vmatprep.subr.bf16.mxu0 0
        %1364 = vmatpush1.bf16.msra.mxu0 0
        %1365 = vmatprep.subr.bf16.mxu0 0
        %1366 = vmatpush1.bf16.msra.mxu0 %v1328
        %1367 = vmatprep.subr.bf16.mxu0 0
        %1368 = vmatpush1.bf16.msra.mxu0 %v1327
        %1369 = vmatprep.subr.bf16.mxu0 0
        %1370 = vmatpush1.bf16.msra.mxu0 %v1326
        %1371 = vmatprep.subr.bf16.mxu0 0
        %1372 = vmatpush1.bf16.msra.mxu0 %v1325
        %1373 = vmatprep.subr.bf16.mxu0 0
        %1374 = vmatpush2.bf16.msra.mxu0 0
        %1375 = vmatprep.subr.bf16.mxu0 0
        %1376 = vmatpush2.bf16.msra.mxu0 0
        %1377 = vmatprep.subr.bf16.mxu0 0
        %1378 = vmatpush2.bf16.msra.mxu0 0
        %1379 = vmatprep.subr.bf16.mxu0 0
        %1380 = vmatpush2.bf16.msra.mxu0 0
        %1381 = vmatprep.subr.bf16.mxu0 0
        %1382 = vmatpush2.bf16.msra.mxu0 0
        %1383 = vmatprep.subr.bf16.mxu0 0
        %1384 = vmatpush2.bf16.msra.mxu0 0
        %1385 = vmatprep.subr.bf16.mxu0 0
        %1386 = vmatpush2.bf16.msra.mxu0 0
        %1387 = vmatprep.subr.bf16.mxu0 0
        %1388 = vmatpush2.bf16.msra.mxu0 0
        %1389 = vmatprep.mubr.bf16.mxu0 0
        %1390 = vmatmul.mubr.bf16.gmra.mxu0 %v1334
        %v1391 = vpop.f32.mrf.mxu0
        %v1392 = vadd.f32 %v1207, %v1391
        %v1393 = vpop.f32.mrf.mxu0
        %v1394 = vpop.f32.mrf.mxu0
        %v1395 = vadd.f32 %v1210, %v1394
        %v1396 = vpop.f32.mrf.mxu0
        %1397 = vmatprep.mubr.bf16.mxu0 0
        %1398 = vmatmul.mubr.bf16.gmra.mxu0 %v1337
        %v1399 = vpop.f32.mrf.mxu0
        %v1400 = vadd.f32 %v1215, %v1399
        %v1401 = vpop.f32.mrf.mxu0
        %v1402 = vpop.f32.mrf.mxu0
        %v1403 = vadd.f32 %v1218, %v1402
        %v1404 = vpop.f32.mrf.mxu0
        %1405 = vmatprep.mubr.bf16.mxu0 0
        %1406 = vmatmul.mubr.bf16.gmra.mxu0 %v1340
        %v1407 = vpop.f32.mrf.mxu0
        %v1408 = vadd.f32 %v1223, %v1407
        %v1409 = vpop.f32.mrf.mxu0
        %v1410 = vpop.f32.mrf.mxu0
        %v1411 = vadd.f32 %v1226, %v1410
        %v1412 = vpop.f32.mrf.mxu0
        %1413 = vmatprep.mubr.bf16.mxu0 0
        %1414 = vmatmul.mubr.bf16.gmra.mxu0 %v1343
        %v1415 = vpop.f32.mrf.mxu0
        %v1416 = vadd.f32 %v1231, %v1415
        %v1417 = vpop.f32.mrf.mxu0
        %v1418 = vpop.f32.mrf.mxu0
        %v1419 = vadd.f32 %v1234, %v1418
        %v1420 = vpop.f32.mrf.mxu0
        %1421 = vmatprep.mubr.bf16.mxu0 0
        %1422 = vmatmul.mubr.bf16.gmra.mxu0 %v1346
        %v1423 = vpop.f32.mrf.mxu0
        %v1424 = vadd.f32 %v1239, %v1423
        %v1425 = vpop.f32.mrf.mxu0
        %v1426 = vpop.f32.mrf.mxu0
        %v1427 = vadd.f32 %v1242, %v1426
        %v1428 = vpop.f32.mrf.mxu0
        %1429 = vmatprep.mubr.bf16.mxu0 0
        %1430 = vmatmul.mubr.bf16.gmra.mxu0 %v1349
        %v1431 = vpop.f32.mrf.mxu0
        %v1432 = vadd.f32 %v1247, %v1431
        %v1433 = vpop.f32.mrf.mxu0
        %v1434 = vpop.f32.mrf.mxu0
        %v1435 = vadd.f32 %v1250, %v1434
        %v1436 = vpop.f32.mrf.mxu0
        %1437 = vmatprep.mubr.bf16.mxu0 0
        %1438 = vmatmul.mubr.bf16.gmra.mxu0 %v1352
        %v1439 = vpop.f32.mrf.mxu0
        %v1440 = vadd.f32 %v1255, %v1439
        %v1441 = vpop.f32.mrf.mxu0
        %v1442 = vpop.f32.mrf.mxu0
        %v1443 = vadd.f32 %v1258, %v1442
        %v1444 = vpop.f32.mrf.mxu0
        %1445 = vmatprep.mubr.bf16.mxu0 0
        %1446 = vmatmul.mubr.bf16.gmra.mxu0 %v1355
        %v1447 = vpop.f32.mrf.mxu0
        %v1448 = vadd.f32 %v1263, %v1447
        %v1449 = vpop.f32.mrf.mxu0
        %v1450 = vpop.f32.mrf.mxu0
        %v1451 = vadd.f32 %v1266, %v1450
        %v1452 = vpop.f32.mrf.mxu0
        %1453 = vdwg.mxu0
        %s1454 = sadd.s32 %s1028, 72
        %s1455 = smul.addr %s1454, 4
        %s1456 = scalar_lea.vmem [#allocation2], %s1455
        %v1457 = vld [vmem:[%s1456] sm:$0xf]
        %v1458 = vld [vmem:[%s1456 + $0x4] sm:$0xf]
        %v1459 = vld [vmem:[%s1456 + $0x8] sm:$0xf]
        %v1460 = vld [vmem:[%s1456 + $0xc] sm:$0xf]
        %v1461 = vld [vmem:[%s1456 + $0x10] sm:$0xf]
        %v1462 = vld [vmem:[%s1456 + $0x14] sm:$0xf]
        %v1463 = vld [vmem:[%s1456 + $0x18] sm:$0xf]
        %v1464 = vld [vmem:[%s1456 + $0x1c] sm:$0xf]
        %v1465 = vld [vmem:[%s1456 + $0x20] sm:$0xf]
        %v1466 = vld [vmem:[%s1456 + $0x24] sm:$0xf]
        %v1467 = vld [vmem:[%s1456 + $0x28] sm:$0xf]
        %v1468 = vld [vmem:[%s1456 + $0x2c] sm:$0xf]
        %v1469 = vld [vmem:[%s1456 + $0x30] sm:$0xf]
        %v1470 = vld [vmem:[%s1456 + $0x34] sm:$0xf]
        %v1471 = vld [vmem:[%s1456 + $0x38] sm:$0xf]
        %v1472 = vld [vmem:[%s1456 + $0x3c] sm:$0xf]
        %s1473 = scalar_lea.vmem [#allocation7], 64
        %v1474 = vld [vmem:[%s1473] sm:$0xf]
        %v1475 = vld [vmem:[%s1473 + $0x4] sm:$0xf]
        %v1476 = vld [vmem:[%s1473 + $0x8] sm:$0xf]
        %v1477 = vld [vmem:[%s1473 + $0xc] sm:$0xf]
        %v1478 = vld [vmem:[%s1473 + $0x10] sm:$0xf]
        %v1479 = vld [vmem:[%s1473 + $0x14] sm:$0xf]
        %v1480 = vld [vmem:[%s1473 + $0x18] sm:$0xf]
        %v1481 = vld [vmem:[%s1473 + $0x1c] sm:$0xf]
        %v1498 = vunpack.c.l.b16 %v1457
        %v1499 = vunpack.c.l.b16 %v1458
        %v1500 = vunpack.c.l.b16 %v1459
        %v1501 = vunpack.c.l.b16 %v1460
        %v1502 = vunpack.c.l.b16 %v1461
        %v1503 = vunpack.c.l.b16 %v1462
        %v1504 = vunpack.c.l.b16 %v1463
        %v1505 = vunpack.c.l.b16 %v1464
        %v1506 = vunpack.c.l.b16 %v1465
        %v1507 = vunpack.c.l.b16 %v1466
        %v1508 = vunpack.c.l.b16 %v1467
        %v1509 = vunpack.c.l.b16 %v1468
        %v1510 = vunpack.c.l.b16 %v1469
        %v1511 = vunpack.c.l.b16 %v1470
        %v1512 = vunpack.c.l.b16 %v1471
        %v1513 = vunpack.c.l.b16 %v1472
        %v1514 = vpack.c.b16 %v1499, %v1498
        %v1515 = vpack.c.b16 %v1501, %v1500
        %v1516 = vpack.c.b16 %v1503, %v1502
        %v1517 = vpack.c.b16 %v1505, %v1504
        %v1518 = vpack.c.b16 %v1507, %v1506
        %v1519 = vpack.c.b16 %v1509, %v1508
        %v1520 = vpack.c.b16 %v1511, %v1510
        %v1521 = vpack.c.b16 %v1513, %v1512
        %v1530 = vunpack.c.l.b16 %v1474
        %v1531 = vunpack.c.l.b16 %v1475
        %v1532 = vunpack.c.l.b16 %v1476
        %v1533 = vunpack.c.l.b16 %v1477
        %v1534 = vunpack.c.l.b16 %v1478
        %v1535 = vunpack.c.l.b16 %v1479
        %v1536 = vunpack.c.l.b16 %v1480
        %v1537 = vunpack.c.l.b16 %v1481
        %v1538 = vpack.c.b16 %v1531, %v1530
        %v1539 = vpack.c.b16 %v1533, %v1532
        %v1540 = vpack.c.b16 %v1535, %v1534
        %v1541 = vpack.c.b16 %v1537, %v1536
        %v1547 = vsel %vm1147, %v1514, 0
        %v1550 = vsel %vm1147, %v1515, 0
        %v1553 = vsel %vm1147, %v1516, 0
        %v1556 = vsel %vm1147, %v1517, 0
        %v1559 = vsel %vm1147, %v1518, 0
        %v1562 = vsel %vm1147, %v1519, 0
        %v1565 = vsel %vm1147, %v1520, 0
        %v1568 = vsel %vm1147, %v1521, 0
        %1570 = vmatprep.subr.bf16.mxu0 0
        %1571 = vmatpush1.bf16.msra.mxu0 0
        %1572 = vmatprep.subr.bf16.mxu0 0
        %1573 = vmatpush1.bf16.msra.mxu0 0
        %1574 = vmatprep.subr.bf16.mxu0 0
        %1575 = vmatpush1.bf16.msra.mxu0 0
        %1576 = vmatprep.subr.bf16.mxu0 0
        %1577 = vmatpush1.bf16.msra.mxu0 0
        %1578 = vmatprep.subr.bf16.mxu0 0
        %1579 = vmatpush1.bf16.msra.mxu0 %v1541
        %1580 = vmatprep.subr.bf16.mxu0 0
        %1581 = vmatpush1.bf16.msra.mxu0 %v1540
        %1582 = vmatprep.subr.bf16.mxu0 0
        %1583 = vmatpush1.bf16.msra.mxu0 %v1539
        %1584 = vmatprep.subr.bf16.mxu0 0
        %1585 = vmatpush1.bf16.msra.mxu0 %v1538
        %1586 = vmatprep.subr.bf16.mxu0 0
        %1587 = vmatpush2.bf16.msra.mxu0 0
        %1588 = vmatprep.subr.bf16.mxu0 0
        %1589 = vmatpush2.bf16.msra.mxu0 0
        %1590 = vmatprep.subr.bf16.mxu0 0
        %1591 = vmatpush2.bf16.msra.mxu0 0
        %1592 = vmatprep.subr.bf16.mxu0 0
        %1593 = vmatpush2.bf16.msra.mxu0 0
        %1594 = vmatprep.subr.bf16.mxu0 0
        %1595 = vmatpush2.bf16.msra.mxu0 0
        %1596 = vmatprep.subr.bf16.mxu0 0
        %1597 = vmatpush2.bf16.msra.mxu0 0
        %1598 = vmatprep.subr.bf16.mxu0 0
        %1599 = vmatpush2.bf16.msra.mxu0 0
        %1600 = vmatprep.subr.bf16.mxu0 0
        %1601 = vmatpush2.bf16.msra.mxu0 0
        %1602 = vmatprep.mubr.bf16.mxu0 0
        %1603 = vmatmul.mubr.bf16.gmra.mxu0 %v1547
        %v1604 = vpop.f32.mrf.mxu0
        %v1605 = vadd.f32 0.0, %v1604
        %v1606 = vpop.f32.mrf.mxu0
        %v1607 = vpop.f32.mrf.mxu0
        %v1608 = vadd.f32 0.0, %v1607
        %v1609 = vpop.f32.mrf.mxu0
        %1610 = vmatprep.mubr.bf16.mxu0 0
        %1611 = vmatmul.mubr.bf16.gmra.mxu0 %v1550
        %v1612 = vpop.f32.mrf.mxu0
        %v1613 = vadd.f32 0.0, %v1612
        %v1614 = vpop.f32.mrf.mxu0
        %v1615 = vpop.f32.mrf.mxu0
        %v1616 = vadd.f32 0.0, %v1615
        %v1617 = vpop.f32.mrf.mxu0
        %1618 = vmatprep.mubr.bf16.mxu0 0
        %1619 = vmatmul.mubr.bf16.gmra.mxu0 %v1553
        %v1620 = vpop.f32.mrf.mxu0
        %v1621 = vadd.f32 0.0, %v1620
        %v1622 = vpop.f32.mrf.mxu0
        %v1623 = vpop.f32.mrf.mxu0
        %v1624 = vadd.f32 0.0, %v1623
        %v1625 = vpop.f32.mrf.mxu0
        %1626 = vmatprep.mubr.bf16.mxu0 0
        %1627 = vmatmul.mubr.bf16.gmra.mxu0 %v1556
        %v1628 = vpop.f32.mrf.mxu0
        %v1629 = vadd.f32 0.0, %v1628
        %v1630 = vpop.f32.mrf.mxu0
        %v1631 = vpop.f32.mrf.mxu0
        %v1632 = vadd.f32 0.0, %v1631
        %v1633 = vpop.f32.mrf.mxu0
        %1634 = vmatprep.mubr.bf16.mxu0 0
        %1635 = vmatmul.mubr.bf16.gmra.mxu0 %v1559
        %v1636 = vpop.f32.mrf.mxu0
        %v1637 = vadd.f32 0.0, %v1636
        %v1638 = vpop.f32.mrf.mxu0
        %v1639 = vpop.f32.mrf.mxu0
        %v1640 = vadd.f32 0.0, %v1639
        %v1641 = vpop.f32.mrf.mxu0
        %1642 = vmatprep.mubr.bf16.mxu0 0
        %1643 = vmatmul.mubr.bf16.gmra.mxu0 %v1562
        %v1644 = vpop.f32.mrf.mxu0
        %v1645 = vadd.f32 0.0, %v1644
        %v1646 = vpop.f32.mrf.mxu0
        %v1647 = vpop.f32.mrf.mxu0
        %v1648 = vadd.f32 0.0, %v1647
        %v1649 = vpop.f32.mrf.mxu0
        %1650 = vmatprep.mubr.bf16.mxu0 0
        %1651 = vmatmul.mubr.bf16.gmra.mxu0 %v1565
        %v1652 = vpop.f32.mrf.mxu0
        %v1653 = vadd.f32 0.0, %v1652
        %v1654 = vpop.f32.mrf.mxu0
        %v1655 = vpop.f32.mrf.mxu0
        %v1656 = vadd.f32 0.0, %v1655
        %v1657 = vpop.f32.mrf.mxu0
        %1658 = vmatprep.mubr.bf16.mxu0 0
        %1659 = vmatmul.mubr.bf16.gmra.mxu0 %v1568
        %v1660 = vpop.f32.mrf.mxu0
        %v1661 = vadd.f32 0.0, %v1660
        %v1662 = vpop.f32.mrf.mxu0
        %v1663 = vpop.f32.mrf.mxu0
        %v1664 = vadd.f32 0.0, %v1663
        %v1665 = vpop.f32.mrf.mxu0
        %1666 = vdwg.mxu0
        %v1667 = vadd.f32 %v1392, %v1605
        %v1668 = vadd.f32 %v1395, %v1608
        %v1669 = vadd.f32 %v1400, %v1613
        %v1670 = vadd.f32 %v1403, %v1616
        %v1671 = vadd.f32 %v1408, %v1621
        %v1672 = vadd.f32 %v1411, %v1624
        %v1673 = vadd.f32 %v1416, %v1629
        %v1674 = vadd.f32 %v1419, %v1632
        %v1675 = vadd.f32 %v1424, %v1637
        %v1676 = vadd.f32 %v1427, %v1640
        %v1677 = vadd.f32 %v1432, %v1645
        %v1678 = vadd.f32 %v1435, %v1648
        %v1679 = vadd.f32 %v1440, %v1653
        %v1680 = vadd.f32 %v1443, %v1656
        %v1681 = vadd.f32 %v1448, %v1661
        %v1682 = vadd.f32 %v1451, %v1664
        %v1683 = vld [vmem:[%s580] sm:$0xf]
        %v1684 = vld [vmem:[%s580 + $0x4] sm:$0xf]
        %v1685 = vld [vmem:[%s580 + $0x8] sm:$0xf]
        %v1686 = vld [vmem:[%s580 + $0xc] sm:$0xf]
        %v1687 = vld [vmem:[%s580 + $0x10] sm:$0xf]
        %v1688 = vld [vmem:[%s580 + $0x14] sm:$0xf]
        %v1689 = vld [vmem:[%s580 + $0x18] sm:$0xf]
        %v1690 = vld [vmem:[%s580 + $0x1c] sm:$0xf]
        %v1691 = vld [vmem:[%s580 + $0x20] sm:$0xf]
        %v1692 = vld [vmem:[%s580 + $0x24] sm:$0xf]
        %v1693 = vld [vmem:[%s580 + $0x28] sm:$0xf]
        %v1694 = vld [vmem:[%s580 + $0x2c] sm:$0xf]
        %v1695 = vld [vmem:[%s580 + $0x30] sm:$0xf]
        %v1696 = vld [vmem:[%s580 + $0x34] sm:$0xf]
        %v1697 = vld [vmem:[%s580 + $0x38] sm:$0xf]
        %v1698 = vld [vmem:[%s580 + $0x3c] sm:$0xf]
        %s1699 = scalar_lea.vmem [#allocation7], 96
        %v1700 = vld [vmem:[%s1699] sm:$0xf]
        %v1701 = vld [vmem:[%s1699 + $0x4] sm:$0xf]
        %v1702 = vld [vmem:[%s1699 + $0x8] sm:$0xf]
        %v1703 = vld [vmem:[%s1699 + $0xc] sm:$0xf]
        %v1704 = vld [vmem:[%s1699 + $0x10] sm:$0xf]
        %v1705 = vld [vmem:[%s1699 + $0x14] sm:$0xf]
        %v1706 = vld [vmem:[%s1699 + $0x18] sm:$0xf]
        %v1707 = vld [vmem:[%s1699 + $0x1c] sm:$0xf]
        %v1724 = vunpack.c.l.b16 %v1683
        %v1725 = vunpack.c.l.b16 %v1684
        %v1726 = vunpack.c.l.b16 %v1685
        %v1727 = vunpack.c.l.b16 %v1686
        %v1728 = vunpack.c.l.b16 %v1687
        %v1729 = vunpack.c.l.b16 %v1688
        %v1730 = vunpack.c.l.b16 %v1689
        %v1731 = vunpack.c.l.b16 %v1690
        %v1732 = vunpack.c.l.b16 %v1691
        %v1733 = vunpack.c.l.b16 %v1692
        %v1734 = vunpack.c.l.b16 %v1693
        %v1735 = vunpack.c.l.b16 %v1694
        %v1736 = vunpack.c.l.b16 %v1695
        %v1737 = vunpack.c.l.b16 %v1696
        %v1738 = vunpack.c.l.b16 %v1697
        %v1739 = vunpack.c.l.b16 %v1698
        %v1740 = vpack.c.b16 %v1725, %v1724
        %v1741 = vpack.c.b16 %v1727, %v1726
        %v1742 = vpack.c.b16 %v1729, %v1728
        %v1743 = vpack.c.b16 %v1731, %v1730
        %v1744 = vpack.c.b16 %v1733, %v1732
        %v1745 = vpack.c.b16 %v1735, %v1734
        %v1746 = vpack.c.b16 %v1737, %v1736
        %v1747 = vpack.c.b16 %v1739, %v1738
        %v1756 = vunpack.c.l.b16 %v1700
        %v1757 = vunpack.c.l.b16 %v1701
        %v1758 = vunpack.c.l.b16 %v1702
        %v1759 = vunpack.c.l.b16 %v1703
        %v1760 = vunpack.c.l.b16 %v1704
        %v1761 = vunpack.c.l.b16 %v1705
        %v1762 = vunpack.c.l.b16 %v1706
        %v1763 = vunpack.c.l.b16 %v1707
        %v1764 = vpack.c.b16 %v1757, %v1756
        %v1765 = vpack.c.b16 %v1759, %v1758
        %v1766 = vpack.c.b16 %v1761, %v1760
        %v1767 = vpack.c.b16 %v1763, %v1762
        %v1773 = vsel %vm1147, %v1740, 0
        %v1776 = vsel %vm1147, %v1741, 0
        %v1779 = vsel %vm1147, %v1742, 0
        %v1782 = vsel %vm1147, %v1743, 0
        %v1785 = vsel %vm1147, %v1744, 0
        %v1788 = vsel %vm1147, %v1745, 0
        %v1791 = vsel %vm1147, %v1746, 0
        %v1794 = vsel %vm1147, %v1747, 0
        %1796 = vmatprep.subr.bf16.mxu0 0
        %1797 = vmatpush1.bf16.msra.mxu0 0
        %1798 = vmatprep.subr.bf16.mxu0 0
        %1799 = vmatpush1.bf16.msra.mxu0 0
        %1800 = vmatprep.subr.bf16.mxu0 0
        %1801 = vmatpush1.bf16.msra.mxu0 0
        %1802 = vmatprep.subr.bf16.mxu0 0
        %1803 = vmatpush1.bf16.msra.mxu0 0
        %1804 = vmatprep.subr.bf16.mxu0 0
        %1805 = vmatpush1.bf16.msra.mxu0 %v1767
        %1806 = vmatprep.subr.bf16.mxu0 0
        %1807 = vmatpush1.bf16.msra.mxu0 %v1766
        %1808 = vmatprep.subr.bf16.mxu0 0
        %1809 = vmatpush1.bf16.msra.mxu0 %v1765
        %1810 = vmatprep.subr.bf16.mxu0 0
        %1811 = vmatpush1.bf16.msra.mxu0 %v1764
        %1812 = vmatprep.subr.bf16.mxu0 0
        %1813 = vmatpush2.bf16.msra.mxu0 0
        %1814 = vmatprep.subr.bf16.mxu0 0
        %1815 = vmatpush2.bf16.msra.mxu0 0
        %1816 = vmatprep.subr.bf16.mxu0 0
        %1817 = vmatpush2.bf16.msra.mxu0 0
        %1818 = vmatprep.subr.bf16.mxu0 0
        %1819 = vmatpush2.bf16.msra.mxu0 0
        %1820 = vmatprep.subr.bf16.mxu0 0
        %1821 = vmatpush2.bf16.msra.mxu0 0
        %1822 = vmatprep.subr.bf16.mxu0 0
        %1823 = vmatpush2.bf16.msra.mxu0 0
        %1824 = vmatprep.subr.bf16.mxu0 0
        %1825 = vmatpush2.bf16.msra.mxu0 0
        %1826 = vmatprep.subr.bf16.mxu0 0
        %1827 = vmatpush2.bf16.msra.mxu0 0
        %1828 = vmatprep.mubr.bf16.mxu0 0
        %1829 = vmatmul.mubr.bf16.gmra.mxu0 %v1773
        %v1830 = vpop.f32.mrf.mxu0
        %v1831 = vadd.f32 0.0, %v1830
        %v1832 = vpop.f32.mrf.mxu0
        %v1833 = vpop.f32.mrf.mxu0
        %v1834 = vadd.f32 0.0, %v1833
        %v1835 = vpop.f32.mrf.mxu0
        %1836 = vmatprep.mubr.bf16.mxu0 0
        %1837 = vmatmul.mubr.bf16.gmra.mxu0 %v1776
        %v1838 = vpop.f32.mrf.mxu0
        %v1839 = vadd.f32 0.0, %v1838
        %v1840 = vpop.f32.mrf.mxu0
        %v1841 = vpop.f32.mrf.mxu0
        %v1842 = vadd.f32 0.0, %v1841
        %v1843 = vpop.f32.mrf.mxu0
        %1844 = vmatprep.mubr.bf16.mxu0 0
        %1845 = vmatmul.mubr.bf16.gmra.mxu0 %v1779
        %v1846 = vpop.f32.mrf.mxu0
        %v1847 = vadd.f32 0.0, %v1846
        %v1848 = vpop.f32.mrf.mxu0
        %v1849 = vpop.f32.mrf.mxu0
        %v1850 = vadd.f32 0.0, %v1849
        %v1851 = vpop.f32.mrf.mxu0
        %1852 = vmatprep.mubr.bf16.mxu0 0
        %1853 = vmatmul.mubr.bf16.gmra.mxu0 %v1782
        %v1854 = vpop.f32.mrf.mxu0
        %v1855 = vadd.f32 0.0, %v1854
        %v1856 = vpop.f32.mrf.mxu0
        %v1857 = vpop.f32.mrf.mxu0
        %v1858 = vadd.f32 0.0, %v1857
        %v1859 = vpop.f32.mrf.mxu0
        %1860 = vmatprep.mubr.bf16.mxu0 0
        %1861 = vmatmul.mubr.bf16.gmra.mxu0 %v1785
        %v1862 = vpop.f32.mrf.mxu0
        %v1863 = vadd.f32 0.0, %v1862
        %v1864 = vpop.f32.mrf.mxu0
        %v1865 = vpop.f32.mrf.mxu0
        %v1866 = vadd.f32 0.0, %v1865
        %v1867 = vpop.f32.mrf.mxu0
        %1868 = vmatprep.mubr.bf16.mxu0 0
        %1869 = vmatmul.mubr.bf16.gmra.mxu0 %v1788
        %v1870 = vpop.f32.mrf.mxu0
        %v1871 = vadd.f32 0.0, %v1870
        %v1872 = vpop.f32.mrf.mxu0
        %v1873 = vpop.f32.mrf.mxu0
        %v1874 = vadd.f32 0.0, %v1873
        %v1875 = vpop.f32.mrf.mxu0
        %1876 = vmatprep.mubr.bf16.mxu0 0
        %1877 = vmatmul.mubr.bf16.gmra.mxu0 %v1791
        %v1878 = vpop.f32.mrf.mxu0
        %v1879 = vadd.f32 0.0, %v1878
        %v1880 = vpop.f32.mrf.mxu0
        %v1881 = vpop.f32.mrf.mxu0
        %v1882 = vadd.f32 0.0, %v1881
        %v1883 = vpop.f32.mrf.mxu0
        %1884 = vmatprep.mubr.bf16.mxu0 0
        %1885 = vmatmul.mubr.bf16.gmra.mxu0 %v1794
        %v1886 = vpop.f32.mrf.mxu0
        %v1887 = vadd.f32 0.0, %v1886
        %v1888 = vpop.f32.mrf.mxu0
        %v1889 = vpop.f32.mrf.mxu0
        %v1890 = vadd.f32 0.0, %v1889
        %v1891 = vpop.f32.mrf.mxu0
        %1892 = vdwg.mxu0
        %v1893 = vadd.f32 %v1667, %v1831
        %v1894 = vadd.f32 %v1668, %v1834
        %v1895 = vadd.f32 %v1669, %v1839
        %v1896 = vadd.f32 %v1670, %v1842
        %v1897 = vadd.f32 %v1671, %v1847
        %v1898 = vadd.f32 %v1672, %v1850
        %v1899 = vadd.f32 %v1673, %v1855
        %v1900 = vadd.f32 %v1674, %v1858
        %v1901 = vadd.f32 %v1675, %v1863
        %v1902 = vadd.f32 %v1676, %v1866
        %v1903 = vadd.f32 %v1677, %v1871
        %v1904 = vadd.f32 %v1678, %v1874
        %v1905 = vadd.f32 %v1679, %v1879
        %v1906 = vadd.f32 %v1680, %v1882
        %v1907 = vadd.f32 %v1681, %v1887
        %v1908 = vadd.f32 %v1682, %v1890
        %v1909 = vld [vmem:[%s506] sm:$0xf]
        %v1910 = vld [vmem:[%s506 + $0x4] sm:$0xf]
        %v1911 = vld [vmem:[%s506 + $0x8] sm:$0xf]
        %v1912 = vld [vmem:[%s506 + $0xc] sm:$0xf]
        %v1913 = vld [vmem:[%s506 + $0x10] sm:$0xf]
        %v1914 = vld [vmem:[%s506 + $0x14] sm:$0xf]
        %v1915 = vld [vmem:[%s506 + $0x18] sm:$0xf]
        %v1916 = vld [vmem:[%s506 + $0x1c] sm:$0xf]
        %v1917 = vld [vmem:[%s506 + $0x20] sm:$0xf]
        %v1918 = vld [vmem:[%s506 + $0x24] sm:$0xf]
        %v1919 = vld [vmem:[%s506 + $0x28] sm:$0xf]
        %v1920 = vld [vmem:[%s506 + $0x2c] sm:$0xf]
        %v1921 = vld [vmem:[%s506 + $0x30] sm:$0xf]
        %v1922 = vld [vmem:[%s506 + $0x34] sm:$0xf]
        %v1923 = vld [vmem:[%s506 + $0x38] sm:$0xf]
        %v1924 = vld [vmem:[%s506 + $0x3c] sm:$0xf]
        %s1925 = scalar_lea.vmem [#allocation7], 128
        %v1926 = vld [vmem:[%s1925] sm:$0xf]
        %v1927 = vld [vmem:[%s1925 + $0x4] sm:$0xf]
        %v1928 = vld [vmem:[%s1925 + $0x8] sm:$0xf]
        %v1929 = vld [vmem:[%s1925 + $0xc] sm:$0xf]
        %v1930 = vld [vmem:[%s1925 + $0x10] sm:$0xf]
        %v1931 = vld [vmem:[%s1925 + $0x14] sm:$0xf]
        %v1932 = vld [vmem:[%s1925 + $0x18] sm:$0xf]
        %v1933 = vld [vmem:[%s1925 + $0x1c] sm:$0xf]
        %v1950 = vunpack.c.l.b16 %v1909
        %v1951 = vunpack.c.l.b16 %v1910
        %v1952 = vunpack.c.l.b16 %v1911
        %v1953 = vunpack.c.l.b16 %v1912
        %v1954 = vunpack.c.l.b16 %v1913
        %v1955 = vunpack.c.l.b16 %v1914
        %v1956 = vunpack.c.l.b16 %v1915
        %v1957 = vunpack.c.l.b16 %v1916
        %v1958 = vunpack.c.l.b16 %v1917
        %v1959 = vunpack.c.l.b16 %v1918
        %v1960 = vunpack.c.l.b16 %v1919
        %v1961 = vunpack.c.l.b16 %v1920
        %v1962 = vunpack.c.l.b16 %v1921
        %v1963 = vunpack.c.l.b16 %v1922
        %v1964 = vunpack.c.l.b16 %v1923
        %v1965 = vunpack.c.l.b16 %v1924
        %v1966 = vpack.c.b16 %v1951, %v1950
        %v1967 = vpack.c.b16 %v1953, %v1952
        %v1968 = vpack.c.b16 %v1955, %v1954
        %v1969 = vpack.c.b16 %v1957, %v1956
        %v1970 = vpack.c.b16 %v1959, %v1958
        %v1971 = vpack.c.b16 %v1961, %v1960
        %v1972 = vpack.c.b16 %v1963, %v1962
        %v1973 = vpack.c.b16 %v1965, %v1964
        %v1982 = vunpack.c.l.b16 %v1926
        %v1983 = vunpack.c.l.b16 %v1927
        %v1984 = vunpack.c.l.b16 %v1928
        %v1985 = vunpack.c.l.b16 %v1929
        %v1986 = vunpack.c.l.b16 %v1930
        %v1987 = vunpack.c.l.b16 %v1931
        %v1988 = vunpack.c.l.b16 %v1932
        %v1989 = vunpack.c.l.b16 %v1933
        %v1990 = vpack.c.b16 %v1983, %v1982
        %v1991 = vpack.c.b16 %v1985, %v1984
        %v1992 = vpack.c.b16 %v1987, %v1986
        %v1993 = vpack.c.b16 %v1989, %v1988
        %v1999 = vsel %vm1147, %v1966, 0
        %v2002 = vsel %vm1147, %v1967, 0
        %v2005 = vsel %vm1147, %v1968, 0
        %v2008 = vsel %vm1147, %v1969, 0
        %v2011 = vsel %vm1147, %v1970, 0
        %v2014 = vsel %vm1147, %v1971, 0
        %v2017 = vsel %vm1147, %v1972, 0
        %v2020 = vsel %vm1147, %v1973, 0
        %2022 = vmatprep.subr.bf16.mxu0 0
        %2023 = vmatpush1.bf16.msra.mxu0 0
        %2024 = vmatprep.subr.bf16.mxu0 0
        %2025 = vmatpush1.bf16.msra.mxu0 0
        %2026 = vmatprep.subr.bf16.mxu0 0
        %2027 = vmatpush1.bf16.msra.mxu0 0
        %2028 = vmatprep.subr.bf16.mxu0 0
        %2029 = vmatpush1.bf16.msra.mxu0 0
        %2030 = vmatprep.subr.bf16.mxu0 0
        %2031 = vmatpush1.bf16.msra.mxu0 %v1993
        %2032 = vmatprep.subr.bf16.mxu0 0
        %2033 = vmatpush1.bf16.msra.mxu0 %v1992
        %2034 = vmatprep.subr.bf16.mxu0 0
        %2035 = vmatpush1.bf16.msra.mxu0 %v1991
        %2036 = vmatprep.subr.bf16.mxu0 0
        %2037 = vmatpush1.bf16.msra.mxu0 %v1990
        %2038 = vmatprep.subr.bf16.mxu0 0
        %2039 = vmatpush2.bf16.msra.mxu0 0
        %2040 = vmatprep.subr.bf16.mxu0 0
        %2041 = vmatpush2.bf16.msra.mxu0 0
        %2042 = vmatprep.subr.bf16.mxu0 0
        %2043 = vmatpush2.bf16.msra.mxu0 0
        %2044 = vmatprep.subr.bf16.mxu0 0
        %2045 = vmatpush2.bf16.msra.mxu0 0
        %2046 = vmatprep.subr.bf16.mxu0 0
        %2047 = vmatpush2.bf16.msra.mxu0 0
        %2048 = vmatprep.subr.bf16.mxu0 0
        %2049 = vmatpush2.bf16.msra.mxu0 0
        %2050 = vmatprep.subr.bf16.mxu0 0
        %2051 = vmatpush2.bf16.msra.mxu0 0
        %2052 = vmatprep.subr.bf16.mxu0 0
        %2053 = vmatpush2.bf16.msra.mxu0 0
        %2054 = vmatprep.mubr.bf16.mxu0 0
        %2055 = vmatmul.mubr.bf16.gmra.mxu0 %v1999
        %v2056 = vpop.f32.mrf.mxu0
        %v2057 = vadd.f32 0.0, %v2056
        %v2058 = vpop.f32.mrf.mxu0
        %v2059 = vpop.f32.mrf.mxu0
        %v2060 = vadd.f32 0.0, %v2059
        %v2061 = vpop.f32.mrf.mxu0
        %2062 = vmatprep.mubr.bf16.mxu0 0
        %2063 = vmatmul.mubr.bf16.gmra.mxu0 %v2002
        %v2064 = vpop.f32.mrf.mxu0
        %v2065 = vadd.f32 0.0, %v2064
        %v2066 = vpop.f32.mrf.mxu0
        %v2067 = vpop.f32.mrf.mxu0
        %v2068 = vadd.f32 0.0, %v2067
        %v2069 = vpop.f32.mrf.mxu0
        %2070 = vmatprep.mubr.bf16.mxu0 0
        %2071 = vmatmul.mubr.bf16.gmra.mxu0 %v2005
        %v2072 = vpop.f32.mrf.mxu0
        %v2073 = vadd.f32 0.0, %v2072
        %v2074 = vpop.f32.mrf.mxu0
        %v2075 = vpop.f32.mrf.mxu0
        %v2076 = vadd.f32 0.0, %v2075
        %v2077 = vpop.f32.mrf.mxu0
        %2078 = vmatprep.mubr.bf16.mxu0 0
        %2079 = vmatmul.mubr.bf16.gmra.mxu0 %v2008
        %v2080 = vpop.f32.mrf.mxu0
        %v2081 = vadd.f32 0.0, %v2080
        %v2082 = vpop.f32.mrf.mxu0
        %v2083 = vpop.f32.mrf.mxu0
        %v2084 = vadd.f32 0.0, %v2083
        %v2085 = vpop.f32.mrf.mxu0
        %2086 = vmatprep.mubr.bf16.mxu0 0
        %2087 = vmatmul.mubr.bf16.gmra.mxu0 %v2011
        %v2088 = vpop.f32.mrf.mxu0
        %v2089 = vadd.f32 0.0, %v2088
        %v2090 = vpop.f32.mrf.mxu0
        %v2091 = vpop.f32.mrf.mxu0
        %v2092 = vadd.f32 0.0, %v2091
        %v2093 = vpop.f32.mrf.mxu0
        %2094 = vmatprep.mubr.bf16.mxu0 0
        %2095 = vmatmul.mubr.bf16.gmra.mxu0 %v2014
        %v2096 = vpop.f32.mrf.mxu0
        %v2097 = vadd.f32 0.0, %v2096
        %v2098 = vpop.f32.mrf.mxu0
        %v2099 = vpop.f32.mrf.mxu0
        %v2100 = vadd.f32 0.0, %v2099
        %v2101 = vpop.f32.mrf.mxu0
        %2102 = vmatprep.mubr.bf16.mxu0 0
        %2103 = vmatmul.mubr.bf16.gmra.mxu0 %v2017
        %v2104 = vpop.f32.mrf.mxu0
        %v2105 = vadd.f32 0.0, %v2104
        %v2106 = vpop.f32.mrf.mxu0
        %v2107 = vpop.f32.mrf.mxu0
        %v2108 = vadd.f32 0.0, %v2107
        %v2109 = vpop.f32.mrf.mxu0
        %2110 = vmatprep.mubr.bf16.mxu0 0
        %2111 = vmatmul.mubr.bf16.gmra.mxu0 %v2020
        %v2112 = vpop.f32.mrf.mxu0
        %v2113 = vadd.f32 0.0, %v2112
        %v2114 = vpop.f32.mrf.mxu0
        %v2115 = vpop.f32.mrf.mxu0
        %v2116 = vadd.f32 0.0, %v2115
        %v2117 = vpop.f32.mrf.mxu0
        %2118 = vdwg.mxu0
        %v2119 = vadd.f32 %v1893, %v2057
        %v2120 = vadd.f32 %v1894, %v2060
        %v2121 = vadd.f32 %v1895, %v2065
        %v2122 = vadd.f32 %v1896, %v2068
        %v2123 = vadd.f32 %v1897, %v2073
        %v2124 = vadd.f32 %v1898, %v2076
        %v2125 = vadd.f32 %v1899, %v2081
        %v2126 = vadd.f32 %v1900, %v2084
        %v2127 = vadd.f32 %v1901, %v2089
        %v2128 = vadd.f32 %v1902, %v2092
        %v2129 = vadd.f32 %v1903, %v2097
        %v2130 = vadd.f32 %v1904, %v2100
        %v2131 = vadd.f32 %v1905, %v2105
        %v2132 = vadd.f32 %v1906, %v2108
        %v2133 = vadd.f32 %v1907, %v2113
        %v2134 = vadd.f32 %v1908, %v2116
        %v2135 = vld [vmem:[%s655] sm:$0xf]
        %v2136 = vld [vmem:[%s655 + $0x4] sm:$0xf]
        %v2137 = vld [vmem:[%s655 + $0x8] sm:$0xf]
        %v2138 = vld [vmem:[%s655 + $0xc] sm:$0xf]
        %v2139 = vld [vmem:[%s655 + $0x10] sm:$0xf]
        %v2140 = vld [vmem:[%s655 + $0x14] sm:$0xf]
        %v2141 = vld [vmem:[%s655 + $0x18] sm:$0xf]
        %v2142 = vld [vmem:[%s655 + $0x1c] sm:$0xf]
        %v2143 = vld [vmem:[%s655 + $0x20] sm:$0xf]
        %v2144 = vld [vmem:[%s655 + $0x24] sm:$0xf]
        %v2145 = vld [vmem:[%s655 + $0x28] sm:$0xf]
        %v2146 = vld [vmem:[%s655 + $0x2c] sm:$0xf]
        %v2147 = vld [vmem:[%s655 + $0x30] sm:$0xf]
        %v2148 = vld [vmem:[%s655 + $0x34] sm:$0xf]
        %v2149 = vld [vmem:[%s655 + $0x38] sm:$0xf]
        %v2150 = vld [vmem:[%s655 + $0x3c] sm:$0xf]
        %s2151 = scalar_lea.vmem [#allocation7], 160
        %v2152 = vld [vmem:[%s2151] sm:$0xf]
        %v2153 = vld [vmem:[%s2151 + $0x4] sm:$0xf]
        %v2154 = vld [vmem:[%s2151 + $0x8] sm:$0xf]
        %v2155 = vld [vmem:[%s2151 + $0xc] sm:$0xf]
        %v2156 = vld [vmem:[%s2151 + $0x10] sm:$0xf]
        %v2157 = vld [vmem:[%s2151 + $0x14] sm:$0xf]
        %v2158 = vld [vmem:[%s2151 + $0x18] sm:$0xf]
        %v2159 = vld [vmem:[%s2151 + $0x1c] sm:$0xf]
        %v2176 = vunpack.c.l.b16 %v2135
        %v2177 = vunpack.c.l.b16 %v2136
        %v2178 = vunpack.c.l.b16 %v2137
        %v2179 = vunpack.c.l.b16 %v2138
        %v2180 = vunpack.c.l.b16 %v2139
        %v2181 = vunpack.c.l.b16 %v2140
        %v2182 = vunpack.c.l.b16 %v2141
        %v2183 = vunpack.c.l.b16 %v2142
        %v2184 = vunpack.c.l.b16 %v2143
        %v2185 = vunpack.c.l.b16 %v2144
        %v2186 = vunpack.c.l.b16 %v2145
        %v2187 = vunpack.c.l.b16 %v2146
        %v2188 = vunpack.c.l.b16 %v2147
        %v2189 = vunpack.c.l.b16 %v2148
        %v2190 = vunpack.c.l.b16 %v2149
        %v2191 = vunpack.c.l.b16 %v2150
        %v2192 = vpack.c.b16 %v2177, %v2176
        %v2193 = vpack.c.b16 %v2179, %v2178
        %v2194 = vpack.c.b16 %v2181, %v2180
        %v2195 = vpack.c.b16 %v2183, %v2182
        %v2196 = vpack.c.b16 %v2185, %v2184
        %v2197 = vpack.c.b16 %v2187, %v2186
        %v2198 = vpack.c.b16 %v2189, %v2188
        %v2199 = vpack.c.b16 %v2191, %v2190
        %v2208 = vunpack.c.l.b16 %v2152
        %v2209 = vunpack.c.l.b16 %v2153
        %v2210 = vunpack.c.l.b16 %v2154
        %v2211 = vunpack.c.l.b16 %v2155
        %v2212 = vunpack.c.l.b16 %v2156
        %v2213 = vunpack.c.l.b16 %v2157
        %v2214 = vunpack.c.l.b16 %v2158
        %v2215 = vunpack.c.l.b16 %v2159
        %v2216 = vpack.c.b16 %v2209, %v2208
        %v2217 = vpack.c.b16 %v2211, %v2210
        %v2218 = vpack.c.b16 %v2213, %v2212
        %v2219 = vpack.c.b16 %v2215, %v2214
        %v2225 = vsel %vm1147, %v2192, 0
        %v2228 = vsel %vm1147, %v2193, 0
        %v2231 = vsel %vm1147, %v2194, 0
        %v2234 = vsel %vm1147, %v2195, 0
        %v2237 = vsel %vm1147, %v2196, 0
        %v2240 = vsel %vm1147, %v2197, 0
        %v2243 = vsel %vm1147, %v2198, 0
        %v2246 = vsel %vm1147, %v2199, 0
        %2248 = vmatprep.subr.bf16.mxu0 0
        %2249 = vmatpush1.bf16.msra.mxu0 0
        %2250 = vmatprep.subr.bf16.mxu0 0
        %2251 = vmatpush1.bf16.msra.mxu0 0
        %2252 = vmatprep.subr.bf16.mxu0 0
        %2253 = vmatpush1.bf16.msra.mxu0 0
        %2254 = vmatprep.subr.bf16.mxu0 0
        %2255 = vmatpush1.bf16.msra.mxu0 0
        %2256 = vmatprep.subr.bf16.mxu0 0
        %2257 = vmatpush1.bf16.msra.mxu0 %v2219
        %2258 = vmatprep.subr.bf16.mxu0 0
        %2259 = vmatpush1.bf16.msra.mxu0 %v2218
        %2260 = vmatprep.subr.bf16.mxu0 0
        %2261 = vmatpush1.bf16.msra.mxu0 %v2217
        %2262 = vmatprep.subr.bf16.mxu0 0
        %2263 = vmatpush1.bf16.msra.mxu0 %v2216
        %2264 = vmatprep.subr.bf16.mxu0 0
        %2265 = vmatpush2.bf16.msra.mxu0 0
        %2266 = vmatprep.subr.bf16.mxu0 0
        %2267 = vmatpush2.bf16.msra.mxu0 0
        %2268 = vmatprep.subr.bf16.mxu0 0
        %2269 = vmatpush2.bf16.msra.mxu0 0
        %2270 = vmatprep.subr.bf16.mxu0 0
        %2271 = vmatpush2.bf16.msra.mxu0 0
        %2272 = vmatprep.subr.bf16.mxu0 0
        %2273 = vmatpush2.bf16.msra.mxu0 0
        %2274 = vmatprep.subr.bf16.mxu0 0
        %2275 = vmatpush2.bf16.msra.mxu0 0
        %2276 = vmatprep.subr.bf16.mxu0 0
        %2277 = vmatpush2.bf16.msra.mxu0 0
        %2278 = vmatprep.subr.bf16.mxu0 0
        %2279 = vmatpush2.bf16.msra.mxu0 0
        %2280 = vmatprep.mubr.bf16.mxu0 0
        %2281 = vmatmul.mubr.bf16.gmra.mxu0 %v2225
        %v2282 = vpop.f32.mrf.mxu0
        %v2283 = vadd.f32 0.0, %v2282
        %v2284 = vpop.f32.mrf.mxu0
        %v2285 = vpop.f32.mrf.mxu0
        %v2286 = vadd.f32 0.0, %v2285
        %v2287 = vpop.f32.mrf.mxu0
        %2288 = vmatprep.mubr.bf16.mxu0 0
        %2289 = vmatmul.mubr.bf16.gmra.mxu0 %v2228
        %v2290 = vpop.f32.mrf.mxu0
        %v2291 = vadd.f32 0.0, %v2290
        %v2292 = vpop.f32.mrf.mxu0
        %v2293 = vpop.f32.mrf.mxu0
        %v2294 = vadd.f32 0.0, %v2293
        %v2295 = vpop.f32.mrf.mxu0
        %2296 = vmatprep.mubr.bf16.mxu0 0
        %2297 = vmatmul.mubr.bf16.gmra.mxu0 %v2231
        %v2298 = vpop.f32.mrf.mxu0
        %v2299 = vadd.f32 0.0, %v2298
        %v2300 = vpop.f32.mrf.mxu0
        %v2301 = vpop.f32.mrf.mxu0
        %v2302 = vadd.f32 0.0, %v2301
        %v2303 = vpop.f32.mrf.mxu0
        %2304 = vmatprep.mubr.bf16.mxu0 0
        %2305 = vmatmul.mubr.bf16.gmra.mxu0 %v2234
        %v2306 = vpop.f32.mrf.mxu0
        %v2307 = vadd.f32 0.0, %v2306
        %v2308 = vpop.f32.mrf.mxu0
        %v2309 = vpop.f32.mrf.mxu0
        %v2310 = vadd.f32 0.0, %v2309
        %v2311 = vpop.f32.mrf.mxu0
        %2312 = vmatprep.mubr.bf16.mxu0 0
        %2313 = vmatmul.mubr.bf16.gmra.mxu0 %v2237
        %v2314 = vpop.f32.mrf.mxu0
        %v2315 = vadd.f32 0.0, %v2314
        %v2316 = vpop.f32.mrf.mxu0
        %v2317 = vpop.f32.mrf.mxu0
        %v2318 = vadd.f32 0.0, %v2317
        %v2319 = vpop.f32.mrf.mxu0
        %2320 = vmatprep.mubr.bf16.mxu0 0
        %2321 = vmatmul.mubr.bf16.gmra.mxu0 %v2240
        %v2322 = vpop.f32.mrf.mxu0
        %v2323 = vadd.f32 0.0, %v2322
        %v2324 = vpop.f32.mrf.mxu0
        %v2325 = vpop.f32.mrf.mxu0
        %v2326 = vadd.f32 0.0, %v2325
        %v2327 = vpop.f32.mrf.mxu0
        %2328 = vmatprep.mubr.bf16.mxu0 0
        %2329 = vmatmul.mubr.bf16.gmra.mxu0 %v2243
        %v2330 = vpop.f32.mrf.mxu0
        %v2331 = vadd.f32 0.0, %v2330
        %v2332 = vpop.f32.mrf.mxu0
        %v2333 = vpop.f32.mrf.mxu0
        %v2334 = vadd.f32 0.0, %v2333
        %v2335 = vpop.f32.mrf.mxu0
        %2336 = vmatprep.mubr.bf16.mxu0 0
        %2337 = vmatmul.mubr.bf16.gmra.mxu0 %v2246
        %v2338 = vpop.f32.mrf.mxu0
        %v2339 = vadd.f32 0.0, %v2338
        %v2340 = vpop.f32.mrf.mxu0
        %v2341 = vpop.f32.mrf.mxu0
        %v2342 = vadd.f32 0.0, %v2341
        %v2343 = vpop.f32.mrf.mxu0
        %2344 = vdwg.mxu0
        %v2345 = vadd.f32 %v2119, %v2283
        %v2346 = vadd.f32 %v2120, %v2286
        %v2347 = vadd.f32 %v2121, %v2291
        %v2348 = vadd.f32 %v2122, %v2294
        %v2349 = vadd.f32 %v2123, %v2299
        %v2350 = vadd.f32 %v2124, %v2302
        %v2351 = vadd.f32 %v2125, %v2307
        %v2352 = vadd.f32 %v2126, %v2310
        %v2353 = vadd.f32 %v2127, %v2315
        %v2354 = vadd.f32 %v2128, %v2318
        %v2355 = vadd.f32 %v2129, %v2323
        %v2356 = vadd.f32 %v2130, %v2326
        %v2357 = vadd.f32 %v2131, %v2331
        %v2358 = vadd.f32 %v2132, %v2334
        %v2359 = vadd.f32 %v2133, %v2339
        %v2360 = vadd.f32 %v2134, %v2342
        %s2361 = sadd.s32 0, 2
        %s2362 = smul.u32 %s2361, 2
        %s2363 = smul.addr %s2362, 4
        %s2364 = scalar_lea.vmem [#allocation2], %s2363
        %v2365 = vld [vmem:[%s2364] sm:$0xf]
        %v2366 = vld [vmem:[%s2364 + $0x4] sm:$0xf]
        %v2367 = vld [vmem:[%s2364 + $0x8] sm:$0xf]
        %v2368 = vld [vmem:[%s2364 + $0xc] sm:$0xf]
        %v2369 = vld [vmem:[%s2364 + $0x10] sm:$0xf]
        %v2370 = vld [vmem:[%s2364 + $0x14] sm:$0xf]
        %v2371 = vld [vmem:[%s2364 + $0x18] sm:$0xf]
        %v2372 = vld [vmem:[%s2364 + $0x1c] sm:$0xf]
        %v2373 = vld [vmem:[%s2364 + $0x20] sm:$0xf]
        %v2374 = vld [vmem:[%s2364 + $0x24] sm:$0xf]
        %v2375 = vld [vmem:[%s2364 + $0x28] sm:$0xf]
        %v2376 = vld [vmem:[%s2364 + $0x2c] sm:$0xf]
        %v2377 = vld [vmem:[%s2364 + $0x30] sm:$0xf]
        %v2378 = vld [vmem:[%s2364 + $0x34] sm:$0xf]
        %v2379 = vld [vmem:[%s2364 + $0x38] sm:$0xf]
        %v2380 = vld [vmem:[%s2364 + $0x3c] sm:$0xf]
        %s2381 = scalar_lea.vmem [#allocation7], 192
        %v2382 = vld [vmem:[%s2381] sm:$0xf]
        %v2383 = vld [vmem:[%s2381 + $0x4] sm:$0xf]
        %v2384 = vld [vmem:[%s2381 + $0x8] sm:$0xf]
        %v2385 = vld [vmem:[%s2381 + $0xc] sm:$0xf]
        %v2386 = vld [vmem:[%s2381 + $0x10] sm:$0xf]
        %v2387 = vld [vmem:[%s2381 + $0x14] sm:$0xf]
        %v2388 = vld [vmem:[%s2381 + $0x18] sm:$0xf]
        %v2389 = vld [vmem:[%s2381 + $0x1c] sm:$0xf]
        %v2406 = vunpack.c.l.b16 %v2365
        %v2407 = vunpack.c.l.b16 %v2366
        %v2408 = vunpack.c.l.b16 %v2367
        %v2409 = vunpack.c.l.b16 %v2368
        %v2410 = vunpack.c.l.b16 %v2369
        %v2411 = vunpack.c.l.b16 %v2370
        %v2412 = vunpack.c.l.b16 %v2371
        %v2413 = vunpack.c.l.b16 %v2372
        %v2414 = vunpack.c.l.b16 %v2373
        %v2415 = vunpack.c.l.b16 %v2374
        %v2416 = vunpack.c.l.b16 %v2375
        %v2417 = vunpack.c.l.b16 %v2376
        %v2418 = vunpack.c.l.b16 %v2377
        %v2419 = vunpack.c.l.b16 %v2378
        %v2420 = vunpack.c.l.b16 %v2379
        %v2421 = vunpack.c.l.b16 %v2380
        %v2422 = vpack.c.b16 %v2407, %v2406
        %v2423 = vpack.c.b16 %v2409, %v2408
        %v2424 = vpack.c.b16 %v2411, %v2410
        %v2425 = vpack.c.b16 %v2413, %v2412
        %v2426 = vpack.c.b16 %v2415, %v2414
        %v2427 = vpack.c.b16 %v2417, %v2416
        %v2428 = vpack.c.b16 %v2419, %v2418
        %v2429 = vpack.c.b16 %v2421, %v2420
        %v2438 = vunpack.c.l.b16 %v2382
        %v2439 = vunpack.c.l.b16 %v2383
        %v2440 = vunpack.c.l.b16 %v2384
        %v2441 = vunpack.c.l.b16 %v2385
        %v2442 = vunpack.c.l.b16 %v2386
        %v2443 = vunpack.c.l.b16 %v2387
        %v2444 = vunpack.c.l.b16 %v2388
        %v2445 = vunpack.c.l.b16 %v2389
        %v2446 = vpack.c.b16 %v2439, %v2438
        %v2447 = vpack.c.b16 %v2441, %v2440
        %v2448 = vpack.c.b16 %v2443, %v2442
        %v2449 = vpack.c.b16 %v2445, %v2444
        %v2455 = vsel %vm1147, %v2422, 0
        %v2458 = vsel %vm1147, %v2423, 0
        %v2461 = vsel %vm1147, %v2424, 0
        %v2464 = vsel %vm1147, %v2425, 0
        %v2467 = vsel %vm1147, %v2426, 0
        %v2470 = vsel %vm1147, %v2427, 0
        %v2473 = vsel %vm1147, %v2428, 0
        %v2476 = vsel %vm1147, %v2429, 0
        %2478 = vmatprep.subr.bf16.mxu0 0
        %2479 = vmatpush1.bf16.msra.mxu0 0
        %2480 = vmatprep.subr.bf16.mxu0 0
        %2481 = vmatpush1.bf16.msra.mxu0 0
        %2482 = vmatprep.subr.bf16.mxu0 0
        %2483 = vmatpush1.bf16.msra.mxu0 0
        %2484 = vmatprep.subr.bf16.mxu0 0
        %2485 = vmatpush1.bf16.msra.mxu0 0
        %2486 = vmatprep.subr.bf16.mxu0 0
        %2487 = vmatpush1.bf16.msra.mxu0 %v2449
        %2488 = vmatprep.subr.bf16.mxu0 0
        %2489 = vmatpush1.bf16.msra.mxu0 %v2448
        %2490 = vmatprep.subr.bf16.mxu0 0
        %2491 = vmatpush1.bf16.msra.mxu0 %v2447
        %2492 = vmatprep.subr.bf16.mxu0 0
        %2493 = vmatpush1.bf16.msra.mxu0 %v2446
        %2494 = vmatprep.subr.bf16.mxu0 0
        %2495 = vmatpush2.bf16.msra.mxu0 0
        %2496 = vmatprep.subr.bf16.mxu0 0
        %2497 = vmatpush2.bf16.msra.mxu0 0
        %2498 = vmatprep.subr.bf16.mxu0 0
        %2499 = vmatpush2.bf16.msra.mxu0 0
        %2500 = vmatprep.subr.bf16.mxu0 0
        %2501 = vmatpush2.bf16.msra.mxu0 0
        %2502 = vmatprep.subr.bf16.mxu0 0
        %2503 = vmatpush2.bf16.msra.mxu0 0
        %2504 = vmatprep.subr.bf16.mxu0 0
        %2505 = vmatpush2.bf16.msra.mxu0 0
        %2506 = vmatprep.subr.bf16.mxu0 0
        %2507 = vmatpush2.bf16.msra.mxu0 0
        %2508 = vmatprep.subr.bf16.mxu0 0
        %2509 = vmatpush2.bf16.msra.mxu0 0
        %2510 = vmatprep.mubr.bf16.mxu0 0
        %2511 = vmatmul.mubr.bf16.gmra.mxu0 %v2455
        %v2512 = vpop.f32.mrf.mxu0
        %v2513 = vadd.f32 0.0, %v2512
        %v2514 = vpop.f32.mrf.mxu0
        %v2515 = vpop.f32.mrf.mxu0
        %v2516 = vadd.f32 0.0, %v2515
        %v2517 = vpop.f32.mrf.mxu0
        %2518 = vmatprep.mubr.bf16.mxu0 0
        %2519 = vmatmul.mubr.bf16.gmra.mxu0 %v2458
        %v2520 = vpop.f32.mrf.mxu0
        %v2521 = vadd.f32 0.0, %v2520
        %v2522 = vpop.f32.mrf.mxu0
        %v2523 = vpop.f32.mrf.mxu0
        %v2524 = vadd.f32 0.0, %v2523
        %v2525 = vpop.f32.mrf.mxu0
        %2526 = vmatprep.mubr.bf16.mxu0 0
        %2527 = vmatmul.mubr.bf16.gmra.mxu0 %v2461
        %v2528 = vpop.f32.mrf.mxu0
        %v2529 = vadd.f32 0.0, %v2528
        %v2530 = vpop.f32.mrf.mxu0
        %v2531 = vpop.f32.mrf.mxu0
        %v2532 = vadd.f32 0.0, %v2531
        %v2533 = vpop.f32.mrf.mxu0
        %2534 = vmatprep.mubr.bf16.mxu0 0
        %2535 = vmatmul.mubr.bf16.gmra.mxu0 %v2464
        %v2536 = vpop.f32.mrf.mxu0
        %v2537 = vadd.f32 0.0, %v2536
        %v2538 = vpop.f32.mrf.mxu0
        %v2539 = vpop.f32.mrf.mxu0
        %v2540 = vadd.f32 0.0, %v2539
        %v2541 = vpop.f32.mrf.mxu0
        %2542 = vmatprep.mubr.bf16.mxu0 0
        %2543 = vmatmul.mubr.bf16.gmra.mxu0 %v2467
        %v2544 = vpop.f32.mrf.mxu0
        %v2545 = vadd.f32 0.0, %v2544
        %v2546 = vpop.f32.mrf.mxu0
        %v2547 = vpop.f32.mrf.mxu0
        %v2548 = vadd.f32 0.0, %v2547
        %v2549 = vpop.f32.mrf.mxu0
        %2550 = vmatprep.mubr.bf16.mxu0 0
        %2551 = vmatmul.mubr.bf16.gmra.mxu0 %v2470
        %v2552 = vpop.f32.mrf.mxu0
        %v2553 = vadd.f32 0.0, %v2552
        %v2554 = vpop.f32.mrf.mxu0
        %v2555 = vpop.f32.mrf.mxu0
        %v2556 = vadd.f32 0.0, %v2555
        %v2557 = vpop.f32.mrf.mxu0
        %2558 = vmatprep.mubr.bf16.mxu0 0
        %2559 = vmatmul.mubr.bf16.gmra.mxu0 %v2473
        %v2560 = vpop.f32.mrf.mxu0
        %v2561 = vadd.f32 0.0, %v2560
        %v2562 = vpop.f32.mrf.mxu0
        %v2563 = vpop.f32.mrf.mxu0
        %v2564 = vadd.f32 0.0, %v2563
        %v2565 = vpop.f32.mrf.mxu0
        %2566 = vmatprep.mubr.bf16.mxu0 0
        %2567 = vmatmul.mubr.bf16.gmra.mxu0 %v2476
        %v2568 = vpop.f32.mrf.mxu0
        %v2569 = vadd.f32 0.0, %v2568
        %v2570 = vpop.f32.mrf.mxu0
        %v2571 = vpop.f32.mrf.mxu0
        %v2572 = vadd.f32 0.0, %v2571
        %v2573 = vpop.f32.mrf.mxu0
        %2574 = vdwg.mxu0
        %v2575 = vadd.f32 %v2345, %v2513
        %v2576 = vadd.f32 %v2346, %v2516
        %v2577 = vadd.f32 %v2347, %v2521
        %v2578 = vadd.f32 %v2348, %v2524
        %v2579 = vadd.f32 %v2349, %v2529
        %v2580 = vadd.f32 %v2350, %v2532
        %v2581 = vadd.f32 %v2351, %v2537
        %v2582 = vadd.f32 %v2352, %v2540
        %v2583 = vadd.f32 %v2353, %v2545
        %v2584 = vadd.f32 %v2354, %v2548
        %v2585 = vadd.f32 %v2355, %v2553
        %v2586 = vadd.f32 %v2356, %v2556
        %v2587 = vadd.f32 %v2357, %v2561
        %v2588 = vadd.f32 %v2358, %v2564
        %v2589 = vadd.f32 %v2359, %v2569
        %v2590 = vadd.f32 %v2360, %v2572
        %s2591 = sadd.s32 %s2362, 36
        %s2592 = smul.addr %s2591, 4
        %s2593 = scalar_lea.vmem [#allocation2], %s2592
        %v2594 = vld [vmem:[%s2593] sm:$0xf]
        %v2595 = vld [vmem:[%s2593 + $0x4] sm:$0xf]
        %v2596 = vld [vmem:[%s2593 + $0x8] sm:$0xf]
        %v2597 = vld [vmem:[%s2593 + $0xc] sm:$0xf]
        %v2598 = vld [vmem:[%s2593 + $0x10] sm:$0xf]
        %v2599 = vld [vmem:[%s2593 + $0x14] sm:$0xf]
        %v2600 = vld [vmem:[%s2593 + $0x18] sm:$0xf]
        %v2601 = vld [vmem:[%s2593 + $0x1c] sm:$0xf]
        %v2602 = vld [vmem:[%s2593 + $0x20] sm:$0xf]
        %v2603 = vld [vmem:[%s2593 + $0x24] sm:$0xf]
        %v2604 = vld [vmem:[%s2593 + $0x28] sm:$0xf]
        %v2605 = vld [vmem:[%s2593 + $0x2c] sm:$0xf]
        %v2606 = vld [vmem:[%s2593 + $0x30] sm:$0xf]
        %v2607 = vld [vmem:[%s2593 + $0x34] sm:$0xf]
        %v2608 = vld [vmem:[%s2593 + $0x38] sm:$0xf]
        %v2609 = vld [vmem:[%s2593 + $0x3c] sm:$0xf]
        %s2610 = scalar_lea.vmem [#allocation7], 224
        %v2611 = vld [vmem:[%s2610] sm:$0xf]
        %v2612 = vld [vmem:[%s2610 + $0x4] sm:$0xf]
        %v2613 = vld [vmem:[%s2610 + $0x8] sm:$0xf]
        %v2614 = vld [vmem:[%s2610 + $0xc] sm:$0xf]
        %v2615 = vld [vmem:[%s2610 + $0x10] sm:$0xf]
        %v2616 = vld [vmem:[%s2610 + $0x14] sm:$0xf]
        %v2617 = vld [vmem:[%s2610 + $0x18] sm:$0xf]
        %v2618 = vld [vmem:[%s2610 + $0x1c] sm:$0xf]
        %v2635 = vunpack.c.l.b16 %v2594
        %v2636 = vunpack.c.l.b16 %v2595
        %v2637 = vunpack.c.l.b16 %v2596
        %v2638 = vunpack.c.l.b16 %v2597
        %v2639 = vunpack.c.l.b16 %v2598
        %v2640 = vunpack.c.l.b16 %v2599
        %v2641 = vunpack.c.l.b16 %v2600
        %v2642 = vunpack.c.l.b16 %v2601
        %v2643 = vunpack.c.l.b16 %v2602
        %v2644 = vunpack.c.l.b16 %v2603
        %v2645 = vunpack.c.l.b16 %v2604
        %v2646 = vunpack.c.l.b16 %v2605
        %v2647 = vunpack.c.l.b16 %v2606
        %v2648 = vunpack.c.l.b16 %v2607
        %v2649 = vunpack.c.l.b16 %v2608
        %v2650 = vunpack.c.l.b16 %v2609
        %v2651 = vpack.c.b16 %v2636, %v2635
        %v2652 = vpack.c.b16 %v2638, %v2637
        %v2653 = vpack.c.b16 %v2640, %v2639
        %v2654 = vpack.c.b16 %v2642, %v2641
        %v2655 = vpack.c.b16 %v2644, %v2643
        %v2656 = vpack.c.b16 %v2646, %v2645
        %v2657 = vpack.c.b16 %v2648, %v2647
        %v2658 = vpack.c.b16 %v2650, %v2649
        %v2667 = vunpack.c.l.b16 %v2611
        %v2668 = vunpack.c.l.b16 %v2612
        %v2669 = vunpack.c.l.b16 %v2613
        %v2670 = vunpack.c.l.b16 %v2614
        %v2671 = vunpack.c.l.b16 %v2615
        %v2672 = vunpack.c.l.b16 %v2616
        %v2673 = vunpack.c.l.b16 %v2617
        %v2674 = vunpack.c.l.b16 %v2618
        %v2675 = vpack.c.b16 %v2668, %v2667
        %v2676 = vpack.c.b16 %v2670, %v2669
        %v2677 = vpack.c.b16 %v2672, %v2671
        %v2678 = vpack.c.b16 %v2674, %v2673
        %v2684 = vsel %vm1147, %v2651, 0
        %v2687 = vsel %vm1147, %v2652, 0
        %v2690 = vsel %vm1147, %v2653, 0
        %v2693 = vsel %vm1147, %v2654, 0
        %v2696 = vsel %vm1147, %v2655, 0
        %v2699 = vsel %vm1147, %v2656, 0
        %v2702 = vsel %vm1147, %v2657, 0
        %v2705 = vsel %vm1147, %v2658, 0
        %2707 = vmatprep.subr.bf16.mxu0 0
        %2708 = vmatpush1.bf16.msra.mxu0 0
        %2709 = vmatprep.subr.bf16.mxu0 0
        %2710 = vmatpush1.bf16.msra.mxu0 0
        %2711 = vmatprep.subr.bf16.mxu0 0
        %2712 = vmatpush1.bf16.msra.mxu0 0
        %2713 = vmatprep.subr.bf16.mxu0 0
        %2714 = vmatpush1.bf16.msra.mxu0 0
        %2715 = vmatprep.subr.bf16.mxu0 0
        %2716 = vmatpush1.bf16.msra.mxu0 %v2678
        %2717 = vmatprep.subr.bf16.mxu0 0
        %2718 = vmatpush1.bf16.msra.mxu0 %v2677
        %2719 = vmatprep.subr.bf16.mxu0 0
        %2720 = vmatpush1.bf16.msra.mxu0 %v2676
        %2721 = vmatprep.subr.bf16.mxu0 0
        %2722 = vmatpush1.bf16.msra.mxu0 %v2675
        %2723 = vmatprep.subr.bf16.mxu0 0
        %2724 = vmatpush2.bf16.msra.mxu0 0
        %2725 = vmatprep.subr.bf16.mxu0 0
        %2726 = vmatpush2.bf16.msra.mxu0 0
        %2727 = vmatprep.subr.bf16.mxu0 0
        %2728 = vmatpush2.bf16.msra.mxu0 0
        %2729 = vmatprep.subr.bf16.mxu0 0
        %2730 = vmatpush2.bf16.msra.mxu0 0
        %2731 = vmatprep.subr.bf16.mxu0 0
        %2732 = vmatpush2.bf16.msra.mxu0 0
        %2733 = vmatprep.subr.bf16.mxu0 0
        %2734 = vmatpush2.bf16.msra.mxu0 0
        %2735 = vmatprep.subr.bf16.mxu0 0
        %2736 = vmatpush2.bf16.msra.mxu0 0
        %2737 = vmatprep.subr.bf16.mxu0 0
        %2738 = vmatpush2.bf16.msra.mxu0 0
        %2739 = vmatprep.mubr.bf16.mxu0 0
        %2740 = vmatmul.mubr.bf16.gmra.mxu0 %v2684
        %v2741 = vpop.f32.mrf.mxu0
        %v2742 = vadd.f32 0.0, %v2741
        %v2743 = vpop.f32.mrf.mxu0
        %v2744 = vpop.f32.mrf.mxu0
        %v2745 = vadd.f32 0.0, %v2744
        %v2746 = vpop.f32.mrf.mxu0
        %2747 = vmatprep.mubr.bf16.mxu0 0
        %2748 = vmatmul.mubr.bf16.gmra.mxu0 %v2687
        %v2749 = vpop.f32.mrf.mxu0
        %v2750 = vadd.f32 0.0, %v2749
        %v2751 = vpop.f32.mrf.mxu0
        %v2752 = vpop.f32.mrf.mxu0
        %v2753 = vadd.f32 0.0, %v2752
        %v2754 = vpop.f32.mrf.mxu0
        %2755 = vmatprep.mubr.bf16.mxu0 0
        %2756 = vmatmul.mubr.bf16.gmra.mxu0 %v2690
        %v2757 = vpop.f32.mrf.mxu0
        %v2758 = vadd.f32 0.0, %v2757
        %v2759 = vpop.f32.mrf.mxu0
        %v2760 = vpop.f32.mrf.mxu0
        %v2761 = vadd.f32 0.0, %v2760
        %v2762 = vpop.f32.mrf.mxu0
        %2763 = vmatprep.mubr.bf16.mxu0 0
        %2764 = vmatmul.mubr.bf16.gmra.mxu0 %v2693
        %v2765 = vpop.f32.mrf.mxu0
        %v2766 = vadd.f32 0.0, %v2765
        %v2767 = vpop.f32.mrf.mxu0
        %v2768 = vpop.f32.mrf.mxu0
        %v2769 = vadd.f32 0.0, %v2768
        %v2770 = vpop.f32.mrf.mxu0
        %2771 = vmatprep.mubr.bf16.mxu0 0
        %2772 = vmatmul.mubr.bf16.gmra.mxu0 %v2696
        %v2773 = vpop.f32.mrf.mxu0
        %v2774 = vadd.f32 0.0, %v2773
        %v2775 = vpop.f32.mrf.mxu0
        %v2776 = vpop.f32.mrf.mxu0
        %v2777 = vadd.f32 0.0, %v2776
        %v2778 = vpop.f32.mrf.mxu0
        %2779 = vmatprep.mubr.bf16.mxu0 0
        %2780 = vmatmul.mubr.bf16.gmra.mxu0 %v2699
        %v2781 = vpop.f32.mrf.mxu0
        %v2782 = vadd.f32 0.0, %v2781
        %v2783 = vpop.f32.mrf.mxu0
        %v2784 = vpop.f32.mrf.mxu0
        %v2785 = vadd.f32 0.0, %v2784
        %v2786 = vpop.f32.mrf.mxu0
        %2787 = vmatprep.mubr.bf16.mxu0 0
        %2788 = vmatmul.mubr.bf16.gmra.mxu0 %v2702
        %v2789 = vpop.f32.mrf.mxu0
        %v2790 = vadd.f32 0.0, %v2789
        %v2791 = vpop.f32.mrf.mxu0
        %v2792 = vpop.f32.mrf.mxu0
        %v2793 = vadd.f32 0.0, %v2792
        %v2794 = vpop.f32.mrf.mxu0
        %2795 = vmatprep.mubr.bf16.mxu0 0
        %2796 = vmatmul.mubr.bf16.gmra.mxu0 %v2705
        %v2797 = vpop.f32.mrf.mxu0
        %v2798 = vadd.f32 0.0, %v2797
        %v2799 = vpop.f32.mrf.mxu0
        %v2800 = vpop.f32.mrf.mxu0
        %v2801 = vadd.f32 0.0, %v2800
        %v2802 = vpop.f32.mrf.mxu0
        %2803 = vdwg.mxu0
        %v2804 = vadd.f32 %v2575, %v2742
        %v2805 = vadd.f32 %v2576, %v2745
        %v2806 = vadd.f32 %v2577, %v2750
        %v2807 = vadd.f32 %v2578, %v2753
        %v2808 = vadd.f32 %v2579, %v2758
        %v2809 = vadd.f32 %v2580, %v2761
        %v2810 = vadd.f32 %v2581, %v2766
        %v2811 = vadd.f32 %v2582, %v2769
        %v2812 = vadd.f32 %v2583, %v2774
        %v2813 = vadd.f32 %v2584, %v2777
        %v2814 = vadd.f32 %v2585, %v2782
        %v2815 = vadd.f32 %v2586, %v2785
        %v2816 = vadd.f32 %v2587, %v2790
        %v2817 = vadd.f32 %v2588, %v2793
        %v2818 = vadd.f32 %v2589, %v2798
        %v2819 = vadd.f32 %v2590, %v2801
        %s2820 = sadd.s32 %s2362, 72
        %s2821 = smul.addr %s2820, 4
        %s2822 = scalar_lea.vmem [#allocation2], %s2821
        %v2823 = vld [vmem:[%s2822] sm:$0xf]
        %v2824 = vld [vmem:[%s2822 + $0x4] sm:$0xf]
        %v2825 = vld [vmem:[%s2822 + $0x8] sm:$0xf]
        %v2826 = vld [vmem:[%s2822 + $0xc] sm:$0xf]
        %v2827 = vld [vmem:[%s2822 + $0x10] sm:$0xf]
        %v2828 = vld [vmem:[%s2822 + $0x14] sm:$0xf]
        %v2829 = vld [vmem:[%s2822 + $0x18] sm:$0xf]
        %v2830 = vld [vmem:[%s2822 + $0x1c] sm:$0xf]
        %v2831 = vld [vmem:[%s2822 + $0x20] sm:$0xf]
        %v2832 = vld [vmem:[%s2822 + $0x24] sm:$0xf]
        %v2833 = vld [vmem:[%s2822 + $0x28] sm:$0xf]
        %v2834 = vld [vmem:[%s2822 + $0x2c] sm:$0xf]
        %v2835 = vld [vmem:[%s2822 + $0x30] sm:$0xf]
        %v2836 = vld [vmem:[%s2822 + $0x34] sm:$0xf]
        %v2837 = vld [vmem:[%s2822 + $0x38] sm:$0xf]
        %v2838 = vld [vmem:[%s2822 + $0x3c] sm:$0xf]
        %s2839 = scalar_lea.vmem [#allocation7], 256
        %v2840 = vld [vmem:[%s2839] sm:$0xf]
        %v2841 = vld [vmem:[%s2839 + $0x4] sm:$0xf]
        %v2842 = vld [vmem:[%s2839 + $0x8] sm:$0xf]
        %v2843 = vld [vmem:[%s2839 + $0xc] sm:$0xf]
        %v2844 = vld [vmem:[%s2839 + $0x10] sm:$0xf]
        %v2845 = vld [vmem:[%s2839 + $0x14] sm:$0xf]
        %v2846 = vld [vmem:[%s2839 + $0x18] sm:$0xf]
        %v2847 = vld [vmem:[%s2839 + $0x1c] sm:$0xf]
        %v2864 = vunpack.c.l.b16 %v2823
        %v2865 = vunpack.c.l.b16 %v2824
        %v2866 = vunpack.c.l.b16 %v2825
        %v2867 = vunpack.c.l.b16 %v2826
        %v2868 = vunpack.c.l.b16 %v2827
        %v2869 = vunpack.c.l.b16 %v2828
        %v2870 = vunpack.c.l.b16 %v2829
        %v2871 = vunpack.c.l.b16 %v2830
        %v2872 = vunpack.c.l.b16 %v2831
        %v2873 = vunpack.c.l.b16 %v2832
        %v2874 = vunpack.c.l.b16 %v2833
        %v2875 = vunpack.c.l.b16 %v2834
        %v2876 = vunpack.c.l.b16 %v2835
        %v2877 = vunpack.c.l.b16 %v2836
        %v2878 = vunpack.c.l.b16 %v2837
        %v2879 = vunpack.c.l.b16 %v2838
        %v2880 = vpack.c.b16 %v2865, %v2864
        %v2881 = vpack.c.b16 %v2867, %v2866
        %v2882 = vpack.c.b16 %v2869, %v2868
        %v2883 = vpack.c.b16 %v2871, %v2870
        %v2884 = vpack.c.b16 %v2873, %v2872
        %v2885 = vpack.c.b16 %v2875, %v2874
        %v2886 = vpack.c.b16 %v2877, %v2876
        %v2887 = vpack.c.b16 %v2879, %v2878
        %v2896 = vunpack.c.l.b16 %v2840
        %v2897 = vunpack.c.l.b16 %v2841
        %v2898 = vunpack.c.l.b16 %v2842
        %v2899 = vunpack.c.l.b16 %v2843
        %v2900 = vunpack.c.l.b16 %v2844
        %v2901 = vunpack.c.l.b16 %v2845
        %v2902 = vunpack.c.l.b16 %v2846
        %v2903 = vunpack.c.l.b16 %v2847
        %v2904 = vpack.c.b16 %v2897, %v2896
        %v2905 = vpack.c.b16 %v2899, %v2898
        %v2906 = vpack.c.b16 %v2901, %v2900
        %v2907 = vpack.c.b16 %v2903, %v2902
        %v2913 = vsel %vm1147, %v2880, 0
        %v2916 = vsel %vm1147, %v2881, 0
        %v2919 = vsel %vm1147, %v2882, 0
        %v2922 = vsel %vm1147, %v2883, 0
        %v2925 = vsel %vm1147, %v2884, 0
        %v2928 = vsel %vm1147, %v2885, 0
        %v2931 = vsel %vm1147, %v2886, 0
        %v2934 = vsel %vm1147, %v2887, 0
        %2936 = vmatprep.subr.bf16.mxu0 0
        %2937 = vmatpush1.bf16.msra.mxu0 0
        %2938 = vmatprep.subr.bf16.mxu0 0
        %2939 = vmatpush1.bf16.msra.mxu0 0
        %2940 = vmatprep.subr.bf16.mxu0 0
        %2941 = vmatpush1.bf16.msra.mxu0 0
        %2942 = vmatprep.subr.bf16.mxu0 0
        %2943 = vmatpush1.bf16.msra.mxu0 0
        %2944 = vmatprep.subr.bf16.mxu0 0
        %2945 = vmatpush1.bf16.msra.mxu0 %v2907
        %2946 = vmatprep.subr.bf16.mxu0 0
        %2947 = vmatpush1.bf16.msra.mxu0 %v2906
        %2948 = vmatprep.subr.bf16.mxu0 0
        %2949 = vmatpush1.bf16.msra.mxu0 %v2905
        %2950 = vmatprep.subr.bf16.mxu0 0
        %2951 = vmatpush1.bf16.msra.mxu0 %v2904
        %2952 = vmatprep.subr.bf16.mxu0 0
        %2953 = vmatpush2.bf16.msra.mxu0 0
        %2954 = vmatprep.subr.bf16.mxu0 0
        %2955 = vmatpush2.bf16.msra.mxu0 0
        %2956 = vmatprep.subr.bf16.mxu0 0
        %2957 = vmatpush2.bf16.msra.mxu0 0
        %2958 = vmatprep.subr.bf16.mxu0 0
        %2959 = vmatpush2.bf16.msra.mxu0 0
        %2960 = vmatprep.subr.bf16.mxu0 0
        %2961 = vmatpush2.bf16.msra.mxu0 0
        %2962 = vmatprep.subr.bf16.mxu0 0
        %2963 = vmatpush2.bf16.msra.mxu0 0
        %2964 = vmatprep.subr.bf16.mxu0 0
        %2965 = vmatpush2.bf16.msra.mxu0 0
        %2966 = vmatprep.subr.bf16.mxu0 0
        %2967 = vmatpush2.bf16.msra.mxu0 0
        %2968 = vmatprep.mubr.bf16.mxu0 0
        %2969 = vmatmul.mubr.bf16.gmra.mxu0 %v2913
        %v2970 = vpop.f32.mrf.mxu0
        %v2971 = vadd.f32 0.0, %v2970
        %v2972 = vpop.f32.mrf.mxu0
        %v2973 = vpop.f32.mrf.mxu0
        %v2974 = vadd.f32 0.0, %v2973
        %v2975 = vpop.f32.mrf.mxu0
        %2976 = vmatprep.mubr.bf16.mxu0 0
        %2977 = vmatmul.mubr.bf16.gmra.mxu0 %v2916
        %v2978 = vpop.f32.mrf.mxu0
        %v2979 = vadd.f32 0.0, %v2978
        %v2980 = vpop.f32.mrf.mxu0
        %v2981 = vpop.f32.mrf.mxu0
        %v2982 = vadd.f32 0.0, %v2981
        %v2983 = vpop.f32.mrf.mxu0
        %2984 = vmatprep.mubr.bf16.mxu0 0
        %2985 = vmatmul.mubr.bf16.gmra.mxu0 %v2919
        %v2986 = vpop.f32.mrf.mxu0
        %v2987 = vadd.f32 0.0, %v2986
        %v2988 = vpop.f32.mrf.mxu0
        %v2989 = vpop.f32.mrf.mxu0
        %v2990 = vadd.f32 0.0, %v2989
        %v2991 = vpop.f32.mrf.mxu0
        %2992 = vmatprep.mubr.bf16.mxu0 0
        %2993 = vmatmul.mubr.bf16.gmra.mxu0 %v2922
        %v2994 = vpop.f32.mrf.mxu0
        %v2995 = vadd.f32 0.0, %v2994
        %v2996 = vpop.f32.mrf.mxu0
        %v2997 = vpop.f32.mrf.mxu0
        %v2998 = vadd.f32 0.0, %v2997
        %v2999 = vpop.f32.mrf.mxu0
        %3000 = vmatprep.mubr.bf16.mxu0 0
        %3001 = vmatmul.mubr.bf16.gmra.mxu0 %v2925
        %v3002 = vpop.f32.mrf.mxu0
        %v3003 = vadd.f32 0.0, %v3002
        %v3004 = vpop.f32.mrf.mxu0
        %v3005 = vpop.f32.mrf.mxu0
        %v3006 = vadd.f32 0.0, %v3005
        %v3007 = vpop.f32.mrf.mxu0
        %3008 = vmatprep.mubr.bf16.mxu0 0
        %3009 = vmatmul.mubr.bf16.gmra.mxu0 %v2928
        %v3010 = vpop.f32.mrf.mxu0
        %v3011 = vadd.f32 0.0, %v3010
        %v3012 = vpop.f32.mrf.mxu0
        %v3013 = vpop.f32.mrf.mxu0
        %v3014 = vadd.f32 0.0, %v3013
        %v3015 = vpop.f32.mrf.mxu0
        %3016 = vmatprep.mubr.bf16.mxu0 0
        %3017 = vmatmul.mubr.bf16.gmra.mxu0 %v2931
        %v3018 = vpop.f32.mrf.mxu0
        %v3019 = vadd.f32 0.0, %v3018
        %v3020 = vpop.f32.mrf.mxu0
        %v3021 = vpop.f32.mrf.mxu0
        %v3022 = vadd.f32 0.0, %v3021
        %v3023 = vpop.f32.mrf.mxu0
        %3024 = vmatprep.mubr.bf16.mxu0 0
        %3025 = vmatmul.mubr.bf16.gmra.mxu0 %v2934
        %v3026 = vpop.f32.mrf.mxu0
        %v3027 = vadd.f32 0.0, %v3026
        %v3028 = vpop.f32.mrf.mxu0
        %v3029 = vpop.f32.mrf.mxu0
        %v3030 = vadd.f32 0.0, %v3029
        %v3031 = vpop.f32.mrf.mxu0
        %3032 = vdwg.mxu0
        %v3033 = vadd.f32 %v2804, %v2971
        %v3034 = vadd.f32 %v2805, %v2974
        %v3035 = vadd.f32 %v2806, %v2979
        %v3036 = vadd.f32 %v2807, %v2982
        %v3037 = vadd.f32 %v2808, %v2987
        %v3038 = vadd.f32 %v2809, %v2990
        %v3039 = vadd.f32 %v2810, %v2995
        %v3040 = vadd.f32 %v2811, %v2998
        %v3041 = vadd.f32 %v2812, %v3003
        %v3042 = vadd.f32 %v2813, %v3006
        %v3043 = vadd.f32 %v2814, %v3011
        %v3044 = vadd.f32 %v2815, %v3014
        %v3045 = vadd.f32 %v2816, %v3019
        %v3046 = vadd.f32 %v2817, %v3022
        %v3047 = vadd.f32 %v2818, %v3027
        %v3048 = vadd.f32 %v2819, %v3030
        %v3050 = vlaneseq
        %v3051 = vshrl.u32 %v3050, 7
        %v3052 = vsub.s32 0, %v3051
        %v3053 = vrot.slane %v308, %v3052
        %v3055 = vadd.f32 %v3033, %v3053
        %v3056 = vadd.f32 %v3034, %v3053
        %v3057 = vadd.f32 %v3035, %v3053
        %v3058 = vadd.f32 %v3036, %v3053
        %v3059 = vadd.f32 %v3037, %v3053
        %v3060 = vadd.f32 %v3038, %v3053
        %v3061 = vadd.f32 %v3039, %v3053
        %v3062 = vadd.f32 %v3040, %v3053
        %v3063 = vadd.f32 %v3041, %v3053
        %v3064 = vadd.f32 %v3042, %v3053
        %v3065 = vadd.f32 %v3043, %v3053
        %v3066 = vadd.f32 %v3044, %v3053
        %v3067 = vadd.f32 %v3045, %v3053
        %v3068 = vadd.f32 %v3046, %v3053
        %v3069 = vadd.f32 %v3047, %v3053
        %v3070 = vadd.f32 %v3048, %v3053
        %v3071 = vmax.f32 %v3055, 0.0
        %v3072 = vmax.f32 %v3056, 0.0
        %v3073 = vmax.f32 %v3057, 0.0
        %v3074 = vmax.f32 %v3058, 0.0
        %v3075 = vmax.f32 %v3059, 0.0
        %v3076 = vmax.f32 %v3060, 0.0
        %v3077 = vmax.f32 %v3061, 0.0
        %v3078 = vmax.f32 %v3062, 0.0
        %v3079 = vmax.f32 %v3063, 0.0
        %v3080 = vmax.f32 %v3064, 0.0
        %v3081 = vmax.f32 %v3065, 0.0
        %v3082 = vmax.f32 %v3066, 0.0
        %v3083 = vmax.f32 %v3067, 0.0
        %v3084 = vmax.f32 %v3068, 0.0
        %v3085 = vmax.f32 %v3069, 0.0
        %v3086 = vmax.f32 %v3070, 0.0
        %v3087 = vpack.c.bf16 %v3072, %v3071
        %v3088 = vpack.c.bf16 %v3074, %v3073
        %v3089 = vpack.c.bf16 %v3076, %v3075
        %v3090 = vpack.c.bf16 %v3078, %v3077
        %v3091 = vpack.c.bf16 %v3080, %v3079
        %v3092 = vpack.c.bf16 %v3082, %v3081
        %v3093 = vpack.c.bf16 %v3084, %v3083
        %v3094 = vpack.c.bf16 %v3086, %v3085
        %v3096 = vshrl.u32 %v3087, 16
        %v3098 = vrot.slane %v3096, 7
        %v3099 = vshll.u32 %v3087, 16
        %v3101 = vor.u32 %v3098, %v3099
        %v3103 = vshrl.u32 %v3088, 16
        %v3105 = vrot.slane %v3103, 7
        %v3106 = vshll.u32 %v3088, 16
        %v3108 = vor.u32 %v3105, %v3106
        %v3110 = vshrl.u32 %v3089, 16
        %v3112 = vrot.slane %v3110, 7
        %v3113 = vshll.u32 %v3089, 16
        %v3115 = vor.u32 %v3112, %v3113
        %v3117 = vshrl.u32 %v3090, 16
        %v3119 = vrot.slane %v3117, 7
        %v3120 = vshll.u32 %v3090, 16
        %v3122 = vor.u32 %v3119, %v3120
        %v3124 = vshrl.u32 %v3091, 16
        %v3126 = vrot.slane %v3124, 7
        %v3127 = vshll.u32 %v3091, 16
        %v3129 = vor.u32 %v3126, %v3127
        %v3131 = vshrl.u32 %v3092, 16
        %v3133 = vrot.slane %v3131, 7
        %v3134 = vshll.u32 %v3092, 16
        %v3136 = vor.u32 %v3133, %v3134
        %v3138 = vshrl.u32 %v3093, 16
        %v3140 = vrot.slane %v3138, 7
        %v3141 = vshll.u32 %v3093, 16
        %v3143 = vor.u32 %v3140, %v3141
        %v3145 = vshrl.u32 %v3094, 16
        %v3147 = vrot.slane %v3145, 7
        %v3148 = vshll.u32 %v3094, 16
        %v3150 = vor.u32 %v3147, %v3148
        %v3159 = vsel %vm402, 0, %v3101
        %v3160 = vsel %vm402, 0, %v3108
        %v3161 = vsel %vm402, 0, %v3115
        %v3162 = vsel %vm402, 0, %v3122
        %v3163 = vsel %vm402, 0, %v3129
        %v3164 = vsel %vm402, 0, %v3136
        %v3165 = vsel %vm402, 0, %v3143
        %v3166 = vsel %vm402, 0, %v3150
        %v3167 = vrot.slane %v3099, 1
        %v3168 = vor.u32 %v3096, %v3167
        %v3169 = vrot.slane %v3106, 1
        %v3170 = vor.u32 %v3103, %v3169
        %v3171 = vrot.slane %v3113, 1
        %v3172 = vor.u32 %v3110, %v3171
        %v3173 = vrot.slane %v3120, 1
        %v3174 = vor.u32 %v3117, %v3173
        %v3175 = vrot.slane %v3127, 1
        %v3176 = vor.u32 %v3124, %v3175
        %v3177 = vrot.slane %v3134, 1
        %v3178 = vor.u32 %v3131, %v3177
        %v3179 = vrot.slane %v3141, 1
        %v3180 = vor.u32 %v3138, %v3179
        %v3181 = vrot.slane %v3148, 1
        %v3182 = vor.u32 %v3145, %v3181
        %v3191 = vsel %vm437, %v3168, 0
        %v3192 = vsel %vm437, %v3170, 0
        %v3193 = vsel %vm437, %v3172, 0
        %v3194 = vsel %vm437, %v3174, 0
        %v3195 = vsel %vm437, %v3176, 0
        %v3196 = vsel %vm437, %v3178, 0
        %v3197 = vsel %vm437, %v3180, 0
        %v3198 = vsel %vm437, %v3182, 0
        %v3207 = vunpack.c.l.b16 %v3087
        %v3208 = vunpack.c.h.b16 %v3087
        %v3209 = vunpack.c.l.b16 %v3088
        %v3210 = vunpack.c.h.b16 %v3088
        %v3211 = vunpack.c.l.b16 %v3089
        %v3212 = vunpack.c.h.b16 %v3089
        %v3213 = vunpack.c.l.b16 %v3090
        %v3214 = vunpack.c.h.b16 %v3090
        %v3215 = vunpack.c.l.b16 %v3091
        %v3216 = vunpack.c.h.b16 %v3091
        %v3217 = vunpack.c.l.b16 %v3092
        %v3218 = vunpack.c.h.b16 %v3092
        %v3219 = vunpack.c.l.b16 %v3093
        %v3220 = vunpack.c.h.b16 %v3093
        %v3221 = vunpack.c.l.b16 %v3094
        %v3222 = vunpack.c.h.b16 %v3094
        %v3223 = vpack.c.b16 %v3207, %v3207
        %v3224 = vpack.c.b16 %v3208, %v3208
        %v3225 = vpack.c.b16 %v3209, %v3209
        %v3226 = vpack.c.b16 %v3210, %v3210
        %v3227 = vpack.c.b16 %v3211, %v3211
        %v3228 = vpack.c.b16 %v3212, %v3212
        %v3229 = vpack.c.b16 %v3213, %v3213
        %v3230 = vpack.c.b16 %v3214, %v3214
        %v3231 = vpack.c.b16 %v3215, %v3215
        %v3232 = vpack.c.b16 %v3216, %v3216
        %v3233 = vpack.c.b16 %v3217, %v3217
        %v3234 = vpack.c.b16 %v3218, %v3218
        %v3235 = vpack.c.b16 %v3219, %v3219
        %v3236 = vpack.c.b16 %v3220, %v3220
        %v3237 = vpack.c.b16 %v3221, %v3221
        %v3238 = vpack.c.b16 %v3222, %v3222
        %s3255 = smul.addr %s504, 4
        %s3256 = scalar_lea.vmem [#allocation3], %s3255
        %3257 = vst.msk [vmem:[%s3256] sm:$0xf] %vm273, %v3223
        %3258 = vst.msk [vmem:[%s3256 + $0x4] sm:$0xf] %vm273, %v3224
        %3259 = vst.msk [vmem:[%s3256 + $0x8] sm:$0xf] %vm273, %v3225
        %3260 = vst.msk [vmem:[%s3256 + $0xc] sm:$0xf] %vm273, %v3226
        %3261 = vst.msk [vmem:[%s3256 + $0x10] sm:$0xf] %vm273, %v3227
        %3262 = vst.msk [vmem:[%s3256 + $0x14] sm:$0xf] %vm273, %v3228
        %3263 = vst.msk [vmem:[%s3256 + $0x18] sm:$0xf] %vm273, %v3229
        %3264 = vst.msk [vmem:[%s3256 + $0x1c] sm:$0xf] %vm273, %v3230
        %3265 = vst.msk [vmem:[%s3256 + $0x20] sm:$0xf] %vm273, %v3231
        %3266 = vst.msk [vmem:[%s3256 + $0x24] sm:$0xf] %vm273, %v3232
        %3267 = vst.msk [vmem:[%s3256 + $0x28] sm:$0xf] %vm273, %v3233
        %3268 = vst.msk [vmem:[%s3256 + $0x2c] sm:$0xf] %vm273, %v3234
        %3269 = vst.msk [vmem:[%s3256 + $0x30] sm:$0xf] %vm273, %v3235
        %3270 = vst.msk [vmem:[%s3256 + $0x34] sm:$0xf] %vm273, %v3236
        %3271 = vst.msk [vmem:[%s3256 + $0x38] sm:$0xf] %vm273, %v3237
        %3272 = vst.msk [vmem:[%s3256 + $0x3c] sm:$0xf] %vm273, %v3238
        %v3281 = vunpack.c.l.b16 %v3159
        %v3282 = vunpack.c.h.b16 %v3159
        %v3283 = vunpack.c.l.b16 %v3160
        %v3284 = vunpack.c.h.b16 %v3160
        %v3285 = vunpack.c.l.b16 %v3161
        %v3286 = vunpack.c.h.b16 %v3161
        %v3287 = vunpack.c.l.b16 %v3162
        %v3288 = vunpack.c.h.b16 %v3162
        %v3289 = vunpack.c.l.b16 %v3163
        %v3290 = vunpack.c.h.b16 %v3163
        %v3291 = vunpack.c.l.b16 %v3164
        %v3292 = vunpack.c.h.b16 %v3164
        %v3293 = vunpack.c.l.b16 %v3165
        %v3294 = vunpack.c.h.b16 %v3165
        %v3295 = vunpack.c.l.b16 %v3166
        %v3296 = vunpack.c.h.b16 %v3166
        %v3297 = vpack.c.b16 %v3281, %v3281
        %v3298 = vpack.c.b16 %v3282, %v3282
        %v3299 = vpack.c.b16 %v3283, %v3283
        %v3300 = vpack.c.b16 %v3284, %v3284
        %v3301 = vpack.c.b16 %v3285, %v3285
        %v3302 = vpack.c.b16 %v3286, %v3286
        %v3303 = vpack.c.b16 %v3287, %v3287
        %v3304 = vpack.c.b16 %v3288, %v3288
        %v3305 = vpack.c.b16 %v3289, %v3289
        %v3306 = vpack.c.b16 %v3290, %v3290
        %v3307 = vpack.c.b16 %v3291, %v3291
        %v3308 = vpack.c.b16 %v3292, %v3292
        %v3309 = vpack.c.b16 %v3293, %v3293
        %v3310 = vpack.c.b16 %v3294, %v3294
        %v3311 = vpack.c.b16 %v3295, %v3295
        %v3312 = vpack.c.b16 %v3296, %v3296
        %s3329 = smul.addr %s503, 4
        %s3330 = scalar_lea.vmem [#allocation3], %s3329
        %3331 = vst.msk [vmem:[%s3330] sm:$0xf] %vm273, %v3297
        %3332 = vst.msk [vmem:[%s3330 + $0x4] sm:$0xf] %vm273, %v3298
        %3333 = vst.msk [vmem:[%s3330 + $0x8] sm:$0xf] %vm273, %v3299
        %3334 = vst.msk [vmem:[%s3330 + $0xc] sm:$0xf] %vm273, %v3300
        %3335 = vst.msk [vmem:[%s3330 + $0x10] sm:$0xf] %vm273, %v3301
        %3336 = vst.msk [vmem:[%s3330 + $0x14] sm:$0xf] %vm273, %v3302
        %3337 = vst.msk [vmem:[%s3330 + $0x18] sm:$0xf] %vm273, %v3303
        %3338 = vst.msk [vmem:[%s3330 + $0x1c] sm:$0xf] %vm273, %v3304
        %3339 = vst.msk [vmem:[%s3330 + $0x20] sm:$0xf] %vm273, %v3305
        %3340 = vst.msk [vmem:[%s3330 + $0x24] sm:$0xf] %vm273, %v3306
        %3341 = vst.msk [vmem:[%s3330 + $0x28] sm:$0xf] %vm273, %v3307
        %3342 = vst.msk [vmem:[%s3330 + $0x2c] sm:$0xf] %vm273, %v3308
        %3343 = vst.msk [vmem:[%s3330 + $0x30] sm:$0xf] %vm273, %v3309
        %3344 = vst.msk [vmem:[%s3330 + $0x34] sm:$0xf] %vm273, %v3310
        %3345 = vst.msk [vmem:[%s3330 + $0x38] sm:$0xf] %vm273, %v3311
        %3346 = vst.msk [vmem:[%s3330 + $0x3c] sm:$0xf] %vm273, %v3312
        %v3355 = vunpack.c.l.b16 %v3191
        %v3356 = vunpack.c.h.b16 %v3191
        %v3357 = vunpack.c.l.b16 %v3192
        %v3358 = vunpack.c.h.b16 %v3192
        %v3359 = vunpack.c.l.b16 %v3193
        %v3360 = vunpack.c.h.b16 %v3193
        %v3361 = vunpack.c.l.b16 %v3194
        %v3362 = vunpack.c.h.b16 %v3194
        %v3363 = vunpack.c.l.b16 %v3195
        %v3364 = vunpack.c.h.b16 %v3195
        %v3365 = vunpack.c.l.b16 %v3196
        %v3366 = vunpack.c.h.b16 %v3196
        %v3367 = vunpack.c.l.b16 %v3197
        %v3368 = vunpack.c.h.b16 %v3197
        %v3369 = vunpack.c.l.b16 %v3198
        %v3370 = vunpack.c.h.b16 %v3198
        %v3371 = vpack.c.b16 %v3355, %v3355
        %v3372 = vpack.c.b16 %v3356, %v3356
        %v3373 = vpack.c.b16 %v3357, %v3357
        %v3374 = vpack.c.b16 %v3358, %v3358
        %v3375 = vpack.c.b16 %v3359, %v3359
        %v3376 = vpack.c.b16 %v3360, %v3360
        %v3377 = vpack.c.b16 %v3361, %v3361
        %v3378 = vpack.c.b16 %v3362, %v3362
        %v3379 = vpack.c.b16 %v3363, %v3363
        %v3380 = vpack.c.b16 %v3364, %v3364
        %v3381 = vpack.c.b16 %v3365, %v3365
        %v3382 = vpack.c.b16 %v3366, %v3366
        %v3383 = vpack.c.b16 %v3367, %v3367
        %v3384 = vpack.c.b16 %v3368, %v3368
        %v3385 = vpack.c.b16 %v3369, %v3369
        %v3386 = vpack.c.b16 %v3370, %v3370
        %s3403 = smul.addr %s653, 4
        %s3404 = scalar_lea.vmem [#allocation3], %s3403
        %3405 = vst.msk [vmem:[%s3404] sm:$0xf] %vm273, %v3371
        %3406 = vst.msk [vmem:[%s3404 + $0x4] sm:$0xf] %vm273, %v3372
        %3407 = vst.msk [vmem:[%s3404 + $0x8] sm:$0xf] %vm273, %v3373
        %3408 = vst.msk [vmem:[%s3404 + $0xc] sm:$0xf] %vm273, %v3374
        %3409 = vst.msk [vmem:[%s3404 + $0x10] sm:$0xf] %vm273, %v3375
        %3410 = vst.msk [vmem:[%s3404 + $0x14] sm:$0xf] %vm273, %v3376
        %3411 = vst.msk [vmem:[%s3404 + $0x18] sm:$0xf] %vm273, %v3377
        %3412 = vst.msk [vmem:[%s3404 + $0x1c] sm:$0xf] %vm273, %v3378
        %3413 = vst.msk [vmem:[%s3404 + $0x20] sm:$0xf] %vm273, %v3379
        %3414 = vst.msk [vmem:[%s3404 + $0x24] sm:$0xf] %vm273, %v3380
        %3415 = vst.msk [vmem:[%s3404 + $0x28] sm:$0xf] %vm273, %v3381
        %3416 = vst.msk [vmem:[%s3404 + $0x2c] sm:$0xf] %vm273, %v3382
        %3417 = vst.msk [vmem:[%s3404 + $0x30] sm:$0xf] %vm273, %v3383
        %3418 = vst.msk [vmem:[%s3404 + $0x34] sm:$0xf] %vm273, %v3384
        %3419 = vst.msk [vmem:[%s3404 + $0x38] sm:$0xf] %vm273, %v3385
        %3420 = vst.msk [vmem:[%s3404 + $0x3c] sm:$0xf] %vm273, %v3386
        %s3421 = smul.u32 8, 2
        %s3422 = smul.addr %s3421, 4
        %s3423 = scalar_lea.vmem [#allocation2], %s3422
        %v3424 = vld [vmem:[%s3423] sm:$0xf]
        %v3425 = vld [vmem:[%s3423 + $0x4] sm:$0xf]
        %v3426 = vld [vmem:[%s3423 + $0x8] sm:$0xf]
        %v3427 = vld [vmem:[%s3423 + $0xc] sm:$0xf]
        %v3428 = vld [vmem:[%s3423 + $0x10] sm:$0xf]
        %v3429 = vld [vmem:[%s3423 + $0x14] sm:$0xf]
        %v3430 = vld [vmem:[%s3423 + $0x18] sm:$0xf]
        %v3431 = vld [vmem:[%s3423 + $0x1c] sm:$0xf]
        %v3432 = vld [vmem:[%s3423 + $0x20] sm:$0xf]
        %v3433 = vld [vmem:[%s3423 + $0x24] sm:$0xf]
        %v3434 = vld [vmem:[%s3423 + $0x28] sm:$0xf]
        %v3435 = vld [vmem:[%s3423 + $0x2c] sm:$0xf]
        %v3436 = vld [vmem:[%s3423 + $0x30] sm:$0xf]
        %v3437 = vld [vmem:[%s3423 + $0x34] sm:$0xf]
        %v3438 = vld [vmem:[%s3423 + $0x38] sm:$0xf]
        %v3439 = vld [vmem:[%s3423 + $0x3c] sm:$0xf]
        %v3440 = vld [vmem:[#allocation7] sm:$0xf]
        %v3441 = vld [vmem:[#allocation7 + $0x4] sm:$0xf]
        %v3442 = vld [vmem:[#allocation7 + $0x8] sm:$0xf]
        %v3443 = vld [vmem:[#allocation7 + $0xc] sm:$0xf]
        %v3444 = vld [vmem:[#allocation7 + $0x10] sm:$0xf]
        %v3445 = vld [vmem:[#allocation7 + $0x14] sm:$0xf]
        %v3446 = vld [vmem:[#allocation7 + $0x18] sm:$0xf]
        %v3447 = vld [vmem:[#allocation7 + $0x1c] sm:$0xf]
        %s3448 = sadd.s32 %s3421, 36
        %s3449 = smul.addr %s3448, 4
        %s3450 = scalar_lea.vmem [#allocation2], %s3449
        %v3451 = vld [vmem:[%s3450] sm:$0xf]
        %v3452 = vld [vmem:[%s3450 + $0x4] sm:$0xf]
        %v3453 = vld [vmem:[%s3450 + $0x8] sm:$0xf]
        %v3454 = vld [vmem:[%s3450 + $0xc] sm:$0xf]
        %v3455 = vld [vmem:[%s3450 + $0x10] sm:$0xf]
        %v3456 = vld [vmem:[%s3450 + $0x14] sm:$0xf]
        %v3457 = vld [vmem:[%s3450 + $0x18] sm:$0xf]
        %v3458 = vld [vmem:[%s3450 + $0x1c] sm:$0xf]
        %v3459 = vld [vmem:[%s3450 + $0x20] sm:$0xf]
        %v3460 = vld [vmem:[%s3450 + $0x24] sm:$0xf]
        %v3461 = vld [vmem:[%s3450 + $0x28] sm:$0xf]
        %v3462 = vld [vmem:[%s3450 + $0x2c] sm:$0xf]
        %v3463 = vld [vmem:[%s3450 + $0x30] sm:$0xf]
        %v3464 = vld [vmem:[%s3450 + $0x34] sm:$0xf]
        %v3465 = vld [vmem:[%s3450 + $0x38] sm:$0xf]
        %v3466 = vld [vmem:[%s3450 + $0x3c] sm:$0xf]
        %v3467 = vld [vmem:[%s1074] sm:$0xf]
        %v3468 = vld [vmem:[%s1074 + $0x4] sm:$0xf]
        %v3469 = vld [vmem:[%s1074 + $0x8] sm:$0xf]
        %v3470 = vld [vmem:[%s1074 + $0xc] sm:$0xf]
        %v3471 = vld [vmem:[%s1074 + $0x10] sm:$0xf]
        %v3472 = vld [vmem:[%s1074 + $0x14] sm:$0xf]
        %v3473 = vld [vmem:[%s1074 + $0x18] sm:$0xf]
        %v3474 = vld [vmem:[%s1074 + $0x1c] sm:$0xf]
        %v3491 = vunpack.c.l.b16 %v3451
        %v3492 = vunpack.c.l.b16 %v3452
        %v3493 = vunpack.c.l.b16 %v3453
        %v3494 = vunpack.c.l.b16 %v3454
        %v3495 = vunpack.c.l.b16 %v3455
        %v3496 = vunpack.c.l.b16 %v3456
        %v3497 = vunpack.c.l.b16 %v3457
        %v3498 = vunpack.c.l.b16 %v3458
        %v3499 = vunpack.c.l.b16 %v3459
        %v3500 = vunpack.c.l.b16 %v3460
        %v3501 = vunpack.c.l.b16 %v3461
        %v3502 = vunpack.c.l.b16 %v3462
        %v3503 = vunpack.c.l.b16 %v3463
        %v3504 = vunpack.c.l.b16 %v3464
        %v3505 = vunpack.c.l.b16 %v3465
        %v3506 = vunpack.c.l.b16 %v3466
        %v3507 = vpack.c.b16 %v3492, %v3491
        %v3508 = vpack.c.b16 %v3494, %v3493
        %v3509 = vpack.c.b16 %v3496, %v3495
        %v3510 = vpack.c.b16 %v3498, %v3497
        %v3511 = vpack.c.b16 %v3500, %v3499
        %v3512 = vpack.c.b16 %v3502, %v3501
        %v3513 = vpack.c.b16 %v3504, %v3503
        %v3514 = vpack.c.b16 %v3506, %v3505
        %v3523 = vunpack.c.l.b16 %v3467
        %v3524 = vunpack.c.l.b16 %v3468
        %v3525 = vunpack.c.l.b16 %v3469
        %v3526 = vunpack.c.l.b16 %v3470
        %v3527 = vunpack.c.l.b16 %v3471
        %v3528 = vunpack.c.l.b16 %v3472
        %v3529 = vunpack.c.l.b16 %v3473
        %v3530 = vunpack.c.l.b16 %v3474
        %v3531 = vpack.c.b16 %v3524, %v3523
        %v3532 = vpack.c.b16 %v3526, %v3525
        %v3533 = vpack.c.b16 %v3528, %v3527
        %v3534 = vpack.c.b16 %v3530, %v3529
        %v3540 = vsel %vm1147, %v3507, 0
        %v3543 = vsel %vm1147, %v3508, 0
        %v3546 = vsel %vm1147, %v3509, 0
        %v3549 = vsel %vm1147, %v3510, 0
        %v3552 = vsel %vm1147, %v3511, 0
        %v3555 = vsel %vm1147, %v3512, 0
        %v3558 = vsel %vm1147, %v3513, 0
        %v3561 = vsel %vm1147, %v3514, 0
        %3563 = vmatprep.subr.bf16.mxu0 0
        %3564 = vmatpush1.bf16.msra.mxu0 0
        %3565 = vmatprep.subr.bf16.mxu0 0
        %3566 = vmatpush1.bf16.msra.mxu0 0
        %3567 = vmatprep.subr.bf16.mxu0 0
        %3568 = vmatpush1.bf16.msra.mxu0 0
        %3569 = vmatprep.subr.bf16.mxu0 0
        %3570 = vmatpush1.bf16.msra.mxu0 0
        %3571 = vmatprep.subr.bf16.mxu0 0
        %3572 = vmatpush1.bf16.msra.mxu0 %v3534
        %3573 = vmatprep.subr.bf16.mxu0 0
        %3574 = vmatpush1.bf16.msra.mxu0 %v3533
        %3575 = vmatprep.subr.bf16.mxu0 0
        %3576 = vmatpush1.bf16.msra.mxu0 %v3532
        %3577 = vmatprep.subr.bf16.mxu0 0
        %3578 = vmatpush1.bf16.msra.mxu0 %v3531
        %3579 = vmatprep.subr.bf16.mxu0 0
        %3580 = vmatpush2.bf16.msra.mxu0 0
        %3581 = vmatprep.subr.bf16.mxu0 0
        %3582 = vmatpush2.bf16.msra.mxu0 0
        %3583 = vmatprep.subr.bf16.mxu0 0
        %3584 = vmatpush2.bf16.msra.mxu0 0
        %3585 = vmatprep.subr.bf16.mxu0 0
        %3586 = vmatpush2.bf16.msra.mxu0 0
        %3587 = vmatprep.subr.bf16.mxu0 0
        %3588 = vmatpush2.bf16.msra.mxu0 0
        %3589 = vmatprep.subr.bf16.mxu0 0
        %3590 = vmatpush2.bf16.msra.mxu0 0
        %3591 = vmatprep.subr.bf16.mxu0 0
        %3592 = vmatpush2.bf16.msra.mxu0 0
        %3593 = vmatprep.subr.bf16.mxu0 0
        %3594 = vmatpush2.bf16.msra.mxu0 0
        %3595 = vmatprep.mubr.bf16.mxu0 0
        %3596 = vmatmul.mubr.bf16.gmra.mxu0 %v3540
        %v3597 = vpop.f32.mrf.mxu0
        %v3598 = vadd.f32 0.0, %v3597
        %v3599 = vpop.f32.mrf.mxu0
        %v3600 = vpop.f32.mrf.mxu0
        %v3601 = vadd.f32 0.0, %v3600
        %v3602 = vpop.f32.mrf.mxu0
        %3603 = vmatprep.mubr.bf16.mxu0 0
        %3604 = vmatmul.mubr.bf16.gmra.mxu0 %v3543
        %v3605 = vpop.f32.mrf.mxu0
        %v3606 = vadd.f32 0.0, %v3605
        %v3607 = vpop.f32.mrf.mxu0
        %v3608 = vpop.f32.mrf.mxu0
        %v3609 = vadd.f32 0.0, %v3608
        %v3610 = vpop.f32.mrf.mxu0
        %3611 = vmatprep.mubr.bf16.mxu0 0
        %3612 = vmatmul.mubr.bf16.gmra.mxu0 %v3546
        %v3613 = vpop.f32.mrf.mxu0
        %v3614 = vadd.f32 0.0, %v3613
        %v3615 = vpop.f32.mrf.mxu0
        %v3616 = vpop.f32.mrf.mxu0
        %v3617 = vadd.f32 0.0, %v3616
        %v3618 = vpop.f32.mrf.mxu0
        %3619 = vmatprep.mubr.bf16.mxu0 0
        %3620 = vmatmul.mubr.bf16.gmra.mxu0 %v3549
        %v3621 = vpop.f32.mrf.mxu0
        %v3622 = vadd.f32 0.0, %v3621
        %v3623 = vpop.f32.mrf.mxu0
        %v3624 = vpop.f32.mrf.mxu0
        %v3625 = vadd.f32 0.0, %v3624
        %v3626 = vpop.f32.mrf.mxu0
        %3627 = vmatprep.mubr.bf16.mxu0 0
        %3628 = vmatmul.mubr.bf16.gmra.mxu0 %v3552
        %v3629 = vpop.f32.mrf.mxu0
        %v3630 = vadd.f32 0.0, %v3629
        %v3631 = vpop.f32.mrf.mxu0
        %v3632 = vpop.f32.mrf.mxu0
        %v3633 = vadd.f32 0.0, %v3632
        %v3634 = vpop.f32.mrf.mxu0
        %3635 = vmatprep.mubr.bf16.mxu0 0
        %3636 = vmatmul.mubr.bf16.gmra.mxu0 %v3555
        %v3637 = vpop.f32.mrf.mxu0
        %v3638 = vadd.f32 0.0, %v3637
        %v3639 = vpop.f32.mrf.mxu0
        %v3640 = vpop.f32.mrf.mxu0
        %v3641 = vadd.f32 0.0, %v3640
        %v3642 = vpop.f32.mrf.mxu0
        %3643 = vmatprep.mubr.bf16.mxu0 0
        %3644 = vmatmul.mubr.bf16.gmra.mxu0 %v3558
        %v3645 = vpop.f32.mrf.mxu0
        %v3646 = vadd.f32 0.0, %v3645
        %v3647 = vpop.f32.mrf.mxu0
        %v3648 = vpop.f32.mrf.mxu0
        %v3649 = vadd.f32 0.0, %v3648
        %v3650 = vpop.f32.mrf.mxu0
        %3651 = vmatprep.mubr.bf16.mxu0 0
        %3652 = vmatmul.mubr.bf16.gmra.mxu0 %v3561
        %v3653 = vpop.f32.mrf.mxu0
        %v3654 = vadd.f32 0.0, %v3653
        %v3655 = vpop.f32.mrf.mxu0
        %v3656 = vpop.f32.mrf.mxu0
        %v3657 = vadd.f32 0.0, %v3656
        %v3658 = vpop.f32.mrf.mxu0
        %3659 = vdwg.mxu0
        %v3676 = vunpack.c.l.b16 %v3424
        %v3677 = vunpack.c.l.b16 %v3425
        %v3678 = vunpack.c.l.b16 %v3426
        %v3679 = vunpack.c.l.b16 %v3427
        %v3680 = vunpack.c.l.b16 %v3428
        %v3681 = vunpack.c.l.b16 %v3429
        %v3682 = vunpack.c.l.b16 %v3430
        %v3683 = vunpack.c.l.b16 %v3431
        %v3684 = vunpack.c.l.b16 %v3432
        %v3685 = vunpack.c.l.b16 %v3433
        %v3686 = vunpack.c.l.b16 %v3434
        %v3687 = vunpack.c.l.b16 %v3435
        %v3688 = vunpack.c.l.b16 %v3436
        %v3689 = vunpack.c.l.b16 %v3437
        %v3690 = vunpack.c.l.b16 %v3438
        %v3691 = vunpack.c.l.b16 %v3439
        %v3692 = vpack.c.b16 %v3677, %v3676
        %v3693 = vpack.c.b16 %v3679, %v3678
        %v3694 = vpack.c.b16 %v3681, %v3680
        %v3695 = vpack.c.b16 %v3683, %v3682
        %v3696 = vpack.c.b16 %v3685, %v3684
        %v3697 = vpack.c.b16 %v3687, %v3686
        %v3698 = vpack.c.b16 %v3689, %v3688
        %v3699 = vpack.c.b16 %v3691, %v3690
        %v3708 = vunpack.c.l.b16 %v3440
        %v3709 = vunpack.c.l.b16 %v3441
        %v3710 = vunpack.c.l.b16 %v3442
        %v3711 = vunpack.c.l.b16 %v3443
        %v3712 = vunpack.c.l.b16 %v3444
        %v3713 = vunpack.c.l.b16 %v3445
        %v3714 = vunpack.c.l.b16 %v3446
        %v3715 = vunpack.c.l.b16 %v3447
        %v3716 = vpack.c.b16 %v3709, %v3708
        %v3717 = vpack.c.b16 %v3711, %v3710
        %v3718 = vpack.c.b16 %v3713, %v3712
        %v3719 = vpack.c.b16 %v3715, %v3714
        %v3725 = vsel %vm1147, %v3692, 0
        %v3728 = vsel %vm1147, %v3693, 0
        %v3731 = vsel %vm1147, %v3694, 0
        %v3734 = vsel %vm1147, %v3695, 0
        %v3737 = vsel %vm1147, %v3696, 0
        %v3740 = vsel %vm1147, %v3697, 0
        %v3743 = vsel %vm1147, %v3698, 0
        %v3746 = vsel %vm1147, %v3699, 0
        %3748 = vmatprep.subr.bf16.mxu0 0
        %3749 = vmatpush1.bf16.msra.mxu0 0
        %3750 = vmatprep.subr.bf16.mxu0 0
        %3751 = vmatpush1.bf16.msra.mxu0 0
        %3752 = vmatprep.subr.bf16.mxu0 0
        %3753 = vmatpush1.bf16.msra.mxu0 0
        %3754 = vmatprep.subr.bf16.mxu0 0
        %3755 = vmatpush1.bf16.msra.mxu0 0
        %3756 = vmatprep.subr.bf16.mxu0 0
        %3757 = vmatpush1.bf16.msra.mxu0 %v3719
        %3758 = vmatprep.subr.bf16.mxu0 0
        %3759 = vmatpush1.bf16.msra.mxu0 %v3718
        %3760 = vmatprep.subr.bf16.mxu0 0
        %3761 = vmatpush1.bf16.msra.mxu0 %v3717
        %3762 = vmatprep.subr.bf16.mxu0 0
        %3763 = vmatpush1.bf16.msra.mxu0 %v3716
        %3764 = vmatprep.subr.bf16.mxu0 0
        %3765 = vmatpush2.bf16.msra.mxu0 0
        %3766 = vmatprep.subr.bf16.mxu0 0
        %3767 = vmatpush2.bf16.msra.mxu0 0
        %3768 = vmatprep.subr.bf16.mxu0 0
        %3769 = vmatpush2.bf16.msra.mxu0 0
        %3770 = vmatprep.subr.bf16.mxu0 0
        %3771 = vmatpush2.bf16.msra.mxu0 0
        %3772 = vmatprep.subr.bf16.mxu0 0
        %3773 = vmatpush2.bf16.msra.mxu0 0
        %3774 = vmatprep.subr.bf16.mxu0 0
        %3775 = vmatpush2.bf16.msra.mxu0 0
        %3776 = vmatprep.subr.bf16.mxu0 0
        %3777 = vmatpush2.bf16.msra.mxu0 0
        %3778 = vmatprep.subr.bf16.mxu0 0
        %3779 = vmatpush2.bf16.msra.mxu0 0
        %3780 = vmatprep.mubr.bf16.mxu0 0
        %3781 = vmatmul.mubr.bf16.gmra.mxu0 %v3725
        %v3782 = vpop.f32.mrf.mxu0
        %v3783 = vadd.f32 %v3598, %v3782
        %v3784 = vpop.f32.mrf.mxu0
        %v3785 = vpop.f32.mrf.mxu0
        %v3786 = vadd.f32 %v3601, %v3785
        %v3787 = vpop.f32.mrf.mxu0
        %3788 = vmatprep.mubr.bf16.mxu0 0
        %3789 = vmatmul.mubr.bf16.gmra.mxu0 %v3728
        %v3790 = vpop.f32.mrf.mxu0
        %v3791 = vadd.f32 %v3606, %v3790
        %v3792 = vpop.f32.mrf.mxu0
        %v3793 = vpop.f32.mrf.mxu0
        %v3794 = vadd.f32 %v3609, %v3793
        %v3795 = vpop.f32.mrf.mxu0
        %3796 = vmatprep.mubr.bf16.mxu0 0
        %3797 = vmatmul.mubr.bf16.gmra.mxu0 %v3731
        %v3798 = vpop.f32.mrf.mxu0
        %v3799 = vadd.f32 %v3614, %v3798
        %v3800 = vpop.f32.mrf.mxu0
        %v3801 = vpop.f32.mrf.mxu0
        %v3802 = vadd.f32 %v3617, %v3801
        %v3803 = vpop.f32.mrf.mxu0
        %3804 = vmatprep.mubr.bf16.mxu0 0
        %3805 = vmatmul.mubr.bf16.gmra.mxu0 %v3734
        %v3806 = vpop.f32.mrf.mxu0
        %v3807 = vadd.f32 %v3622, %v3806
        %v3808 = vpop.f32.mrf.mxu0
        %v3809 = vpop.f32.mrf.mxu0
        %v3810 = vadd.f32 %v3625, %v3809
        %v3811 = vpop.f32.mrf.mxu0
        %3812 = vmatprep.mubr.bf16.mxu0 0
        %3813 = vmatmul.mubr.bf16.gmra.mxu0 %v3737
        %v3814 = vpop.f32.mrf.mxu0
        %v3815 = vadd.f32 %v3630, %v3814
        %v3816 = vpop.f32.mrf.mxu0
        %v3817 = vpop.f32.mrf.mxu0
        %v3818 = vadd.f32 %v3633, %v3817
        %v3819 = vpop.f32.mrf.mxu0
        %3820 = vmatprep.mubr.bf16.mxu0 0
        %3821 = vmatmul.mubr.bf16.gmra.mxu0 %v3740
        %v3822 = vpop.f32.mrf.mxu0
        %v3823 = vadd.f32 %v3638, %v3822
        %v3824 = vpop.f32.mrf.mxu0
        %v3825 = vpop.f32.mrf.mxu0
        %v3826 = vadd.f32 %v3641, %v3825
        %v3827 = vpop.f32.mrf.mxu0
        %3828 = vmatprep.mubr.bf16.mxu0 0
        %3829 = vmatmul.mubr.bf16.gmra.mxu0 %v3743
        %v3830 = vpop.f32.mrf.mxu0
        %v3831 = vadd.f32 %v3646, %v3830
        %v3832 = vpop.f32.mrf.mxu0
        %v3833 = vpop.f32.mrf.mxu0
        %v3834 = vadd.f32 %v3649, %v3833
        %v3835 = vpop.f32.mrf.mxu0
        %3836 = vmatprep.mubr.bf16.mxu0 0
        %3837 = vmatmul.mubr.bf16.gmra.mxu0 %v3746
        %v3838 = vpop.f32.mrf.mxu0
        %v3839 = vadd.f32 %v3654, %v3838
        %v3840 = vpop.f32.mrf.mxu0
        %v3841 = vpop.f32.mrf.mxu0
        %v3842 = vadd.f32 %v3657, %v3841
        %v3843 = vpop.f32.mrf.mxu0
        %3844 = vdwg.mxu0
        %s3845 = sadd.s32 %s3421, 72
        %s3846 = smul.addr %s3845, 4
        %s3847 = scalar_lea.vmem [#allocation2], %s3846
        %v3848 = vld [vmem:[%s3847] sm:$0xf]
        %v3849 = vld [vmem:[%s3847 + $0x4] sm:$0xf]
        %v3850 = vld [vmem:[%s3847 + $0x8] sm:$0xf]
        %v3851 = vld [vmem:[%s3847 + $0xc] sm:$0xf]
        %v3852 = vld [vmem:[%s3847 + $0x10] sm:$0xf]
        %v3853 = vld [vmem:[%s3847 + $0x14] sm:$0xf]
        %v3854 = vld [vmem:[%s3847 + $0x18] sm:$0xf]
        %v3855 = vld [vmem:[%s3847 + $0x1c] sm:$0xf]
        %v3856 = vld [vmem:[%s3847 + $0x20] sm:$0xf]
        %v3857 = vld [vmem:[%s3847 + $0x24] sm:$0xf]
        %v3858 = vld [vmem:[%s3847 + $0x28] sm:$0xf]
        %v3859 = vld [vmem:[%s3847 + $0x2c] sm:$0xf]
        %v3860 = vld [vmem:[%s3847 + $0x30] sm:$0xf]
        %v3861 = vld [vmem:[%s3847 + $0x34] sm:$0xf]
        %v3862 = vld [vmem:[%s3847 + $0x38] sm:$0xf]
        %v3863 = vld [vmem:[%s3847 + $0x3c] sm:$0xf]
        %v3864 = vld [vmem:[%s1473] sm:$0xf]
        %v3865 = vld [vmem:[%s1473 + $0x4] sm:$0xf]
        %v3866 = vld [vmem:[%s1473 + $0x8] sm:$0xf]
        %v3867 = vld [vmem:[%s1473 + $0xc] sm:$0xf]
        %v3868 = vld [vmem:[%s1473 + $0x10] sm:$0xf]
        %v3869 = vld [vmem:[%s1473 + $0x14] sm:$0xf]
        %v3870 = vld [vmem:[%s1473 + $0x18] sm:$0xf]
        %v3871 = vld [vmem:[%s1473 + $0x1c] sm:$0xf]
        %v3888 = vunpack.c.l.b16 %v3848
        %v3889 = vunpack.c.l.b16 %v3849
        %v3890 = vunpack.c.l.b16 %v3850
        %v3891 = vunpack.c.l.b16 %v3851
        %v3892 = vunpack.c.l.b16 %v3852
        %v3893 = vunpack.c.l.b16 %v3853
        %v3894 = vunpack.c.l.b16 %v3854
        %v3895 = vunpack.c.l.b16 %v3855
        %v3896 = vunpack.c.l.b16 %v3856
        %v3897 = vunpack.c.l.b16 %v3857
        %v3898 = vunpack.c.l.b16 %v3858
        %v3899 = vunpack.c.l.b16 %v3859
        %v3900 = vunpack.c.l.b16 %v3860
        %v3901 = vunpack.c.l.b16 %v3861
        %v3902 = vunpack.c.l.b16 %v3862
        %v3903 = vunpack.c.l.b16 %v3863
        %v3904 = vpack.c.b16 %v3889, %v3888
        %v3905 = vpack.c.b16 %v3891, %v3890
        %v3906 = vpack.c.b16 %v3893, %v3892
        %v3907 = vpack.c.b16 %v3895, %v3894
        %v3908 = vpack.c.b16 %v3897, %v3896
        %v3909 = vpack.c.b16 %v3899, %v3898
        %v3910 = vpack.c.b16 %v3901, %v3900
        %v3911 = vpack.c.b16 %v3903, %v3902
        %v3920 = vunpack.c.l.b16 %v3864
        %v3921 = vunpack.c.l.b16 %v3865
        %v3922 = vunpack.c.l.b16 %v3866
        %v3923 = vunpack.c.l.b16 %v3867
        %v3924 = vunpack.c.l.b16 %v3868
        %v3925 = vunpack.c.l.b16 %v3869
        %v3926 = vunpack.c.l.b16 %v3870
        %v3927 = vunpack.c.l.b16 %v3871
        %v3928 = vpack.c.b16 %v3921, %v3920
        %v3929 = vpack.c.b16 %v3923, %v3922
        %v3930 = vpack.c.b16 %v3925, %v3924
        %v3931 = vpack.c.b16 %v3927, %v3926
        %v3937 = vsel %vm1147, %v3904, 0
        %v3940 = vsel %vm1147, %v3905, 0
        %v3943 = vsel %vm1147, %v3906, 0
        %v3946 = vsel %vm1147, %v3907, 0
        %v3949 = vsel %vm1147, %v3908, 0
        %v3952 = vsel %vm1147, %v3909, 0
        %v3955 = vsel %vm1147, %v3910, 0
        %v3958 = vsel %vm1147, %v3911, 0
        %3960 = vmatprep.subr.bf16.mxu0 0
        %3961 = vmatpush1.bf16.msra.mxu0 0
        %3962 = vmatprep.subr.bf16.mxu0 0
        %3963 = vmatpush1.bf16.msra.mxu0 0
        %3964 = vmatprep.subr.bf16.mxu0 0
        %3965 = vmatpush1.bf16.msra.mxu0 0
        %3966 = vmatprep.subr.bf16.mxu0 0
        %3967 = vmatpush1.bf16.msra.mxu0 0
        %3968 = vmatprep.subr.bf16.mxu0 0
        %3969 = vmatpush1.bf16.msra.mxu0 %v3931
        %3970 = vmatprep.subr.bf16.mxu0 0
        %3971 = vmatpush1.bf16.msra.mxu0 %v3930
        %3972 = vmatprep.subr.bf16.mxu0 0
        %3973 = vmatpush1.bf16.msra.mxu0 %v3929
        %3974 = vmatprep.subr.bf16.mxu0 0
        %3975 = vmatpush1.bf16.msra.mxu0 %v3928
        %3976 = vmatprep.subr.bf16.mxu0 0
        %3977 = vmatpush2.bf16.msra.mxu0 0
        %3978 = vmatprep.subr.bf16.mxu0 0
        %3979 = vmatpush2.bf16.msra.mxu0 0
        %3980 = vmatprep.subr.bf16.mxu0 0
        %3981 = vmatpush2.bf16.msra.mxu0 0
        %3982 = vmatprep.subr.bf16.mxu0 0
        %3983 = vmatpush2.bf16.msra.mxu0 0
        %3984 = vmatprep.subr.bf16.mxu0 0
        %3985 = vmatpush2.bf16.msra.mxu0 0
        %3986 = vmatprep.subr.bf16.mxu0 0
        %3987 = vmatpush2.bf16.msra.mxu0 0
        %3988 = vmatprep.subr.bf16.mxu0 0
        %3989 = vmatpush2.bf16.msra.mxu0 0
        %3990 = vmatprep.subr.bf16.mxu0 0
        %3991 = vmatpush2.bf16.msra.mxu0 0
        %3992 = vmatprep.mubr.bf16.mxu0 0
        %3993 = vmatmul.mubr.bf16.gmra.mxu0 %v3937
        %v3994 = vpop.f32.mrf.mxu0
        %v3995 = vadd.f32 0.0, %v3994
        %v3996 = vpop.f32.mrf.mxu0
        %v3997 = vpop.f32.mrf.mxu0
        %v3998 = vadd.f32 0.0, %v3997
        %v3999 = vpop.f32.mrf.mxu0
        %4000 = vmatprep.mubr.bf16.mxu0 0
        %4001 = vmatmul.mubr.bf16.gmra.mxu0 %v3940
        %v4002 = vpop.f32.mrf.mxu0
        %v4003 = vadd.f32 0.0, %v4002
        %v4004 = vpop.f32.mrf.mxu0
        %v4005 = vpop.f32.mrf.mxu0
        %v4006 = vadd.f32 0.0, %v4005
        %v4007 = vpop.f32.mrf.mxu0
        %4008 = vmatprep.mubr.bf16.mxu0 0
        %4009 = vmatmul.mubr.bf16.gmra.mxu0 %v3943
        %v4010 = vpop.f32.mrf.mxu0
        %v4011 = vadd.f32 0.0, %v4010
        %v4012 = vpop.f32.mrf.mxu0
        %v4013 = vpop.f32.mrf.mxu0
        %v4014 = vadd.f32 0.0, %v4013
        %v4015 = vpop.f32.mrf.mxu0
        %4016 = vmatprep.mubr.bf16.mxu0 0
        %4017 = vmatmul.mubr.bf16.gmra.mxu0 %v3946
        %v4018 = vpop.f32.mrf.mxu0
        %v4019 = vadd.f32 0.0, %v4018
        %v4020 = vpop.f32.mrf.mxu0
        %v4021 = vpop.f32.mrf.mxu0
        %v4022 = vadd.f32 0.0, %v4021
        %v4023 = vpop.f32.mrf.mxu0
        %4024 = vmatprep.mubr.bf16.mxu0 0
        %4025 = vmatmul.mubr.bf16.gmra.mxu0 %v3949
        %v4026 = vpop.f32.mrf.mxu0
        %v4027 = vadd.f32 0.0, %v4026
        %v4028 = vpop.f32.mrf.mxu0
        %v4029 = vpop.f32.mrf.mxu0
        %v4030 = vadd.f32 0.0, %v4029
        %v4031 = vpop.f32.mrf.mxu0
        %4032 = vmatprep.mubr.bf16.mxu0 0
        %4033 = vmatmul.mubr.bf16.gmra.mxu0 %v3952
        %v4034 = vpop.f32.mrf.mxu0
        %v4035 = vadd.f32 0.0, %v4034
        %v4036 = vpop.f32.mrf.mxu0
        %v4037 = vpop.f32.mrf.mxu0
        %v4038 = vadd.f32 0.0, %v4037
        %v4039 = vpop.f32.mrf.mxu0
        %4040 = vmatprep.mubr.bf16.mxu0 0
        %4041 = vmatmul.mubr.bf16.gmra.mxu0 %v3955
        %v4042 = vpop.f32.mrf.mxu0
        %v4043 = vadd.f32 0.0, %v4042
        %v4044 = vpop.f32.mrf.mxu0
        %v4045 = vpop.f32.mrf.mxu0
        %v4046 = vadd.f32 0.0, %v4045
        %v4047 = vpop.f32.mrf.mxu0
        %4048 = vmatprep.mubr.bf16.mxu0 0
        %4049 = vmatmul.mubr.bf16.gmra.mxu0 %v3958
        %v4050 = vpop.f32.mrf.mxu0
        %v4051 = vadd.f32 0.0, %v4050
        %v4052 = vpop.f32.mrf.mxu0
        %v4053 = vpop.f32.mrf.mxu0
        %v4054 = vadd.f32 0.0, %v4053
        %v4055 = vpop.f32.mrf.mxu0
        %4056 = vdwg.mxu0
        %v4057 = vadd.f32 %v3783, %v3995
        %v4058 = vadd.f32 %v3786, %v3998
        %v4059 = vadd.f32 %v3791, %v4003
        %v4060 = vadd.f32 %v3794, %v4006
        %v4061 = vadd.f32 %v3799, %v4011
        %v4062 = vadd.f32 %v3802, %v4014
        %v4063 = vadd.f32 %v3807, %v4019
        %v4064 = vadd.f32 %v3810, %v4022
        %v4065 = vadd.f32 %v3815, %v4027
        %v4066 = vadd.f32 %v3818, %v4030
        %v4067 = vadd.f32 %v3823, %v4035
        %v4068 = vadd.f32 %v3826, %v4038
        %v4069 = vadd.f32 %v3831, %v4043
        %v4070 = vadd.f32 %v3834, %v4046
        %v4071 = vadd.f32 %v3839, %v4051
        %v4072 = vadd.f32 %v3842, %v4054
        %v4073 = vld [vmem:[%s936] sm:$0xf]
        %v4074 = vld [vmem:[%s936 + $0x4] sm:$0xf]
        %v4075 = vld [vmem:[%s936 + $0x8] sm:$0xf]
        %v4076 = vld [vmem:[%s936 + $0xc] sm:$0xf]
        %v4077 = vld [vmem:[%s936 + $0x10] sm:$0xf]
        %v4078 = vld [vmem:[%s936 + $0x14] sm:$0xf]
        %v4079 = vld [vmem:[%s936 + $0x18] sm:$0xf]
        %v4080 = vld [vmem:[%s936 + $0x1c] sm:$0xf]
        %v4081 = vld [vmem:[%s936 + $0x20] sm:$0xf]
        %v4082 = vld [vmem:[%s936 + $0x24] sm:$0xf]
        %v4083 = vld [vmem:[%s936 + $0x28] sm:$0xf]
        %v4084 = vld [vmem:[%s936 + $0x2c] sm:$0xf]
        %v4085 = vld [vmem:[%s936 + $0x30] sm:$0xf]
        %v4086 = vld [vmem:[%s936 + $0x34] sm:$0xf]
        %v4087 = vld [vmem:[%s936 + $0x38] sm:$0xf]
        %v4088 = vld [vmem:[%s936 + $0x3c] sm:$0xf]
        %v4089 = vld [vmem:[%s1699] sm:$0xf]
        %v4090 = vld [vmem:[%s1699 + $0x4] sm:$0xf]
        %v4091 = vld [vmem:[%s1699 + $0x8] sm:$0xf]
        %v4092 = vld [vmem:[%s1699 + $0xc] sm:$0xf]
        %v4093 = vld [vmem:[%s1699 + $0x10] sm:$0xf]
        %v4094 = vld [vmem:[%s1699 + $0x14] sm:$0xf]
        %v4095 = vld [vmem:[%s1699 + $0x18] sm:$0xf]
        %v4096 = vld [vmem:[%s1699 + $0x1c] sm:$0xf]
        %v4113 = vunpack.c.l.b16 %v4073
        %v4114 = vunpack.c.l.b16 %v4074
        %v4115 = vunpack.c.l.b16 %v4075
        %v4116 = vunpack.c.l.b16 %v4076
        %v4117 = vunpack.c.l.b16 %v4077
        %v4118 = vunpack.c.l.b16 %v4078
        %v4119 = vunpack.c.l.b16 %v4079
        %v4120 = vunpack.c.l.b16 %v4080
        %v4121 = vunpack.c.l.b16 %v4081
        %v4122 = vunpack.c.l.b16 %v4082
        %v4123 = vunpack.c.l.b16 %v4083
        %v4124 = vunpack.c.l.b16 %v4084
        %v4125 = vunpack.c.l.b16 %v4085
        %v4126 = vunpack.c.l.b16 %v4086
        %v4127 = vunpack.c.l.b16 %v4087
        %v4128 = vunpack.c.l.b16 %v4088
        %v4129 = vpack.c.b16 %v4114, %v4113
        %v4130 = vpack.c.b16 %v4116, %v4115
        %v4131 = vpack.c.b16 %v4118, %v4117
        %v4132 = vpack.c.b16 %v4120, %v4119
        %v4133 = vpack.c.b16 %v4122, %v4121
        %v4134 = vpack.c.b16 %v4124, %v4123
        %v4135 = vpack.c.b16 %v4126, %v4125
        %v4136 = vpack.c.b16 %v4128, %v4127
        %v4145 = vunpack.c.l.b16 %v4089
        %v4146 = vunpack.c.l.b16 %v4090
        %v4147 = vunpack.c.l.b16 %v4091
        %v4148 = vunpack.c.l.b16 %v4092
        %v4149 = vunpack.c.l.b16 %v4093
        %v4150 = vunpack.c.l.b16 %v4094
        %v4151 = vunpack.c.l.b16 %v4095
        %v4152 = vunpack.c.l.b16 %v4096
        %v4153 = vpack.c.b16 %v4146, %v4145
        %v4154 = vpack.c.b16 %v4148, %v4147
        %v4155 = vpack.c.b16 %v4150, %v4149
        %v4156 = vpack.c.b16 %v4152, %v4151
        %v4162 = vsel %vm1147, %v4129, 0
        %v4165 = vsel %vm1147, %v4130, 0
        %v4168 = vsel %vm1147, %v4131, 0
        %v4171 = vsel %vm1147, %v4132, 0
        %v4174 = vsel %vm1147, %v4133, 0
        %v4177 = vsel %vm1147, %v4134, 0
        %v4180 = vsel %vm1147, %v4135, 0
        %v4183 = vsel %vm1147, %v4136, 0
        %4185 = vmatprep.subr.bf16.mxu0 0
        %4186 = vmatpush1.bf16.msra.mxu0 0
        %4187 = vmatprep.subr.bf16.mxu0 0
        %4188 = vmatpush1.bf16.msra.mxu0 0
        %4189 = vmatprep.subr.bf16.mxu0 0
        %4190 = vmatpush1.bf16.msra.mxu0 0
        %4191 = vmatprep.subr.bf16.mxu0 0
        %4192 = vmatpush1.bf16.msra.mxu0 0
        %4193 = vmatprep.subr.bf16.mxu0 0
        %4194 = vmatpush1.bf16.msra.mxu0 %v4156
        %4195 = vmatprep.subr.bf16.mxu0 0
        %4196 = vmatpush1.bf16.msra.mxu0 %v4155
        %4197 = vmatprep.subr.bf16.mxu0 0
        %4198 = vmatpush1.bf16.msra.mxu0 %v4154
        %4199 = vmatprep.subr.bf16.mxu0 0
        %4200 = vmatpush1.bf16.msra.mxu0 %v4153
        %4201 = vmatprep.subr.bf16.mxu0 0
        %4202 = vmatpush2.bf16.msra.mxu0 0
        %4203 = vmatprep.subr.bf16.mxu0 0
        %4204 = vmatpush2.bf16.msra.mxu0 0
        %4205 = vmatprep.subr.bf16.mxu0 0
        %4206 = vmatpush2.bf16.msra.mxu0 0
        %4207 = vmatprep.subr.bf16.mxu0 0
        %4208 = vmatpush2.bf16.msra.mxu0 0
        %4209 = vmatprep.subr.bf16.mxu0 0
        %4210 = vmatpush2.bf16.msra.mxu0 0
        %4211 = vmatprep.subr.bf16.mxu0 0
        %4212 = vmatpush2.bf16.msra.mxu0 0
        %4213 = vmatprep.subr.bf16.mxu0 0
        %4214 = vmatpush2.bf16.msra.mxu0 0
        %4215 = vmatprep.subr.bf16.mxu0 0
        %4216 = vmatpush2.bf16.msra.mxu0 0
        %4217 = vmatprep.mubr.bf16.mxu0 0
        %4218 = vmatmul.mubr.bf16.gmra.mxu0 %v4162
        %v4219 = vpop.f32.mrf.mxu0
        %v4220 = vadd.f32 0.0, %v4219
        %v4221 = vpop.f32.mrf.mxu0
        %v4222 = vpop.f32.mrf.mxu0
        %v4223 = vadd.f32 0.0, %v4222
        %v4224 = vpop.f32.mrf.mxu0
        %4225 = vmatprep.mubr.bf16.mxu0 0
        %4226 = vmatmul.mubr.bf16.gmra.mxu0 %v4165
        %v4227 = vpop.f32.mrf.mxu0
        %v4228 = vadd.f32 0.0, %v4227
        %v4229 = vpop.f32.mrf.mxu0
        %v4230 = vpop.f32.mrf.mxu0
        %v4231 = vadd.f32 0.0, %v4230
        %v4232 = vpop.f32.mrf.mxu0
        %4233 = vmatprep.mubr.bf16.mxu0 0
        %4234 = vmatmul.mubr.bf16.gmra.mxu0 %v4168
        %v4235 = vpop.f32.mrf.mxu0
        %v4236 = vadd.f32 0.0, %v4235
        %v4237 = vpop.f32.mrf.mxu0
        %v4238 = vpop.f32.mrf.mxu0
        %v4239 = vadd.f32 0.0, %v4238
        %v4240 = vpop.f32.mrf.mxu0
        %4241 = vmatprep.mubr.bf16.mxu0 0
        %4242 = vmatmul.mubr.bf16.gmra.mxu0 %v4171
        %v4243 = vpop.f32.mrf.mxu0
        %v4244 = vadd.f32 0.0, %v4243
        %v4245 = vpop.f32.mrf.mxu0
        %v4246 = vpop.f32.mrf.mxu0
        %v4247 = vadd.f32 0.0, %v4246
        %v4248 = vpop.f32.mrf.mxu0
        %4249 = vmatprep.mubr.bf16.mxu0 0
        %4250 = vmatmul.mubr.bf16.gmra.mxu0 %v4174
        %v4251 = vpop.f32.mrf.mxu0
        %v4252 = vadd.f32 0.0, %v4251
        %v4253 = vpop.f32.mrf.mxu0
        %v4254 = vpop.f32.mrf.mxu0
        %v4255 = vadd.f32 0.0, %v4254
        %v4256 = vpop.f32.mrf.mxu0
        %4257 = vmatprep.mubr.bf16.mxu0 0
        %4258 = vmatmul.mubr.bf16.gmra.mxu0 %v4177
        %v4259 = vpop.f32.mrf.mxu0
        %v4260 = vadd.f32 0.0, %v4259
        %v4261 = vpop.f32.mrf.mxu0
        %v4262 = vpop.f32.mrf.mxu0
        %v4263 = vadd.f32 0.0, %v4262
        %v4264 = vpop.f32.mrf.mxu0
        %4265 = vmatprep.mubr.bf16.mxu0 0
        %4266 = vmatmul.mubr.bf16.gmra.mxu0 %v4180
        %v4267 = vpop.f32.mrf.mxu0
        %v4268 = vadd.f32 0.0, %v4267
        %v4269 = vpop.f32.mrf.mxu0
        %v4270 = vpop.f32.mrf.mxu0
        %v4271 = vadd.f32 0.0, %v4270
        %v4272 = vpop.f32.mrf.mxu0
        %4273 = vmatprep.mubr.bf16.mxu0 0
        %4274 = vmatmul.mubr.bf16.gmra.mxu0 %v4183
        %v4275 = vpop.f32.mrf.mxu0
        %v4276 = vadd.f32 0.0, %v4275
        %v4277 = vpop.f32.mrf.mxu0
        %v4278 = vpop.f32.mrf.mxu0
        %v4279 = vadd.f32 0.0, %v4278
        %v4280 = vpop.f32.mrf.mxu0
        %4281 = vdwg.mxu0
        %v4282 = vadd.f32 %v4057, %v4220
        %v4283 = vadd.f32 %v4058, %v4223
        %v4284 = vadd.f32 %v4059, %v4228
        %v4285 = vadd.f32 %v4060, %v4231
        %v4286 = vadd.f32 %v4061, %v4236
        %v4287 = vadd.f32 %v4062, %v4239
        %v4288 = vadd.f32 %v4063, %v4244
        %v4289 = vadd.f32 %v4064, %v4247
        %v4290 = vadd.f32 %v4065, %v4252
        %v4291 = vadd.f32 %v4066, %v4255
        %v4292 = vadd.f32 %v4067, %v4260
        %v4293 = vadd.f32 %v4068, %v4263
        %v4294 = vadd.f32 %v4069, %v4268
        %v4295 = vadd.f32 %v4070, %v4271
        %v4296 = vadd.f32 %v4071, %v4276
        %v4297 = vadd.f32 %v4072, %v4279
        %v4298 = vld [vmem:[%s862] sm:$0xf]
        %v4299 = vld [vmem:[%s862 + $0x4] sm:$0xf]
        %v4300 = vld [vmem:[%s862 + $0x8] sm:$0xf]
        %v4301 = vld [vmem:[%s862 + $0xc] sm:$0xf]
        %v4302 = vld [vmem:[%s862 + $0x10] sm:$0xf]
        %v4303 = vld [vmem:[%s862 + $0x14] sm:$0xf]
        %v4304 = vld [vmem:[%s862 + $0x18] sm:$0xf]
        %v4305 = vld [vmem:[%s862 + $0x1c] sm:$0xf]
        %v4306 = vld [vmem:[%s862 + $0x20] sm:$0xf]
        %v4307 = vld [vmem:[%s862 + $0x24] sm:$0xf]
        %v4308 = vld [vmem:[%s862 + $0x28] sm:$0xf]
        %v4309 = vld [vmem:[%s862 + $0x2c] sm:$0xf]
        %v4310 = vld [vmem:[%s862 + $0x30] sm:$0xf]
        %v4311 = vld [vmem:[%s862 + $0x34] sm:$0xf]
        %v4312 = vld [vmem:[%s862 + $0x38] sm:$0xf]
        %v4313 = vld [vmem:[%s862 + $0x3c] sm:$0xf]
        %v4314 = vld [vmem:[%s1925] sm:$0xf]
        %v4315 = vld [vmem:[%s1925 + $0x4] sm:$0xf]
        %v4316 = vld [vmem:[%s1925 + $0x8] sm:$0xf]
        %v4317 = vld [vmem:[%s1925 + $0xc] sm:$0xf]
        %v4318 = vld [vmem:[%s1925 + $0x10] sm:$0xf]
        %v4319 = vld [vmem:[%s1925 + $0x14] sm:$0xf]
        %v4320 = vld [vmem:[%s1925 + $0x18] sm:$0xf]
        %v4321 = vld [vmem:[%s1925 + $0x1c] sm:$0xf]
        %v4338 = vunpack.c.l.b16 %v4298
        %v4339 = vunpack.c.l.b16 %v4299
        %v4340 = vunpack.c.l.b16 %v4300
        %v4341 = vunpack.c.l.b16 %v4301
        %v4342 = vunpack.c.l.b16 %v4302
        %v4343 = vunpack.c.l.b16 %v4303
        %v4344 = vunpack.c.l.b16 %v4304
        %v4345 = vunpack.c.l.b16 %v4305
        %v4346 = vunpack.c.l.b16 %v4306
        %v4347 = vunpack.c.l.b16 %v4307
        %v4348 = vunpack.c.l.b16 %v4308
        %v4349 = vunpack.c.l.b16 %v4309
        %v4350 = vunpack.c.l.b16 %v4310
        %v4351 = vunpack.c.l.b16 %v4311
        %v4352 = vunpack.c.l.b16 %v4312
        %v4353 = vunpack.c.l.b16 %v4313
        %v4354 = vpack.c.b16 %v4339, %v4338
        %v4355 = vpack.c.b16 %v4341, %v4340
        %v4356 = vpack.c.b16 %v4343, %v4342
        %v4357 = vpack.c.b16 %v4345, %v4344
        %v4358 = vpack.c.b16 %v4347, %v4346
        %v4359 = vpack.c.b16 %v4349, %v4348
        %v4360 = vpack.c.b16 %v4351, %v4350
        %v4361 = vpack.c.b16 %v4353, %v4352
        %v4370 = vunpack.c.l.b16 %v4314
        %v4371 = vunpack.c.l.b16 %v4315
        %v4372 = vunpack.c.l.b16 %v4316
        %v4373 = vunpack.c.l.b16 %v4317
        %v4374 = vunpack.c.l.b16 %v4318
        %v4375 = vunpack.c.l.b16 %v4319
        %v4376 = vunpack.c.l.b16 %v4320
        %v4377 = vunpack.c.l.b16 %v4321
        %v4378 = vpack.c.b16 %v4371, %v4370
        %v4379 = vpack.c.b16 %v4373, %v4372
        %v4380 = vpack.c.b16 %v4375, %v4374
        %v4381 = vpack.c.b16 %v4377, %v4376
        %v4387 = vsel %vm1147, %v4354, 0
        %v4390 = vsel %vm1147, %v4355, 0
        %v4393 = vsel %vm1147, %v4356, 0
        %v4396 = vsel %vm1147, %v4357, 0
        %v4399 = vsel %vm1147, %v4358, 0
        %v4402 = vsel %vm1147, %v4359, 0
        %v4405 = vsel %vm1147, %v4360, 0
        %v4408 = vsel %vm1147, %v4361, 0
        %4410 = vmatprep.subr.bf16.mxu0 0
        %4411 = vmatpush1.bf16.msra.mxu0 0
        %4412 = vmatprep.subr.bf16.mxu0 0
        %4413 = vmatpush1.bf16.msra.mxu0 0
        %4414 = vmatprep.subr.bf16.mxu0 0
        %4415 = vmatpush1.bf16.msra.mxu0 0
        %4416 = vmatprep.subr.bf16.mxu0 0
        %4417 = vmatpush1.bf16.msra.mxu0 0
        %4418 = vmatprep.subr.bf16.mxu0 0
        %4419 = vmatpush1.bf16.msra.mxu0 %v4381
        %4420 = vmatprep.subr.bf16.mxu0 0
        %4421 = vmatpush1.bf16.msra.mxu0 %v4380
        %4422 = vmatprep.subr.bf16.mxu0 0
        %4423 = vmatpush1.bf16.msra.mxu0 %v4379
        %4424 = vmatprep.subr.bf16.mxu0 0
        %4425 = vmatpush1.bf16.msra.mxu0 %v4378
        %4426 = vmatprep.subr.bf16.mxu0 0
        %4427 = vmatpush2.bf16.msra.mxu0 0
        %4428 = vmatprep.subr.bf16.mxu0 0
        %4429 = vmatpush2.bf16.msra.mxu0 0
        %4430 = vmatprep.subr.bf16.mxu0 0
        %4431 = vmatpush2.bf16.msra.mxu0 0
        %4432 = vmatprep.subr.bf16.mxu0 0
        %4433 = vmatpush2.bf16.msra.mxu0 0
        %4434 = vmatprep.subr.bf16.mxu0 0
        %4435 = vmatpush2.bf16.msra.mxu0 0
        %4436 = vmatprep.subr.bf16.mxu0 0
        %4437 = vmatpush2.bf16.msra.mxu0 0
        %4438 = vmatprep.subr.bf16.mxu0 0
        %4439 = vmatpush2.bf16.msra.mxu0 0
        %4440 = vmatprep.subr.bf16.mxu0 0
        %4441 = vmatpush2.bf16.msra.mxu0 0
        %4442 = vmatprep.mubr.bf16.mxu0 0
        %4443 = vmatmul.mubr.bf16.gmra.mxu0 %v4387
        %v4444 = vpop.f32.mrf.mxu0
        %v4445 = vadd.f32 0.0, %v4444
        %v4446 = vpop.f32.mrf.mxu0
        %v4447 = vpop.f32.mrf.mxu0
        %v4448 = vadd.f32 0.0, %v4447
        %v4449 = vpop.f32.mrf.mxu0
        %4450 = vmatprep.mubr.bf16.mxu0 0
        %4451 = vmatmul.mubr.bf16.gmra.mxu0 %v4390
        %v4452 = vpop.f32.mrf.mxu0
        %v4453 = vadd.f32 0.0, %v4452
        %v4454 = vpop.f32.mrf.mxu0
        %v4455 = vpop.f32.mrf.mxu0
        %v4456 = vadd.f32 0.0, %v4455
        %v4457 = vpop.f32.mrf.mxu0
        %4458 = vmatprep.mubr.bf16.mxu0 0
        %4459 = vmatmul.mubr.bf16.gmra.mxu0 %v4393
        %v4460 = vpop.f32.mrf.mxu0
        %v4461 = vadd.f32 0.0, %v4460
        %v4462 = vpop.f32.mrf.mxu0
        %v4463 = vpop.f32.mrf.mxu0
        %v4464 = vadd.f32 0.0, %v4463
        %v4465 = vpop.f32.mrf.mxu0
        %4466 = vmatprep.mubr.bf16.mxu0 0
        %4467 = vmatmul.mubr.bf16.gmra.mxu0 %v4396
        %v4468 = vpop.f32.mrf.mxu0
        %v4469 = vadd.f32 0.0, %v4468
        %v4470 = vpop.f32.mrf.mxu0
        %v4471 = vpop.f32.mrf.mxu0
        %v4472 = vadd.f32 0.0, %v4471
        %v4473 = vpop.f32.mrf.mxu0
        %4474 = vmatprep.mubr.bf16.mxu0 0
        %4475 = vmatmul.mubr.bf16.gmra.mxu0 %v4399
        %v4476 = vpop.f32.mrf.mxu0
        %v4477 = vadd.f32 0.0, %v4476
        %v4478 = vpop.f32.mrf.mxu0
        %v4479 = vpop.f32.mrf.mxu0
        %v4480 = vadd.f32 0.0, %v4479
        %v4481 = vpop.f32.mrf.mxu0
        %4482 = vmatprep.mubr.bf16.mxu0 0
        %4483 = vmatmul.mubr.bf16.gmra.mxu0 %v4402
        %v4484 = vpop.f32.mrf.mxu0
        %v4485 = vadd.f32 0.0, %v4484
        %v4486 = vpop.f32.mrf.mxu0
        %v4487 = vpop.f32.mrf.mxu0
        %v4488 = vadd.f32 0.0, %v4487
        %v4489 = vpop.f32.mrf.mxu0
        %4490 = vmatprep.mubr.bf16.mxu0 0
        %4491 = vmatmul.mubr.bf16.gmra.mxu0 %v4405
        %v4492 = vpop.f32.mrf.mxu0
        %v4493 = vadd.f32 0.0, %v4492
        %v4494 = vpop.f32.mrf.mxu0
        %v4495 = vpop.f32.mrf.mxu0
        %v4496 = vadd.f32 0.0, %v4495
        %v4497 = vpop.f32.mrf.mxu0
        %4498 = vmatprep.mubr.bf16.mxu0 0
        %4499 = vmatmul.mubr.bf16.gmra.mxu0 %v4408
        %v4500 = vpop.f32.mrf.mxu0
        %v4501 = vadd.f32 0.0, %v4500
        %v4502 = vpop.f32.mrf.mxu0
        %v4503 = vpop.f32.mrf.mxu0
        %v4504 = vadd.f32 0.0, %v4503
        %v4505 = vpop.f32.mrf.mxu0
        %4506 = vdwg.mxu0
        %v4507 = vadd.f32 %v4282, %v4445
        %v4508 = vadd.f32 %v4283, %v4448
        %v4509 = vadd.f32 %v4284, %v4453
        %v4510 = vadd.f32 %v4285, %v4456
        %v4511 = vadd.f32 %v4286, %v4461
        %v4512 = vadd.f32 %v4287, %v4464
        %v4513 = vadd.f32 %v4288, %v4469
        %v4514 = vadd.f32 %v4289, %v4472
        %v4515 = vadd.f32 %v4290, %v4477
        %v4516 = vadd.f32 %v4291, %v4480
        %v4517 = vadd.f32 %v4292, %v4485
        %v4518 = vadd.f32 %v4293, %v4488
        %v4519 = vadd.f32 %v4294, %v4493
        %v4520 = vadd.f32 %v4295, %v4496
        %v4521 = vadd.f32 %v4296, %v4501
        %v4522 = vadd.f32 %v4297, %v4504
        %v4523 = vld [vmem:[%s1011] sm:$0xf]
        %v4524 = vld [vmem:[%s1011 + $0x4] sm:$0xf]
        %v4525 = vld [vmem:[%s1011 + $0x8] sm:$0xf]
        %v4526 = vld [vmem:[%s1011 + $0xc] sm:$0xf]
        %v4527 = vld [vmem:[%s1011 + $0x10] sm:$0xf]
        %v4528 = vld [vmem:[%s1011 + $0x14] sm:$0xf]
        %v4529 = vld [vmem:[%s1011 + $0x18] sm:$0xf]
        %v4530 = vld [vmem:[%s1011 + $0x1c] sm:$0xf]
        %v4531 = vld [vmem:[%s1011 + $0x20] sm:$0xf]
        %v4532 = vld [vmem:[%s1011 + $0x24] sm:$0xf]
        %v4533 = vld [vmem:[%s1011 + $0x28] sm:$0xf]
        %v4534 = vld [vmem:[%s1011 + $0x2c] sm:$0xf]
        %v4535 = vld [vmem:[%s1011 + $0x30] sm:$0xf]
        %v4536 = vld [vmem:[%s1011 + $0x34] sm:$0xf]
        %v4537 = vld [vmem:[%s1011 + $0x38] sm:$0xf]
        %v4538 = vld [vmem:[%s1011 + $0x3c] sm:$0xf]
        %v4539 = vld [vmem:[%s2151] sm:$0xf]
        %v4540 = vld [vmem:[%s2151 + $0x4] sm:$0xf]
        %v4541 = vld [vmem:[%s2151 + $0x8] sm:$0xf]
        %v4542 = vld [vmem:[%s2151 + $0xc] sm:$0xf]
        %v4543 = vld [vmem:[%s2151 + $0x10] sm:$0xf]
        %v4544 = vld [vmem:[%s2151 + $0x14] sm:$0xf]
        %v4545 = vld [vmem:[%s2151 + $0x18] sm:$0xf]
        %v4546 = vld [vmem:[%s2151 + $0x1c] sm:$0xf]
        %v4563 = vunpack.c.l.b16 %v4523
        %v4564 = vunpack.c.l.b16 %v4524
        %v4565 = vunpack.c.l.b16 %v4525
        %v4566 = vunpack.c.l.b16 %v4526
        %v4567 = vunpack.c.l.b16 %v4527
        %v4568 = vunpack.c.l.b16 %v4528
        %v4569 = vunpack.c.l.b16 %v4529
        %v4570 = vunpack.c.l.b16 %v4530
        %v4571 = vunpack.c.l.b16 %v4531
        %v4572 = vunpack.c.l.b16 %v4532
        %v4573 = vunpack.c.l.b16 %v4533
        %v4574 = vunpack.c.l.b16 %v4534
        %v4575 = vunpack.c.l.b16 %v4535
        %v4576 = vunpack.c.l.b16 %v4536
        %v4577 = vunpack.c.l.b16 %v4537
        %v4578 = vunpack.c.l.b16 %v4538
        %v4579 = vpack.c.b16 %v4564, %v4563
        %v4580 = vpack.c.b16 %v4566, %v4565
        %v4581 = vpack.c.b16 %v4568, %v4567
        %v4582 = vpack.c.b16 %v4570, %v4569
        %v4583 = vpack.c.b16 %v4572, %v4571
        %v4584 = vpack.c.b16 %v4574, %v4573
        %v4585 = vpack.c.b16 %v4576, %v4575
        %v4586 = vpack.c.b16 %v4578, %v4577
        %v4595 = vunpack.c.l.b16 %v4539
        %v4596 = vunpack.c.l.b16 %v4540
        %v4597 = vunpack.c.l.b16 %v4541
        %v4598 = vunpack.c.l.b16 %v4542
        %v4599 = vunpack.c.l.b16 %v4543
        %v4600 = vunpack.c.l.b16 %v4544
        %v4601 = vunpack.c.l.b16 %v4545
        %v4602 = vunpack.c.l.b16 %v4546
        %v4603 = vpack.c.b16 %v4596, %v4595
        %v4604 = vpack.c.b16 %v4598, %v4597
        %v4605 = vpack.c.b16 %v4600, %v4599
        %v4606 = vpack.c.b16 %v4602, %v4601
        %v4612 = vsel %vm1147, %v4579, 0
        %v4615 = vsel %vm1147, %v4580, 0
        %v4618 = vsel %vm1147, %v4581, 0
        %v4621 = vsel %vm1147, %v4582, 0
        %v4624 = vsel %vm1147, %v4583, 0
        %v4627 = vsel %vm1147, %v4584, 0
        %v4630 = vsel %vm1147, %v4585, 0
        %v4633 = vsel %vm1147, %v4586, 0
        %4635 = vmatprep.subr.bf16.mxu0 0
        %4636 = vmatpush1.bf16.msra.mxu0 0
        %4637 = vmatprep.subr.bf16.mxu0 0
        %4638 = vmatpush1.bf16.msra.mxu0 0
        %4639 = vmatprep.subr.bf16.mxu0 0
        %4640 = vmatpush1.bf16.msra.mxu0 0
        %4641 = vmatprep.subr.bf16.mxu0 0
        %4642 = vmatpush1.bf16.msra.mxu0 0
        %4643 = vmatprep.subr.bf16.mxu0 0
        %4644 = vmatpush1.bf16.msra.mxu0 %v4606
        %4645 = vmatprep.subr.bf16.mxu0 0
        %4646 = vmatpush1.bf16.msra.mxu0 %v4605
        %4647 = vmatprep.subr.bf16.mxu0 0
        %4648 = vmatpush1.bf16.msra.mxu0 %v4604
        %4649 = vmatprep.subr.bf16.mxu0 0
        %4650 = vmatpush1.bf16.msra.mxu0 %v4603
        %4651 = vmatprep.subr.bf16.mxu0 0
        %4652 = vmatpush2.bf16.msra.mxu0 0
        %4653 = vmatprep.subr.bf16.mxu0 0
        %4654 = vmatpush2.bf16.msra.mxu0 0
        %4655 = vmatprep.subr.bf16.mxu0 0
        %4656 = vmatpush2.bf16.msra.mxu0 0
        %4657 = vmatprep.subr.bf16.mxu0 0
        %4658 = vmatpush2.bf16.msra.mxu0 0
        %4659 = vmatprep.subr.bf16.mxu0 0
        %4660 = vmatpush2.bf16.msra.mxu0 0
        %4661 = vmatprep.subr.bf16.mxu0 0
        %4662 = vmatpush2.bf16.msra.mxu0 0
        %4663 = vmatprep.subr.bf16.mxu0 0
        %4664 = vmatpush2.bf16.msra.mxu0 0
        %4665 = vmatprep.subr.bf16.mxu0 0
        %4666 = vmatpush2.bf16.msra.mxu0 0
        %4667 = vmatprep.mubr.bf16.mxu0 0
        %4668 = vmatmul.mubr.bf16.gmra.mxu0 %v4612
        %v4669 = vpop.f32.mrf.mxu0
        %v4670 = vadd.f32 0.0, %v4669
        %v4671 = vpop.f32.mrf.mxu0
        %v4672 = vpop.f32.mrf.mxu0
        %v4673 = vadd.f32 0.0, %v4672
        %v4674 = vpop.f32.mrf.mxu0
        %4675 = vmatprep.mubr.bf16.mxu0 0
        %4676 = vmatmul.mubr.bf16.gmra.mxu0 %v4615
        %v4677 = vpop.f32.mrf.mxu0
        %v4678 = vadd.f32 0.0, %v4677
        %v4679 = vpop.f32.mrf.mxu0
        %v4680 = vpop.f32.mrf.mxu0
        %v4681 = vadd.f32 0.0, %v4680
        %v4682 = vpop.f32.mrf.mxu0
        %4683 = vmatprep.mubr.bf16.mxu0 0
        %4684 = vmatmul.mubr.bf16.gmra.mxu0 %v4618
        %v4685 = vpop.f32.mrf.mxu0
        %v4686 = vadd.f32 0.0, %v4685
        %v4687 = vpop.f32.mrf.mxu0
        %v4688 = vpop.f32.mrf.mxu0
        %v4689 = vadd.f32 0.0, %v4688
        %v4690 = vpop.f32.mrf.mxu0
        %4691 = vmatprep.mubr.bf16.mxu0 0
        %4692 = vmatmul.mubr.bf16.gmra.mxu0 %v4621
        %v4693 = vpop.f32.mrf.mxu0
        %v4694 = vadd.f32 0.0, %v4693
        %v4695 = vpop.f32.mrf.mxu0
        %v4696 = vpop.f32.mrf.mxu0
        %v4697 = vadd.f32 0.0, %v4696
        %v4698 = vpop.f32.mrf.mxu0
        %4699 = vmatprep.mubr.bf16.mxu0 0
        %4700 = vmatmul.mubr.bf16.gmra.mxu0 %v4624
        %v4701 = vpop.f32.mrf.mxu0
        %v4702 = vadd.f32 0.0, %v4701
        %v4703 = vpop.f32.mrf.mxu0
        %v4704 = vpop.f32.mrf.mxu0
        %v4705 = vadd.f32 0.0, %v4704
        %v4706 = vpop.f32.mrf.mxu0
        %4707 = vmatprep.mubr.bf16.mxu0 0
        %4708 = vmatmul.mubr.bf16.gmra.mxu0 %v4627
        %v4709 = vpop.f32.mrf.mxu0
        %v4710 = vadd.f32 0.0, %v4709
        %v4711 = vpop.f32.mrf.mxu0
        %v4712 = vpop.f32.mrf.mxu0
        %v4713 = vadd.f32 0.0, %v4712
        %v4714 = vpop.f32.mrf.mxu0
        %4715 = vmatprep.mubr.bf16.mxu0 0
        %4716 = vmatmul.mubr.bf16.gmra.mxu0 %v4630
        %v4717 = vpop.f32.mrf.mxu0
        %v4718 = vadd.f32 0.0, %v4717
        %v4719 = vpop.f32.mrf.mxu0
        %v4720 = vpop.f32.mrf.mxu0
        %v4721 = vadd.f32 0.0, %v4720
        %v4722 = vpop.f32.mrf.mxu0
        %4723 = vmatprep.mubr.bf16.mxu0 0
        %4724 = vmatmul.mubr.bf16.gmra.mxu0 %v4633
        %v4725 = vpop.f32.mrf.mxu0
        %v4726 = vadd.f32 0.0, %v4725
        %v4727 = vpop.f32.mrf.mxu0
        %v4728 = vpop.f32.mrf.mxu0
        %v4729 = vadd.f32 0.0, %v4728
        %v4730 = vpop.f32.mrf.mxu0
        %4731 = vdwg.mxu0
        %v4732 = vadd.f32 %v4507, %v4670
        %v4733 = vadd.f32 %v4508, %v4673
        %v4734 = vadd.f32 %v4509, %v4678
        %v4735 = vadd.f32 %v4510, %v4681
        %v4736 = vadd.f32 %v4511, %v4686
        %v4737 = vadd.f32 %v4512, %v4689
        %v4738 = vadd.f32 %v4513, %v4694
        %v4739 = vadd.f32 %v4514, %v4697
        %v4740 = vadd.f32 %v4515, %v4702
        %v4741 = vadd.f32 %v4516, %v4705
        %v4742 = vadd.f32 %v4517, %v4710
        %v4743 = vadd.f32 %v4518, %v4713
        %v4744 = vadd.f32 %v4519, %v4718
        %v4745 = vadd.f32 %v4520, %v4721
        %v4746 = vadd.f32 %v4521, %v4726
        %v4747 = vadd.f32 %v4522, %v4729
        %s4748 = sadd.s32 8, 2
        %s4749 = smul.u32 %s4748, 2
        %s4750 = smul.addr %s4749, 4
        %s4751 = scalar_lea.vmem [#allocation2], %s4750
        %v4752 = vld [vmem:[%s4751] sm:$0xf]
        %v4753 = vld [vmem:[%s4751 + $0x4] sm:$0xf]
        %v4754 = vld [vmem:[%s4751 + $0x8] sm:$0xf]
        %v4755 = vld [vmem:[%s4751 + $0xc] sm:$0xf]
        %v4756 = vld [vmem:[%s4751 + $0x10] sm:$0xf]
        %v4757 = vld [vmem:[%s4751 + $0x14] sm:$0xf]
        %v4758 = vld [vmem:[%s4751 + $0x18] sm:$0xf]
        %v4759 = vld [vmem:[%s4751 + $0x1c] sm:$0xf]
        %v4760 = vld [vmem:[%s4751 + $0x20] sm:$0xf]
        %v4761 = vld [vmem:[%s4751 + $0x24] sm:$0xf]
        %v4762 = vld [vmem:[%s4751 + $0x28] sm:$0xf]
        %v4763 = vld [vmem:[%s4751 + $0x2c] sm:$0xf]
        %v4764 = vld [vmem:[%s4751 + $0x30] sm:$0xf]
        %v4765 = vld [vmem:[%s4751 + $0x34] sm:$0xf]
        %v4766 = vld [vmem:[%s4751 + $0x38] sm:$0xf]
        %v4767 = vld [vmem:[%s4751 + $0x3c] sm:$0xf]
        %v4768 = vld [vmem:[%s2381] sm:$0xf]
        %v4769 = vld [vmem:[%s2381 + $0x4] sm:$0xf]
        %v4770 = vld [vmem:[%s2381 + $0x8] sm:$0xf]
        %v4771 = vld [vmem:[%s2381 + $0xc] sm:$0xf]
        %v4772 = vld [vmem:[%s2381 + $0x10] sm:$0xf]
        %v4773 = vld [vmem:[%s2381 + $0x14] sm:$0xf]
        %v4774 = vld [vmem:[%s2381 + $0x18] sm:$0xf]
        %v4775 = vld [vmem:[%s2381 + $0x1c] sm:$0xf]
        %v4792 = vunpack.c.l.b16 %v4752
        %v4793 = vunpack.c.l.b16 %v4753
        %v4794 = vunpack.c.l.b16 %v4754
        %v4795 = vunpack.c.l.b16 %v4755
        %v4796 = vunpack.c.l.b16 %v4756
        %v4797 = vunpack.c.l.b16 %v4757
        %v4798 = vunpack.c.l.b16 %v4758
        %v4799 = vunpack.c.l.b16 %v4759
        %v4800 = vunpack.c.l.b16 %v4760
        %v4801 = vunpack.c.l.b16 %v4761
        %v4802 = vunpack.c.l.b16 %v4762
        %v4803 = vunpack.c.l.b16 %v4763
        %v4804 = vunpack.c.l.b16 %v4764
        %v4805 = vunpack.c.l.b16 %v4765
        %v4806 = vunpack.c.l.b16 %v4766
        %v4807 = vunpack.c.l.b16 %v4767
        %v4808 = vpack.c.b16 %v4793, %v4792
        %v4809 = vpack.c.b16 %v4795, %v4794
        %v4810 = vpack.c.b16 %v4797, %v4796
        %v4811 = vpack.c.b16 %v4799, %v4798
        %v4812 = vpack.c.b16 %v4801, %v4800
        %v4813 = vpack.c.b16 %v4803, %v4802
        %v4814 = vpack.c.b16 %v4805, %v4804
        %v4815 = vpack.c.b16 %v4807, %v4806
        %v4824 = vunpack.c.l.b16 %v4768
        %v4825 = vunpack.c.l.b16 %v4769
        %v4826 = vunpack.c.l.b16 %v4770
        %v4827 = vunpack.c.l.b16 %v4771
        %v4828 = vunpack.c.l.b16 %v4772
        %v4829 = vunpack.c.l.b16 %v4773
        %v4830 = vunpack.c.l.b16 %v4774
        %v4831 = vunpack.c.l.b16 %v4775
        %v4832 = vpack.c.b16 %v4825, %v4824
        %v4833 = vpack.c.b16 %v4827, %v4826
        %v4834 = vpack.c.b16 %v4829, %v4828
        %v4835 = vpack.c.b16 %v4831, %v4830
        %v4841 = vsel %vm1147, %v4808, 0
        %v4844 = vsel %vm1147, %v4809, 0
        %v4847 = vsel %vm1147, %v4810, 0
        %v4850 = vsel %vm1147, %v4811, 0
        %v4853 = vsel %vm1147, %v4812, 0
        %v4856 = vsel %vm1147, %v4813, 0
        %v4859 = vsel %vm1147, %v4814, 0
        %v4862 = vsel %vm1147, %v4815, 0
        %4864 = vmatprep.subr.bf16.mxu0 0
        %4865 = vmatpush1.bf16.msra.mxu0 0
        %4866 = vmatprep.subr.bf16.mxu0 0
        %4867 = vmatpush1.bf16.msra.mxu0 0
        %4868 = vmatprep.subr.bf16.mxu0 0
        %4869 = vmatpush1.bf16.msra.mxu0 0
        %4870 = vmatprep.subr.bf16.mxu0 0
        %4871 = vmatpush1.bf16.msra.mxu0 0
        %4872 = vmatprep.subr.bf16.mxu0 0
        %4873 = vmatpush1.bf16.msra.mxu0 %v4835
        %4874 = vmatprep.subr.bf16.mxu0 0
        %4875 = vmatpush1.bf16.msra.mxu0 %v4834
        %4876 = vmatprep.subr.bf16.mxu0 0
        %4877 = vmatpush1.bf16.msra.mxu0 %v4833
        %4878 = vmatprep.subr.bf16.mxu0 0
        %4879 = vmatpush1.bf16.msra.mxu0 %v4832
        %4880 = vmatprep.subr.bf16.mxu0 0
        %4881 = vmatpush2.bf16.msra.mxu0 0
        %4882 = vmatprep.subr.bf16.mxu0 0
        %4883 = vmatpush2.bf16.msra.mxu0 0
        %4884 = vmatprep.subr.bf16.mxu0 0
        %4885 = vmatpush2.bf16.msra.mxu0 0
        %4886 = vmatprep.subr.bf16.mxu0 0
        %4887 = vmatpush2.bf16.msra.mxu0 0
        %4888 = vmatprep.subr.bf16.mxu0 0
        %4889 = vmatpush2.bf16.msra.mxu0 0
        %4890 = vmatprep.subr.bf16.mxu0 0
        %4891 = vmatpush2.bf16.msra.mxu0 0
        %4892 = vmatprep.subr.bf16.mxu0 0
        %4893 = vmatpush2.bf16.msra.mxu0 0
        %4894 = vmatprep.subr.bf16.mxu0 0
        %4895 = vmatpush2.bf16.msra.mxu0 0
        %4896 = vmatprep.mubr.bf16.mxu0 0
        %4897 = vmatmul.mubr.bf16.gmra.mxu0 %v4841
        %v4898 = vpop.f32.mrf.mxu0
        %v4899 = vadd.f32 0.0, %v4898
        %v4900 = vpop.f32.mrf.mxu0
        %v4901 = vpop.f32.mrf.mxu0
        %v4902 = vadd.f32 0.0, %v4901
        %v4903 = vpop.f32.mrf.mxu0
        %4904 = vmatprep.mubr.bf16.mxu0 0
        %4905 = vmatmul.mubr.bf16.gmra.mxu0 %v4844
        %v4906 = vpop.f32.mrf.mxu0
        %v4907 = vadd.f32 0.0, %v4906
        %v4908 = vpop.f32.mrf.mxu0
        %v4909 = vpop.f32.mrf.mxu0
        %v4910 = vadd.f32 0.0, %v4909
        %v4911 = vpop.f32.mrf.mxu0
        %4912 = vmatprep.mubr.bf16.mxu0 0
        %4913 = vmatmul.mubr.bf16.gmra.mxu0 %v4847
        %v4914 = vpop.f32.mrf.mxu0
        %v4915 = vadd.f32 0.0, %v4914
        %v4916 = vpop.f32.mrf.mxu0
        %v4917 = vpop.f32.mrf.mxu0
        %v4918 = vadd.f32 0.0, %v4917
        %v4919 = vpop.f32.mrf.mxu0
        %4920 = vmatprep.mubr.bf16.mxu0 0
        %4921 = vmatmul.mubr.bf16.gmra.mxu0 %v4850
        %v4922 = vpop.f32.mrf.mxu0
        %v4923 = vadd.f32 0.0, %v4922
        %v4924 = vpop.f32.mrf.mxu0
        %v4925 = vpop.f32.mrf.mxu0
        %v4926 = vadd.f32 0.0, %v4925
        %v4927 = vpop.f32.mrf.mxu0
        %4928 = vmatprep.mubr.bf16.mxu0 0
        %4929 = vmatmul.mubr.bf16.gmra.mxu0 %v4853
        %v4930 = vpop.f32.mrf.mxu0
        %v4931 = vadd.f32 0.0, %v4930
        %v4932 = vpop.f32.mrf.mxu0
        %v4933 = vpop.f32.mrf.mxu0
        %v4934 = vadd.f32 0.0, %v4933
        %v4935 = vpop.f32.mrf.mxu0
        %4936 = vmatprep.mubr.bf16.mxu0 0
        %4937 = vmatmul.mubr.bf16.gmra.mxu0 %v4856
        %v4938 = vpop.f32.mrf.mxu0
        %v4939 = vadd.f32 0.0, %v4938
        %v4940 = vpop.f32.mrf.mxu0
        %v4941 = vpop.f32.mrf.mxu0
        %v4942 = vadd.f32 0.0, %v4941
        %v4943 = vpop.f32.mrf.mxu0
        %4944 = vmatprep.mubr.bf16.mxu0 0
        %4945 = vmatmul.mubr.bf16.gmra.mxu0 %v4859
        %v4946 = vpop.f32.mrf.mxu0
        %v4947 = vadd.f32 0.0, %v4946
        %v4948 = vpop.f32.mrf.mxu0
        %v4949 = vpop.f32.mrf.mxu0
        %v4950 = vadd.f32 0.0, %v4949
        %v4951 = vpop.f32.mrf.mxu0
        %4952 = vmatprep.mubr.bf16.mxu0 0
        %4953 = vmatmul.mubr.bf16.gmra.mxu0 %v4862
        %v4954 = vpop.f32.mrf.mxu0
        %v4955 = vadd.f32 0.0, %v4954
        %v4956 = vpop.f32.mrf.mxu0
        %v4957 = vpop.f32.mrf.mxu0
        %v4958 = vadd.f32 0.0, %v4957
        %v4959 = vpop.f32.mrf.mxu0
        %4960 = vdwg.mxu0
        %v4961 = vadd.f32 %v4732, %v4899
        %v4962 = vadd.f32 %v4733, %v4902
        %v4963 = vadd.f32 %v4734, %v4907
        %v4964 = vadd.f32 %v4735, %v4910
        %v4965 = vadd.f32 %v4736, %v4915
        %v4966 = vadd.f32 %v4737, %v4918
        %v4967 = vadd.f32 %v4738, %v4923
        %v4968 = vadd.f32 %v4739, %v4926
        %v4969 = vadd.f32 %v4740, %v4931
        %v4970 = vadd.f32 %v4741, %v4934
        %v4971 = vadd.f32 %v4742, %v4939
        %v4972 = vadd.f32 %v4743, %v4942
        %v4973 = vadd.f32 %v4744, %v4947
        %v4974 = vadd.f32 %v4745, %v4950
        %v4975 = vadd.f32 %v4746, %v4955
        %v4976 = vadd.f32 %v4747, %v4958
        %s4977 = sadd.s32 %s4749, 36
        %s4978 = smul.addr %s4977, 4
        %s4979 = scalar_lea.vmem [#allocation2], %s4978
        %v4980 = vld [vmem:[%s4979] sm:$0xf]
        %v4981 = vld [vmem:[%s4979 + $0x4] sm:$0xf]
        %v4982 = vld [vmem:[%s4979 + $0x8] sm:$0xf]
        %v4983 = vld [vmem:[%s4979 + $0xc] sm:$0xf]
        %v4984 = vld [vmem:[%s4979 + $0x10] sm:$0xf]
        %v4985 = vld [vmem:[%s4979 + $0x14] sm:$0xf]
        %v4986 = vld [vmem:[%s4979 + $0x18] sm:$0xf]
        %v4987 = vld [vmem:[%s4979 + $0x1c] sm:$0xf]
        %v4988 = vld [vmem:[%s4979 + $0x20] sm:$0xf]
        %v4989 = vld [vmem:[%s4979 + $0x24] sm:$0xf]
        %v4990 = vld [vmem:[%s4979 + $0x28] sm:$0xf]
        %v4991 = vld [vmem:[%s4979 + $0x2c] sm:$0xf]
        %v4992 = vld [vmem:[%s4979 + $0x30] sm:$0xf]
        %v4993 = vld [vmem:[%s4979 + $0x34] sm:$0xf]
        %v4994 = vld [vmem:[%s4979 + $0x38] sm:$0xf]
        %v4995 = vld [vmem:[%s4979 + $0x3c] sm:$0xf]
        %v4996 = vld [vmem:[%s2610] sm:$0xf]
        %v4997 = vld [vmem:[%s2610 + $0x4] sm:$0xf]
        %v4998 = vld [vmem:[%s2610 + $0x8] sm:$0xf]
        %v4999 = vld [vmem:[%s2610 + $0xc] sm:$0xf]
        %v5000 = vld [vmem:[%s2610 + $0x10] sm:$0xf]
        %v5001 = vld [vmem:[%s2610 + $0x14] sm:$0xf]
        %v5002 = vld [vmem:[%s2610 + $0x18] sm:$0xf]
        %v5003 = vld [vmem:[%s2610 + $0x1c] sm:$0xf]
        %v5020 = vunpack.c.l.b16 %v4980
        %v5021 = vunpack.c.l.b16 %v4981
        %v5022 = vunpack.c.l.b16 %v4982
        %v5023 = vunpack.c.l.b16 %v4983
        %v5024 = vunpack.c.l.b16 %v4984
        %v5025 = vunpack.c.l.b16 %v4985
        %v5026 = vunpack.c.l.b16 %v4986
        %v5027 = vunpack.c.l.b16 %v4987
        %v5028 = vunpack.c.l.b16 %v4988
        %v5029 = vunpack.c.l.b16 %v4989
        %v5030 = vunpack.c.l.b16 %v4990
        %v5031 = vunpack.c.l.b16 %v4991
        %v5032 = vunpack.c.l.b16 %v4992
        %v5033 = vunpack.c.l.b16 %v4993
        %v5034 = vunpack.c.l.b16 %v4994
        %v5035 = vunpack.c.l.b16 %v4995
        %v5036 = vpack.c.b16 %v5021, %v5020
        %v5037 = vpack.c.b16 %v5023, %v5022
        %v5038 = vpack.c.b16 %v5025, %v5024
        %v5039 = vpack.c.b16 %v5027, %v5026
        %v5040 = vpack.c.b16 %v5029, %v5028
        %v5041 = vpack.c.b16 %v5031, %v5030
        %v5042 = vpack.c.b16 %v5033, %v5032
        %v5043 = vpack.c.b16 %v5035, %v5034
        %v5052 = vunpack.c.l.b16 %v4996
        %v5053 = vunpack.c.l.b16 %v4997
        %v5054 = vunpack.c.l.b16 %v4998
        %v5055 = vunpack.c.l.b16 %v4999
        %v5056 = vunpack.c.l.b16 %v5000
        %v5057 = vunpack.c.l.b16 %v5001
        %v5058 = vunpack.c.l.b16 %v5002
        %v5059 = vunpack.c.l.b16 %v5003
        %v5060 = vpack.c.b16 %v5053, %v5052
        %v5061 = vpack.c.b16 %v5055, %v5054
        %v5062 = vpack.c.b16 %v5057, %v5056
        %v5063 = vpack.c.b16 %v5059, %v5058
        %v5069 = vsel %vm1147, %v5036, 0
        %v5072 = vsel %vm1147, %v5037, 0
        %v5075 = vsel %vm1147, %v5038, 0
        %v5078 = vsel %vm1147, %v5039, 0
        %v5081 = vsel %vm1147, %v5040, 0
        %v5084 = vsel %vm1147, %v5041, 0
        %v5087 = vsel %vm1147, %v5042, 0
        %v5090 = vsel %vm1147, %v5043, 0
        %5092 = vmatprep.subr.bf16.mxu0 0
        %5093 = vmatpush1.bf16.msra.mxu0 0
        %5094 = vmatprep.subr.bf16.mxu0 0
        %5095 = vmatpush1.bf16.msra.mxu0 0
        %5096 = vmatprep.subr.bf16.mxu0 0
        %5097 = vmatpush1.bf16.msra.mxu0 0
        %5098 = vmatprep.subr.bf16.mxu0 0
        %5099 = vmatpush1.bf16.msra.mxu0 0
        %5100 = vmatprep.subr.bf16.mxu0 0
        %5101 = vmatpush1.bf16.msra.mxu0 %v5063
        %5102 = vmatprep.subr.bf16.mxu0 0
        %5103 = vmatpush1.bf16.msra.mxu0 %v5062
        %5104 = vmatprep.subr.bf16.mxu0 0
        %5105 = vmatpush1.bf16.msra.mxu0 %v5061
        %5106 = vmatprep.subr.bf16.mxu0 0
        %5107 = vmatpush1.bf16.msra.mxu0 %v5060
        %5108 = vmatprep.subr.bf16.mxu0 0
        %5109 = vmatpush2.bf16.msra.mxu0 0
        %5110 = vmatprep.subr.bf16.mxu0 0
        %5111 = vmatpush2.bf16.msra.mxu0 0
        %5112 = vmatprep.subr.bf16.mxu0 0
        %5113 = vmatpush2.bf16.msra.mxu0 0
        %5114 = vmatprep.subr.bf16.mxu0 0
        %5115 = vmatpush2.bf16.msra.mxu0 0
        %5116 = vmatprep.subr.bf16.mxu0 0
        %5117 = vmatpush2.bf16.msra.mxu0 0
        %5118 = vmatprep.subr.bf16.mxu0 0
        %5119 = vmatpush2.bf16.msra.mxu0 0
        %5120 = vmatprep.subr.bf16.mxu0 0
        %5121 = vmatpush2.bf16.msra.mxu0 0
        %5122 = vmatprep.subr.bf16.mxu0 0
        %5123 = vmatpush2.bf16.msra.mxu0 0
        %5124 = vmatprep.mubr.bf16.mxu0 0
        %5125 = vmatmul.mubr.bf16.gmra.mxu0 %v5069
        %v5126 = vpop.f32.mrf.mxu0
        %v5127 = vadd.f32 0.0, %v5126
        %v5128 = vpop.f32.mrf.mxu0
        %v5129 = vpop.f32.mrf.mxu0
        %v5130 = vadd.f32 0.0, %v5129
        %v5131 = vpop.f32.mrf.mxu0
        %5132 = vmatprep.mubr.bf16.mxu0 0
        %5133 = vmatmul.mubr.bf16.gmra.mxu0 %v5072
        %v5134 = vpop.f32.mrf.mxu0
        %v5135 = vadd.f32 0.0, %v5134
        %v5136 = vpop.f32.mrf.mxu0
        %v5137 = vpop.f32.mrf.mxu0
        %v5138 = vadd.f32 0.0, %v5137
        %v5139 = vpop.f32.mrf.mxu0
        %5140 = vmatprep.mubr.bf16.mxu0 0
        %5141 = vmatmul.mubr.bf16.gmra.mxu0 %v5075
        %v5142 = vpop.f32.mrf.mxu0
        %v5143 = vadd.f32 0.0, %v5142
        %v5144 = vpop.f32.mrf.mxu0
        %v5145 = vpop.f32.mrf.mxu0
        %v5146 = vadd.f32 0.0, %v5145
        %v5147 = vpop.f32.mrf.mxu0
        %5148 = vmatprep.mubr.bf16.mxu0 0
        %5149 = vmatmul.mubr.bf16.gmra.mxu0 %v5078
        %v5150 = vpop.f32.mrf.mxu0
        %v5151 = vadd.f32 0.0, %v5150
        %v5152 = vpop.f32.mrf.mxu0
        %v5153 = vpop.f32.mrf.mxu0
        %v5154 = vadd.f32 0.0, %v5153
        %v5155 = vpop.f32.mrf.mxu0
        %5156 = vmatprep.mubr.bf16.mxu0 0
        %5157 = vmatmul.mubr.bf16.gmra.mxu0 %v5081
        %v5158 = vpop.f32.mrf.mxu0
        %v5159 = vadd.f32 0.0, %v5158
        %v5160 = vpop.f32.mrf.mxu0
        %v5161 = vpop.f32.mrf.mxu0
        %v5162 = vadd.f32 0.0, %v5161
        %v5163 = vpop.f32.mrf.mxu0
        %5164 = vmatprep.mubr.bf16.mxu0 0
        %5165 = vmatmul.mubr.bf16.gmra.mxu0 %v5084
        %v5166 = vpop.f32.mrf.mxu0
        %v5167 = vadd.f32 0.0, %v5166
        %v5168 = vpop.f32.mrf.mxu0
        %v5169 = vpop.f32.mrf.mxu0
        %v5170 = vadd.f32 0.0, %v5169
        %v5171 = vpop.f32.mrf.mxu0
        %5172 = vmatprep.mubr.bf16.mxu0 0
        %5173 = vmatmul.mubr.bf16.gmra.mxu0 %v5087
        %v5174 = vpop.f32.mrf.mxu0
        %v5175 = vadd.f32 0.0, %v5174
        %v5176 = vpop.f32.mrf.mxu0
        %v5177 = vpop.f32.mrf.mxu0
        %v5178 = vadd.f32 0.0, %v5177
        %v5179 = vpop.f32.mrf.mxu0
        %5180 = vmatprep.mubr.bf16.mxu0 0
        %5181 = vmatmul.mubr.bf16.gmra.mxu0 %v5090
        %v5182 = vpop.f32.mrf.mxu0
        %v5183 = vadd.f32 0.0, %v5182
        %v5184 = vpop.f32.mrf.mxu0
        %v5185 = vpop.f32.mrf.mxu0
        %v5186 = vadd.f32 0.0, %v5185
        %v5187 = vpop.f32.mrf.mxu0
        %5188 = vdwg.mxu0
        %v5189 = vadd.f32 %v4961, %v5127
        %v5190 = vadd.f32 %v4962, %v5130
        %v5191 = vadd.f32 %v4963, %v5135
        %v5192 = vadd.f32 %v4964, %v5138
        %v5193 = vadd.f32 %v4965, %v5143
        %v5194 = vadd.f32 %v4966, %v5146
        %v5195 = vadd.f32 %v4967, %v5151
        %v5196 = vadd.f32 %v4968, %v5154
        %v5197 = vadd.f32 %v4969, %v5159
        %v5198 = vadd.f32 %v4970, %v5162
        %v5199 = vadd.f32 %v4971, %v5167
        %v5200 = vadd.f32 %v4972, %v5170
        %v5201 = vadd.f32 %v4973, %v5175
        %v5202 = vadd.f32 %v4974, %v5178
        %v5203 = vadd.f32 %v4975, %v5183
        %v5204 = vadd.f32 %v4976, %v5186
        %s5205 = sadd.s32 %s4749, 72
        %s5206 = smul.addr %s5205, 4
        %s5207 = scalar_lea.vmem [#allocation2], %s5206
        %v5208 = vld [vmem:[%s5207] sm:$0xf]
        %v5209 = vld [vmem:[%s5207 + $0x4] sm:$0xf]
        %v5210 = vld [vmem:[%s5207 + $0x8] sm:$0xf]
        %v5211 = vld [vmem:[%s5207 + $0xc] sm:$0xf]
        %v5212 = vld [vmem:[%s5207 + $0x10] sm:$0xf]
        %v5213 = vld [vmem:[%s5207 + $0x14] sm:$0xf]
        %v5214 = vld [vmem:[%s5207 + $0x18] sm:$0xf]
        %v5215 = vld [vmem:[%s5207 + $0x1c] sm:$0xf]
        %v5216 = vld [vmem:[%s5207 + $0x20] sm:$0xf]
        %v5217 = vld [vmem:[%s5207 + $0x24] sm:$0xf]
        %v5218 = vld [vmem:[%s5207 + $0x28] sm:$0xf]
        %v5219 = vld [vmem:[%s5207 + $0x2c] sm:$0xf]
        %v5220 = vld [vmem:[%s5207 + $0x30] sm:$0xf]
        %v5221 = vld [vmem:[%s5207 + $0x34] sm:$0xf]
        %v5222 = vld [vmem:[%s5207 + $0x38] sm:$0xf]
        %v5223 = vld [vmem:[%s5207 + $0x3c] sm:$0xf]
        %v5224 = vld [vmem:[%s2839] sm:$0xf]
        %v5225 = vld [vmem:[%s2839 + $0x4] sm:$0xf]
        %v5226 = vld [vmem:[%s2839 + $0x8] sm:$0xf]
        %v5227 = vld [vmem:[%s2839 + $0xc] sm:$0xf]
        %v5228 = vld [vmem:[%s2839 + $0x10] sm:$0xf]
        %v5229 = vld [vmem:[%s2839 + $0x14] sm:$0xf]
        %v5230 = vld [vmem:[%s2839 + $0x18] sm:$0xf]
        %v5231 = vld [vmem:[%s2839 + $0x1c] sm:$0xf]
        %v5248 = vunpack.c.l.b16 %v5208
        %v5249 = vunpack.c.l.b16 %v5209
        %v5250 = vunpack.c.l.b16 %v5210
        %v5251 = vunpack.c.l.b16 %v5211
        %v5252 = vunpack.c.l.b16 %v5212
        %v5253 = vunpack.c.l.b16 %v5213
        %v5254 = vunpack.c.l.b16 %v5214
        %v5255 = vunpack.c.l.b16 %v5215
        %v5256 = vunpack.c.l.b16 %v5216
        %v5257 = vunpack.c.l.b16 %v5217
        %v5258 = vunpack.c.l.b16 %v5218
        %v5259 = vunpack.c.l.b16 %v5219
        %v5260 = vunpack.c.l.b16 %v5220
        %v5261 = vunpack.c.l.b16 %v5221
        %v5262 = vunpack.c.l.b16 %v5222
        %v5263 = vunpack.c.l.b16 %v5223
        %v5264 = vpack.c.b16 %v5249, %v5248
        %v5265 = vpack.c.b16 %v5251, %v5250
        %v5266 = vpack.c.b16 %v5253, %v5252
        %v5267 = vpack.c.b16 %v5255, %v5254
        %v5268 = vpack.c.b16 %v5257, %v5256
        %v5269 = vpack.c.b16 %v5259, %v5258
        %v5270 = vpack.c.b16 %v5261, %v5260
        %v5271 = vpack.c.b16 %v5263, %v5262
        %v5280 = vunpack.c.l.b16 %v5224
        %v5281 = vunpack.c.l.b16 %v5225
        %v5282 = vunpack.c.l.b16 %v5226
        %v5283 = vunpack.c.l.b16 %v5227
        %v5284 = vunpack.c.l.b16 %v5228
        %v5285 = vunpack.c.l.b16 %v5229
        %v5286 = vunpack.c.l.b16 %v5230
        %v5287 = vunpack.c.l.b16 %v5231
        %v5288 = vpack.c.b16 %v5281, %v5280
        %v5289 = vpack.c.b16 %v5283, %v5282
        %v5290 = vpack.c.b16 %v5285, %v5284
        %v5291 = vpack.c.b16 %v5287, %v5286
        %v5297 = vsel %vm1147, %v5264, 0
        %v5300 = vsel %vm1147, %v5265, 0
        %v5303 = vsel %vm1147, %v5266, 0
        %v5306 = vsel %vm1147, %v5267, 0
        %v5309 = vsel %vm1147, %v5268, 0
        %v5312 = vsel %vm1147, %v5269, 0
        %v5315 = vsel %vm1147, %v5270, 0
        %v5318 = vsel %vm1147, %v5271, 0
        %5320 = vmatprep.subr.bf16.mxu0 0
        %5321 = vmatpush1.bf16.msra.mxu0 0
        %5322 = vmatprep.subr.bf16.mxu0 0
        %5323 = vmatpush1.bf16.msra.mxu0 0
        %5324 = vmatprep.subr.bf16.mxu0 0
        %5325 = vmatpush1.bf16.msra.mxu0 0
        %5326 = vmatprep.subr.bf16.mxu0 0
        %5327 = vmatpush1.bf16.msra.mxu0 0
        %5328 = vmatprep.subr.bf16.mxu0 0
        %5329 = vmatpush1.bf16.msra.mxu0 %v5291
        %5330 = vmatprep.subr.bf16.mxu0 0
        %5331 = vmatpush1.bf16.msra.mxu0 %v5290
        %5332 = vmatprep.subr.bf16.mxu0 0
        %5333 = vmatpush1.bf16.msra.mxu0 %v5289
        %5334 = vmatprep.subr.bf16.mxu0 0
        %5335 = vmatpush1.bf16.msra.mxu0 %v5288
        %5336 = vmatprep.subr.bf16.mxu0 0
        %5337 = vmatpush2.bf16.msra.mxu0 0
        %5338 = vmatprep.subr.bf16.mxu0 0
        %5339 = vmatpush2.bf16.msra.mxu0 0
        %5340 = vmatprep.subr.bf16.mxu0 0
        %5341 = vmatpush2.bf16.msra.mxu0 0
        %5342 = vmatprep.subr.bf16.mxu0 0
        %5343 = vmatpush2.bf16.msra.mxu0 0
        %5344 = vmatprep.subr.bf16.mxu0 0
        %5345 = vmatpush2.bf16.msra.mxu0 0
        %5346 = vmatprep.subr.bf16.mxu0 0
        %5347 = vmatpush2.bf16.msra.mxu0 0
        %5348 = vmatprep.subr.bf16.mxu0 0
        %5349 = vmatpush2.bf16.msra.mxu0 0
        %5350 = vmatprep.subr.bf16.mxu0 0
        %5351 = vmatpush2.bf16.msra.mxu0 0
        %5352 = vmatprep.mubr.bf16.mxu0 0
        %5353 = vmatmul.mubr.bf16.gmra.mxu0 %v5297
        %v5354 = vpop.f32.mrf.mxu0
        %v5355 = vadd.f32 0.0, %v5354
        %v5356 = vpop.f32.mrf.mxu0
        %v5357 = vpop.f32.mrf.mxu0
        %v5358 = vadd.f32 0.0, %v5357
        %v5359 = vpop.f32.mrf.mxu0
        %5360 = vmatprep.mubr.bf16.mxu0 0
        %5361 = vmatmul.mubr.bf16.gmra.mxu0 %v5300
        %v5362 = vpop.f32.mrf.mxu0
        %v5363 = vadd.f32 0.0, %v5362
        %v5364 = vpop.f32.mrf.mxu0
        %v5365 = vpop.f32.mrf.mxu0
        %v5366 = vadd.f32 0.0, %v5365
        %v5367 = vpop.f32.mrf.mxu0
        %5368 = vmatprep.mubr.bf16.mxu0 0
        %5369 = vmatmul.mubr.bf16.gmra.mxu0 %v5303
        %v5370 = vpop.f32.mrf.mxu0
        %v5371 = vadd.f32 0.0, %v5370
        %v5372 = vpop.f32.mrf.mxu0
        %v5373 = vpop.f32.mrf.mxu0
        %v5374 = vadd.f32 0.0, %v5373
        %v5375 = vpop.f32.mrf.mxu0
        %5376 = vmatprep.mubr.bf16.mxu0 0
        %5377 = vmatmul.mubr.bf16.gmra.mxu0 %v5306
        %v5378 = vpop.f32.mrf.mxu0
        %v5379 = vadd.f32 0.0, %v5378
        %v5380 = vpop.f32.mrf.mxu0
        %v5381 = vpop.f32.mrf.mxu0
        %v5382 = vadd.f32 0.0, %v5381
        %v5383 = vpop.f32.mrf.mxu0
        %5384 = vmatprep.mubr.bf16.mxu0 0
        %5385 = vmatmul.mubr.bf16.gmra.mxu0 %v5309
        %v5386 = vpop.f32.mrf.mxu0
        %v5387 = vadd.f32 0.0, %v5386
        %v5388 = vpop.f32.mrf.mxu0
        %v5389 = vpop.f32.mrf.mxu0
        %v5390 = vadd.f32 0.0, %v5389
        %v5391 = vpop.f32.mrf.mxu0
        %5392 = vmatprep.mubr.bf16.mxu0 0
        %5393 = vmatmul.mubr.bf16.gmra.mxu0 %v5312
        %v5394 = vpop.f32.mrf.mxu0
        %v5395 = vadd.f32 0.0, %v5394
        %v5396 = vpop.f32.mrf.mxu0
        %v5397 = vpop.f32.mrf.mxu0
        %v5398 = vadd.f32 0.0, %v5397
        %v5399 = vpop.f32.mrf.mxu0
        %5400 = vmatprep.mubr.bf16.mxu0 0
        %5401 = vmatmul.mubr.bf16.gmra.mxu0 %v5315
        %v5402 = vpop.f32.mrf.mxu0
        %v5403 = vadd.f32 0.0, %v5402
        %v5404 = vpop.f32.mrf.mxu0
        %v5405 = vpop.f32.mrf.mxu0
        %v5406 = vadd.f32 0.0, %v5405
        %v5407 = vpop.f32.mrf.mxu0
        %5408 = vmatprep.mubr.bf16.mxu0 0
        %5409 = vmatmul.mubr.bf16.gmra.mxu0 %v5318
        %v5410 = vpop.f32.mrf.mxu0
        %v5411 = vadd.f32 0.0, %v5410
        %v5412 = vpop.f32.mrf.mxu0
        %v5413 = vpop.f32.mrf.mxu0
        %v5414 = vadd.f32 0.0, %v5413
        %v5415 = vpop.f32.mrf.mxu0
        %5416 = vdwg.mxu0
        %v5417 = vadd.f32 %v5189, %v5355
        %v5418 = vadd.f32 %v5190, %v5358
        %v5419 = vadd.f32 %v5191, %v5363
        %v5420 = vadd.f32 %v5192, %v5366
        %v5421 = vadd.f32 %v5193, %v5371
        %v5422 = vadd.f32 %v5194, %v5374
        %v5423 = vadd.f32 %v5195, %v5379
        %v5424 = vadd.f32 %v5196, %v5382
        %v5425 = vadd.f32 %v5197, %v5387
        %v5426 = vadd.f32 %v5198, %v5390
        %v5427 = vadd.f32 %v5199, %v5395
        %v5428 = vadd.f32 %v5200, %v5398
        %v5429 = vadd.f32 %v5201, %v5403
        %v5430 = vadd.f32 %v5202, %v5406
        %v5431 = vadd.f32 %v5203, %v5411
        %v5432 = vadd.f32 %v5204, %v5414
        %v5433 = vadd.f32 %v5417, %v3053
        %v5434 = vadd.f32 %v5418, %v3053
        %v5435 = vadd.f32 %v5419, %v3053
        %v5436 = vadd.f32 %v5420, %v3053
        %v5437 = vadd.f32 %v5421, %v3053
        %v5438 = vadd.f32 %v5422, %v3053
        %v5439 = vadd.f32 %v5423, %v3053
        %v5440 = vadd.f32 %v5424, %v3053
        %v5441 = vadd.f32 %v5425, %v3053
        %v5442 = vadd.f32 %v5426, %v3053
        %v5443 = vadd.f32 %v5427, %v3053
        %v5444 = vadd.f32 %v5428, %v3053
        %v5445 = vadd.f32 %v5429, %v3053
        %v5446 = vadd.f32 %v5430, %v3053
        %v5447 = vadd.f32 %v5431, %v3053
        %v5448 = vadd.f32 %v5432, %v3053
        %v5449 = vmax.f32 %v5433, 0.0
        %v5450 = vmax.f32 %v5434, 0.0
        %v5451 = vmax.f32 %v5435, 0.0
        %v5452 = vmax.f32 %v5436, 0.0
        %v5453 = vmax.f32 %v5437, 0.0
        %v5454 = vmax.f32 %v5438, 0.0
        %v5455 = vmax.f32 %v5439, 0.0
        %v5456 = vmax.f32 %v5440, 0.0
        %v5457 = vmax.f32 %v5441, 0.0
        %v5458 = vmax.f32 %v5442, 0.0
        %v5459 = vmax.f32 %v5443, 0.0
        %v5460 = vmax.f32 %v5444, 0.0
        %v5461 = vmax.f32 %v5445, 0.0
        %v5462 = vmax.f32 %v5446, 0.0
        %v5463 = vmax.f32 %v5447, 0.0
        %v5464 = vmax.f32 %v5448, 0.0
        %v5465 = vpack.c.bf16 %v5450, %v5449
        %v5466 = vpack.c.bf16 %v5452, %v5451
        %v5467 = vpack.c.bf16 %v5454, %v5453
        %v5468 = vpack.c.bf16 %v5456, %v5455
        %v5469 = vpack.c.bf16 %v5458, %v5457
        %v5470 = vpack.c.bf16 %v5460, %v5459
        %v5471 = vpack.c.bf16 %v5462, %v5461
        %v5472 = vpack.c.bf16 %v5464, %v5463
        %v5474 = vshrl.u32 %v5465, 16
        %v5476 = vrot.slane %v5474, 7
        %v5477 = vshll.u32 %v5465, 16
        %v5479 = vor.u32 %v5476, %v5477
        %v5481 = vshrl.u32 %v5466, 16
        %v5483 = vrot.slane %v5481, 7
        %v5484 = vshll.u32 %v5466, 16
        %v5486 = vor.u32 %v5483, %v5484
        %v5488 = vshrl.u32 %v5467, 16
        %v5490 = vrot.slane %v5488, 7
        %v5491 = vshll.u32 %v5467, 16
        %v5493 = vor.u32 %v5490, %v5491
        %v5495 = vshrl.u32 %v5468, 16
        %v5497 = vrot.slane %v5495, 7
        %v5498 = vshll.u32 %v5468, 16
        %v5500 = vor.u32 %v5497, %v5498
        %v5502 = vshrl.u32 %v5469, 16
        %v5504 = vrot.slane %v5502, 7
        %v5505 = vshll.u32 %v5469, 16
        %v5507 = vor.u32 %v5504, %v5505
        %v5509 = vshrl.u32 %v5470, 16
        %v5511 = vrot.slane %v5509, 7
        %v5512 = vshll.u32 %v5470, 16
        %v5514 = vor.u32 %v5511, %v5512
        %v5516 = vshrl.u32 %v5471, 16
        %v5518 = vrot.slane %v5516, 7
        %v5519 = vshll.u32 %v5471, 16
        %v5521 = vor.u32 %v5518, %v5519
        %v5523 = vshrl.u32 %v5472, 16
        %v5525 = vrot.slane %v5523, 7
        %v5526 = vshll.u32 %v5472, 16
        %v5528 = vor.u32 %v5525, %v5526
        %v5537 = vsel %vm402, 0, %v5479
        %v5538 = vsel %vm402, 0, %v5486
        %v5539 = vsel %vm402, 0, %v5493
        %v5540 = vsel %vm402, 0, %v5500
        %v5541 = vsel %vm402, 0, %v5507
        %v5542 = vsel %vm402, 0, %v5514
        %v5543 = vsel %vm402, 0, %v5521
        %v5544 = vsel %vm402, 0, %v5528
        %v5545 = vrot.slane %v5477, 1
        %v5546 = vor.u32 %v5474, %v5545
        %v5547 = vrot.slane %v5484, 1
        %v5548 = vor.u32 %v5481, %v5547
        %v5549 = vrot.slane %v5491, 1
        %v5550 = vor.u32 %v5488, %v5549
        %v5551 = vrot.slane %v5498, 1
        %v5552 = vor.u32 %v5495, %v5551
        %v5553 = vrot.slane %v5505, 1
        %v5554 = vor.u32 %v5502, %v5553
        %v5555 = vrot.slane %v5512, 1
        %v5556 = vor.u32 %v5509, %v5555
        %v5557 = vrot.slane %v5519, 1
        %v5558 = vor.u32 %v5516, %v5557
        %v5559 = vrot.slane %v5526, 1
        %v5560 = vor.u32 %v5523, %v5559
        %v5569 = vsel %vm437, %v5546, 0
        %v5570 = vsel %vm437, %v5548, 0
        %v5571 = vsel %vm437, %v5550, 0
        %v5572 = vsel %vm437, %v5552, 0
        %v5573 = vsel %vm437, %v5554, 0
        %v5574 = vsel %vm437, %v5556, 0
        %v5575 = vsel %vm437, %v5558, 0
        %v5576 = vsel %vm437, %v5560, 0
        %v5585 = vunpack.c.l.b16 %v5465
        %v5586 = vunpack.c.h.b16 %v5465
        %v5587 = vunpack.c.l.b16 %v5466
        %v5588 = vunpack.c.h.b16 %v5466
        %v5589 = vunpack.c.l.b16 %v5467
        %v5590 = vunpack.c.h.b16 %v5467
        %v5591 = vunpack.c.l.b16 %v5468
        %v5592 = vunpack.c.h.b16 %v5468
        %v5593 = vunpack.c.l.b16 %v5469
        %v5594 = vunpack.c.h.b16 %v5469
        %v5595 = vunpack.c.l.b16 %v5470
        %v5596 = vunpack.c.h.b16 %v5470
        %v5597 = vunpack.c.l.b16 %v5471
        %v5598 = vunpack.c.h.b16 %v5471
        %v5599 = vunpack.c.l.b16 %v5472
        %v5600 = vunpack.c.h.b16 %v5472
        %v5601 = vpack.c.b16 %v5585, %v5585
        %v5602 = vpack.c.b16 %v5586, %v5586
        %v5603 = vpack.c.b16 %v5587, %v5587
        %v5604 = vpack.c.b16 %v5588, %v5588
        %v5605 = vpack.c.b16 %v5589, %v5589
        %v5606 = vpack.c.b16 %v5590, %v5590
        %v5607 = vpack.c.b16 %v5591, %v5591
        %v5608 = vpack.c.b16 %v5592, %v5592
        %v5609 = vpack.c.b16 %v5593, %v5593
        %v5610 = vpack.c.b16 %v5594, %v5594
        %v5611 = vpack.c.b16 %v5595, %v5595
        %v5612 = vpack.c.b16 %v5596, %v5596
        %v5613 = vpack.c.b16 %v5597, %v5597
        %v5614 = vpack.c.b16 %v5598, %v5598
        %v5615 = vpack.c.b16 %v5599, %v5599
        %v5616 = vpack.c.b16 %v5600, %v5600
        %s5633 = smul.addr %s860, 4
        %s5634 = scalar_lea.vmem [#allocation3], %s5633
        %5635 = vst.msk [vmem:[%s5634] sm:$0xf] %vm273, %v5601
        %5636 = vst.msk [vmem:[%s5634 + $0x4] sm:$0xf] %vm273, %v5602
        %5637 = vst.msk [vmem:[%s5634 + $0x8] sm:$0xf] %vm273, %v5603
        %5638 = vst.msk [vmem:[%s5634 + $0xc] sm:$0xf] %vm273, %v5604
        %5639 = vst.msk [vmem:[%s5634 + $0x10] sm:$0xf] %vm273, %v5605
        %5640 = vst.msk [vmem:[%s5634 + $0x14] sm:$0xf] %vm273, %v5606
        %5641 = vst.msk [vmem:[%s5634 + $0x18] sm:$0xf] %vm273, %v5607
        %5642 = vst.msk [vmem:[%s5634 + $0x1c] sm:$0xf] %vm273, %v5608
        %5643 = vst.msk [vmem:[%s5634 + $0x20] sm:$0xf] %vm273, %v5609
        %5644 = vst.msk [vmem:[%s5634 + $0x24] sm:$0xf] %vm273, %v5610
        %5645 = vst.msk [vmem:[%s5634 + $0x28] sm:$0xf] %vm273, %v5611
        %5646 = vst.msk [vmem:[%s5634 + $0x2c] sm:$0xf] %vm273, %v5612
        %5647 = vst.msk [vmem:[%s5634 + $0x30] sm:$0xf] %vm273, %v5613
        %5648 = vst.msk [vmem:[%s5634 + $0x34] sm:$0xf] %vm273, %v5614
        %5649 = vst.msk [vmem:[%s5634 + $0x38] sm:$0xf] %vm273, %v5615
        %5650 = vst.msk [vmem:[%s5634 + $0x3c] sm:$0xf] %vm273, %v5616
        %v5659 = vunpack.c.l.b16 %v5537
        %v5660 = vunpack.c.h.b16 %v5537
        %v5661 = vunpack.c.l.b16 %v5538
        %v5662 = vunpack.c.h.b16 %v5538
        %v5663 = vunpack.c.l.b16 %v5539
        %v5664 = vunpack.c.h.b16 %v5539
        %v5665 = vunpack.c.l.b16 %v5540
        %v5666 = vunpack.c.h.b16 %v5540
        %v5667 = vunpack.c.l.b16 %v5541
        %v5668 = vunpack.c.h.b16 %v5541
        %v5669 = vunpack.c.l.b16 %v5542
        %v5670 = vunpack.c.h.b16 %v5542
        %v5671 = vunpack.c.l.b16 %v5543
        %v5672 = vunpack.c.h.b16 %v5543
        %v5673 = vunpack.c.l.b16 %v5544
        %v5674 = vunpack.c.h.b16 %v5544
        %v5675 = vpack.c.b16 %v5659, %v5659
        %v5676 = vpack.c.b16 %v5660, %v5660
        %v5677 = vpack.c.b16 %v5661, %v5661
        %v5678 = vpack.c.b16 %v5662, %v5662
        %v5679 = vpack.c.b16 %v5663, %v5663
        %v5680 = vpack.c.b16 %v5664, %v5664
        %v5681 = vpack.c.b16 %v5665, %v5665
        %v5682 = vpack.c.b16 %v5666, %v5666
        %v5683 = vpack.c.b16 %v5667, %v5667
        %v5684 = vpack.c.b16 %v5668, %v5668
        %v5685 = vpack.c.b16 %v5669, %v5669
        %v5686 = vpack.c.b16 %v5670, %v5670
        %v5687 = vpack.c.b16 %v5671, %v5671
        %v5688 = vpack.c.b16 %v5672, %v5672
        %v5689 = vpack.c.b16 %v5673, %v5673
        %v5690 = vpack.c.b16 %v5674, %v5674
        %s5707 = smul.addr %s859, 4
        %s5708 = scalar_lea.vmem [#allocation3], %s5707
        %5709 = vst.msk [vmem:[%s5708] sm:$0xf] %vm273, %v5675
        %5710 = vst.msk [vmem:[%s5708 + $0x4] sm:$0xf] %vm273, %v5676
        %5711 = vst.msk [vmem:[%s5708 + $0x8] sm:$0xf] %vm273, %v5677
        %5712 = vst.msk [vmem:[%s5708 + $0xc] sm:$0xf] %vm273, %v5678
        %5713 = vst.msk [vmem:[%s5708 + $0x10] sm:$0xf] %vm273, %v5679
        %5714 = vst.msk [vmem:[%s5708 + $0x14] sm:$0xf] %vm273, %v5680
        %5715 = vst.msk [vmem:[%s5708 + $0x18] sm:$0xf] %vm273, %v5681
        %5716 = vst.msk [vmem:[%s5708 + $0x1c] sm:$0xf] %vm273, %v5682
        %5717 = vst.msk [vmem:[%s5708 + $0x20] sm:$0xf] %vm273, %v5683
        %5718 = vst.msk [vmem:[%s5708 + $0x24] sm:$0xf] %vm273, %v5684
        %5719 = vst.msk [vmem:[%s5708 + $0x28] sm:$0xf] %vm273, %v5685
        %5720 = vst.msk [vmem:[%s5708 + $0x2c] sm:$0xf] %vm273, %v5686
        %5721 = vst.msk [vmem:[%s5708 + $0x30] sm:$0xf] %vm273, %v5687
        %5722 = vst.msk [vmem:[%s5708 + $0x34] sm:$0xf] %vm273, %v5688
        %5723 = vst.msk [vmem:[%s5708 + $0x38] sm:$0xf] %vm273, %v5689
        %5724 = vst.msk [vmem:[%s5708 + $0x3c] sm:$0xf] %vm273, %v5690
        %v5733 = vunpack.c.l.b16 %v5569
        %v5734 = vunpack.c.h.b16 %v5569
        %v5735 = vunpack.c.l.b16 %v5570
        %v5736 = vunpack.c.h.b16 %v5570
        %v5737 = vunpack.c.l.b16 %v5571
        %v5738 = vunpack.c.h.b16 %v5571
        %v5739 = vunpack.c.l.b16 %v5572
        %v5740 = vunpack.c.h.b16 %v5572
        %v5741 = vunpack.c.l.b16 %v5573
        %v5742 = vunpack.c.h.b16 %v5573
        %v5743 = vunpack.c.l.b16 %v5574
        %v5744 = vunpack.c.h.b16 %v5574
        %v5745 = vunpack.c.l.b16 %v5575
        %v5746 = vunpack.c.h.b16 %v5575
        %v5747 = vunpack.c.l.b16 %v5576
        %v5748 = vunpack.c.h.b16 %v5576
        %v5749 = vpack.c.b16 %v5733, %v5733
        %v5750 = vpack.c.b16 %v5734, %v5734
        %v5751 = vpack.c.b16 %v5735, %v5735
        %v5752 = vpack.c.b16 %v5736, %v5736
        %v5753 = vpack.c.b16 %v5737, %v5737
        %v5754 = vpack.c.b16 %v5738, %v5738
        %v5755 = vpack.c.b16 %v5739, %v5739
        %v5756 = vpack.c.b16 %v5740, %v5740
        %v5757 = vpack.c.b16 %v5741, %v5741
        %v5758 = vpack.c.b16 %v5742, %v5742
        %v5759 = vpack.c.b16 %v5743, %v5743
        %v5760 = vpack.c.b16 %v5744, %v5744
        %v5761 = vpack.c.b16 %v5745, %v5745
        %v5762 = vpack.c.b16 %v5746, %v5746
        %v5763 = vpack.c.b16 %v5747, %v5747
        %v5764 = vpack.c.b16 %v5748, %v5748
        %s5781 = smul.addr %s1009, 4
        %s5782 = scalar_lea.vmem [#allocation3], %s5781
        %5783 = vst.msk [vmem:[%s5782] sm:$0xf] %vm273, %v5749
        %5784 = vst.msk [vmem:[%s5782 + $0x4] sm:$0xf] %vm273, %v5750
        %5785 = vst.msk [vmem:[%s5782 + $0x8] sm:$0xf] %vm273, %v5751
        %5786 = vst.msk [vmem:[%s5782 + $0xc] sm:$0xf] %vm273, %v5752
        %5787 = vst.msk [vmem:[%s5782 + $0x10] sm:$0xf] %vm273, %v5753
        %5788 = vst.msk [vmem:[%s5782 + $0x14] sm:$0xf] %vm273, %v5754
        %5789 = vst.msk [vmem:[%s5782 + $0x18] sm:$0xf] %vm273, %v5755
        %5790 = vst.msk [vmem:[%s5782 + $0x1c] sm:$0xf] %vm273, %v5756
        %5791 = vst.msk [vmem:[%s5782 + $0x20] sm:$0xf] %vm273, %v5757
        %5792 = vst.msk [vmem:[%s5782 + $0x24] sm:$0xf] %vm273, %v5758
        %5793 = vst.msk [vmem:[%s5782 + $0x28] sm:$0xf] %vm273, %v5759
        %5794 = vst.msk [vmem:[%s5782 + $0x2c] sm:$0xf] %vm273, %v5760
        %5795 = vst.msk [vmem:[%s5782 + $0x30] sm:$0xf] %vm273, %v5761
        %5796 = vst.msk [vmem:[%s5782 + $0x34] sm:$0xf] %vm273, %v5762
        %5797 = vst.msk [vmem:[%s5782 + $0x38] sm:$0xf] %vm273, %v5763
        %5798 = vst.msk [vmem:[%s5782 + $0x3c] sm:$0xf] %vm273, %v5764
        %s5799 = smul.addr %s1028, 4
        %s5800 = scalar_lea.vmem [#allocation3], %s5799
        %v5801 = vld [vmem:[%s5800] sm:$0xf]
        %v5802 = vld [vmem:[%s5800 + $0x4] sm:$0xf]
        %v5803 = vld [vmem:[%s5800 + $0x8] sm:$0xf]
        %v5804 = vld [vmem:[%s5800 + $0xc] sm:$0xf]
        %v5805 = vld [vmem:[%s5800 + $0x10] sm:$0xf]
        %v5806 = vld [vmem:[%s5800 + $0x14] sm:$0xf]
        %v5807 = vld [vmem:[%s5800 + $0x18] sm:$0xf]
        %v5808 = vld [vmem:[%s5800 + $0x1c] sm:$0xf]
        %v5809 = vld [vmem:[%s5800 + $0x20] sm:$0xf]
        %v5810 = vld [vmem:[%s5800 + $0x24] sm:$0xf]
        %v5811 = vld [vmem:[%s5800 + $0x28] sm:$0xf]
        %v5812 = vld [vmem:[%s5800 + $0x2c] sm:$0xf]
        %v5813 = vld [vmem:[%s5800 + $0x30] sm:$0xf]
        %v5814 = vld [vmem:[%s5800 + $0x34] sm:$0xf]
        %v5815 = vld [vmem:[%s5800 + $0x38] sm:$0xf]
        %v5816 = vld [vmem:[%s5800 + $0x3c] sm:$0xf]
        %v5817 = vld [vmem:[#allocation9] sm:$0xf]
        %v5818 = vld [vmem:[#allocation9 + $0x4] sm:$0xf]
        %v5819 = vld [vmem:[#allocation9 + $0x8] sm:$0xf]
        %v5820 = vld [vmem:[#allocation9 + $0xc] sm:$0xf]
        %v5821 = vld [vmem:[#allocation9 + $0x10] sm:$0xf]
        %v5822 = vld [vmem:[#allocation9 + $0x14] sm:$0xf]
        %v5823 = vld [vmem:[#allocation9 + $0x18] sm:$0xf]
        %v5824 = vld [vmem:[#allocation9 + $0x1c] sm:$0xf]
        %s5825 = smul.addr %s1055, 4
        %s5826 = scalar_lea.vmem [#allocation3], %s5825
        %v5827 = vld [vmem:[%s5826] sm:$0xf]
        %v5828 = vld [vmem:[%s5826 + $0x4] sm:$0xf]
        %v5829 = vld [vmem:[%s5826 + $0x8] sm:$0xf]
        %v5830 = vld [vmem:[%s5826 + $0xc] sm:$0xf]
        %v5831 = vld [vmem:[%s5826 + $0x10] sm:$0xf]
        %v5832 = vld [vmem:[%s5826 + $0x14] sm:$0xf]
        %v5833 = vld [vmem:[%s5826 + $0x18] sm:$0xf]
        %v5834 = vld [vmem:[%s5826 + $0x1c] sm:$0xf]
        %v5835 = vld [vmem:[%s5826 + $0x20] sm:$0xf]
        %v5836 = vld [vmem:[%s5826 + $0x24] sm:$0xf]
        %v5837 = vld [vmem:[%s5826 + $0x28] sm:$0xf]
        %v5838 = vld [vmem:[%s5826 + $0x2c] sm:$0xf]
        %v5839 = vld [vmem:[%s5826 + $0x30] sm:$0xf]
        %v5840 = vld [vmem:[%s5826 + $0x34] sm:$0xf]
        %v5841 = vld [vmem:[%s5826 + $0x38] sm:$0xf]
        %v5842 = vld [vmem:[%s5826 + $0x3c] sm:$0xf]
        %s5843 = scalar_lea.vmem [#allocation9], 32
        %v5844 = vld [vmem:[%s5843] sm:$0xf]
        %v5845 = vld [vmem:[%s5843 + $0x4] sm:$0xf]
        %v5846 = vld [vmem:[%s5843 + $0x8] sm:$0xf]
        %v5847 = vld [vmem:[%s5843 + $0xc] sm:$0xf]
        %v5848 = vld [vmem:[%s5843 + $0x10] sm:$0xf]
        %v5849 = vld [vmem:[%s5843 + $0x14] sm:$0xf]
        %v5850 = vld [vmem:[%s5843 + $0x18] sm:$0xf]
        %v5851 = vld [vmem:[%s5843 + $0x1c] sm:$0xf]
        %v5868 = vunpack.c.l.b16 %v5827
        %v5869 = vunpack.c.l.b16 %v5828
        %v5870 = vunpack.c.l.b16 %v5829
        %v5871 = vunpack.c.l.b16 %v5830
        %v5872 = vunpack.c.l.b16 %v5831
        %v5873 = vunpack.c.l.b16 %v5832
        %v5874 = vunpack.c.l.b16 %v5833
        %v5875 = vunpack.c.l.b16 %v5834
        %v5876 = vunpack.c.l.b16 %v5835
        %v5877 = vunpack.c.l.b16 %v5836
        %v5878 = vunpack.c.l.b16 %v5837
        %v5879 = vunpack.c.l.b16 %v5838
        %v5880 = vunpack.c.l.b16 %v5839
        %v5881 = vunpack.c.l.b16 %v5840
        %v5882 = vunpack.c.l.b16 %v5841
        %v5883 = vunpack.c.l.b16 %v5842
        %v5884 = vpack.c.b16 %v5869, %v5868
        %v5885 = vpack.c.b16 %v5871, %v5870
        %v5886 = vpack.c.b16 %v5873, %v5872
        %v5887 = vpack.c.b16 %v5875, %v5874
        %v5888 = vpack.c.b16 %v5877, %v5876
        %v5889 = vpack.c.b16 %v5879, %v5878
        %v5890 = vpack.c.b16 %v5881, %v5880
        %v5891 = vpack.c.b16 %v5883, %v5882
        %v5900 = vunpack.c.l.b16 %v5844
        %v5901 = vunpack.c.l.b16 %v5845
        %v5902 = vunpack.c.l.b16 %v5846
        %v5903 = vunpack.c.l.b16 %v5847
        %v5904 = vunpack.c.l.b16 %v5848
        %v5905 = vunpack.c.l.b16 %v5849
        %v5906 = vunpack.c.l.b16 %v5850
        %v5907 = vunpack.c.l.b16 %v5851
        %v5908 = vpack.c.b16 %v5901, %v5900
        %v5909 = vpack.c.b16 %v5903, %v5902
        %v5910 = vpack.c.b16 %v5905, %v5904
        %v5911 = vpack.c.b16 %v5907, %v5906
        %v5917 = vsel %vm1147, %v5884, 0
        %v5920 = vsel %vm1147, %v5885, 0
        %v5923 = vsel %vm1147, %v5886, 0
        %v5926 = vsel %vm1147, %v5887, 0
        %v5929 = vsel %vm1147, %v5888, 0
        %v5932 = vsel %vm1147, %v5889, 0
        %v5935 = vsel %vm1147, %v5890, 0
        %v5938 = vsel %vm1147, %v5891, 0
        %5940 = vmatprep.subr.bf16.mxu0 0
        %5941 = vmatpush1.bf16.msra.mxu0 0
        %5942 = vmatprep.subr.bf16.mxu0 0
        %5943 = vmatpush1.bf16.msra.mxu0 0
        %5944 = vmatprep.subr.bf16.mxu0 0
        %5945 = vmatpush1.bf16.msra.mxu0 0
        %5946 = vmatprep.subr.bf16.mxu0 0
        %5947 = vmatpush1.bf16.msra.mxu0 0
        %5948 = vmatprep.subr.bf16.mxu0 0
        %5949 = vmatpush1.bf16.msra.mxu0 %v5911
        %5950 = vmatprep.subr.bf16.mxu0 0
        %5951 = vmatpush1.bf16.msra.mxu0 %v5910
        %5952 = vmatprep.subr.bf16.mxu0 0
        %5953 = vmatpush1.bf16.msra.mxu0 %v5909
        %5954 = vmatprep.subr.bf16.mxu0 0
        %5955 = vmatpush1.bf16.msra.mxu0 %v5908
        %5956 = vmatprep.subr.bf16.mxu0 0
        %5957 = vmatpush2.bf16.msra.mxu0 0
        %5958 = vmatprep.subr.bf16.mxu0 0
        %5959 = vmatpush2.bf16.msra.mxu0 0
        %5960 = vmatprep.subr.bf16.mxu0 0
        %5961 = vmatpush2.bf16.msra.mxu0 0
        %5962 = vmatprep.subr.bf16.mxu0 0
        %5963 = vmatpush2.bf16.msra.mxu0 0
        %5964 = vmatprep.subr.bf16.mxu0 0
        %5965 = vmatpush2.bf16.msra.mxu0 0
        %5966 = vmatprep.subr.bf16.mxu0 0
        %5967 = vmatpush2.bf16.msra.mxu0 0
        %5968 = vmatprep.subr.bf16.mxu0 0
        %5969 = vmatpush2.bf16.msra.mxu0 0
        %5970 = vmatprep.subr.bf16.mxu0 0
        %5971 = vmatpush2.bf16.msra.mxu0 0
        %5972 = vmatprep.mubr.bf16.mxu0 0
        %5973 = vmatmul.mubr.bf16.gmra.mxu0 %v5917
        %v5974 = vpop.f32.mrf.mxu0
        %v5975 = vadd.f32 0.0, %v5974
        %v5976 = vpop.f32.mrf.mxu0
        %v5977 = vpop.f32.mrf.mxu0
        %v5978 = vadd.f32 0.0, %v5977
        %v5979 = vpop.f32.mrf.mxu0
        %5980 = vmatprep.mubr.bf16.mxu0 0
        %5981 = vmatmul.mubr.bf16.gmra.mxu0 %v5920
        %v5982 = vpop.f32.mrf.mxu0
        %v5983 = vadd.f32 0.0, %v5982
        %v5984 = vpop.f32.mrf.mxu0
        %v5985 = vpop.f32.mrf.mxu0
        %v5986 = vadd.f32 0.0, %v5985
        %v5987 = vpop.f32.mrf.mxu0
        %5988 = vmatprep.mubr.bf16.mxu0 0
        %5989 = vmatmul.mubr.bf16.gmra.mxu0 %v5923
        %v5990 = vpop.f32.mrf.mxu0
        %v5991 = vadd.f32 0.0, %v5990
        %v5992 = vpop.f32.mrf.mxu0
        %v5993 = vpop.f32.mrf.mxu0
        %v5994 = vadd.f32 0.0, %v5993
        %v5995 = vpop.f32.mrf.mxu0
        %5996 = vmatprep.mubr.bf16.mxu0 0
        %5997 = vmatmul.mubr.bf16.gmra.mxu0 %v5926
        %v5998 = vpop.f32.mrf.mxu0
        %v5999 = vadd.f32 0.0, %v5998
        %v6000 = vpop.f32.mrf.mxu0
        %v6001 = vpop.f32.mrf.mxu0
        %v6002 = vadd.f32 0.0, %v6001
        %v6003 = vpop.f32.mrf.mxu0
        %6004 = vmatprep.mubr.bf16.mxu0 0
        %6005 = vmatmul.mubr.bf16.gmra.mxu0 %v5929
        %v6006 = vpop.f32.mrf.mxu0
        %v6007 = vadd.f32 0.0, %v6006
        %v6008 = vpop.f32.mrf.mxu0
        %v6009 = vpop.f32.mrf.mxu0
        %v6010 = vadd.f32 0.0, %v6009
        %v6011 = vpop.f32.mrf.mxu0
        %6012 = vmatprep.mubr.bf16.mxu0 0
        %6013 = vmatmul.mubr.bf16.gmra.mxu0 %v5932
        %v6014 = vpop.f32.mrf.mxu0
        %v6015 = vadd.f32 0.0, %v6014
        %v6016 = vpop.f32.mrf.mxu0
        %v6017 = vpop.f32.mrf.mxu0
        %v6018 = vadd.f32 0.0, %v6017
        %v6019 = vpop.f32.mrf.mxu0
        %6020 = vmatprep.mubr.bf16.mxu0 0
        %6021 = vmatmul.mubr.bf16.gmra.mxu0 %v5935
        %v6022 = vpop.f32.mrf.mxu0
        %v6023 = vadd.f32 0.0, %v6022
        %v6024 = vpop.f32.mrf.mxu0
        %v6025 = vpop.f32.mrf.mxu0
        %v6026 = vadd.f32 0.0, %v6025
        %v6027 = vpop.f32.mrf.mxu0
        %6028 = vmatprep.mubr.bf16.mxu0 0
        %6029 = vmatmul.mubr.bf16.gmra.mxu0 %v5938
        %v6030 = vpop.f32.mrf.mxu0
        %v6031 = vadd.f32 0.0, %v6030
        %v6032 = vpop.f32.mrf.mxu0
        %v6033 = vpop.f32.mrf.mxu0
        %v6034 = vadd.f32 0.0, %v6033
        %v6035 = vpop.f32.mrf.mxu0
        %6036 = vdwg.mxu0
        %v6053 = vunpack.c.l.b16 %v5801
        %v6054 = vunpack.c.l.b16 %v5802
        %v6055 = vunpack.c.l.b16 %v5803
        %v6056 = vunpack.c.l.b16 %v5804
        %v6057 = vunpack.c.l.b16 %v5805
        %v6058 = vunpack.c.l.b16 %v5806
        %v6059 = vunpack.c.l.b16 %v5807
        %v6060 = vunpack.c.l.b16 %v5808
        %v6061 = vunpack.c.l.b16 %v5809
        %v6062 = vunpack.c.l.b16 %v5810
        %v6063 = vunpack.c.l.b16 %v5811
        %v6064 = vunpack.c.l.b16 %v5812
        %v6065 = vunpack.c.l.b16 %v5813
        %v6066 = vunpack.c.l.b16 %v5814
        %v6067 = vunpack.c.l.b16 %v5815
        %v6068 = vunpack.c.l.b16 %v5816
        %v6069 = vpack.c.b16 %v6054, %v6053
        %v6070 = vpack.c.b16 %v6056, %v6055
        %v6071 = vpack.c.b16 %v6058, %v6057
        %v6072 = vpack.c.b16 %v6060, %v6059
        %v6073 = vpack.c.b16 %v6062, %v6061
        %v6074 = vpack.c.b16 %v6064, %v6063
        %v6075 = vpack.c.b16 %v6066, %v6065
        %v6076 = vpack.c.b16 %v6068, %v6067
        %v6085 = vunpack.c.l.b16 %v5817
        %v6086 = vunpack.c.l.b16 %v5818
        %v6087 = vunpack.c.l.b16 %v5819
        %v6088 = vunpack.c.l.b16 %v5820
        %v6089 = vunpack.c.l.b16 %v5821
        %v6090 = vunpack.c.l.b16 %v5822
        %v6091 = vunpack.c.l.b16 %v5823
        %v6092 = vunpack.c.l.b16 %v5824
        %v6093 = vpack.c.b16 %v6086, %v6085
        %v6094 = vpack.c.b16 %v6088, %v6087
        %v6095 = vpack.c.b16 %v6090, %v6089
        %v6096 = vpack.c.b16 %v6092, %v6091
        %v6102 = vsel %vm1147, %v6069, 0
        %v6105 = vsel %vm1147, %v6070, 0
        %v6108 = vsel %vm1147, %v6071, 0
        %v6111 = vsel %vm1147, %v6072, 0
        %v6114 = vsel %vm1147, %v6073, 0
        %v6117 = vsel %vm1147, %v6074, 0
        %v6120 = vsel %vm1147, %v6075, 0
        %v6123 = vsel %vm1147, %v6076, 0
        %6125 = vmatprep.subr.bf16.mxu0 0
        %6126 = vmatpush1.bf16.msra.mxu0 0
        %6127 = vmatprep.subr.bf16.mxu0 0
        %6128 = vmatpush1.bf16.msra.mxu0 0
        %6129 = vmatprep.subr.bf16.mxu0 0
        %6130 = vmatpush1.bf16.msra.mxu0 0
        %6131 = vmatprep.subr.bf16.mxu0 0
        %6132 = vmatpush1.bf16.msra.mxu0 0
        %6133 = vmatprep.subr.bf16.mxu0 0
        %6134 = vmatpush1.bf16.msra.mxu0 %v6096
        %6135 = vmatprep.subr.bf16.mxu0 0
        %6136 = vmatpush1.bf16.msra.mxu0 %v6095
        %6137 = vmatprep.subr.bf16.mxu0 0
        %6138 = vmatpush1.bf16.msra.mxu0 %v6094
        %6139 = vmatprep.subr.bf16.mxu0 0
        %6140 = vmatpush1.bf16.msra.mxu0 %v6093
        %6141 = vmatprep.subr.bf16.mxu0 0
        %6142 = vmatpush2.bf16.msra.mxu0 0
        %6143 = vmatprep.subr.bf16.mxu0 0
        %6144 = vmatpush2.bf16.msra.mxu0 0
        %6145 = vmatprep.subr.bf16.mxu0 0
        %6146 = vmatpush2.bf16.msra.mxu0 0
        %6147 = vmatprep.subr.bf16.mxu0 0
        %6148 = vmatpush2.bf16.msra.mxu0 0
        %6149 = vmatprep.subr.bf16.mxu0 0
        %6150 = vmatpush2.bf16.msra.mxu0 0
        %6151 = vmatprep.subr.bf16.mxu0 0
        %6152 = vmatpush2.bf16.msra.mxu0 0
        %6153 = vmatprep.subr.bf16.mxu0 0
        %6154 = vmatpush2.bf16.msra.mxu0 0
        %6155 = vmatprep.subr.bf16.mxu0 0
        %6156 = vmatpush2.bf16.msra.mxu0 0
        %6157 = vmatprep.mubr.bf16.mxu0 0
        %6158 = vmatmul.mubr.bf16.gmra.mxu0 %v6102
        %v6159 = vpop.f32.mrf.mxu0
        %v6160 = vadd.f32 %v5975, %v6159
        %v6161 = vpop.f32.mrf.mxu0
        %v6162 = vpop.f32.mrf.mxu0
        %v6163 = vadd.f32 %v5978, %v6162
        %v6164 = vpop.f32.mrf.mxu0
        %6165 = vmatprep.mubr.bf16.mxu0 0
        %6166 = vmatmul.mubr.bf16.gmra.mxu0 %v6105
        %v6167 = vpop.f32.mrf.mxu0
        %v6168 = vadd.f32 %v5983, %v6167
        %v6169 = vpop.f32.mrf.mxu0
        %v6170 = vpop.f32.mrf.mxu0
        %v6171 = vadd.f32 %v5986, %v6170
        %v6172 = vpop.f32.mrf.mxu0
        %6173 = vmatprep.mubr.bf16.mxu0 0
        %6174 = vmatmul.mubr.bf16.gmra.mxu0 %v6108
        %v6175 = vpop.f32.mrf.mxu0
        %v6176 = vadd.f32 %v5991, %v6175
        %v6177 = vpop.f32.mrf.mxu0
        %v6178 = vpop.f32.mrf.mxu0
        %v6179 = vadd.f32 %v5994, %v6178
        %v6180 = vpop.f32.mrf.mxu0
        %6181 = vmatprep.mubr.bf16.mxu0 0
        %6182 = vmatmul.mubr.bf16.gmra.mxu0 %v6111
        %v6183 = vpop.f32.mrf.mxu0
        %v6184 = vadd.f32 %v5999, %v6183
        %v6185 = vpop.f32.mrf.mxu0
        %v6186 = vpop.f32.mrf.mxu0
        %v6187 = vadd.f32 %v6002, %v6186
        %v6188 = vpop.f32.mrf.mxu0
        %6189 = vmatprep.mubr.bf16.mxu0 0
        %6190 = vmatmul.mubr.bf16.gmra.mxu0 %v6114
        %v6191 = vpop.f32.mrf.mxu0
        %v6192 = vadd.f32 %v6007, %v6191
        %v6193 = vpop.f32.mrf.mxu0
        %v6194 = vpop.f32.mrf.mxu0
        %v6195 = vadd.f32 %v6010, %v6194
        %v6196 = vpop.f32.mrf.mxu0
        %6197 = vmatprep.mubr.bf16.mxu0 0
        %6198 = vmatmul.mubr.bf16.gmra.mxu0 %v6117
        %v6199 = vpop.f32.mrf.mxu0
        %v6200 = vadd.f32 %v6015, %v6199
        %v6201 = vpop.f32.mrf.mxu0
        %v6202 = vpop.f32.mrf.mxu0
        %v6203 = vadd.f32 %v6018, %v6202
        %v6204 = vpop.f32.mrf.mxu0
        %6205 = vmatprep.mubr.bf16.mxu0 0
        %6206 = vmatmul.mubr.bf16.gmra.mxu0 %v6120
        %v6207 = vpop.f32.mrf.mxu0
        %v6208 = vadd.f32 %v6023, %v6207
        %v6209 = vpop.f32.mrf.mxu0
        %v6210 = vpop.f32.mrf.mxu0
        %v6211 = vadd.f32 %v6026, %v6210
        %v6212 = vpop.f32.mrf.mxu0
        %6213 = vmatprep.mubr.bf16.mxu0 0
        %6214 = vmatmul.mubr.bf16.gmra.mxu0 %v6123
        %v6215 = vpop.f32.mrf.mxu0
        %v6216 = vadd.f32 %v6031, %v6215
        %v6217 = vpop.f32.mrf.mxu0
        %v6218 = vpop.f32.mrf.mxu0
        %v6219 = vadd.f32 %v6034, %v6218
        %v6220 = vpop.f32.mrf.mxu0
        %6221 = vdwg.mxu0
        %s6222 = smul.addr %s1454, 4
        %s6223 = scalar_lea.vmem [#allocation3], %s6222
        %v6224 = vld [vmem:[%s6223] sm:$0xf]
        %v6225 = vld [vmem:[%s6223 + $0x4] sm:$0xf]
        %v6226 = vld [vmem:[%s6223 + $0x8] sm:$0xf]
        %v6227 = vld [vmem:[%s6223 + $0xc] sm:$0xf]
        %v6228 = vld [vmem:[%s6223 + $0x10] sm:$0xf]
        %v6229 = vld [vmem:[%s6223 + $0x14] sm:$0xf]
        %v6230 = vld [vmem:[%s6223 + $0x18] sm:$0xf]
        %v6231 = vld [vmem:[%s6223 + $0x1c] sm:$0xf]
        %v6232 = vld [vmem:[%s6223 + $0x20] sm:$0xf]
        %v6233 = vld [vmem:[%s6223 + $0x24] sm:$0xf]
        %v6234 = vld [vmem:[%s6223 + $0x28] sm:$0xf]
        %v6235 = vld [vmem:[%s6223 + $0x2c] sm:$0xf]
        %v6236 = vld [vmem:[%s6223 + $0x30] sm:$0xf]
        %v6237 = vld [vmem:[%s6223 + $0x34] sm:$0xf]
        %v6238 = vld [vmem:[%s6223 + $0x38] sm:$0xf]
        %v6239 = vld [vmem:[%s6223 + $0x3c] sm:$0xf]
        %s6240 = scalar_lea.vmem [#allocation9], 64
        %v6241 = vld [vmem:[%s6240] sm:$0xf]
        %v6242 = vld [vmem:[%s6240 + $0x4] sm:$0xf]
        %v6243 = vld [vmem:[%s6240 + $0x8] sm:$0xf]
        %v6244 = vld [vmem:[%s6240 + $0xc] sm:$0xf]
        %v6245 = vld [vmem:[%s6240 + $0x10] sm:$0xf]
        %v6246 = vld [vmem:[%s6240 + $0x14] sm:$0xf]
        %v6247 = vld [vmem:[%s6240 + $0x18] sm:$0xf]
        %v6248 = vld [vmem:[%s6240 + $0x1c] sm:$0xf]
        %v6265 = vunpack.c.l.b16 %v6224
        %v6266 = vunpack.c.l.b16 %v6225
        %v6267 = vunpack.c.l.b16 %v6226
        %v6268 = vunpack.c.l.b16 %v6227
        %v6269 = vunpack.c.l.b16 %v6228
        %v6270 = vunpack.c.l.b16 %v6229
        %v6271 = vunpack.c.l.b16 %v6230
        %v6272 = vunpack.c.l.b16 %v6231
        %v6273 = vunpack.c.l.b16 %v6232
        %v6274 = vunpack.c.l.b16 %v6233
        %v6275 = vunpack.c.l.b16 %v6234
        %v6276 = vunpack.c.l.b16 %v6235
        %v6277 = vunpack.c.l.b16 %v6236
        %v6278 = vunpack.c.l.b16 %v6237
        %v6279 = vunpack.c.l.b16 %v6238
        %v6280 = vunpack.c.l.b16 %v6239
        %v6281 = vpack.c.b16 %v6266, %v6265
        %v6282 = vpack.c.b16 %v6268, %v6267
        %v6283 = vpack.c.b16 %v6270, %v6269
        %v6284 = vpack.c.b16 %v6272, %v6271
        %v6285 = vpack.c.b16 %v6274, %v6273
        %v6286 = vpack.c.b16 %v6276, %v6275
        %v6287 = vpack.c.b16 %v6278, %v6277
        %v6288 = vpack.c.b16 %v6280, %v6279
        %v6297 = vunpack.c.l.b16 %v6241
        %v6298 = vunpack.c.l.b16 %v6242
        %v6299 = vunpack.c.l.b16 %v6243
        %v6300 = vunpack.c.l.b16 %v6244
        %v6301 = vunpack.c.l.b16 %v6245
        %v6302 = vunpack.c.l.b16 %v6246
        %v6303 = vunpack.c.l.b16 %v6247
        %v6304 = vunpack.c.l.b16 %v6248
        %v6305 = vpack.c.b16 %v6298, %v6297
        %v6306 = vpack.c.b16 %v6300, %v6299
        %v6307 = vpack.c.b16 %v6302, %v6301
        %v6308 = vpack.c.b16 %v6304, %v6303
        %v6314 = vsel %vm1147, %v6281, 0
        %v6317 = vsel %vm1147, %v6282, 0
        %v6320 = vsel %vm1147, %v6283, 0
        %v6323 = vsel %vm1147, %v6284, 0
        %v6326 = vsel %vm1147, %v6285, 0
        %v6329 = vsel %vm1147, %v6286, 0
        %v6332 = vsel %vm1147, %v6287, 0
        %v6335 = vsel %vm1147, %v6288, 0
        %6337 = vmatprep.subr.bf16.mxu0 0
        %6338 = vmatpush1.bf16.msra.mxu0 0
        %6339 = vmatprep.subr.bf16.mxu0 0
        %6340 = vmatpush1.bf16.msra.mxu0 0
        %6341 = vmatprep.subr.bf16.mxu0 0
        %6342 = vmatpush1.bf16.msra.mxu0 0
        %6343 = vmatprep.subr.bf16.mxu0 0
        %6344 = vmatpush1.bf16.msra.mxu0 0
        %6345 = vmatprep.subr.bf16.mxu0 0
        %6346 = vmatpush1.bf16.msra.mxu0 %v6308
        %6347 = vmatprep.subr.bf16.mxu0 0
        %6348 = vmatpush1.bf16.msra.mxu0 %v6307
        %6349 = vmatprep.subr.bf16.mxu0 0
        %6350 = vmatpush1.bf16.msra.mxu0 %v6306
        %6351 = vmatprep.subr.bf16.mxu0 0
        %6352 = vmatpush1.bf16.msra.mxu0 %v6305
        %6353 = vmatprep.subr.bf16.mxu0 0
        %6354 = vmatpush2.bf16.msra.mxu0 0
        %6355 = vmatprep.subr.bf16.mxu0 0
        %6356 = vmatpush2.bf16.msra.mxu0 0
        %6357 = vmatprep.subr.bf16.mxu0 0
        %6358 = vmatpush2.bf16.msra.mxu0 0
        %6359 = vmatprep.subr.bf16.mxu0 0
        %6360 = vmatpush2.bf16.msra.mxu0 0
        %6361 = vmatprep.subr.bf16.mxu0 0
        %6362 = vmatpush2.bf16.msra.mxu0 0
        %6363 = vmatprep.subr.bf16.mxu0 0
        %6364 = vmatpush2.bf16.msra.mxu0 0
        %6365 = vmatprep.subr.bf16.mxu0 0
        %6366 = vmatpush2.bf16.msra.mxu0 0
        %6367 = vmatprep.subr.bf16.mxu0 0
        %6368 = vmatpush2.bf16.msra.mxu0 0
        %6369 = vmatprep.mubr.bf16.mxu0 0
        %6370 = vmatmul.mubr.bf16.gmra.mxu0 %v6314
        %v6371 = vpop.f32.mrf.mxu0
        %v6372 = vadd.f32 0.0, %v6371
        %v6373 = vpop.f32.mrf.mxu0
        %v6374 = vpop.f32.mrf.mxu0
        %v6375 = vadd.f32 0.0, %v6374
        %v6376 = vpop.f32.mrf.mxu0
        %6377 = vmatprep.mubr.bf16.mxu0 0
        %6378 = vmatmul.mubr.bf16.gmra.mxu0 %v6317
        %v6379 = vpop.f32.mrf.mxu0
        %v6380 = vadd.f32 0.0, %v6379
        %v6381 = vpop.f32.mrf.mxu0
        %v6382 = vpop.f32.mrf.mxu0
        %v6383 = vadd.f32 0.0, %v6382
        %v6384 = vpop.f32.mrf.mxu0
        %6385 = vmatprep.mubr.bf16.mxu0 0
        %6386 = vmatmul.mubr.bf16.gmra.mxu0 %v6320
        %v6387 = vpop.f32.mrf.mxu0
        %v6388 = vadd.f32 0.0, %v6387
        %v6389 = vpop.f32.mrf.mxu0
        %v6390 = vpop.f32.mrf.mxu0
        %v6391 = vadd.f32 0.0, %v6390
        %v6392 = vpop.f32.mrf.mxu0
        %6393 = vmatprep.mubr.bf16.mxu0 0
        %6394 = vmatmul.mubr.bf16.gmra.mxu0 %v6323
        %v6395 = vpop.f32.mrf.mxu0
        %v6396 = vadd.f32 0.0, %v6395
        %v6397 = vpop.f32.mrf.mxu0
        %v6398 = vpop.f32.mrf.mxu0
        %v6399 = vadd.f32 0.0, %v6398
        %v6400 = vpop.f32.mrf.mxu0
        %6401 = vmatprep.mubr.bf16.mxu0 0
        %6402 = vmatmul.mubr.bf16.gmra.mxu0 %v6326
        %v6403 = vpop.f32.mrf.mxu0
        %v6404 = vadd.f32 0.0, %v6403
        %v6405 = vpop.f32.mrf.mxu0
        %v6406 = vpop.f32.mrf.mxu0
        %v6407 = vadd.f32 0.0, %v6406
        %v6408 = vpop.f32.mrf.mxu0
        %6409 = vmatprep.mubr.bf16.mxu0 0
        %6410 = vmatmul.mubr.bf16.gmra.mxu0 %v6329
        %v6411 = vpop.f32.mrf.mxu0
        %v6412 = vadd.f32 0.0, %v6411
        %v6413 = vpop.f32.mrf.mxu0
        %v6414 = vpop.f32.mrf.mxu0
        %v6415 = vadd.f32 0.0, %v6414
        %v6416 = vpop.f32.mrf.mxu0
        %6417 = vmatprep.mubr.bf16.mxu0 0
        %6418 = vmatmul.mubr.bf16.gmra.mxu0 %v6332
        %v6419 = vpop.f32.mrf.mxu0
        %v6420 = vadd.f32 0.0, %v6419
        %v6421 = vpop.f32.mrf.mxu0
        %v6422 = vpop.f32.mrf.mxu0
        %v6423 = vadd.f32 0.0, %v6422
        %v6424 = vpop.f32.mrf.mxu0
        %6425 = vmatprep.mubr.bf16.mxu0 0
        %6426 = vmatmul.mubr.bf16.gmra.mxu0 %v6335
        %v6427 = vpop.f32.mrf.mxu0
        %v6428 = vadd.f32 0.0, %v6427
        %v6429 = vpop.f32.mrf.mxu0
        %v6430 = vpop.f32.mrf.mxu0
        %v6431 = vadd.f32 0.0, %v6430
        %v6432 = vpop.f32.mrf.mxu0
        %6433 = vdwg.mxu0
        %v6434 = vadd.f32 %v6160, %v6372
        %v6435 = vadd.f32 %v6163, %v6375
        %v6436 = vadd.f32 %v6168, %v6380
        %v6437 = vadd.f32 %v6171, %v6383
        %v6438 = vadd.f32 %v6176, %v6388
        %v6439 = vadd.f32 %v6179, %v6391
        %v6440 = vadd.f32 %v6184, %v6396
        %v6441 = vadd.f32 %v6187, %v6399
        %v6442 = vadd.f32 %v6192, %v6404
        %v6443 = vadd.f32 %v6195, %v6407
        %v6444 = vadd.f32 %v6200, %v6412
        %v6445 = vadd.f32 %v6203, %v6415
        %v6446 = vadd.f32 %v6208, %v6420
        %v6447 = vadd.f32 %v6211, %v6423
        %v6448 = vadd.f32 %v6216, %v6428
        %v6449 = vadd.f32 %v6219, %v6431
        %v6450 = vld [vmem:[%s3330] sm:$0xf]
        %v6451 = vld [vmem:[%s3330 + $0x4] sm:$0xf]
        %v6452 = vld [vmem:[%s3330 + $0x8] sm:$0xf]
        %v6453 = vld [vmem:[%s3330 + $0xc] sm:$0xf]
        %v6454 = vld [vmem:[%s3330 + $0x10] sm:$0xf]
        %v6455 = vld [vmem:[%s3330 + $0x14] sm:$0xf]
        %v6456 = vld [vmem:[%s3330 + $0x18] sm:$0xf]
        %v6457 = vld [vmem:[%s3330 + $0x1c] sm:$0xf]
        %v6458 = vld [vmem:[%s3330 + $0x20] sm:$0xf]
        %v6459 = vld [vmem:[%s3330 + $0x24] sm:$0xf]
        %v6460 = vld [vmem:[%s3330 + $0x28] sm:$0xf]
        %v6461 = vld [vmem:[%s3330 + $0x2c] sm:$0xf]
        %v6462 = vld [vmem:[%s3330 + $0x30] sm:$0xf]
        %v6463 = vld [vmem:[%s3330 + $0x34] sm:$0xf]
        %v6464 = vld [vmem:[%s3330 + $0x38] sm:$0xf]
        %v6465 = vld [vmem:[%s3330 + $0x3c] sm:$0xf]
        %s6466 = scalar_lea.vmem [#allocation9], 96
        %v6467 = vld [vmem:[%s6466] sm:$0xf]
        %v6468 = vld [vmem:[%s6466 + $0x4] sm:$0xf]
        %v6469 = vld [vmem:[%s6466 + $0x8] sm:$0xf]
        %v6470 = vld [vmem:[%s6466 + $0xc] sm:$0xf]
        %v6471 = vld [vmem:[%s6466 + $0x10] sm:$0xf]
        %v6472 = vld [vmem:[%s6466 + $0x14] sm:$0xf]
        %v6473 = vld [vmem:[%s6466 + $0x18] sm:$0xf]
        %v6474 = vld [vmem:[%s6466 + $0x1c] sm:$0xf]
        %v6491 = vunpack.c.l.b16 %v6450
        %v6492 = vunpack.c.l.b16 %v6451
        %v6493 = vunpack.c.l.b16 %v6452
        %v6494 = vunpack.c.l.b16 %v6453
        %v6495 = vunpack.c.l.b16 %v6454
        %v6496 = vunpack.c.l.b16 %v6455
        %v6497 = vunpack.c.l.b16 %v6456
        %v6498 = vunpack.c.l.b16 %v6457
        %v6499 = vunpack.c.l.b16 %v6458
        %v6500 = vunpack.c.l.b16 %v6459
        %v6501 = vunpack.c.l.b16 %v6460
        %v6502 = vunpack.c.l.b16 %v6461
        %v6503 = vunpack.c.l.b16 %v6462
        %v6504 = vunpack.c.l.b16 %v6463
        %v6505 = vunpack.c.l.b16 %v6464
        %v6506 = vunpack.c.l.b16 %v6465
        %v6507 = vpack.c.b16 %v6492, %v6491
        %v6508 = vpack.c.b16 %v6494, %v6493
        %v6509 = vpack.c.b16 %v6496, %v6495
        %v6510 = vpack.c.b16 %v6498, %v6497
        %v6511 = vpack.c.b16 %v6500, %v6499
        %v6512 = vpack.c.b16 %v6502, %v6501
        %v6513 = vpack.c.b16 %v6504, %v6503
        %v6514 = vpack.c.b16 %v6506, %v6505
        %v6523 = vunpack.c.l.b16 %v6467
        %v6524 = vunpack.c.l.b16 %v6468
        %v6525 = vunpack.c.l.b16 %v6469
        %v6526 = vunpack.c.l.b16 %v6470
        %v6527 = vunpack.c.l.b16 %v6471
        %v6528 = vunpack.c.l.b16 %v6472
        %v6529 = vunpack.c.l.b16 %v6473
        %v6530 = vunpack.c.l.b16 %v6474
        %v6531 = vpack.c.b16 %v6524, %v6523
        %v6532 = vpack.c.b16 %v6526, %v6525
        %v6533 = vpack.c.b16 %v6528, %v6527
        %v6534 = vpack.c.b16 %v6530, %v6529
        %v6540 = vsel %vm1147, %v6507, 0
        %v6543 = vsel %vm1147, %v6508, 0
        %v6546 = vsel %vm1147, %v6509, 0
        %v6549 = vsel %vm1147, %v6510, 0
        %v6552 = vsel %vm1147, %v6511, 0
        %v6555 = vsel %vm1147, %v6512, 0
        %v6558 = vsel %vm1147, %v6513, 0
        %v6561 = vsel %vm1147, %v6514, 0
        %6563 = vmatprep.subr.bf16.mxu0 0
        %6564 = vmatpush1.bf16.msra.mxu0 0
        %6565 = vmatprep.subr.bf16.mxu0 0
        %6566 = vmatpush1.bf16.msra.mxu0 0
        %6567 = vmatprep.subr.bf16.mxu0 0
        %6568 = vmatpush1.bf16.msra.mxu0 0
        %6569 = vmatprep.subr.bf16.mxu0 0
        %6570 = vmatpush1.bf16.msra.mxu0 0
        %6571 = vmatprep.subr.bf16.mxu0 0
        %6572 = vmatpush1.bf16.msra.mxu0 %v6534
        %6573 = vmatprep.subr.bf16.mxu0 0
        %6574 = vmatpush1.bf16.msra.mxu0 %v6533
        %6575 = vmatprep.subr.bf16.mxu0 0
        %6576 = vmatpush1.bf16.msra.mxu0 %v6532
        %6577 = vmatprep.subr.bf16.mxu0 0
        %6578 = vmatpush1.bf16.msra.mxu0 %v6531
        %6579 = vmatprep.subr.bf16.mxu0 0
        %6580 = vmatpush2.bf16.msra.mxu0 0
        %6581 = vmatprep.subr.bf16.mxu0 0
        %6582 = vmatpush2.bf16.msra.mxu0 0
        %6583 = vmatprep.subr.bf16.mxu0 0
        %6584 = vmatpush2.bf16.msra.mxu0 0
        %6585 = vmatprep.subr.bf16.mxu0 0
        %6586 = vmatpush2.bf16.msra.mxu0 0
        %6587 = vmatprep.subr.bf16.mxu0 0
        %6588 = vmatpush2.bf16.msra.mxu0 0
        %6589 = vmatprep.subr.bf16.mxu0 0
        %6590 = vmatpush2.bf16.msra.mxu0 0
        %6591 = vmatprep.subr.bf16.mxu0 0
        %6592 = vmatpush2.bf16.msra.mxu0 0
        %6593 = vmatprep.subr.bf16.mxu0 0
        %6594 = vmatpush2.bf16.msra.mxu0 0
        %6595 = vmatprep.mubr.bf16.mxu0 0
        %6596 = vmatmul.mubr.bf16.gmra.mxu0 %v6540
        %v6597 = vpop.f32.mrf.mxu0
        %v6598 = vadd.f32 0.0, %v6597
        %v6599 = vpop.f32.mrf.mxu0
        %v6600 = vpop.f32.mrf.mxu0
        %v6601 = vadd.f32 0.0, %v6600
        %v6602 = vpop.f32.mrf.mxu0
        %6603 = vmatprep.mubr.bf16.mxu0 0
        %6604 = vmatmul.mubr.bf16.gmra.mxu0 %v6543
        %v6605 = vpop.f32.mrf.mxu0
        %v6606 = vadd.f32 0.0, %v6605
        %v6607 = vpop.f32.mrf.mxu0
        %v6608 = vpop.f32.mrf.mxu0
        %v6609 = vadd.f32 0.0, %v6608
        %v6610 = vpop.f32.mrf.mxu0
        %6611 = vmatprep.mubr.bf16.mxu0 0
        %6612 = vmatmul.mubr.bf16.gmra.mxu0 %v6546
        %v6613 = vpop.f32.mrf.mxu0
        %v6614 = vadd.f32 0.0, %v6613
        %v6615 = vpop.f32.mrf.mxu0
        %v6616 = vpop.f32.mrf.mxu0
        %v6617 = vadd.f32 0.0, %v6616
        %v6618 = vpop.f32.mrf.mxu0
        %6619 = vmatprep.mubr.bf16.mxu0 0
        %6620 = vmatmul.mubr.bf16.gmra.mxu0 %v6549
        %v6621 = vpop.f32.mrf.mxu0
        %v6622 = vadd.f32 0.0, %v6621
        %v6623 = vpop.f32.mrf.mxu0
        %v6624 = vpop.f32.mrf.mxu0
        %v6625 = vadd.f32 0.0, %v6624
        %v6626 = vpop.f32.mrf.mxu0
        %6627 = vmatprep.mubr.bf16.mxu0 0
        %6628 = vmatmul.mubr.bf16.gmra.mxu0 %v6552
        %v6629 = vpop.f32.mrf.mxu0
        %v6630 = vadd.f32 0.0, %v6629
        %v6631 = vpop.f32.mrf.mxu0
        %v6632 = vpop.f32.mrf.mxu0
        %v6633 = vadd.f32 0.0, %v6632
        %v6634 = vpop.f32.mrf.mxu0
        %6635 = vmatprep.mubr.bf16.mxu0 0
        %6636 = vmatmul.mubr.bf16.gmra.mxu0 %v6555
        %v6637 = vpop.f32.mrf.mxu0
        %v6638 = vadd.f32 0.0, %v6637
        %v6639 = vpop.f32.mrf.mxu0
        %v6640 = vpop.f32.mrf.mxu0
        %v6641 = vadd.f32 0.0, %v6640
        %v6642 = vpop.f32.mrf.mxu0
        %6643 = vmatprep.mubr.bf16.mxu0 0
        %6644 = vmatmul.mubr.bf16.gmra.mxu0 %v6558
        %v6645 = vpop.f32.mrf.mxu0
        %v6646 = vadd.f32 0.0, %v6645
        %v6647 = vpop.f32.mrf.mxu0
        %v6648 = vpop.f32.mrf.mxu0
        %v6649 = vadd.f32 0.0, %v6648
        %v6650 = vpop.f32.mrf.mxu0
        %6651 = vmatprep.mubr.bf16.mxu0 0
        %6652 = vmatmul.mubr.bf16.gmra.mxu0 %v6561
        %v6653 = vpop.f32.mrf.mxu0
        %v6654 = vadd.f32 0.0, %v6653
        %v6655 = vpop.f32.mrf.mxu0
        %v6656 = vpop.f32.mrf.mxu0
        %v6657 = vadd.f32 0.0, %v6656
        %v6658 = vpop.f32.mrf.mxu0
        %6659 = vdwg.mxu0
        %v6660 = vadd.f32 %v6434, %v6598
        %v6661 = vadd.f32 %v6435, %v6601
        %v6662 = vadd.f32 %v6436, %v6606
        %v6663 = vadd.f32 %v6437, %v6609
        %v6664 = vadd.f32 %v6438, %v6614
        %v6665 = vadd.f32 %v6439, %v6617
        %v6666 = vadd.f32 %v6440, %v6622
        %v6667 = vadd.f32 %v6441, %v6625
        %v6668 = vadd.f32 %v6442, %v6630
        %v6669 = vadd.f32 %v6443, %v6633
        %v6670 = vadd.f32 %v6444, %v6638
        %v6671 = vadd.f32 %v6445, %v6641
        %v6672 = vadd.f32 %v6446, %v6646
        %v6673 = vadd.f32 %v6447, %v6649
        %v6674 = vadd.f32 %v6448, %v6654
        %v6675 = vadd.f32 %v6449, %v6657
        %v6676 = vld [vmem:[%s3256] sm:$0xf]
        %v6677 = vld [vmem:[%s3256 + $0x4] sm:$0xf]
        %v6678 = vld [vmem:[%s3256 + $0x8] sm:$0xf]
        %v6679 = vld [vmem:[%s3256 + $0xc] sm:$0xf]
        %v6680 = vld [vmem:[%s3256 + $0x10] sm:$0xf]
        %v6681 = vld [vmem:[%s3256 + $0x14] sm:$0xf]
        %v6682 = vld [vmem:[%s3256 + $0x18] sm:$0xf]
        %v6683 = vld [vmem:[%s3256 + $0x1c] sm:$0xf]
        %v6684 = vld [vmem:[%s3256 + $0x20] sm:$0xf]
        %v6685 = vld [vmem:[%s3256 + $0x24] sm:$0xf]
        %v6686 = vld [vmem:[%s3256 + $0x28] sm:$0xf]
        %v6687 = vld [vmem:[%s3256 + $0x2c] sm:$0xf]
        %v6688 = vld [vmem:[%s3256 + $0x30] sm:$0xf]
        %v6689 = vld [vmem:[%s3256 + $0x34] sm:$0xf]
        %v6690 = vld [vmem:[%s3256 + $0x38] sm:$0xf]
        %v6691 = vld [vmem:[%s3256 + $0x3c] sm:$0xf]
        %s6692 = scalar_lea.vmem [#allocation9], 128
        %v6693 = vld [vmem:[%s6692] sm:$0xf]
        %v6694 = vld [vmem:[%s6692 + $0x4] sm:$0xf]
        %v6695 = vld [vmem:[%s6692 + $0x8] sm:$0xf]
        %v6696 = vld [vmem:[%s6692 + $0xc] sm:$0xf]
        %v6697 = vld [vmem:[%s6692 + $0x10] sm:$0xf]
        %v6698 = vld [vmem:[%s6692 + $0x14] sm:$0xf]
        %v6699 = vld [vmem:[%s6692 + $0x18] sm:$0xf]
        %v6700 = vld [vmem:[%s6692 + $0x1c] sm:$0xf]
        %v6717 = vunpack.c.l.b16 %v6676
        %v6718 = vunpack.c.l.b16 %v6677
        %v6719 = vunpack.c.l.b16 %v6678
        %v6720 = vunpack.c.l.b16 %v6679
        %v6721 = vunpack.c.l.b16 %v6680
        %v6722 = vunpack.c.l.b16 %v6681
        %v6723 = vunpack.c.l.b16 %v6682
        %v6724 = vunpack.c.l.b16 %v6683
        %v6725 = vunpack.c.l.b16 %v6684
        %v6726 = vunpack.c.l.b16 %v6685
        %v6727 = vunpack.c.l.b16 %v6686
        %v6728 = vunpack.c.l.b16 %v6687
        %v6729 = vunpack.c.l.b16 %v6688
        %v6730 = vunpack.c.l.b16 %v6689
        %v6731 = vunpack.c.l.b16 %v6690
        %v6732 = vunpack.c.l.b16 %v6691
        %v6733 = vpack.c.b16 %v6718, %v6717
        %v6734 = vpack.c.b16 %v6720, %v6719
        %v6735 = vpack.c.b16 %v6722, %v6721
        %v6736 = vpack.c.b16 %v6724, %v6723
        %v6737 = vpack.c.b16 %v6726, %v6725
        %v6738 = vpack.c.b16 %v6728, %v6727
        %v6739 = vpack.c.b16 %v6730, %v6729
        %v6740 = vpack.c.b16 %v6732, %v6731
        %v6749 = vunpack.c.l.b16 %v6693
        %v6750 = vunpack.c.l.b16 %v6694
        %v6751 = vunpack.c.l.b16 %v6695
        %v6752 = vunpack.c.l.b16 %v6696
        %v6753 = vunpack.c.l.b16 %v6697
        %v6754 = vunpack.c.l.b16 %v6698
        %v6755 = vunpack.c.l.b16 %v6699
        %v6756 = vunpack.c.l.b16 %v6700
        %v6757 = vpack.c.b16 %v6750, %v6749
        %v6758 = vpack.c.b16 %v6752, %v6751
        %v6759 = vpack.c.b16 %v6754, %v6753
        %v6760 = vpack.c.b16 %v6756, %v6755
        %v6766 = vsel %vm1147, %v6733, 0
        %v6769 = vsel %vm1147, %v6734, 0
        %v6772 = vsel %vm1147, %v6735, 0
        %v6775 = vsel %vm1147, %v6736, 0
        %v6778 = vsel %vm1147, %v6737, 0
        %v6781 = vsel %vm1147, %v6738, 0
        %v6784 = vsel %vm1147, %v6739, 0
        %v6787 = vsel %vm1147, %v6740, 0
        %6789 = vmatprep.subr.bf16.mxu0 0
        %6790 = vmatpush1.bf16.msra.mxu0 0
        %6791 = vmatprep.subr.bf16.mxu0 0
        %6792 = vmatpush1.bf16.msra.mxu0 0
        %6793 = vmatprep.subr.bf16.mxu0 0
        %6794 = vmatpush1.bf16.msra.mxu0 0
        %6795 = vmatprep.subr.bf16.mxu0 0
        %6796 = vmatpush1.bf16.msra.mxu0 0
        %6797 = vmatprep.subr.bf16.mxu0 0
        %6798 = vmatpush1.bf16.msra.mxu0 %v6760
        %6799 = vmatprep.subr.bf16.mxu0 0
        %6800 = vmatpush1.bf16.msra.mxu0 %v6759
        %6801 = vmatprep.subr.bf16.mxu0 0
        %6802 = vmatpush1.bf16.msra.mxu0 %v6758
        %6803 = vmatprep.subr.bf16.mxu0 0
        %6804 = vmatpush1.bf16.msra.mxu0 %v6757
        %6805 = vmatprep.subr.bf16.mxu0 0
        %6806 = vmatpush2.bf16.msra.mxu0 0
        %6807 = vmatprep.subr.bf16.mxu0 0
        %6808 = vmatpush2.bf16.msra.mxu0 0
        %6809 = vmatprep.subr.bf16.mxu0 0
        %6810 = vmatpush2.bf16.msra.mxu0 0
        %6811 = vmatprep.subr.bf16.mxu0 0
        %6812 = vmatpush2.bf16.msra.mxu0 0
        %6813 = vmatprep.subr.bf16.mxu0 0
        %6814 = vmatpush2.bf16.msra.mxu0 0
        %6815 = vmatprep.subr.bf16.mxu0 0
        %6816 = vmatpush2.bf16.msra.mxu0 0
        %6817 = vmatprep.subr.bf16.mxu0 0
        %6818 = vmatpush2.bf16.msra.mxu0 0
        %6819 = vmatprep.subr.bf16.mxu0 0
        %6820 = vmatpush2.bf16.msra.mxu0 0
        %6821 = vmatprep.mubr.bf16.mxu0 0
        %6822 = vmatmul.mubr.bf16.gmra.mxu0 %v6766
        %v6823 = vpop.f32.mrf.mxu0
        %v6824 = vadd.f32 0.0, %v6823
        %v6825 = vpop.f32.mrf.mxu0
        %v6826 = vpop.f32.mrf.mxu0
        %v6827 = vadd.f32 0.0, %v6826
        %v6828 = vpop.f32.mrf.mxu0
        %6829 = vmatprep.mubr.bf16.mxu0 0
        %6830 = vmatmul.mubr.bf16.gmra.mxu0 %v6769
        %v6831 = vpop.f32.mrf.mxu0
        %v6832 = vadd.f32 0.0, %v6831
        %v6833 = vpop.f32.mrf.mxu0
        %v6834 = vpop.f32.mrf.mxu0
        %v6835 = vadd.f32 0.0, %v6834
        %v6836 = vpop.f32.mrf.mxu0
        %6837 = vmatprep.mubr.bf16.mxu0 0
        %6838 = vmatmul.mubr.bf16.gmra.mxu0 %v6772
        %v6839 = vpop.f32.mrf.mxu0
        %v6840 = vadd.f32 0.0, %v6839
        %v6841 = vpop.f32.mrf.mxu0
        %v6842 = vpop.f32.mrf.mxu0
        %v6843 = vadd.f32 0.0, %v6842
        %v6844 = vpop.f32.mrf.mxu0
        %6845 = vmatprep.mubr.bf16.mxu0 0
        %6846 = vmatmul.mubr.bf16.gmra.mxu0 %v6775
        %v6847 = vpop.f32.mrf.mxu0
        %v6848 = vadd.f32 0.0, %v6847
        %v6849 = vpop.f32.mrf.mxu0
        %v6850 = vpop.f32.mrf.mxu0
        %v6851 = vadd.f32 0.0, %v6850
        %v6852 = vpop.f32.mrf.mxu0
        %6853 = vmatprep.mubr.bf16.mxu0 0
        %6854 = vmatmul.mubr.bf16.gmra.mxu0 %v6778
        %v6855 = vpop.f32.mrf.mxu0
        %v6856 = vadd.f32 0.0, %v6855
        %v6857 = vpop.f32.mrf.mxu0
        %v6858 = vpop.f32.mrf.mxu0
        %v6859 = vadd.f32 0.0, %v6858
        %v6860 = vpop.f32.mrf.mxu0
        %6861 = vmatprep.mubr.bf16.mxu0 0
        %6862 = vmatmul.mubr.bf16.gmra.mxu0 %v6781
        %v6863 = vpop.f32.mrf.mxu0
        %v6864 = vadd.f32 0.0, %v6863
        %v6865 = vpop.f32.mrf.mxu0
        %v6866 = vpop.f32.mrf.mxu0
        %v6867 = vadd.f32 0.0, %v6866
        %v6868 = vpop.f32.mrf.mxu0
        %6869 = vmatprep.mubr.bf16.mxu0 0
        %6870 = vmatmul.mubr.bf16.gmra.mxu0 %v6784
        %v6871 = vpop.f32.mrf.mxu0
        %v6872 = vadd.f32 0.0, %v6871
        %v6873 = vpop.f32.mrf.mxu0
        %v6874 = vpop.f32.mrf.mxu0
        %v6875 = vadd.f32 0.0, %v6874
        %v6876 = vpop.f32.mrf.mxu0
        %6877 = vmatprep.mubr.bf16.mxu0 0
        %6878 = vmatmul.mubr.bf16.gmra.mxu0 %v6787
        %v6879 = vpop.f32.mrf.mxu0
        %v6880 = vadd.f32 0.0, %v6879
        %v6881 = vpop.f32.mrf.mxu0
        %v6882 = vpop.f32.mrf.mxu0
        %v6883 = vadd.f32 0.0, %v6882
        %v6884 = vpop.f32.mrf.mxu0
        %6885 = vdwg.mxu0
        %v6886 = vadd.f32 %v6660, %v6824
        %v6887 = vadd.f32 %v6661, %v6827
        %v6888 = vadd.f32 %v6662, %v6832
        %v6889 = vadd.f32 %v6663, %v6835
        %v6890 = vadd.f32 %v6664, %v6840
        %v6891 = vadd.f32 %v6665, %v6843
        %v6892 = vadd.f32 %v6666, %v6848
        %v6893 = vadd.f32 %v6667, %v6851
        %v6894 = vadd.f32 %v6668, %v6856
        %v6895 = vadd.f32 %v6669, %v6859
        %v6896 = vadd.f32 %v6670, %v6864
        %v6897 = vadd.f32 %v6671, %v6867
        %v6898 = vadd.f32 %v6672, %v6872
        %v6899 = vadd.f32 %v6673, %v6875
        %v6900 = vadd.f32 %v6674, %v6880
        %v6901 = vadd.f32 %v6675, %v6883
        %v6902 = vld [vmem:[%s3404] sm:$0xf]
        %v6903 = vld [vmem:[%s3404 + $0x4] sm:$0xf]
        %v6904 = vld [vmem:[%s3404 + $0x8] sm:$0xf]
        %v6905 = vld [vmem:[%s3404 + $0xc] sm:$0xf]
        %v6906 = vld [vmem:[%s3404 + $0x10] sm:$0xf]
        %v6907 = vld [vmem:[%s3404 + $0x14] sm:$0xf]
        %v6908 = vld [vmem:[%s3404 + $0x18] sm:$0xf]
        %v6909 = vld [vmem:[%s3404 + $0x1c] sm:$0xf]
        %v6910 = vld [vmem:[%s3404 + $0x20] sm:$0xf]
        %v6911 = vld [vmem:[%s3404 + $0x24] sm:$0xf]
        %v6912 = vld [vmem:[%s3404 + $0x28] sm:$0xf]
        %v6913 = vld [vmem:[%s3404 + $0x2c] sm:$0xf]
        %v6914 = vld [vmem:[%s3404 + $0x30] sm:$0xf]
        %v6915 = vld [vmem:[%s3404 + $0x34] sm:$0xf]
        %v6916 = vld [vmem:[%s3404 + $0x38] sm:$0xf]
        %v6917 = vld [vmem:[%s3404 + $0x3c] sm:$0xf]
        %s6918 = scalar_lea.vmem [#allocation9], 160
        %v6919 = vld [vmem:[%s6918] sm:$0xf]
        %v6920 = vld [vmem:[%s6918 + $0x4] sm:$0xf]
        %v6921 = vld [vmem:[%s6918 + $0x8] sm:$0xf]
        %v6922 = vld [vmem:[%s6918 + $0xc] sm:$0xf]
        %v6923 = vld [vmem:[%s6918 + $0x10] sm:$0xf]
        %v6924 = vld [vmem:[%s6918 + $0x14] sm:$0xf]
        %v6925 = vld [vmem:[%s6918 + $0x18] sm:$0xf]
        %v6926 = vld [vmem:[%s6918 + $0x1c] sm:$0xf]
        %v6943 = vunpack.c.l.b16 %v6902
        %v6944 = vunpack.c.l.b16 %v6903
        %v6945 = vunpack.c.l.b16 %v6904
        %v6946 = vunpack.c.l.b16 %v6905
        %v6947 = vunpack.c.l.b16 %v6906
        %v6948 = vunpack.c.l.b16 %v6907
        %v6949 = vunpack.c.l.b16 %v6908
        %v6950 = vunpack.c.l.b16 %v6909
        %v6951 = vunpack.c.l.b16 %v6910
        %v6952 = vunpack.c.l.b16 %v6911
        %v6953 = vunpack.c.l.b16 %v6912
        %v6954 = vunpack.c.l.b16 %v6913
        %v6955 = vunpack.c.l.b16 %v6914
        %v6956 = vunpack.c.l.b16 %v6915
        %v6957 = vunpack.c.l.b16 %v6916
        %v6958 = vunpack.c.l.b16 %v6917
        %v6959 = vpack.c.b16 %v6944, %v6943
        %v6960 = vpack.c.b16 %v6946, %v6945
        %v6961 = vpack.c.b16 %v6948, %v6947
        %v6962 = vpack.c.b16 %v6950, %v6949
        %v6963 = vpack.c.b16 %v6952, %v6951
        %v6964 = vpack.c.b16 %v6954, %v6953
        %v6965 = vpack.c.b16 %v6956, %v6955
        %v6966 = vpack.c.b16 %v6958, %v6957
        %v6975 = vunpack.c.l.b16 %v6919
        %v6976 = vunpack.c.l.b16 %v6920
        %v6977 = vunpack.c.l.b16 %v6921
        %v6978 = vunpack.c.l.b16 %v6922
        %v6979 = vunpack.c.l.b16 %v6923
        %v6980 = vunpack.c.l.b16 %v6924
        %v6981 = vunpack.c.l.b16 %v6925
        %v6982 = vunpack.c.l.b16 %v6926
        %v6983 = vpack.c.b16 %v6976, %v6975
        %v6984 = vpack.c.b16 %v6978, %v6977
        %v6985 = vpack.c.b16 %v6980, %v6979
        %v6986 = vpack.c.b16 %v6982, %v6981
        %v6992 = vsel %vm1147, %v6959, 0
        %v6995 = vsel %vm1147, %v6960, 0
        %v6998 = vsel %vm1147, %v6961, 0
        %v7001 = vsel %vm1147, %v6962, 0
        %v7004 = vsel %vm1147, %v6963, 0
        %v7007 = vsel %vm1147, %v6964, 0
        %v7010 = vsel %vm1147, %v6965, 0
        %v7013 = vsel %vm1147, %v6966, 0
        %7015 = vmatprep.subr.bf16.mxu0 0
        %7016 = vmatpush1.bf16.msra.mxu0 0
        %7017 = vmatprep.subr.bf16.mxu0 0
        %7018 = vmatpush1.bf16.msra.mxu0 0
        %7019 = vmatprep.subr.bf16.mxu0 0
        %7020 = vmatpush1.bf16.msra.mxu0 0
        %7021 = vmatprep.subr.bf16.mxu0 0
        %7022 = vmatpush1.bf16.msra.mxu0 0
        %7023 = vmatprep.subr.bf16.mxu0 0
        %7024 = vmatpush1.bf16.msra.mxu0 %v6986
        %7025 = vmatprep.subr.bf16.mxu0 0
        %7026 = vmatpush1.bf16.msra.mxu0 %v6985
        %7027 = vmatprep.subr.bf16.mxu0 0
        %7028 = vmatpush1.bf16.msra.mxu0 %v6984
        %7029 = vmatprep.subr.bf16.mxu0 0
        %7030 = vmatpush1.bf16.msra.mxu0 %v6983
        %7031 = vmatprep.subr.bf16.mxu0 0
        %7032 = vmatpush2.bf16.msra.mxu0 0
        %7033 = vmatprep.subr.bf16.mxu0 0
        %7034 = vmatpush2.bf16.msra.mxu0 0
        %7035 = vmatprep.subr.bf16.mxu0 0
        %7036 = vmatpush2.bf16.msra.mxu0 0
        %7037 = vmatprep.subr.bf16.mxu0 0
        %7038 = vmatpush2.bf16.msra.mxu0 0
        %7039 = vmatprep.subr.bf16.mxu0 0
        %7040 = vmatpush2.bf16.msra.mxu0 0
        %7041 = vmatprep.subr.bf16.mxu0 0
        %7042 = vmatpush2.bf16.msra.mxu0 0
        %7043 = vmatprep.subr.bf16.mxu0 0
        %7044 = vmatpush2.bf16.msra.mxu0 0
        %7045 = vmatprep.subr.bf16.mxu0 0
        %7046 = vmatpush2.bf16.msra.mxu0 0
        %7047 = vmatprep.mubr.bf16.mxu0 0
        %7048 = vmatmul.mubr.bf16.gmra.mxu0 %v6992
        %v7049 = vpop.f32.mrf.mxu0
        %v7050 = vadd.f32 0.0, %v7049
        %v7051 = vpop.f32.mrf.mxu0
        %v7052 = vpop.f32.mrf.mxu0
        %v7053 = vadd.f32 0.0, %v7052
        %v7054 = vpop.f32.mrf.mxu0
        %7055 = vmatprep.mubr.bf16.mxu0 0
        %7056 = vmatmul.mubr.bf16.gmra.mxu0 %v6995
        %v7057 = vpop.f32.mrf.mxu0
        %v7058 = vadd.f32 0.0, %v7057
        %v7059 = vpop.f32.mrf.mxu0
        %v7060 = vpop.f32.mrf.mxu0
        %v7061 = vadd.f32 0.0, %v7060
        %v7062 = vpop.f32.mrf.mxu0
        %7063 = vmatprep.mubr.bf16.mxu0 0
        %7064 = vmatmul.mubr.bf16.gmra.mxu0 %v6998
        %v7065 = vpop.f32.mrf.mxu0
        %v7066 = vadd.f32 0.0, %v7065
        %v7067 = vpop.f32.mrf.mxu0
        %v7068 = vpop.f32.mrf.mxu0
        %v7069 = vadd.f32 0.0, %v7068
        %v7070 = vpop.f32.mrf.mxu0
        %7071 = vmatprep.mubr.bf16.mxu0 0
        %7072 = vmatmul.mubr.bf16.gmra.mxu0 %v7001
        %v7073 = vpop.f32.mrf.mxu0
        %v7074 = vadd.f32 0.0, %v7073
        %v7075 = vpop.f32.mrf.mxu0
        %v7076 = vpop.f32.mrf.mxu0
        %v7077 = vadd.f32 0.0, %v7076
        %v7078 = vpop.f32.mrf.mxu0
        %7079 = vmatprep.mubr.bf16.mxu0 0
        %7080 = vmatmul.mubr.bf16.gmra.mxu0 %v7004
        %v7081 = vpop.f32.mrf.mxu0
        %v7082 = vadd.f32 0.0, %v7081
        %v7083 = vpop.f32.mrf.mxu0
        %v7084 = vpop.f32.mrf.mxu0
        %v7085 = vadd.f32 0.0, %v7084
        %v7086 = vpop.f32.mrf.mxu0
        %7087 = vmatprep.mubr.bf16.mxu0 0
        %7088 = vmatmul.mubr.bf16.gmra.mxu0 %v7007
        %v7089 = vpop.f32.mrf.mxu0
        %v7090 = vadd.f32 0.0, %v7089
        %v7091 = vpop.f32.mrf.mxu0
        %v7092 = vpop.f32.mrf.mxu0
        %v7093 = vadd.f32 0.0, %v7092
        %v7094 = vpop.f32.mrf.mxu0
        %7095 = vmatprep.mubr.bf16.mxu0 0
        %7096 = vmatmul.mubr.bf16.gmra.mxu0 %v7010
        %v7097 = vpop.f32.mrf.mxu0
        %v7098 = vadd.f32 0.0, %v7097
        %v7099 = vpop.f32.mrf.mxu0
        %v7100 = vpop.f32.mrf.mxu0
        %v7101 = vadd.f32 0.0, %v7100
        %v7102 = vpop.f32.mrf.mxu0
        %7103 = vmatprep.mubr.bf16.mxu0 0
        %7104 = vmatmul.mubr.bf16.gmra.mxu0 %v7013
        %v7105 = vpop.f32.mrf.mxu0
        %v7106 = vadd.f32 0.0, %v7105
        %v7107 = vpop.f32.mrf.mxu0
        %v7108 = vpop.f32.mrf.mxu0
        %v7109 = vadd.f32 0.0, %v7108
        %v7110 = vpop.f32.mrf.mxu0
        %7111 = vdwg.mxu0
        %v7112 = vadd.f32 %v6886, %v7050
        %v7113 = vadd.f32 %v6887, %v7053
        %v7114 = vadd.f32 %v6888, %v7058
        %v7115 = vadd.f32 %v6889, %v7061
        %v7116 = vadd.f32 %v6890, %v7066
        %v7117 = vadd.f32 %v6891, %v7069
        %v7118 = vadd.f32 %v6892, %v7074
        %v7119 = vadd.f32 %v6893, %v7077
        %v7120 = vadd.f32 %v6894, %v7082
        %v7121 = vadd.f32 %v6895, %v7085
        %v7122 = vadd.f32 %v6896, %v7090
        %v7123 = vadd.f32 %v6897, %v7093
        %v7124 = vadd.f32 %v6898, %v7098
        %v7125 = vadd.f32 %v6899, %v7101
        %v7126 = vadd.f32 %v6900, %v7106
        %v7127 = vadd.f32 %v6901, %v7109
        %s7128 = smul.addr %s2362, 4
        %s7129 = scalar_lea.vmem [#allocation3], %s7128
        %v7130 = vld [vmem:[%s7129] sm:$0xf]
        %v7131 = vld [vmem:[%s7129 + $0x4] sm:$0xf]
        %v7132 = vld [vmem:[%s7129 + $0x8] sm:$0xf]
        %v7133 = vld [vmem:[%s7129 + $0xc] sm:$0xf]
        %v7134 = vld [vmem:[%s7129 + $0x10] sm:$0xf]
        %v7135 = vld [vmem:[%s7129 + $0x14] sm:$0xf]
        %v7136 = vld [vmem:[%s7129 + $0x18] sm:$0xf]
        %v7137 = vld [vmem:[%s7129 + $0x1c] sm:$0xf]
        %v7138 = vld [vmem:[%s7129 + $0x20] sm:$0xf]
        %v7139 = vld [vmem:[%s7129 + $0x24] sm:$0xf]
        %v7140 = vld [vmem:[%s7129 + $0x28] sm:$0xf]
        %v7141 = vld [vmem:[%s7129 + $0x2c] sm:$0xf]
        %v7142 = vld [vmem:[%s7129 + $0x30] sm:$0xf]
        %v7143 = vld [vmem:[%s7129 + $0x34] sm:$0xf]
        %v7144 = vld [vmem:[%s7129 + $0x38] sm:$0xf]
        %v7145 = vld [vmem:[%s7129 + $0x3c] sm:$0xf]
        %s7146 = scalar_lea.vmem [#allocation9], 192
        %v7147 = vld [vmem:[%s7146] sm:$0xf]
        %v7148 = vld [vmem:[%s7146 + $0x4] sm:$0xf]
        %v7149 = vld [vmem:[%s7146 + $0x8] sm:$0xf]
        %v7150 = vld [vmem:[%s7146 + $0xc] sm:$0xf]
        %v7151 = vld [vmem:[%s7146 + $0x10] sm:$0xf]
        %v7152 = vld [vmem:[%s7146 + $0x14] sm:$0xf]
        %v7153 = vld [vmem:[%s7146 + $0x18] sm:$0xf]
        %v7154 = vld [vmem:[%s7146 + $0x1c] sm:$0xf]
        %v7171 = vunpack.c.l.b16 %v7130
        %v7172 = vunpack.c.l.b16 %v7131
        %v7173 = vunpack.c.l.b16 %v7132
        %v7174 = vunpack.c.l.b16 %v7133
        %v7175 = vunpack.c.l.b16 %v7134
        %v7176 = vunpack.c.l.b16 %v7135
        %v7177 = vunpack.c.l.b16 %v7136
        %v7178 = vunpack.c.l.b16 %v7137
        %v7179 = vunpack.c.l.b16 %v7138
        %v7180 = vunpack.c.l.b16 %v7139
        %v7181 = vunpack.c.l.b16 %v7140
        %v7182 = vunpack.c.l.b16 %v7141
        %v7183 = vunpack.c.l.b16 %v7142
        %v7184 = vunpack.c.l.b16 %v7143
        %v7185 = vunpack.c.l.b16 %v7144
        %v7186 = vunpack.c.l.b16 %v7145
        %v7187 = vpack.c.b16 %v7172, %v7171
        %v7188 = vpack.c.b16 %v7174, %v7173
        %v7189 = vpack.c.b16 %v7176, %v7175
        %v7190 = vpack.c.b16 %v7178, %v7177
        %v7191 = vpack.c.b16 %v7180, %v7179
        %v7192 = vpack.c.b16 %v7182, %v7181
        %v7193 = vpack.c.b16 %v7184, %v7183
        %v7194 = vpack.c.b16 %v7186, %v7185
        %v7203 = vunpack.c.l.b16 %v7147
        %v7204 = vunpack.c.l.b16 %v7148
        %v7205 = vunpack.c.l.b16 %v7149
        %v7206 = vunpack.c.l.b16 %v7150
        %v7207 = vunpack.c.l.b16 %v7151
        %v7208 = vunpack.c.l.b16 %v7152
        %v7209 = vunpack.c.l.b16 %v7153
        %v7210 = vunpack.c.l.b16 %v7154
        %v7211 = vpack.c.b16 %v7204, %v7203
        %v7212 = vpack.c.b16 %v7206, %v7205
        %v7213 = vpack.c.b16 %v7208, %v7207
        %v7214 = vpack.c.b16 %v7210, %v7209
        %v7220 = vsel %vm1147, %v7187, 0
        %v7223 = vsel %vm1147, %v7188, 0
        %v7226 = vsel %vm1147, %v7189, 0
        %v7229 = vsel %vm1147, %v7190, 0
        %v7232 = vsel %vm1147, %v7191, 0
        %v7235 = vsel %vm1147, %v7192, 0
        %v7238 = vsel %vm1147, %v7193, 0
        %v7241 = vsel %vm1147, %v7194, 0
        %7243 = vmatprep.subr.bf16.mxu0 0
        %7244 = vmatpush1.bf16.msra.mxu0 0
        %7245 = vmatprep.subr.bf16.mxu0 0
        %7246 = vmatpush1.bf16.msra.mxu0 0
        %7247 = vmatprep.subr.bf16.mxu0 0
        %7248 = vmatpush1.bf16.msra.mxu0 0
        %7249 = vmatprep.subr.bf16.mxu0 0
        %7250 = vmatpush1.bf16.msra.mxu0 0
        %7251 = vmatprep.subr.bf16.mxu0 0
        %7252 = vmatpush1.bf16.msra.mxu0 %v7214
        %7253 = vmatprep.subr.bf16.mxu0 0
        %7254 = vmatpush1.bf16.msra.mxu0 %v7213
        %7255 = vmatprep.subr.bf16.mxu0 0
        %7256 = vmatpush1.bf16.msra.mxu0 %v7212
        %7257 = vmatprep.subr.bf16.mxu0 0
        %7258 = vmatpush1.bf16.msra.mxu0 %v7211
        %7259 = vmatprep.subr.bf16.mxu0 0
        %7260 = vmatpush2.bf16.msra.mxu0 0
        %7261 = vmatprep.subr.bf16.mxu0 0
        %7262 = vmatpush2.bf16.msra.mxu0 0
        %7263 = vmatprep.subr.bf16.mxu0 0
        %7264 = vmatpush2.bf16.msra.mxu0 0
        %7265 = vmatprep.subr.bf16.mxu0 0
        %7266 = vmatpush2.bf16.msra.mxu0 0
        %7267 = vmatprep.subr.bf16.mxu0 0
        %7268 = vmatpush2.bf16.msra.mxu0 0
        %7269 = vmatprep.subr.bf16.mxu0 0
        %7270 = vmatpush2.bf16.msra.mxu0 0
        %7271 = vmatprep.subr.bf16.mxu0 0
        %7272 = vmatpush2.bf16.msra.mxu0 0
        %7273 = vmatprep.subr.bf16.mxu0 0
        %7274 = vmatpush2.bf16.msra.mxu0 0
        %7275 = vmatprep.mubr.bf16.mxu0 0
        %7276 = vmatmul.mubr.bf16.gmra.mxu0 %v7220
        %v7277 = vpop.f32.mrf.mxu0
        %v7278 = vadd.f32 0.0, %v7277
        %v7279 = vpop.f32.mrf.mxu0
        %v7280 = vpop.f32.mrf.mxu0
        %v7281 = vadd.f32 0.0, %v7280
        %v7282 = vpop.f32.mrf.mxu0
        %7283 = vmatprep.mubr.bf16.mxu0 0
        %7284 = vmatmul.mubr.bf16.gmra.mxu0 %v7223
        %v7285 = vpop.f32.mrf.mxu0
        %v7286 = vadd.f32 0.0, %v7285
        %v7287 = vpop.f32.mrf.mxu0
        %v7288 = vpop.f32.mrf.mxu0
        %v7289 = vadd.f32 0.0, %v7288
        %v7290 = vpop.f32.mrf.mxu0
        %7291 = vmatprep.mubr.bf16.mxu0 0
        %7292 = vmatmul.mubr.bf16.gmra.mxu0 %v7226
        %v7293 = vpop.f32.mrf.mxu0
        %v7294 = vadd.f32 0.0, %v7293
        %v7295 = vpop.f32.mrf.mxu0
        %v7296 = vpop.f32.mrf.mxu0
        %v7297 = vadd.f32 0.0, %v7296
        %v7298 = vpop.f32.mrf.mxu0
        %7299 = vmatprep.mubr.bf16.mxu0 0
        %7300 = vmatmul.mubr.bf16.gmra.mxu0 %v7229
        %v7301 = vpop.f32.mrf.mxu0
        %v7302 = vadd.f32 0.0, %v7301
        %v7303 = vpop.f32.mrf.mxu0
        %v7304 = vpop.f32.mrf.mxu0
        %v7305 = vadd.f32 0.0, %v7304
        %v7306 = vpop.f32.mrf.mxu0
        %7307 = vmatprep.mubr.bf16.mxu0 0
        %7308 = vmatmul.mubr.bf16.gmra.mxu0 %v7232
        %v7309 = vpop.f32.mrf.mxu0
        %v7310 = vadd.f32 0.0, %v7309
        %v7311 = vpop.f32.mrf.mxu0
        %v7312 = vpop.f32.mrf.mxu0
        %v7313 = vadd.f32 0.0, %v7312
        %v7314 = vpop.f32.mrf.mxu0
        %7315 = vmatprep.mubr.bf16.mxu0 0
        %7316 = vmatmul.mubr.bf16.gmra.mxu0 %v7235
        %v7317 = vpop.f32.mrf.mxu0
        %v7318 = vadd.f32 0.0, %v7317
        %v7319 = vpop.f32.mrf.mxu0
        %v7320 = vpop.f32.mrf.mxu0
        %v7321 = vadd.f32 0.0, %v7320
        %v7322 = vpop.f32.mrf.mxu0
        %7323 = vmatprep.mubr.bf16.mxu0 0
        %7324 = vmatmul.mubr.bf16.gmra.mxu0 %v7238
        %v7325 = vpop.f32.mrf.mxu0
        %v7326 = vadd.f32 0.0, %v7325
        %v7327 = vpop.f32.mrf.mxu0
        %v7328 = vpop.f32.mrf.mxu0
        %v7329 = vadd.f32 0.0, %v7328
        %v7330 = vpop.f32.mrf.mxu0
        %7331 = vmatprep.mubr.bf16.mxu0 0
        %7332 = vmatmul.mubr.bf16.gmra.mxu0 %v7241
        %v7333 = vpop.f32.mrf.mxu0
        %v7334 = vadd.f32 0.0, %v7333
        %v7335 = vpop.f32.mrf.mxu0
        %v7336 = vpop.f32.mrf.mxu0
        %v7337 = vadd.f32 0.0, %v7336
        %v7338 = vpop.f32.mrf.mxu0
        %7339 = vdwg.mxu0
        %v7340 = vadd.f32 %v7112, %v7278
        %v7341 = vadd.f32 %v7113, %v7281
        %v7342 = vadd.f32 %v7114, %v7286
        %v7343 = vadd.f32 %v7115, %v7289
        %v7344 = vadd.f32 %v7116, %v7294
        %v7345 = vadd.f32 %v7117, %v7297
        %v7346 = vadd.f32 %v7118, %v7302
        %v7347 = vadd.f32 %v7119, %v7305
        %v7348 = vadd.f32 %v7120, %v7310
        %v7349 = vadd.f32 %v7121, %v7313
        %v7350 = vadd.f32 %v7122, %v7318
        %v7351 = vadd.f32 %v7123, %v7321
        %v7352 = vadd.f32 %v7124, %v7326
        %v7353 = vadd.f32 %v7125, %v7329
        %v7354 = vadd.f32 %v7126, %v7334
        %v7355 = vadd.f32 %v7127, %v7337
        %s7356 = smul.addr %s2591, 4
        %s7357 = scalar_lea.vmem [#allocation3], %s7356
        %v7358 = vld [vmem:[%s7357] sm:$0xf]
        %v7359 = vld [vmem:[%s7357 + $0x4] sm:$0xf]
        %v7360 = vld [vmem:[%s7357 + $0x8] sm:$0xf]
        %v7361 = vld [vmem:[%s7357 + $0xc] sm:$0xf]
        %v7362 = vld [vmem:[%s7357 + $0x10] sm:$0xf]
        %v7363 = vld [vmem:[%s7357 + $0x14] sm:$0xf]
        %v7364 = vld [vmem:[%s7357 + $0x18] sm:$0xf]
        %v7365 = vld [vmem:[%s7357 + $0x1c] sm:$0xf]
        %v7366 = vld [vmem:[%s7357 + $0x20] sm:$0xf]
        %v7367 = vld [vmem:[%s7357 + $0x24] sm:$0xf]
        %v7368 = vld [vmem:[%s7357 + $0x28] sm:$0xf]
        %v7369 = vld [vmem:[%s7357 + $0x2c] sm:$0xf]
        %v7370 = vld [vmem:[%s7357 + $0x30] sm:$0xf]
        %v7371 = vld [vmem:[%s7357 + $0x34] sm:$0xf]
        %v7372 = vld [vmem:[%s7357 + $0x38] sm:$0xf]
        %v7373 = vld [vmem:[%s7357 + $0x3c] sm:$0xf]
        %s7374 = scalar_lea.vmem [#allocation9], 224
        %v7375 = vld [vmem:[%s7374] sm:$0xf]
        %v7376 = vld [vmem:[%s7374 + $0x4] sm:$0xf]
        %v7377 = vld [vmem:[%s7374 + $0x8] sm:$0xf]
        %v7378 = vld [vmem:[%s7374 + $0xc] sm:$0xf]
        %v7379 = vld [vmem:[%s7374 + $0x10] sm:$0xf]
        %v7380 = vld [vmem:[%s7374 + $0x14] sm:$0xf]
        %v7381 = vld [vmem:[%s7374 + $0x18] sm:$0xf]
        %v7382 = vld [vmem:[%s7374 + $0x1c] sm:$0xf]
        %v7399 = vunpack.c.l.b16 %v7358
        %v7400 = vunpack.c.l.b16 %v7359
        %v7401 = vunpack.c.l.b16 %v7360
        %v7402 = vunpack.c.l.b16 %v7361
        %v7403 = vunpack.c.l.b16 %v7362
        %v7404 = vunpack.c.l.b16 %v7363
        %v7405 = vunpack.c.l.b16 %v7364
        %v7406 = vunpack.c.l.b16 %v7365
        %v7407 = vunpack.c.l.b16 %v7366
        %v7408 = vunpack.c.l.b16 %v7367
        %v7409 = vunpack.c.l.b16 %v7368
        %v7410 = vunpack.c.l.b16 %v7369
        %v7411 = vunpack.c.l.b16 %v7370
        %v7412 = vunpack.c.l.b16 %v7371
        %v7413 = vunpack.c.l.b16 %v7372
        %v7414 = vunpack.c.l.b16 %v7373
        %v7415 = vpack.c.b16 %v7400, %v7399
        %v7416 = vpack.c.b16 %v7402, %v7401
        %v7417 = vpack.c.b16 %v7404, %v7403
        %v7418 = vpack.c.b16 %v7406, %v7405
        %v7419 = vpack.c.b16 %v7408, %v7407
        %v7420 = vpack.c.b16 %v7410, %v7409
        %v7421 = vpack.c.b16 %v7412, %v7411
        %v7422 = vpack.c.b16 %v7414, %v7413
        %v7431 = vunpack.c.l.b16 %v7375
        %v7432 = vunpack.c.l.b16 %v7376
        %v7433 = vunpack.c.l.b16 %v7377
        %v7434 = vunpack.c.l.b16 %v7378
        %v7435 = vunpack.c.l.b16 %v7379
        %v7436 = vunpack.c.l.b16 %v7380
        %v7437 = vunpack.c.l.b16 %v7381
        %v7438 = vunpack.c.l.b16 %v7382
        %v7439 = vpack.c.b16 %v7432, %v7431
        %v7440 = vpack.c.b16 %v7434, %v7433
        %v7441 = vpack.c.b16 %v7436, %v7435
        %v7442 = vpack.c.b16 %v7438, %v7437
        %v7448 = vsel %vm1147, %v7415, 0
        %v7451 = vsel %vm1147, %v7416, 0
        %v7454 = vsel %vm1147, %v7417, 0
        %v7457 = vsel %vm1147, %v7418, 0
        %v7460 = vsel %vm1147, %v7419, 0
        %v7463 = vsel %vm1147, %v7420, 0
        %v7466 = vsel %vm1147, %v7421, 0
        %v7469 = vsel %vm1147, %v7422, 0
        %7471 = vmatprep.subr.bf16.mxu0 0
        %7472 = vmatpush1.bf16.msra.mxu0 0
        %7473 = vmatprep.subr.bf16.mxu0 0
        %7474 = vmatpush1.bf16.msra.mxu0 0
        %7475 = vmatprep.subr.bf16.mxu0 0
        %7476 = vmatpush1.bf16.msra.mxu0 0
        %7477 = vmatprep.subr.bf16.mxu0 0
        %7478 = vmatpush1.bf16.msra.mxu0 0
        %7479 = vmatprep.subr.bf16.mxu0 0
        %7480 = vmatpush1.bf16.msra.mxu0 %v7442
        %7481 = vmatprep.subr.bf16.mxu0 0
        %7482 = vmatpush1.bf16.msra.mxu0 %v7441
        %7483 = vmatprep.subr.bf16.mxu0 0
        %7484 = vmatpush1.bf16.msra.mxu0 %v7440
        %7485 = vmatprep.subr.bf16.mxu0 0
        %7486 = vmatpush1.bf16.msra.mxu0 %v7439
        %7487 = vmatprep.subr.bf16.mxu0 0
        %7488 = vmatpush2.bf16.msra.mxu0 0
        %7489 = vmatprep.subr.bf16.mxu0 0
        %7490 = vmatpush2.bf16.msra.mxu0 0
        %7491 = vmatprep.subr.bf16.mxu0 0
        %7492 = vmatpush2.bf16.msra.mxu0 0
        %7493 = vmatprep.subr.bf16.mxu0 0
        %7494 = vmatpush2.bf16.msra.mxu0 0
        %7495 = vmatprep.subr.bf16.mxu0 0
        %7496 = vmatpush2.bf16.msra.mxu0 0
        %7497 = vmatprep.subr.bf16.mxu0 0
        %7498 = vmatpush2.bf16.msra.mxu0 0
        %7499 = vmatprep.subr.bf16.mxu0 0
        %7500 = vmatpush2.bf16.msra.mxu0 0
        %7501 = vmatprep.subr.bf16.mxu0 0
        %7502 = vmatpush2.bf16.msra.mxu0 0
        %7503 = vmatprep.mubr.bf16.mxu0 0
        %7504 = vmatmul.mubr.bf16.gmra.mxu0 %v7448
        %v7505 = vpop.f32.mrf.mxu0
        %v7506 = vadd.f32 0.0, %v7505
        %v7507 = vpop.f32.mrf.mxu0
        %v7508 = vpop.f32.mrf.mxu0
        %v7509 = vadd.f32 0.0, %v7508
        %v7510 = vpop.f32.mrf.mxu0
        %7511 = vmatprep.mubr.bf16.mxu0 0
        %7512 = vmatmul.mubr.bf16.gmra.mxu0 %v7451
        %v7513 = vpop.f32.mrf.mxu0
        %v7514 = vadd.f32 0.0, %v7513
        %v7515 = vpop.f32.mrf.mxu0
        %v7516 = vpop.f32.mrf.mxu0
        %v7517 = vadd.f32 0.0, %v7516
        %v7518 = vpop.f32.mrf.mxu0
        %7519 = vmatprep.mubr.bf16.mxu0 0
        %7520 = vmatmul.mubr.bf16.gmra.mxu0 %v7454
        %v7521 = vpop.f32.mrf.mxu0
        %v7522 = vadd.f32 0.0, %v7521
        %v7523 = vpop.f32.mrf.mxu0
        %v7524 = vpop.f32.mrf.mxu0
        %v7525 = vadd.f32 0.0, %v7524
        %v7526 = vpop.f32.mrf.mxu0
        %7527 = vmatprep.mubr.bf16.mxu0 0
        %7528 = vmatmul.mubr.bf16.gmra.mxu0 %v7457
        %v7529 = vpop.f32.mrf.mxu0
        %v7530 = vadd.f32 0.0, %v7529
        %v7531 = vpop.f32.mrf.mxu0
        %v7532 = vpop.f32.mrf.mxu0
        %v7533 = vadd.f32 0.0, %v7532
        %v7534 = vpop.f32.mrf.mxu0
        %7535 = vmatprep.mubr.bf16.mxu0 0
        %7536 = vmatmul.mubr.bf16.gmra.mxu0 %v7460
        %v7537 = vpop.f32.mrf.mxu0
        %v7538 = vadd.f32 0.0, %v7537
        %v7539 = vpop.f32.mrf.mxu0
        %v7540 = vpop.f32.mrf.mxu0
        %v7541 = vadd.f32 0.0, %v7540
        %v7542 = vpop.f32.mrf.mxu0
        %7543 = vmatprep.mubr.bf16.mxu0 0
        %7544 = vmatmul.mubr.bf16.gmra.mxu0 %v7463
        %v7545 = vpop.f32.mrf.mxu0
        %v7546 = vadd.f32 0.0, %v7545
        %v7547 = vpop.f32.mrf.mxu0
        %v7548 = vpop.f32.mrf.mxu0
        %v7549 = vadd.f32 0.0, %v7548
        %v7550 = vpop.f32.mrf.mxu0
        %7551 = vmatprep.mubr.bf16.mxu0 0
        %7552 = vmatmul.mubr.bf16.gmra.mxu0 %v7466
        %v7553 = vpop.f32.mrf.mxu0
        %v7554 = vadd.f32 0.0, %v7553
        %v7555 = vpop.f32.mrf.mxu0
        %v7556 = vpop.f32.mrf.mxu0
        %v7557 = vadd.f32 0.0, %v7556
        %v7558 = vpop.f32.mrf.mxu0
        %7559 = vmatprep.mubr.bf16.mxu0 0
        %7560 = vmatmul.mubr.bf16.gmra.mxu0 %v7469
        %v7561 = vpop.f32.mrf.mxu0
        %v7562 = vadd.f32 0.0, %v7561
        %v7563 = vpop.f32.mrf.mxu0
        %v7564 = vpop.f32.mrf.mxu0
        %v7565 = vadd.f32 0.0, %v7564
        %v7566 = vpop.f32.mrf.mxu0
        %7567 = vdwg.mxu0
        %v7568 = vadd.f32 %v7340, %v7506
        %v7569 = vadd.f32 %v7341, %v7509
        %v7570 = vadd.f32 %v7342, %v7514
        %v7571 = vadd.f32 %v7343, %v7517
        %v7572 = vadd.f32 %v7344, %v7522
        %v7573 = vadd.f32 %v7345, %v7525
        %v7574 = vadd.f32 %v7346, %v7530
        %v7575 = vadd.f32 %v7347, %v7533
        %v7576 = vadd.f32 %v7348, %v7538
        %v7577 = vadd.f32 %v7349, %v7541
        %v7578 = vadd.f32 %v7350, %v7546
        %v7579 = vadd.f32 %v7351, %v7549
        %v7580 = vadd.f32 %v7352, %v7554
        %v7581 = vadd.f32 %v7353, %v7557
        %v7582 = vadd.f32 %v7354, %v7562
        %v7583 = vadd.f32 %v7355, %v7565
        %s7584 = smul.addr %s2820, 4
        %s7585 = scalar_lea.vmem [#allocation3], %s7584
        %v7586 = vld [vmem:[%s7585] sm:$0xf]
        %v7587 = vld [vmem:[%s7585 + $0x4] sm:$0xf]
        %v7588 = vld [vmem:[%s7585 + $0x8] sm:$0xf]
        %v7589 = vld [vmem:[%s7585 + $0xc] sm:$0xf]
        %v7590 = vld [vmem:[%s7585 + $0x10] sm:$0xf]
        %v7591 = vld [vmem:[%s7585 + $0x14] sm:$0xf]
        %v7592 = vld [vmem:[%s7585 + $0x18] sm:$0xf]
        %v7593 = vld [vmem:[%s7585 + $0x1c] sm:$0xf]
        %v7594 = vld [vmem:[%s7585 + $0x20] sm:$0xf]
        %v7595 = vld [vmem:[%s7585 + $0x24] sm:$0xf]
        %v7596 = vld [vmem:[%s7585 + $0x28] sm:$0xf]
        %v7597 = vld [vmem:[%s7585 + $0x2c] sm:$0xf]
        %v7598 = vld [vmem:[%s7585 + $0x30] sm:$0xf]
        %v7599 = vld [vmem:[%s7585 + $0x34] sm:$0xf]
        %v7600 = vld [vmem:[%s7585 + $0x38] sm:$0xf]
        %v7601 = vld [vmem:[%s7585 + $0x3c] sm:$0xf]
        %s7602 = scalar_lea.vmem [#allocation9], 256
        %v7603 = vld [vmem:[%s7602] sm:$0xf]
        %v7604 = vld [vmem:[%s7602 + $0x4] sm:$0xf]
        %v7605 = vld [vmem:[%s7602 + $0x8] sm:$0xf]
        %v7606 = vld [vmem:[%s7602 + $0xc] sm:$0xf]
        %v7607 = vld [vmem:[%s7602 + $0x10] sm:$0xf]
        %v7608 = vld [vmem:[%s7602 + $0x14] sm:$0xf]
        %v7609 = vld [vmem:[%s7602 + $0x18] sm:$0xf]
        %v7610 = vld [vmem:[%s7602 + $0x1c] sm:$0xf]
        %v7627 = vunpack.c.l.b16 %v7586
        %v7628 = vunpack.c.l.b16 %v7587
        %v7629 = vunpack.c.l.b16 %v7588
        %v7630 = vunpack.c.l.b16 %v7589
        %v7631 = vunpack.c.l.b16 %v7590
        %v7632 = vunpack.c.l.b16 %v7591
        %v7633 = vunpack.c.l.b16 %v7592
        %v7634 = vunpack.c.l.b16 %v7593
        %v7635 = vunpack.c.l.b16 %v7594
        %v7636 = vunpack.c.l.b16 %v7595
        %v7637 = vunpack.c.l.b16 %v7596
        %v7638 = vunpack.c.l.b16 %v7597
        %v7639 = vunpack.c.l.b16 %v7598
        %v7640 = vunpack.c.l.b16 %v7599
        %v7641 = vunpack.c.l.b16 %v7600
        %v7642 = vunpack.c.l.b16 %v7601
        %v7643 = vpack.c.b16 %v7628, %v7627
        %v7644 = vpack.c.b16 %v7630, %v7629
        %v7645 = vpack.c.b16 %v7632, %v7631
        %v7646 = vpack.c.b16 %v7634, %v7633
        %v7647 = vpack.c.b16 %v7636, %v7635
        %v7648 = vpack.c.b16 %v7638, %v7637
        %v7649 = vpack.c.b16 %v7640, %v7639
        %v7650 = vpack.c.b16 %v7642, %v7641
        %v7659 = vunpack.c.l.b16 %v7603
        %v7660 = vunpack.c.l.b16 %v7604
        %v7661 = vunpack.c.l.b16 %v7605
        %v7662 = vunpack.c.l.b16 %v7606
        %v7663 = vunpack.c.l.b16 %v7607
        %v7664 = vunpack.c.l.b16 %v7608
        %v7665 = vunpack.c.l.b16 %v7609
        %v7666 = vunpack.c.l.b16 %v7610
        %v7667 = vpack.c.b16 %v7660, %v7659
        %v7668 = vpack.c.b16 %v7662, %v7661
        %v7669 = vpack.c.b16 %v7664, %v7663
        %v7670 = vpack.c.b16 %v7666, %v7665
        %v7676 = vsel %vm1147, %v7643, 0
        %v7679 = vsel %vm1147, %v7644, 0
        %v7682 = vsel %vm1147, %v7645, 0
        %v7685 = vsel %vm1147, %v7646, 0
        %v7688 = vsel %vm1147, %v7647, 0
        %v7691 = vsel %vm1147, %v7648, 0
        %v7694 = vsel %vm1147, %v7649, 0
        %v7697 = vsel %vm1147, %v7650, 0
        %7699 = vmatprep.subr.bf16.mxu0 0
        %7700 = vmatpush1.bf16.msra.mxu0 0
        %7701 = vmatprep.subr.bf16.mxu0 0
        %7702 = vmatpush1.bf16.msra.mxu0 0
        %7703 = vmatprep.subr.bf16.mxu0 0
        %7704 = vmatpush1.bf16.msra.mxu0 0
        %7705 = vmatprep.subr.bf16.mxu0 0
        %7706 = vmatpush1.bf16.msra.mxu0 0
        %7707 = vmatprep.subr.bf16.mxu0 0
        %7708 = vmatpush1.bf16.msra.mxu0 %v7670
        %7709 = vmatprep.subr.bf16.mxu0 0
        %7710 = vmatpush1.bf16.msra.mxu0 %v7669
        %7711 = vmatprep.subr.bf16.mxu0 0
        %7712 = vmatpush1.bf16.msra.mxu0 %v7668
        %7713 = vmatprep.subr.bf16.mxu0 0
        %7714 = vmatpush1.bf16.msra.mxu0 %v7667
        %7715 = vmatprep.subr.bf16.mxu0 0
        %7716 = vmatpush2.bf16.msra.mxu0 0
        %7717 = vmatprep.subr.bf16.mxu0 0
        %7718 = vmatpush2.bf16.msra.mxu0 0
        %7719 = vmatprep.subr.bf16.mxu0 0
        %7720 = vmatpush2.bf16.msra.mxu0 0
        %7721 = vmatprep.subr.bf16.mxu0 0
        %7722 = vmatpush2.bf16.msra.mxu0 0
        %7723 = vmatprep.subr.bf16.mxu0 0
        %7724 = vmatpush2.bf16.msra.mxu0 0
        %7725 = vmatprep.subr.bf16.mxu0 0
        %7726 = vmatpush2.bf16.msra.mxu0 0
        %7727 = vmatprep.subr.bf16.mxu0 0
        %7728 = vmatpush2.bf16.msra.mxu0 0
        %7729 = vmatprep.subr.bf16.mxu0 0
        %7730 = vmatpush2.bf16.msra.mxu0 0
        %7731 = vmatprep.mubr.bf16.mxu0 0
        %7732 = vmatmul.mubr.bf16.gmra.mxu0 %v7676
        %v7733 = vpop.f32.mrf.mxu0
        %v7734 = vadd.f32 0.0, %v7733
        %v7735 = vpop.f32.mrf.mxu0
        %v7736 = vpop.f32.mrf.mxu0
        %v7737 = vadd.f32 0.0, %v7736
        %v7738 = vpop.f32.mrf.mxu0
        %7739 = vmatprep.mubr.bf16.mxu0 0
        %7740 = vmatmul.mubr.bf16.gmra.mxu0 %v7679
        %v7741 = vpop.f32.mrf.mxu0
        %v7742 = vadd.f32 0.0, %v7741
        %v7743 = vpop.f32.mrf.mxu0
        %v7744 = vpop.f32.mrf.mxu0
        %v7745 = vadd.f32 0.0, %v7744
        %v7746 = vpop.f32.mrf.mxu0
        %7747 = vmatprep.mubr.bf16.mxu0 0
        %7748 = vmatmul.mubr.bf16.gmra.mxu0 %v7682
        %v7749 = vpop.f32.mrf.mxu0
        %v7750 = vadd.f32 0.0, %v7749
        %v7751 = vpop.f32.mrf.mxu0
        %v7752 = vpop.f32.mrf.mxu0
        %v7753 = vadd.f32 0.0, %v7752
        %v7754 = vpop.f32.mrf.mxu0
        %7755 = vmatprep.mubr.bf16.mxu0 0
        %7756 = vmatmul.mubr.bf16.gmra.mxu0 %v7685
        %v7757 = vpop.f32.mrf.mxu0
        %v7758 = vadd.f32 0.0, %v7757
        %v7759 = vpop.f32.mrf.mxu0
        %v7760 = vpop.f32.mrf.mxu0
        %v7761 = vadd.f32 0.0, %v7760
        %v7762 = vpop.f32.mrf.mxu0
        %7763 = vmatprep.mubr.bf16.mxu0 0
        %7764 = vmatmul.mubr.bf16.gmra.mxu0 %v7688
        %v7765 = vpop.f32.mrf.mxu0
        %v7766 = vadd.f32 0.0, %v7765
        %v7767 = vpop.f32.mrf.mxu0
        %v7768 = vpop.f32.mrf.mxu0
        %v7769 = vadd.f32 0.0, %v7768
        %v7770 = vpop.f32.mrf.mxu0
        %7771 = vmatprep.mubr.bf16.mxu0 0
        %7772 = vmatmul.mubr.bf16.gmra.mxu0 %v7691
        %v7773 = vpop.f32.mrf.mxu0
        %v7774 = vadd.f32 0.0, %v7773
        %v7775 = vpop.f32.mrf.mxu0
        %v7776 = vpop.f32.mrf.mxu0
        %v7777 = vadd.f32 0.0, %v7776
        %v7778 = vpop.f32.mrf.mxu0
        %7779 = vmatprep.mubr.bf16.mxu0 0
        %7780 = vmatmul.mubr.bf16.gmra.mxu0 %v7694
        %v7781 = vpop.f32.mrf.mxu0
        %v7782 = vadd.f32 0.0, %v7781
        %v7783 = vpop.f32.mrf.mxu0
        %v7784 = vpop.f32.mrf.mxu0
        %v7785 = vadd.f32 0.0, %v7784
        %v7786 = vpop.f32.mrf.mxu0
        %7787 = vmatprep.mubr.bf16.mxu0 0
        %7788 = vmatmul.mubr.bf16.gmra.mxu0 %v7697
        %v7789 = vpop.f32.mrf.mxu0
        %v7790 = vadd.f32 0.0, %v7789
        %v7791 = vpop.f32.mrf.mxu0
        %v7792 = vpop.f32.mrf.mxu0
        %v7793 = vadd.f32 0.0, %v7792
        %v7794 = vpop.f32.mrf.mxu0
        %7795 = vdwg.mxu0
        %v7796 = vadd.f32 %v7568, %v7734
        %v7797 = vadd.f32 %v7569, %v7737
        %v7798 = vadd.f32 %v7570, %v7742
        %v7799 = vadd.f32 %v7571, %v7745
        %v7800 = vadd.f32 %v7572, %v7750
        %v7801 = vadd.f32 %v7573, %v7753
        %v7802 = vadd.f32 %v7574, %v7758
        %v7803 = vadd.f32 %v7575, %v7761
        %v7804 = vadd.f32 %v7576, %v7766
        %v7805 = vadd.f32 %v7577, %v7769
        %v7806 = vadd.f32 %v7578, %v7774
        %v7807 = vadd.f32 %v7579, %v7777
        %v7808 = vadd.f32 %v7580, %v7782
        %v7809 = vadd.f32 %v7581, %v7785
        %v7810 = vadd.f32 %v7582, %v7790
        %v7811 = vadd.f32 %v7583, %v7793
        %v7813 = vlaneseq
        %v7814 = vshrl.u32 %v7813, 7
        %v7815 = vsub.s32 0, %v7814
        %v7816 = vrot.slane %v309, %v7815
        %v7818 = vadd.f32 %v7796, %v7816
        %v7819 = vadd.f32 %v7797, %v7816
        %v7820 = vadd.f32 %v7798, %v7816
        %v7821 = vadd.f32 %v7799, %v7816
        %v7822 = vadd.f32 %v7800, %v7816
        %v7823 = vadd.f32 %v7801, %v7816
        %v7824 = vadd.f32 %v7802, %v7816
        %v7825 = vadd.f32 %v7803, %v7816
        %v7826 = vadd.f32 %v7804, %v7816
        %v7827 = vadd.f32 %v7805, %v7816
        %v7828 = vadd.f32 %v7806, %v7816
        %v7829 = vadd.f32 %v7807, %v7816
        %v7830 = vadd.f32 %v7808, %v7816
        %v7831 = vadd.f32 %v7809, %v7816
        %v7832 = vadd.f32 %v7810, %v7816
        %v7833 = vadd.f32 %v7811, %v7816
        %v7834 = vld [vmem:[%s311] sm:$0xff]
        %v7835 = vld [vmem:[%s311 + $0x8] sm:$0xff]
        %v7836 = vld [vmem:[%s311 + $0x10] sm:$0xff]
        %v7837 = vld [vmem:[%s311 + $0x18] sm:$0xff]
        %v7838 = vld [vmem:[%s311 + $0x20] sm:$0xff]
        %v7839 = vld [vmem:[%s311 + $0x28] sm:$0xff]
        %v7840 = vld [vmem:[%s311 + $0x30] sm:$0xff]
        %v7841 = vld [vmem:[%s311 + $0x38] sm:$0xff]
        %v7842 = vld [vmem:[%s311 + $0x40] sm:$0xff]
        %v7843 = vld [vmem:[%s311 + $0x48] sm:$0xff]
        %v7844 = vld [vmem:[%s311 + $0x50] sm:$0xff]
        %v7845 = vld [vmem:[%s311 + $0x58] sm:$0xff]
        %v7846 = vld [vmem:[%s311 + $0x60] sm:$0xff]
        %v7847 = vld [vmem:[%s311 + $0x68] sm:$0xff]
        %v7848 = vld [vmem:[%s311 + $0x70] sm:$0xff]
        %v7849 = vld [vmem:[%s311 + $0x78] sm:$0xff]
        %v7850 = vadd.f32 %v7818, %v7834
        %v7851 = vadd.f32 %v7819, %v7835
        %v7852 = vadd.f32 %v7820, %v7836
        %v7853 = vadd.f32 %v7821, %v7837
        %v7854 = vadd.f32 %v7822, %v7838
        %v7855 = vadd.f32 %v7823, %v7839
        %v7856 = vadd.f32 %v7824, %v7840
        %v7857 = vadd.f32 %v7825, %v7841
        %v7858 = vadd.f32 %v7826, %v7842
        %v7859 = vadd.f32 %v7827, %v7843
        %v7860 = vadd.f32 %v7828, %v7844
        %v7861 = vadd.f32 %v7829, %v7845
        %v7862 = vadd.f32 %v7830, %v7846
        %v7863 = vadd.f32 %v7831, %v7847
        %v7864 = vadd.f32 %v7832, %v7848
        %v7865 = vadd.f32 %v7833, %v7849
        %s7866 = scalar_lea.vmem %s271, %s310 [#allocation10]
        %7867 = vst.msk [vmem:[%s7866] sm:$0xff] %vm1147, %v7850
        %7868 = vst.msk [vmem:[%s7866 + $0x8] sm:$0xff] %vm1147, %v7851
        %7869 = vst.msk [vmem:[%s7866 + $0x10] sm:$0xff] %vm1147, %v7852
        %7870 = vst.msk [vmem:[%s7866 + $0x18] sm:$0xff] %vm1147, %v7853
        %7871 = vst.msk [vmem:[%s7866 + $0x20] sm:$0xff] %vm1147, %v7854
        %7872 = vst.msk [vmem:[%s7866 + $0x28] sm:$0xff] %vm1147, %v7855
        %7873 = vst.msk [vmem:[%s7866 + $0x30] sm:$0xff] %vm1147, %v7856
        %7874 = vst.msk [vmem:[%s7866 + $0x38] sm:$0xff] %vm1147, %v7857
        %7875 = vst.msk [vmem:[%s7866 + $0x40] sm:$0xff] %vm1147, %v7858
        %7876 = vst.msk [vmem:[%s7866 + $0x48] sm:$0xff] %vm1147, %v7859
        %7877 = vst.msk [vmem:[%s7866 + $0x50] sm:$0xff] %vm1147, %v7860
        %7878 = vst.msk [vmem:[%s7866 + $0x58] sm:$0xff] %vm1147, %v7861
        %7879 = vst.msk [vmem:[%s7866 + $0x60] sm:$0xff] %vm1147, %v7862
        %7880 = vst.msk [vmem:[%s7866 + $0x68] sm:$0xff] %vm1147, %v7863
        %7881 = vst.msk [vmem:[%s7866 + $0x70] sm:$0xff] %vm1147, %v7864
        %7882 = vst.msk [vmem:[%s7866 + $0x78] sm:$0xff] %vm1147, %v7865
        %s7883 = smul.addr %s3421, 4
        %s7884 = scalar_lea.vmem [#allocation3], %s7883
        %v7885 = vld [vmem:[%s7884] sm:$0xf]
        %v7886 = vld [vmem:[%s7884 + $0x4] sm:$0xf]
        %v7887 = vld [vmem:[%s7884 + $0x8] sm:$0xf]
        %v7888 = vld [vmem:[%s7884 + $0xc] sm:$0xf]
        %v7889 = vld [vmem:[%s7884 + $0x10] sm:$0xf]
        %v7890 = vld [vmem:[%s7884 + $0x14] sm:$0xf]
        %v7891 = vld [vmem:[%s7884 + $0x18] sm:$0xf]
        %v7892 = vld [vmem:[%s7884 + $0x1c] sm:$0xf]
        %v7893 = vld [vmem:[%s7884 + $0x20] sm:$0xf]
        %v7894 = vld [vmem:[%s7884 + $0x24] sm:$0xf]
        %v7895 = vld [vmem:[%s7884 + $0x28] sm:$0xf]
        %v7896 = vld [vmem:[%s7884 + $0x2c] sm:$0xf]
        %v7897 = vld [vmem:[%s7884 + $0x30] sm:$0xf]
        %v7898 = vld [vmem:[%s7884 + $0x34] sm:$0xf]
        %v7899 = vld [vmem:[%s7884 + $0x38] sm:$0xf]
        %v7900 = vld [vmem:[%s7884 + $0x3c] sm:$0xf]
        %v7901 = vld [vmem:[#allocation9] sm:$0xf]
        %v7902 = vld [vmem:[#allocation9 + $0x4] sm:$0xf]
        %v7903 = vld [vmem:[#allocation9 + $0x8] sm:$0xf]
        %v7904 = vld [vmem:[#allocation9 + $0xc] sm:$0xf]
        %v7905 = vld [vmem:[#allocation9 + $0x10] sm:$0xf]
        %v7906 = vld [vmem:[#allocation9 + $0x14] sm:$0xf]
        %v7907 = vld [vmem:[#allocation9 + $0x18] sm:$0xf]
        %v7908 = vld [vmem:[#allocation9 + $0x1c] sm:$0xf]
        %s7909 = smul.addr %s3448, 4
        %s7910 = scalar_lea.vmem [#allocation3], %s7909
        %v7911 = vld [vmem:[%s7910] sm:$0xf]
        %v7912 = vld [vmem:[%s7910 + $0x4] sm:$0xf]
        %v7913 = vld [vmem:[%s7910 + $0x8] sm:$0xf]
        %v7914 = vld [vmem:[%s7910 + $0xc] sm:$0xf]
        %v7915 = vld [vmem:[%s7910 + $0x10] sm:$0xf]
        %v7916 = vld [vmem:[%s7910 + $0x14] sm:$0xf]
        %v7917 = vld [vmem:[%s7910 + $0x18] sm:$0xf]
        %v7918 = vld [vmem:[%s7910 + $0x1c] sm:$0xf]
        %v7919 = vld [vmem:[%s7910 + $0x20] sm:$0xf]
        %v7920 = vld [vmem:[%s7910 + $0x24] sm:$0xf]
        %v7921 = vld [vmem:[%s7910 + $0x28] sm:$0xf]
        %v7922 = vld [vmem:[%s7910 + $0x2c] sm:$0xf]
        %v7923 = vld [vmem:[%s7910 + $0x30] sm:$0xf]
        %v7924 = vld [vmem:[%s7910 + $0x34] sm:$0xf]
        %v7925 = vld [vmem:[%s7910 + $0x38] sm:$0xf]
        %v7926 = vld [vmem:[%s7910 + $0x3c] sm:$0xf]
        %v7927 = vld [vmem:[%s5843] sm:$0xf]
        %v7928 = vld [vmem:[%s5843 + $0x4] sm:$0xf]
        %v7929 = vld [vmem:[%s5843 + $0x8] sm:$0xf]
        %v7930 = vld [vmem:[%s5843 + $0xc] sm:$0xf]
        %v7931 = vld [vmem:[%s5843 + $0x10] sm:$0xf]
        %v7932 = vld [vmem:[%s5843 + $0x14] sm:$0xf]
        %v7933 = vld [vmem:[%s5843 + $0x18] sm:$0xf]
        %v7934 = vld [vmem:[%s5843 + $0x1c] sm:$0xf]
        %v7951 = vunpack.c.l.b16 %v7911
        %v7952 = vunpack.c.l.b16 %v7912
        %v7953 = vunpack.c.l.b16 %v7913
        %v7954 = vunpack.c.l.b16 %v7914
        %v7955 = vunpack.c.l.b16 %v7915
        %v7956 = vunpack.c.l.b16 %v7916
        %v7957 = vunpack.c.l.b16 %v7917
        %v7958 = vunpack.c.l.b16 %v7918
        %v7959 = vunpack.c.l.b16 %v7919
        %v7960 = vunpack.c.l.b16 %v7920
        %v7961 = vunpack.c.l.b16 %v7921
        %v7962 = vunpack.c.l.b16 %v7922
        %v7963 = vunpack.c.l.b16 %v7923
        %v7964 = vunpack.c.l.b16 %v7924
        %v7965 = vunpack.c.l.b16 %v7925
        %v7966 = vunpack.c.l.b16 %v7926
        %v7967 = vpack.c.b16 %v7952, %v7951
        %v7968 = vpack.c.b16 %v7954, %v7953
        %v7969 = vpack.c.b16 %v7956, %v7955
        %v7970 = vpack.c.b16 %v7958, %v7957
        %v7971 = vpack.c.b16 %v7960, %v7959
        %v7972 = vpack.c.b16 %v7962, %v7961
        %v7973 = vpack.c.b16 %v7964, %v7963
        %v7974 = vpack.c.b16 %v7966, %v7965
        %v7983 = vunpack.c.l.b16 %v7927
        %v7984 = vunpack.c.l.b16 %v7928
        %v7985 = vunpack.c.l.b16 %v7929
        %v7986 = vunpack.c.l.b16 %v7930
        %v7987 = vunpack.c.l.b16 %v7931
        %v7988 = vunpack.c.l.b16 %v7932
        %v7989 = vunpack.c.l.b16 %v7933
        %v7990 = vunpack.c.l.b16 %v7934
        %v7991 = vpack.c.b16 %v7984, %v7983
        %v7992 = vpack.c.b16 %v7986, %v7985
        %v7993 = vpack.c.b16 %v7988, %v7987
        %v7994 = vpack.c.b16 %v7990, %v7989
        %v8000 = vsel %vm1147, %v7967, 0
        %v8003 = vsel %vm1147, %v7968, 0
        %v8006 = vsel %vm1147, %v7969, 0
        %v8009 = vsel %vm1147, %v7970, 0
        %v8012 = vsel %vm1147, %v7971, 0
        %v8015 = vsel %vm1147, %v7972, 0
        %v8018 = vsel %vm1147, %v7973, 0
        %v8021 = vsel %vm1147, %v7974, 0
        %8023 = vmatprep.subr.bf16.mxu0 0
        %8024 = vmatpush1.bf16.msra.mxu0 0
        %8025 = vmatprep.subr.bf16.mxu0 0
        %8026 = vmatpush1.bf16.msra.mxu0 0
        %8027 = vmatprep.subr.bf16.mxu0 0
        %8028 = vmatpush1.bf16.msra.mxu0 0
        %8029 = vmatprep.subr.bf16.mxu0 0
        %8030 = vmatpush1.bf16.msra.mxu0 0
        %8031 = vmatprep.subr.bf16.mxu0 0
        %8032 = vmatpush1.bf16.msra.mxu0 %v7994
        %8033 = vmatprep.subr.bf16.mxu0 0
        %8034 = vmatpush1.bf16.msra.mxu0 %v7993
        %8035 = vmatprep.subr.bf16.mxu0 0
        %8036 = vmatpush1.bf16.msra.mxu0 %v7992
        %8037 = vmatprep.subr.bf16.mxu0 0
        %8038 = vmatpush1.bf16.msra.mxu0 %v7991
        %8039 = vmatprep.subr.bf16.mxu0 0
        %8040 = vmatpush2.bf16.msra.mxu0 0
        %8041 = vmatprep.subr.bf16.mxu0 0
        %8042 = vmatpush2.bf16.msra.mxu0 0
        %8043 = vmatprep.subr.bf16.mxu0 0
        %8044 = vmatpush2.bf16.msra.mxu0 0
        %8045 = vmatprep.subr.bf16.mxu0 0
        %8046 = vmatpush2.bf16.msra.mxu0 0
        %8047 = vmatprep.subr.bf16.mxu0 0
        %8048 = vmatpush2.bf16.msra.mxu0 0
        %8049 = vmatprep.subr.bf16.mxu0 0
        %8050 = vmatpush2.bf16.msra.mxu0 0
        %8051 = vmatprep.subr.bf16.mxu0 0
        %8052 = vmatpush2.bf16.msra.mxu0 0
        %8053 = vmatprep.subr.bf16.mxu0 0
        %8054 = vmatpush2.bf16.msra.mxu0 0
        %8055 = vmatprep.mubr.bf16.mxu0 0
        %8056 = vmatmul.mubr.bf16.gmra.mxu0 %v8000
        %v8057 = vpop.f32.mrf.mxu0
        %v8058 = vadd.f32 0.0, %v8057
        %v8059 = vpop.f32.mrf.mxu0
        %v8060 = vpop.f32.mrf.mxu0
        %v8061 = vadd.f32 0.0, %v8060
        %v8062 = vpop.f32.mrf.mxu0
        %8063 = vmatprep.mubr.bf16.mxu0 0
        %8064 = vmatmul.mubr.bf16.gmra.mxu0 %v8003
        %v8065 = vpop.f32.mrf.mxu0
        %v8066 = vadd.f32 0.0, %v8065
        %v8067 = vpop.f32.mrf.mxu0
        %v8068 = vpop.f32.mrf.mxu0
        %v8069 = vadd.f32 0.0, %v8068
        %v8070 = vpop.f32.mrf.mxu0
        %8071 = vmatprep.mubr.bf16.mxu0 0
        %8072 = vmatmul.mubr.bf16.gmra.mxu0 %v8006
        %v8073 = vpop.f32.mrf.mxu0
        %v8074 = vadd.f32 0.0, %v8073
        %v8075 = vpop.f32.mrf.mxu0
        %v8076 = vpop.f32.mrf.mxu0
        %v8077 = vadd.f32 0.0, %v8076
        %v8078 = vpop.f32.mrf.mxu0
        %8079 = vmatprep.mubr.bf16.mxu0 0
        %8080 = vmatmul.mubr.bf16.gmra.mxu0 %v8009
        %v8081 = vpop.f32.mrf.mxu0
        %v8082 = vadd.f32 0.0, %v8081
        %v8083 = vpop.f32.mrf.mxu0
        %v8084 = vpop.f32.mrf.mxu0
        %v8085 = vadd.f32 0.0, %v8084
        %v8086 = vpop.f32.mrf.mxu0
        %8087 = vmatprep.mubr.bf16.mxu0 0
        %8088 = vmatmul.mubr.bf16.gmra.mxu0 %v8012
        %v8089 = vpop.f32.mrf.mxu0
        %v8090 = vadd.f32 0.0, %v8089
        %v8091 = vpop.f32.mrf.mxu0
        %v8092 = vpop.f32.mrf.mxu0
        %v8093 = vadd.f32 0.0, %v8092
        %v8094 = vpop.f32.mrf.mxu0
        %8095 = vmatprep.mubr.bf16.mxu0 0
        %8096 = vmatmul.mubr.bf16.gmra.mxu0 %v8015
        %v8097 = vpop.f32.mrf.mxu0
        %v8098 = vadd.f32 0.0, %v8097
        %v8099 = vpop.f32.mrf.mxu0
        %v8100 = vpop.f32.mrf.mxu0
        %v8101 = vadd.f32 0.0, %v8100
        %v8102 = vpop.f32.mrf.mxu0
        %8103 = vmatprep.mubr.bf16.mxu0 0
        %8104 = vmatmul.mubr.bf16.gmra.mxu0 %v8018
        %v8105 = vpop.f32.mrf.mxu0
        %v8106 = vadd.f32 0.0, %v8105
        %v8107 = vpop.f32.mrf.mxu0
        %v8108 = vpop.f32.mrf.mxu0
        %v8109 = vadd.f32 0.0, %v8108
        %v8110 = vpop.f32.mrf.mxu0
        %8111 = vmatprep.mubr.bf16.mxu0 0
        %8112 = vmatmul.mubr.bf16.gmra.mxu0 %v8021
        %v8113 = vpop.f32.mrf.mxu0
        %v8114 = vadd.f32 0.0, %v8113
        %v8115 = vpop.f32.mrf.mxu0
        %v8116 = vpop.f32.mrf.mxu0
        %v8117 = vadd.f32 0.0, %v8116
        %v8118 = vpop.f32.mrf.mxu0
        %8119 = vdwg.mxu0
        %v8136 = vunpack.c.l.b16 %v7885
        %v8137 = vunpack.c.l.b16 %v7886
        %v8138 = vunpack.c.l.b16 %v7887
        %v8139 = vunpack.c.l.b16 %v7888
        %v8140 = vunpack.c.l.b16 %v7889
        %v8141 = vunpack.c.l.b16 %v7890
        %v8142 = vunpack.c.l.b16 %v7891
        %v8143 = vunpack.c.l.b16 %v7892
        %v8144 = vunpack.c.l.b16 %v7893
        %v8145 = vunpack.c.l.b16 %v7894
        %v8146 = vunpack.c.l.b16 %v7895
        %v8147 = vunpack.c.l.b16 %v7896
        %v8148 = vunpack.c.l.b16 %v7897
        %v8149 = vunpack.c.l.b16 %v7898
        %v8150 = vunpack.c.l.b16 %v7899
        %v8151 = vunpack.c.l.b16 %v7900
        %v8152 = vpack.c.b16 %v8137, %v8136
        %v8153 = vpack.c.b16 %v8139, %v8138
        %v8154 = vpack.c.b16 %v8141, %v8140
        %v8155 = vpack.c.b16 %v8143, %v8142
        %v8156 = vpack.c.b16 %v8145, %v8144
        %v8157 = vpack.c.b16 %v8147, %v8146
        %v8158 = vpack.c.b16 %v8149, %v8148
        %v8159 = vpack.c.b16 %v8151, %v8150
        %v8168 = vunpack.c.l.b16 %v7901
        %v8169 = vunpack.c.l.b16 %v7902
        %v8170 = vunpack.c.l.b16 %v7903
        %v8171 = vunpack.c.l.b16 %v7904
        %v8172 = vunpack.c.l.b16 %v7905
        %v8173 = vunpack.c.l.b16 %v7906
        %v8174 = vunpack.c.l.b16 %v7907
        %v8175 = vunpack.c.l.b16 %v7908
        %v8176 = vpack.c.b16 %v8169, %v8168
        %v8177 = vpack.c.b16 %v8171, %v8170
        %v8178 = vpack.c.b16 %v8173, %v8172
        %v8179 = vpack.c.b16 %v8175, %v8174
        %v8185 = vsel %vm1147, %v8152, 0
        %v8188 = vsel %vm1147, %v8153, 0
        %v8191 = vsel %vm1147, %v8154, 0
        %v8194 = vsel %vm1147, %v8155, 0
        %v8197 = vsel %vm1147, %v8156, 0
        %v8200 = vsel %vm1147, %v8157, 0
        %v8203 = vsel %vm1147, %v8158, 0
        %v8206 = vsel %vm1147, %v8159, 0
        %8208 = vmatprep.subr.bf16.mxu0 0
        %8209 = vmatpush1.bf16.msra.mxu0 0
        %8210 = vmatprep.subr.bf16.mxu0 0
        %8211 = vmatpush1.bf16.msra.mxu0 0
        %8212 = vmatprep.subr.bf16.mxu0 0
        %8213 = vmatpush1.bf16.msra.mxu0 0
        %8214 = vmatprep.subr.bf16.mxu0 0
        %8215 = vmatpush1.bf16.msra.mxu0 0
        %8216 = vmatprep.subr.bf16.mxu0 0
        %8217 = vmatpush1.bf16.msra.mxu0 %v8179
        %8218 = vmatprep.subr.bf16.mxu0 0
        %8219 = vmatpush1.bf16.msra.mxu0 %v8178
        %8220 = vmatprep.subr.bf16.mxu0 0
        %8221 = vmatpush1.bf16.msra.mxu0 %v8177
        %8222 = vmatprep.subr.bf16.mxu0 0
        %8223 = vmatpush1.bf16.msra.mxu0 %v8176
        %8224 = vmatprep.subr.bf16.mxu0 0
        %8225 = vmatpush2.bf16.msra.mxu0 0
        %8226 = vmatprep.subr.bf16.mxu0 0
        %8227 = vmatpush2.bf16.msra.mxu0 0
        %8228 = vmatprep.subr.bf16.mxu0 0
        %8229 = vmatpush2.bf16.msra.mxu0 0
        %8230 = vmatprep.subr.bf16.mxu0 0
        %8231 = vmatpush2.bf16.msra.mxu0 0
        %8232 = vmatprep.subr.bf16.mxu0 0
        %8233 = vmatpush2.bf16.msra.mxu0 0
        %8234 = vmatprep.subr.bf16.mxu0 0
        %8235 = vmatpush2.bf16.msra.mxu0 0
        %8236 = vmatprep.subr.bf16.mxu0 0
        %8237 = vmatpush2.bf16.msra.mxu0 0
        %8238 = vmatprep.subr.bf16.mxu0 0
        %8239 = vmatpush2.bf16.msra.mxu0 0
        %8240 = vmatprep.mubr.bf16.mxu0 0
        %8241 = vmatmul.mubr.bf16.gmra.mxu0 %v8185
        %v8242 = vpop.f32.mrf.mxu0
        %v8243 = vadd.f32 %v8058, %v8242
        %v8244 = vpop.f32.mrf.mxu0
        %v8245 = vpop.f32.mrf.mxu0
        %v8246 = vadd.f32 %v8061, %v8245
        %v8247 = vpop.f32.mrf.mxu0
        %8248 = vmatprep.mubr.bf16.mxu0 0
        %8249 = vmatmul.mubr.bf16.gmra.mxu0 %v8188
        %v8250 = vpop.f32.mrf.mxu0
        %v8251 = vadd.f32 %v8066, %v8250
        %v8252 = vpop.f32.mrf.mxu0
        %v8253 = vpop.f32.mrf.mxu0
        %v8254 = vadd.f32 %v8069, %v8253
        %v8255 = vpop.f32.mrf.mxu0
        %8256 = vmatprep.mubr.bf16.mxu0 0
        %8257 = vmatmul.mubr.bf16.gmra.mxu0 %v8191
        %v8258 = vpop.f32.mrf.mxu0
        %v8259 = vadd.f32 %v8074, %v8258
        %v8260 = vpop.f32.mrf.mxu0
        %v8261 = vpop.f32.mrf.mxu0
        %v8262 = vadd.f32 %v8077, %v8261
        %v8263 = vpop.f32.mrf.mxu0
        %8264 = vmatprep.mubr.bf16.mxu0 0
        %8265 = vmatmul.mubr.bf16.gmra.mxu0 %v8194
        %v8266 = vpop.f32.mrf.mxu0
        %v8267 = vadd.f32 %v8082, %v8266
        %v8268 = vpop.f32.mrf.mxu0
        %v8269 = vpop.f32.mrf.mxu0
        %v8270 = vadd.f32 %v8085, %v8269
        %v8271 = vpop.f32.mrf.mxu0
        %8272 = vmatprep.mubr.bf16.mxu0 0
        %8273 = vmatmul.mubr.bf16.gmra.mxu0 %v8197
        %v8274 = vpop.f32.mrf.mxu0
        %v8275 = vadd.f32 %v8090, %v8274
        %v8276 = vpop.f32.mrf.mxu0
        %v8277 = vpop.f32.mrf.mxu0
        %v8278 = vadd.f32 %v8093, %v8277
        %v8279 = vpop.f32.mrf.mxu0
        %8280 = vmatprep.mubr.bf16.mxu0 0
        %8281 = vmatmul.mubr.bf16.gmra.mxu0 %v8200
        %v8282 = vpop.f32.mrf.mxu0
        %v8283 = vadd.f32 %v8098, %v8282
        %v8284 = vpop.f32.mrf.mxu0
        %v8285 = vpop.f32.mrf.mxu0
        %v8286 = vadd.f32 %v8101, %v8285
        %v8287 = vpop.f32.mrf.mxu0
        %8288 = vmatprep.mubr.bf16.mxu0 0
        %8289 = vmatmul.mubr.bf16.gmra.mxu0 %v8203
        %v8290 = vpop.f32.mrf.mxu0
        %v8291 = vadd.f32 %v8106, %v8290
        %v8292 = vpop.f32.mrf.mxu0
        %v8293 = vpop.f32.mrf.mxu0
        %v8294 = vadd.f32 %v8109, %v8293
        %v8295 = vpop.f32.mrf.mxu0
        %8296 = vmatprep.mubr.bf16.mxu0 0
        %8297 = vmatmul.mubr.bf16.gmra.mxu0 %v8206
        %v8298 = vpop.f32.mrf.mxu0
        %v8299 = vadd.f32 %v8114, %v8298
        %v8300 = vpop.f32.mrf.mxu0
        %v8301 = vpop.f32.mrf.mxu0
        %v8302 = vadd.f32 %v8117, %v8301
        %v8303 = vpop.f32.mrf.mxu0
        %8304 = vdwg.mxu0
        %s8305 = smul.addr %s3845, 4
        %s8306 = scalar_lea.vmem [#allocation3], %s8305
        %v8307 = vld [vmem:[%s8306] sm:$0xf]
        %v8308 = vld [vmem:[%s8306 + $0x4] sm:$0xf]
        %v8309 = vld [vmem:[%s8306 + $0x8] sm:$0xf]
        %v8310 = vld [vmem:[%s8306 + $0xc] sm:$0xf]
        %v8311 = vld [vmem:[%s8306 + $0x10] sm:$0xf]
        %v8312 = vld [vmem:[%s8306 + $0x14] sm:$0xf]
        %v8313 = vld [vmem:[%s8306 + $0x18] sm:$0xf]
        %v8314 = vld [vmem:[%s8306 + $0x1c] sm:$0xf]
        %v8315 = vld [vmem:[%s8306 + $0x20] sm:$0xf]
        %v8316 = vld [vmem:[%s8306 + $0x24] sm:$0xf]
        %v8317 = vld [vmem:[%s8306 + $0x28] sm:$0xf]
        %v8318 = vld [vmem:[%s8306 + $0x2c] sm:$0xf]
        %v8319 = vld [vmem:[%s8306 + $0x30] sm:$0xf]
        %v8320 = vld [vmem:[%s8306 + $0x34] sm:$0xf]
        %v8321 = vld [vmem:[%s8306 + $0x38] sm:$0xf]
        %v8322 = vld [vmem:[%s8306 + $0x3c] sm:$0xf]
        %v8323 = vld [vmem:[%s6240] sm:$0xf]
        %v8324 = vld [vmem:[%s6240 + $0x4] sm:$0xf]
        %v8325 = vld [vmem:[%s6240 + $0x8] sm:$0xf]
        %v8326 = vld [vmem:[%s6240 + $0xc] sm:$0xf]
        %v8327 = vld [vmem:[%s6240 + $0x10] sm:$0xf]
        %v8328 = vld [vmem:[%s6240 + $0x14] sm:$0xf]
        %v8329 = vld [vmem:[%s6240 + $0x18] sm:$0xf]
        %v8330 = vld [vmem:[%s6240 + $0x1c] sm:$0xf]
        %v8347 = vunpack.c.l.b16 %v8307
        %v8348 = vunpack.c.l.b16 %v8308
        %v8349 = vunpack.c.l.b16 %v8309
        %v8350 = vunpack.c.l.b16 %v8310
        %v8351 = vunpack.c.l.b16 %v8311
        %v8352 = vunpack.c.l.b16 %v8312
        %v8353 = vunpack.c.l.b16 %v8313
        %v8354 = vunpack.c.l.b16 %v8314
        %v8355 = vunpack.c.l.b16 %v8315
        %v8356 = vunpack.c.l.b16 %v8316
        %v8357 = vunpack.c.l.b16 %v8317
        %v8358 = vunpack.c.l.b16 %v8318
        %v8359 = vunpack.c.l.b16 %v8319
        %v8360 = vunpack.c.l.b16 %v8320
        %v8361 = vunpack.c.l.b16 %v8321
        %v8362 = vunpack.c.l.b16 %v8322
        %v8363 = vpack.c.b16 %v8348, %v8347
        %v8364 = vpack.c.b16 %v8350, %v8349
        %v8365 = vpack.c.b16 %v8352, %v8351
        %v8366 = vpack.c.b16 %v8354, %v8353
        %v8367 = vpack.c.b16 %v8356, %v8355
        %v8368 = vpack.c.b16 %v8358, %v8357
        %v8369 = vpack.c.b16 %v8360, %v8359
        %v8370 = vpack.c.b16 %v8362, %v8361
        %v8379 = vunpack.c.l.b16 %v8323
        %v8380 = vunpack.c.l.b16 %v8324
        %v8381 = vunpack.c.l.b16 %v8325
        %v8382 = vunpack.c.l.b16 %v8326
        %v8383 = vunpack.c.l.b16 %v8327
        %v8384 = vunpack.c.l.b16 %v8328
        %v8385 = vunpack.c.l.b16 %v8329
        %v8386 = vunpack.c.l.b16 %v8330
        %v8387 = vpack.c.b16 %v8380, %v8379
        %v8388 = vpack.c.b16 %v8382, %v8381
        %v8389 = vpack.c.b16 %v8384, %v8383
        %v8390 = vpack.c.b16 %v8386, %v8385
        %v8396 = vsel %vm1147, %v8363, 0
        %v8399 = vsel %vm1147, %v8364, 0
        %v8402 = vsel %vm1147, %v8365, 0
        %v8405 = vsel %vm1147, %v8366, 0
        %v8408 = vsel %vm1147, %v8367, 0
        %v8411 = vsel %vm1147, %v8368, 0
        %v8414 = vsel %vm1147, %v8369, 0
        %v8417 = vsel %vm1147, %v8370, 0
        %8419 = vmatprep.subr.bf16.mxu0 0
        %8420 = vmatpush1.bf16.msra.mxu0 0
        %8421 = vmatprep.subr.bf16.mxu0 0
        %8422 = vmatpush1.bf16.msra.mxu0 0
        %8423 = vmatprep.subr.bf16.mxu0 0
        %8424 = vmatpush1.bf16.msra.mxu0 0
        %8425 = vmatprep.subr.bf16.mxu0 0
        %8426 = vmatpush1.bf16.msra.mxu0 0
        %8427 = vmatprep.subr.bf16.mxu0 0
        %8428 = vmatpush1.bf16.msra.mxu0 %v8390
        %8429 = vmatprep.subr.bf16.mxu0 0
        %8430 = vmatpush1.bf16.msra.mxu0 %v8389
        %8431 = vmatprep.subr.bf16.mxu0 0
        %8432 = vmatpush1.bf16.msra.mxu0 %v8388
        %8433 = vmatprep.subr.bf16.mxu0 0
        %8434 = vmatpush1.bf16.msra.mxu0 %v8387
        %8435 = vmatprep.subr.bf16.mxu0 0
        %8436 = vmatpush2.bf16.msra.mxu0 0
        %8437 = vmatprep.subr.bf16.mxu0 0
        %8438 = vmatpush2.bf16.msra.mxu0 0
        %8439 = vmatprep.subr.bf16.mxu0 0
        %8440 = vmatpush2.bf16.msra.mxu0 0
        %8441 = vmatprep.subr.bf16.mxu0 0
        %8442 = vmatpush2.bf16.msra.mxu0 0
        %8443 = vmatprep.subr.bf16.mxu0 0
        %8444 = vmatpush2.bf16.msra.mxu0 0
        %8445 = vmatprep.subr.bf16.mxu0 0
        %8446 = vmatpush2.bf16.msra.mxu0 0
        %8447 = vmatprep.subr.bf16.mxu0 0
        %8448 = vmatpush2.bf16.msra.mxu0 0
        %8449 = vmatprep.subr.bf16.mxu0 0
        %8450 = vmatpush2.bf16.msra.mxu0 0
        %8451 = vmatprep.mubr.bf16.mxu0 0
        %8452 = vmatmul.mubr.bf16.gmra.mxu0 %v8396
        %v8453 = vpop.f32.mrf.mxu0
        %v8454 = vadd.f32 0.0, %v8453
        %v8455 = vpop.f32.mrf.mxu0
        %v8456 = vpop.f32.mrf.mxu0
        %v8457 = vadd.f32 0.0, %v8456
        %v8458 = vpop.f32.mrf.mxu0
        %8459 = vmatprep.mubr.bf16.mxu0 0
        %8460 = vmatmul.mubr.bf16.gmra.mxu0 %v8399
        %v8461 = vpop.f32.mrf.mxu0
        %v8462 = vadd.f32 0.0, %v8461
        %v8463 = vpop.f32.mrf.mxu0
        %v8464 = vpop.f32.mrf.mxu0
        %v8465 = vadd.f32 0.0, %v8464
        %v8466 = vpop.f32.mrf.mxu0
        %8467 = vmatprep.mubr.bf16.mxu0 0
        %8468 = vmatmul.mubr.bf16.gmra.mxu0 %v8402
        %v8469 = vpop.f32.mrf.mxu0
        %v8470 = vadd.f32 0.0, %v8469
        %v8471 = vpop.f32.mrf.mxu0
        %v8472 = vpop.f32.mrf.mxu0
        %v8473 = vadd.f32 0.0, %v8472
        %v8474 = vpop.f32.mrf.mxu0
        %8475 = vmatprep.mubr.bf16.mxu0 0
        %8476 = vmatmul.mubr.bf16.gmra.mxu0 %v8405
        %v8477 = vpop.f32.mrf.mxu0
        %v8478 = vadd.f32 0.0, %v8477
        %v8479 = vpop.f32.mrf.mxu0
        %v8480 = vpop.f32.mrf.mxu0
        %v8481 = vadd.f32 0.0, %v8480
        %v8482 = vpop.f32.mrf.mxu0
        %8483 = vmatprep.mubr.bf16.mxu0 0
        %8484 = vmatmul.mubr.bf16.gmra.mxu0 %v8408
        %v8485 = vpop.f32.mrf.mxu0
        %v8486 = vadd.f32 0.0, %v8485
        %v8487 = vpop.f32.mrf.mxu0
        %v8488 = vpop.f32.mrf.mxu0
        %v8489 = vadd.f32 0.0, %v8488
        %v8490 = vpop.f32.mrf.mxu0
        %8491 = vmatprep.mubr.bf16.mxu0 0
        %8492 = vmatmul.mubr.bf16.gmra.mxu0 %v8411
        %v8493 = vpop.f32.mrf.mxu0
        %v8494 = vadd.f32 0.0, %v8493
        %v8495 = vpop.f32.mrf.mxu0
        %v8496 = vpop.f32.mrf.mxu0
        %v8497 = vadd.f32 0.0, %v8496
        %v8498 = vpop.f32.mrf.mxu0
        %8499 = vmatprep.mubr.bf16.mxu0 0
        %8500 = vmatmul.mubr.bf16.gmra.mxu0 %v8414
        %v8501 = vpop.f32.mrf.mxu0
        %v8502 = vadd.f32 0.0, %v8501
        %v8503 = vpop.f32.mrf.mxu0
        %v8504 = vpop.f32.mrf.mxu0
        %v8505 = vadd.f32 0.0, %v8504
        %v8506 = vpop.f32.mrf.mxu0
        %8507 = vmatprep.mubr.bf16.mxu0 0
        %8508 = vmatmul.mubr.bf16.gmra.mxu0 %v8417
        %v8509 = vpop.f32.mrf.mxu0
        %v8510 = vadd.f32 0.0, %v8509
        %v8511 = vpop.f32.mrf.mxu0
        %v8512 = vpop.f32.mrf.mxu0
        %v8513 = vadd.f32 0.0, %v8512
        %v8514 = vpop.f32.mrf.mxu0
        %8515 = vdwg.mxu0
        %v8516 = vadd.f32 %v8243, %v8454
        %v8517 = vadd.f32 %v8246, %v8457
        %v8518 = vadd.f32 %v8251, %v8462
        %v8519 = vadd.f32 %v8254, %v8465
        %v8520 = vadd.f32 %v8259, %v8470
        %v8521 = vadd.f32 %v8262, %v8473
        %v8522 = vadd.f32 %v8267, %v8478
        %v8523 = vadd.f32 %v8270, %v8481
        %v8524 = vadd.f32 %v8275, %v8486
        %v8525 = vadd.f32 %v8278, %v8489
        %v8526 = vadd.f32 %v8283, %v8494
        %v8527 = vadd.f32 %v8286, %v8497
        %v8528 = vadd.f32 %v8291, %v8502
        %v8529 = vadd.f32 %v8294, %v8505
        %v8530 = vadd.f32 %v8299, %v8510
        %v8531 = vadd.f32 %v8302, %v8513
        %v8532 = vld [vmem:[%s5708] sm:$0xf]
        %v8533 = vld [vmem:[%s5708 + $0x4] sm:$0xf]
        %v8534 = vld [vmem:[%s5708 + $0x8] sm:$0xf]
        %v8535 = vld [vmem:[%s5708 + $0xc] sm:$0xf]
        %v8536 = vld [vmem:[%s5708 + $0x10] sm:$0xf]
        %v8537 = vld [vmem:[%s5708 + $0x14] sm:$0xf]
        %v8538 = vld [vmem:[%s5708 + $0x18] sm:$0xf]
        %v8539 = vld [vmem:[%s5708 + $0x1c] sm:$0xf]
        %v8540 = vld [vmem:[%s5708 + $0x20] sm:$0xf]
        %v8541 = vld [vmem:[%s5708 + $0x24] sm:$0xf]
        %v8542 = vld [vmem:[%s5708 + $0x28] sm:$0xf]
        %v8543 = vld [vmem:[%s5708 + $0x2c] sm:$0xf]
        %v8544 = vld [vmem:[%s5708 + $0x30] sm:$0xf]
        %v8545 = vld [vmem:[%s5708 + $0x34] sm:$0xf]
        %v8546 = vld [vmem:[%s5708 + $0x38] sm:$0xf]
        %v8547 = vld [vmem:[%s5708 + $0x3c] sm:$0xf]
        %v8548 = vld [vmem:[%s6466] sm:$0xf]
        %v8549 = vld [vmem:[%s6466 + $0x4] sm:$0xf]
        %v8550 = vld [vmem:[%s6466 + $0x8] sm:$0xf]
        %v8551 = vld [vmem:[%s6466 + $0xc] sm:$0xf]
        %v8552 = vld [vmem:[%s6466 + $0x10] sm:$0xf]
        %v8553 = vld [vmem:[%s6466 + $0x14] sm:$0xf]
        %v8554 = vld [vmem:[%s6466 + $0x18] sm:$0xf]
        %v8555 = vld [vmem:[%s6466 + $0x1c] sm:$0xf]
        %v8572 = vunpack.c.l.b16 %v8532
        %v8573 = vunpack.c.l.b16 %v8533
        %v8574 = vunpack.c.l.b16 %v8534
        %v8575 = vunpack.c.l.b16 %v8535
        %v8576 = vunpack.c.l.b16 %v8536
        %v8577 = vunpack.c.l.b16 %v8537
        %v8578 = vunpack.c.l.b16 %v8538
        %v8579 = vunpack.c.l.b16 %v8539
        %v8580 = vunpack.c.l.b16 %v8540
        %v8581 = vunpack.c.l.b16 %v8541
        %v8582 = vunpack.c.l.b16 %v8542
        %v8583 = vunpack.c.l.b16 %v8543
        %v8584 = vunpack.c.l.b16 %v8544
        %v8585 = vunpack.c.l.b16 %v8545
        %v8586 = vunpack.c.l.b16 %v8546
        %v8587 = vunpack.c.l.b16 %v8547
        %v8588 = vpack.c.b16 %v8573, %v8572
        %v8589 = vpack.c.b16 %v8575, %v8574
        %v8590 = vpack.c.b16 %v8577, %v8576
        %v8591 = vpack.c.b16 %v8579, %v8578
        %v8592 = vpack.c.b16 %v8581, %v8580
        %v8593 = vpack.c.b16 %v8583, %v8582
        %v8594 = vpack.c.b16 %v8585, %v8584
        %v8595 = vpack.c.b16 %v8587, %v8586
        %v8604 = vunpack.c.l.b16 %v8548
        %v8605 = vunpack.c.l.b16 %v8549
        %v8606 = vunpack.c.l.b16 %v8550
        %v8607 = vunpack.c.l.b16 %v8551
        %v8608 = vunpack.c.l.b16 %v8552
        %v8609 = vunpack.c.l.b16 %v8553
        %v8610 = vunpack.c.l.b16 %v8554
        %v8611 = vunpack.c.l.b16 %v8555
        %v8612 = vpack.c.b16 %v8605, %v8604
        %v8613 = vpack.c.b16 %v8607, %v8606
        %v8614 = vpack.c.b16 %v8609, %v8608
        %v8615 = vpack.c.b16 %v8611, %v8610
        %v8621 = vsel %vm1147, %v8588, 0
        %v8624 = vsel %vm1147, %v8589, 0
        %v8627 = vsel %vm1147, %v8590, 0
        %v8630 = vsel %vm1147, %v8591, 0
        %v8633 = vsel %vm1147, %v8592, 0
        %v8636 = vsel %vm1147, %v8593, 0
        %v8639 = vsel %vm1147, %v8594, 0
        %v8642 = vsel %vm1147, %v8595, 0
        %8644 = vmatprep.subr.bf16.mxu0 0
        %8645 = vmatpush1.bf16.msra.mxu0 0
        %8646 = vmatprep.subr.bf16.mxu0 0
        %8647 = vmatpush1.bf16.msra.mxu0 0
        %8648 = vmatprep.subr.bf16.mxu0 0
        %8649 = vmatpush1.bf16.msra.mxu0 0
        %8650 = vmatprep.subr.bf16.mxu0 0
        %8651 = vmatpush1.bf16.msra.mxu0 0
        %8652 = vmatprep.subr.bf16.mxu0 0
        %8653 = vmatpush1.bf16.msra.mxu0 %v8615
        %8654 = vmatprep.subr.bf16.mxu0 0
        %8655 = vmatpush1.bf16.msra.mxu0 %v8614
        %8656 = vmatprep.subr.bf16.mxu0 0
        %8657 = vmatpush1.bf16.msra.mxu0 %v8613
        %8658 = vmatprep.subr.bf16.mxu0 0
        %8659 = vmatpush1.bf16.msra.mxu0 %v8612
        %8660 = vmatprep.subr.bf16.mxu0 0
        %8661 = vmatpush2.bf16.msra.mxu0 0
        %8662 = vmatprep.subr.bf16.mxu0 0
        %8663 = vmatpush2.bf16.msra.mxu0 0
        %8664 = vmatprep.subr.bf16.mxu0 0
        %8665 = vmatpush2.bf16.msra.mxu0 0
        %8666 = vmatprep.subr.bf16.mxu0 0
        %8667 = vmatpush2.bf16.msra.mxu0 0
        %8668 = vmatprep.subr.bf16.mxu0 0
        %8669 = vmatpush2.bf16.msra.mxu0 0
        %8670 = vmatprep.subr.bf16.mxu0 0
        %8671 = vmatpush2.bf16.msra.mxu0 0
        %8672 = vmatprep.subr.bf16.mxu0 0
        %8673 = vmatpush2.bf16.msra.mxu0 0
        %8674 = vmatprep.subr.bf16.mxu0 0
        %8675 = vmatpush2.bf16.msra.mxu0 0
        %8676 = vmatprep.mubr.bf16.mxu0 0
        %8677 = vmatmul.mubr.bf16.gmra.mxu0 %v8621
        %v8678 = vpop.f32.mrf.mxu0
        %v8679 = vadd.f32 0.0, %v8678
        %v8680 = vpop.f32.mrf.mxu0
        %v8681 = vpop.f32.mrf.mxu0
        %v8682 = vadd.f32 0.0, %v8681
        %v8683 = vpop.f32.mrf.mxu0
        %8684 = vmatprep.mubr.bf16.mxu0 0
        %8685 = vmatmul.mubr.bf16.gmra.mxu0 %v8624
        %v8686 = vpop.f32.mrf.mxu0
        %v8687 = vadd.f32 0.0, %v8686
        %v8688 = vpop.f32.mrf.mxu0
        %v8689 = vpop.f32.mrf.mxu0
        %v8690 = vadd.f32 0.0, %v8689
        %v8691 = vpop.f32.mrf.mxu0
        %8692 = vmatprep.mubr.bf16.mxu0 0
        %8693 = vmatmul.mubr.bf16.gmra.mxu0 %v8627
        %v8694 = vpop.f32.mrf.mxu0
        %v8695 = vadd.f32 0.0, %v8694
        %v8696 = vpop.f32.mrf.mxu0
        %v8697 = vpop.f32.mrf.mxu0
        %v8698 = vadd.f32 0.0, %v8697
        %v8699 = vpop.f32.mrf.mxu0
        %8700 = vmatprep.mubr.bf16.mxu0 0
        %8701 = vmatmul.mubr.bf16.gmra.mxu0 %v8630
        %v8702 = vpop.f32.mrf.mxu0
        %v8703 = vadd.f32 0.0, %v8702
        %v8704 = vpop.f32.mrf.mxu0
        %v8705 = vpop.f32.mrf.mxu0
        %v8706 = vadd.f32 0.0, %v8705
        %v8707 = vpop.f32.mrf.mxu0
        %8708 = vmatprep.mubr.bf16.mxu0 0
        %8709 = vmatmul.mubr.bf16.gmra.mxu0 %v8633
        %v8710 = vpop.f32.mrf.mxu0
        %v8711 = vadd.f32 0.0, %v8710
        %v8712 = vpop.f32.mrf.mxu0
        %v8713 = vpop.f32.mrf.mxu0
        %v8714 = vadd.f32 0.0, %v8713
        %v8715 = vpop.f32.mrf.mxu0
        %8716 = vmatprep.mubr.bf16.mxu0 0
        %8717 = vmatmul.mubr.bf16.gmra.mxu0 %v8636
        %v8718 = vpop.f32.mrf.mxu0
        %v8719 = vadd.f32 0.0, %v8718
        %v8720 = vpop.f32.mrf.mxu0
        %v8721 = vpop.f32.mrf.mxu0
        %v8722 = vadd.f32 0.0, %v8721
        %v8723 = vpop.f32.mrf.mxu0
        %8724 = vmatprep.mubr.bf16.mxu0 0
        %8725 = vmatmul.mubr.bf16.gmra.mxu0 %v8639
        %v8726 = vpop.f32.mrf.mxu0
        %v8727 = vadd.f32 0.0, %v8726
        %v8728 = vpop.f32.mrf.mxu0
        %v8729 = vpop.f32.mrf.mxu0
        %v8730 = vadd.f32 0.0, %v8729
        %v8731 = vpop.f32.mrf.mxu0
        %8732 = vmatprep.mubr.bf16.mxu0 0
        %8733 = vmatmul.mubr.bf16.gmra.mxu0 %v8642
        %v8734 = vpop.f32.mrf.mxu0
        %v8735 = vadd.f32 0.0, %v8734
        %v8736 = vpop.f32.mrf.mxu0
        %v8737 = vpop.f32.mrf.mxu0
        %v8738 = vadd.f32 0.0, %v8737
        %v8739 = vpop.f32.mrf.mxu0
        %8740 = vdwg.mxu0
        %v8741 = vadd.f32 %v8516, %v8679
        %v8742 = vadd.f32 %v8517, %v8682
        %v8743 = vadd.f32 %v8518, %v8687
        %v8744 = vadd.f32 %v8519, %v8690
        %v8745 = vadd.f32 %v8520, %v8695
        %v8746 = vadd.f32 %v8521, %v8698
        %v8747 = vadd.f32 %v8522, %v8703
        %v8748 = vadd.f32 %v8523, %v8706
        %v8749 = vadd.f32 %v8524, %v8711
        %v8750 = vadd.f32 %v8525, %v8714
        %v8751 = vadd.f32 %v8526, %v8719
        %v8752 = vadd.f32 %v8527, %v8722
        %v8753 = vadd.f32 %v8528, %v8727
        %v8754 = vadd.f32 %v8529, %v8730
        %v8755 = vadd.f32 %v8530, %v8735
        %v8756 = vadd.f32 %v8531, %v8738
        %v8757 = vld [vmem:[%s5634] sm:$0xf]
        %v8758 = vld [vmem:[%s5634 + $0x4] sm:$0xf]
        %v8759 = vld [vmem:[%s5634 + $0x8] sm:$0xf]
        %v8760 = vld [vmem:[%s5634 + $0xc] sm:$0xf]
        %v8761 = vld [vmem:[%s5634 + $0x10] sm:$0xf]
        %v8762 = vld [vmem:[%s5634 + $0x14] sm:$0xf]
        %v8763 = vld [vmem:[%s5634 + $0x18] sm:$0xf]
        %v8764 = vld [vmem:[%s5634 + $0x1c] sm:$0xf]
        %v8765 = vld [vmem:[%s5634 + $0x20] sm:$0xf]
        %v8766 = vld [vmem:[%s5634 + $0x24] sm:$0xf]
        %v8767 = vld [vmem:[%s5634 + $0x28] sm:$0xf]
        %v8768 = vld [vmem:[%s5634 + $0x2c] sm:$0xf]
        %v8769 = vld [vmem:[%s5634 + $0x30] sm:$0xf]
        %v8770 = vld [vmem:[%s5634 + $0x34] sm:$0xf]
        %v8771 = vld [vmem:[%s5634 + $0x38] sm:$0xf]
        %v8772 = vld [vmem:[%s5634 + $0x3c] sm:$0xf]
        %v8773 = vld [vmem:[%s6692] sm:$0xf]
        %v8774 = vld [vmem:[%s6692 + $0x4] sm:$0xf]
        %v8775 = vld [vmem:[%s6692 + $0x8] sm:$0xf]
        %v8776 = vld [vmem:[%s6692 + $0xc] sm:$0xf]
        %v8777 = vld [vmem:[%s6692 + $0x10] sm:$0xf]
        %v8778 = vld [vmem:[%s6692 + $0x14] sm:$0xf]
        %v8779 = vld [vmem:[%s6692 + $0x18] sm:$0xf]
        %v8780 = vld [vmem:[%s6692 + $0x1c] sm:$0xf]
        %v8797 = vunpack.c.l.b16 %v8757
        %v8798 = vunpack.c.l.b16 %v8758
        %v8799 = vunpack.c.l.b16 %v8759
        %v8800 = vunpack.c.l.b16 %v8760
        %v8801 = vunpack.c.l.b16 %v8761
        %v8802 = vunpack.c.l.b16 %v8762
        %v8803 = vunpack.c.l.b16 %v8763
        %v8804 = vunpack.c.l.b16 %v8764
        %v8805 = vunpack.c.l.b16 %v8765
        %v8806 = vunpack.c.l.b16 %v8766
        %v8807 = vunpack.c.l.b16 %v8767
        %v8808 = vunpack.c.l.b16 %v8768
        %v8809 = vunpack.c.l.b16 %v8769
        %v8810 = vunpack.c.l.b16 %v8770
        %v8811 = vunpack.c.l.b16 %v8771
        %v8812 = vunpack.c.l.b16 %v8772
        %v8813 = vpack.c.b16 %v8798, %v8797
        %v8814 = vpack.c.b16 %v8800, %v8799
        %v8815 = vpack.c.b16 %v8802, %v8801
        %v8816 = vpack.c.b16 %v8804, %v8803
        %v8817 = vpack.c.b16 %v8806, %v8805
        %v8818 = vpack.c.b16 %v8808, %v8807
        %v8819 = vpack.c.b16 %v8810, %v8809
        %v8820 = vpack.c.b16 %v8812, %v8811
        %v8829 = vunpack.c.l.b16 %v8773
        %v8830 = vunpack.c.l.b16 %v8774
        %v8831 = vunpack.c.l.b16 %v8775
        %v8832 = vunpack.c.l.b16 %v8776
        %v8833 = vunpack.c.l.b16 %v8777
        %v8834 = vunpack.c.l.b16 %v8778
        %v8835 = vunpack.c.l.b16 %v8779
        %v8836 = vunpack.c.l.b16 %v8780
        %v8837 = vpack.c.b16 %v8830, %v8829
        %v8838 = vpack.c.b16 %v8832, %v8831
        %v8839 = vpack.c.b16 %v8834, %v8833
        %v8840 = vpack.c.b16 %v8836, %v8835
        %v8846 = vsel %vm1147, %v8813, 0
        %v8849 = vsel %vm1147, %v8814, 0
        %v8852 = vsel %vm1147, %v8815, 0
        %v8855 = vsel %vm1147, %v8816, 0
        %v8858 = vsel %vm1147, %v8817, 0
        %v8861 = vsel %vm1147, %v8818, 0
        %v8864 = vsel %vm1147, %v8819, 0
        %v8867 = vsel %vm1147, %v8820, 0
        %8869 = vmatprep.subr.bf16.mxu0 0
        %8870 = vmatpush1.bf16.msra.mxu0 0
        %8871 = vmatprep.subr.bf16.mxu0 0
        %8872 = vmatpush1.bf16.msra.mxu0 0
        %8873 = vmatprep.subr.bf16.mxu0 0
        %8874 = vmatpush1.bf16.msra.mxu0 0
        %8875 = vmatprep.subr.bf16.mxu0 0
        %8876 = vmatpush1.bf16.msra.mxu0 0
        %8877 = vmatprep.subr.bf16.mxu0 0
        %8878 = vmatpush1.bf16.msra.mxu0 %v8840
        %8879 = vmatprep.subr.bf16.mxu0 0
        %8880 = vmatpush1.bf16.msra.mxu0 %v8839
        %8881 = vmatprep.subr.bf16.mxu0 0
        %8882 = vmatpush1.bf16.msra.mxu0 %v8838
        %8883 = vmatprep.subr.bf16.mxu0 0
        %8884 = vmatpush1.bf16.msra.mxu0 %v8837
        %8885 = vmatprep.subr.bf16.mxu0 0
        %8886 = vmatpush2.bf16.msra.mxu0 0
        %8887 = vmatprep.subr.bf16.mxu0 0
        %8888 = vmatpush2.bf16.msra.mxu0 0
        %8889 = vmatprep.subr.bf16.mxu0 0
        %8890 = vmatpush2.bf16.msra.mxu0 0
        %8891 = vmatprep.subr.bf16.mxu0 0
        %8892 = vmatpush2.bf16.msra.mxu0 0
        %8893 = vmatprep.subr.bf16.mxu0 0
        %8894 = vmatpush2.bf16.msra.mxu0 0
        %8895 = vmatprep.subr.bf16.mxu0 0
        %8896 = vmatpush2.bf16.msra.mxu0 0
        %8897 = vmatprep.subr.bf16.mxu0 0
        %8898 = vmatpush2.bf16.msra.mxu0 0
        %8899 = vmatprep.subr.bf16.mxu0 0
        %8900 = vmatpush2.bf16.msra.mxu0 0
        %8901 = vmatprep.mubr.bf16.mxu0 0
        %8902 = vmatmul.mubr.bf16.gmra.mxu0 %v8846
        %v8903 = vpop.f32.mrf.mxu0
        %v8904 = vadd.f32 0.0, %v8903
        %v8905 = vpop.f32.mrf.mxu0
        %v8906 = vpop.f32.mrf.mxu0
        %v8907 = vadd.f32 0.0, %v8906
        %v8908 = vpop.f32.mrf.mxu0
        %8909 = vmatprep.mubr.bf16.mxu0 0
        %8910 = vmatmul.mubr.bf16.gmra.mxu0 %v8849
        %v8911 = vpop.f32.mrf.mxu0
        %v8912 = vadd.f32 0.0, %v8911
        %v8913 = vpop.f32.mrf.mxu0
        %v8914 = vpop.f32.mrf.mxu0
        %v8915 = vadd.f32 0.0, %v8914
        %v8916 = vpop.f32.mrf.mxu0
        %8917 = vmatprep.mubr.bf16.mxu0 0
        %8918 = vmatmul.mubr.bf16.gmra.mxu0 %v8852
        %v8919 = vpop.f32.mrf.mxu0
        %v8920 = vadd.f32 0.0, %v8919
        %v8921 = vpop.f32.mrf.mxu0
        %v8922 = vpop.f32.mrf.mxu0
        %v8923 = vadd.f32 0.0, %v8922
        %v8924 = vpop.f32.mrf.mxu0
        %8925 = vmatprep.mubr.bf16.mxu0 0
        %8926 = vmatmul.mubr.bf16.gmra.mxu0 %v8855
        %v8927 = vpop.f32.mrf.mxu0
        %v8928 = vadd.f32 0.0, %v8927
        %v8929 = vpop.f32.mrf.mxu0
        %v8930 = vpop.f32.mrf.mxu0
        %v8931 = vadd.f32 0.0, %v8930
        %v8932 = vpop.f32.mrf.mxu0
        %8933 = vmatprep.mubr.bf16.mxu0 0
        %8934 = vmatmul.mubr.bf16.gmra.mxu0 %v8858
        %v8935 = vpop.f32.mrf.mxu0
        %v8936 = vadd.f32 0.0, %v8935
        %v8937 = vpop.f32.mrf.mxu0
        %v8938 = vpop.f32.mrf.mxu0
        %v8939 = vadd.f32 0.0, %v8938
        %v8940 = vpop.f32.mrf.mxu0
        %8941 = vmatprep.mubr.bf16.mxu0 0
        %8942 = vmatmul.mubr.bf16.gmra.mxu0 %v8861
        %v8943 = vpop.f32.mrf.mxu0
        %v8944 = vadd.f32 0.0, %v8943
        %v8945 = vpop.f32.mrf.mxu0
        %v8946 = vpop.f32.mrf.mxu0
        %v8947 = vadd.f32 0.0, %v8946
        %v8948 = vpop.f32.mrf.mxu0
        %8949 = vmatprep.mubr.bf16.mxu0 0
        %8950 = vmatmul.mubr.bf16.gmra.mxu0 %v8864
        %v8951 = vpop.f32.mrf.mxu0
        %v8952 = vadd.f32 0.0, %v8951
        %v8953 = vpop.f32.mrf.mxu0
        %v8954 = vpop.f32.mrf.mxu0
        %v8955 = vadd.f32 0.0, %v8954
        %v8956 = vpop.f32.mrf.mxu0
        %8957 = vmatprep.mubr.bf16.mxu0 0
        %8958 = vmatmul.mubr.bf16.gmra.mxu0 %v8867
        %v8959 = vpop.f32.mrf.mxu0
        %v8960 = vadd.f32 0.0, %v8959
        %v8961 = vpop.f32.mrf.mxu0
        %v8962 = vpop.f32.mrf.mxu0
        %v8963 = vadd.f32 0.0, %v8962
        %v8964 = vpop.f32.mrf.mxu0
        %8965 = vdwg.mxu0
        %v8966 = vadd.f32 %v8741, %v8904
        %v8967 = vadd.f32 %v8742, %v8907
        %v8968 = vadd.f32 %v8743, %v8912
        %v8969 = vadd.f32 %v8744, %v8915
        %v8970 = vadd.f32 %v8745, %v8920
        %v8971 = vadd.f32 %v8746, %v8923
        %v8972 = vadd.f32 %v8747, %v8928
        %v8973 = vadd.f32 %v8748, %v8931
        %v8974 = vadd.f32 %v8749, %v8936
        %v8975 = vadd.f32 %v8750, %v8939
        %v8976 = vadd.f32 %v8751, %v8944
        %v8977 = vadd.f32 %v8752, %v8947
        %v8978 = vadd.f32 %v8753, %v8952
        %v8979 = vadd.f32 %v8754, %v8955
        %v8980 = vadd.f32 %v8755, %v8960
        %v8981 = vadd.f32 %v8756, %v8963
        %v8982 = vld [vmem:[%s5782] sm:$0xf]
        %v8983 = vld [vmem:[%s5782 + $0x4] sm:$0xf]
        %v8984 = vld [vmem:[%s5782 + $0x8] sm:$0xf]
        %v8985 = vld [vmem:[%s5782 + $0xc] sm:$0xf]
        %v8986 = vld [vmem:[%s5782 + $0x10] sm:$0xf]
        %v8987 = vld [vmem:[%s5782 + $0x14] sm:$0xf]
        %v8988 = vld [vmem:[%s5782 + $0x18] sm:$0xf]
        %v8989 = vld [vmem:[%s5782 + $0x1c] sm:$0xf]
        %v8990 = vld [vmem:[%s5782 + $0x20] sm:$0xf]
        %v8991 = vld [vmem:[%s5782 + $0x24] sm:$0xf]
        %v8992 = vld [vmem:[%s5782 + $0x28] sm:$0xf]
        %v8993 = vld [vmem:[%s5782 + $0x2c] sm:$0xf]
        %v8994 = vld [vmem:[%s5782 + $0x30] sm:$0xf]
        %v8995 = vld [vmem:[%s5782 + $0x34] sm:$0xf]
        %v8996 = vld [vmem:[%s5782 + $0x38] sm:$0xf]
        %v8997 = vld [vmem:[%s5782 + $0x3c] sm:$0xf]
        %v8998 = vld [vmem:[%s6918] sm:$0xf]
        %v8999 = vld [vmem:[%s6918 + $0x4] sm:$0xf]
        %v9000 = vld [vmem:[%s6918 + $0x8] sm:$0xf]
        %v9001 = vld [vmem:[%s6918 + $0xc] sm:$0xf]
        %v9002 = vld [vmem:[%s6918 + $0x10] sm:$0xf]
        %v9003 = vld [vmem:[%s6918 + $0x14] sm:$0xf]
        %v9004 = vld [vmem:[%s6918 + $0x18] sm:$0xf]
        %v9005 = vld [vmem:[%s6918 + $0x1c] sm:$0xf]
        %v9022 = vunpack.c.l.b16 %v8982
        %v9023 = vunpack.c.l.b16 %v8983
        %v9024 = vunpack.c.l.b16 %v8984
        %v9025 = vunpack.c.l.b16 %v8985
        %v9026 = vunpack.c.l.b16 %v8986
        %v9027 = vunpack.c.l.b16 %v8987
        %v9028 = vunpack.c.l.b16 %v8988
        %v9029 = vunpack.c.l.b16 %v8989
        %v9030 = vunpack.c.l.b16 %v8990
        %v9031 = vunpack.c.l.b16 %v8991
        %v9032 = vunpack.c.l.b16 %v8992
        %v9033 = vunpack.c.l.b16 %v8993
        %v9034 = vunpack.c.l.b16 %v8994
        %v9035 = vunpack.c.l.b16 %v8995
        %v9036 = vunpack.c.l.b16 %v8996
        %v9037 = vunpack.c.l.b16 %v8997
        %v9038 = vpack.c.b16 %v9023, %v9022
        %v9039 = vpack.c.b16 %v9025, %v9024
        %v9040 = vpack.c.b16 %v9027, %v9026
        %v9041 = vpack.c.b16 %v9029, %v9028
        %v9042 = vpack.c.b16 %v9031, %v9030
        %v9043 = vpack.c.b16 %v9033, %v9032
        %v9044 = vpack.c.b16 %v9035, %v9034
        %v9045 = vpack.c.b16 %v9037, %v9036
        %v9054 = vunpack.c.l.b16 %v8998
        %v9055 = vunpack.c.l.b16 %v8999
        %v9056 = vunpack.c.l.b16 %v9000
        %v9057 = vunpack.c.l.b16 %v9001
        %v9058 = vunpack.c.l.b16 %v9002
        %v9059 = vunpack.c.l.b16 %v9003
        %v9060 = vunpack.c.l.b16 %v9004
        %v9061 = vunpack.c.l.b16 %v9005
        %v9062 = vpack.c.b16 %v9055, %v9054
        %v9063 = vpack.c.b16 %v9057, %v9056
        %v9064 = vpack.c.b16 %v9059, %v9058
        %v9065 = vpack.c.b16 %v9061, %v9060
        %v9071 = vsel %vm1147, %v9038, 0
        %v9074 = vsel %vm1147, %v9039, 0
        %v9077 = vsel %vm1147, %v9040, 0
        %v9080 = vsel %vm1147, %v9041, 0
        %v9083 = vsel %vm1147, %v9042, 0
        %v9086 = vsel %vm1147, %v9043, 0
        %v9089 = vsel %vm1147, %v9044, 0
        %v9092 = vsel %vm1147, %v9045, 0
        %9094 = vmatprep.subr.bf16.mxu0 0
        %9095 = vmatpush1.bf16.msra.mxu0 0
        %9096 = vmatprep.subr.bf16.mxu0 0
        %9097 = vmatpush1.bf16.msra.mxu0 0
        %9098 = vmatprep.subr.bf16.mxu0 0
        %9099 = vmatpush1.bf16.msra.mxu0 0
        %9100 = vmatprep.subr.bf16.mxu0 0
        %9101 = vmatpush1.bf16.msra.mxu0 0
        %9102 = vmatprep.subr.bf16.mxu0 0
        %9103 = vmatpush1.bf16.msra.mxu0 %v9065
        %9104 = vmatprep.subr.bf16.mxu0 0
        %9105 = vmatpush1.bf16.msra.mxu0 %v9064
        %9106 = vmatprep.subr.bf16.mxu0 0
        %9107 = vmatpush1.bf16.msra.mxu0 %v9063
        %9108 = vmatprep.subr.bf16.mxu0 0
        %9109 = vmatpush1.bf16.msra.mxu0 %v9062
        %9110 = vmatprep.subr.bf16.mxu0 0
        %9111 = vmatpush2.bf16.msra.mxu0 0
        %9112 = vmatprep.subr.bf16.mxu0 0
        %9113 = vmatpush2.bf16.msra.mxu0 0
        %9114 = vmatprep.subr.bf16.mxu0 0
        %9115 = vmatpush2.bf16.msra.mxu0 0
        %9116 = vmatprep.subr.bf16.mxu0 0
        %9117 = vmatpush2.bf16.msra.mxu0 0
        %9118 = vmatprep.subr.bf16.mxu0 0
        %9119 = vmatpush2.bf16.msra.mxu0 0
        %9120 = vmatprep.subr.bf16.mxu0 0
        %9121 = vmatpush2.bf16.msra.mxu0 0
        %9122 = vmatprep.subr.bf16.mxu0 0
        %9123 = vmatpush2.bf16.msra.mxu0 0
        %9124 = vmatprep.subr.bf16.mxu0 0
        %9125 = vmatpush2.bf16.msra.mxu0 0
        %9126 = vmatprep.mubr.bf16.mxu0 0
        %9127 = vmatmul.mubr.bf16.gmra.mxu0 %v9071
        %v9128 = vpop.f32.mrf.mxu0
        %v9129 = vadd.f32 0.0, %v9128
        %v9130 = vpop.f32.mrf.mxu0
        %v9131 = vpop.f32.mrf.mxu0
        %v9132 = vadd.f32 0.0, %v9131
        %v9133 = vpop.f32.mrf.mxu0
        %9134 = vmatprep.mubr.bf16.mxu0 0
        %9135 = vmatmul.mubr.bf16.gmra.mxu0 %v9074
        %v9136 = vpop.f32.mrf.mxu0
        %v9137 = vadd.f32 0.0, %v9136
        %v9138 = vpop.f32.mrf.mxu0
        %v9139 = vpop.f32.mrf.mxu0
        %v9140 = vadd.f32 0.0, %v9139
        %v9141 = vpop.f32.mrf.mxu0
        %9142 = vmatprep.mubr.bf16.mxu0 0
        %9143 = vmatmul.mubr.bf16.gmra.mxu0 %v9077
        %v9144 = vpop.f32.mrf.mxu0
        %v9145 = vadd.f32 0.0, %v9144
        %v9146 = vpop.f32.mrf.mxu0
        %v9147 = vpop.f32.mrf.mxu0
        %v9148 = vadd.f32 0.0, %v9147
        %v9149 = vpop.f32.mrf.mxu0
        %9150 = vmatprep.mubr.bf16.mxu0 0
        %9151 = vmatmul.mubr.bf16.gmra.mxu0 %v9080
        %v9152 = vpop.f32.mrf.mxu0
        %v9153 = vadd.f32 0.0, %v9152
        %v9154 = vpop.f32.mrf.mxu0
        %v9155 = vpop.f32.mrf.mxu0
        %v9156 = vadd.f32 0.0, %v9155
        %v9157 = vpop.f32.mrf.mxu0
        %9158 = vmatprep.mubr.bf16.mxu0 0
        %9159 = vmatmul.mubr.bf16.gmra.mxu0 %v9083
        %v9160 = vpop.f32.mrf.mxu0
        %v9161 = vadd.f32 0.0, %v9160
        %v9162 = vpop.f32.mrf.mxu0
        %v9163 = vpop.f32.mrf.mxu0
        %v9164 = vadd.f32 0.0, %v9163
        %v9165 = vpop.f32.mrf.mxu0
        %9166 = vmatprep.mubr.bf16.mxu0 0
        %9167 = vmatmul.mubr.bf16.gmra.mxu0 %v9086
        %v9168 = vpop.f32.mrf.mxu0
        %v9169 = vadd.f32 0.0, %v9168
        %v9170 = vpop.f32.mrf.mxu0
        %v9171 = vpop.f32.mrf.mxu0
        %v9172 = vadd.f32 0.0, %v9171
        %v9173 = vpop.f32.mrf.mxu0
        %9174 = vmatprep.mubr.bf16.mxu0 0
        %9175 = vmatmul.mubr.bf16.gmra.mxu0 %v9089
        %v9176 = vpop.f32.mrf.mxu0
        %v9177 = vadd.f32 0.0, %v9176
        %v9178 = vpop.f32.mrf.mxu0
        %v9179 = vpop.f32.mrf.mxu0
        %v9180 = vadd.f32 0.0, %v9179
        %v9181 = vpop.f32.mrf.mxu0
        %9182 = vmatprep.mubr.bf16.mxu0 0
        %9183 = vmatmul.mubr.bf16.gmra.mxu0 %v9092
        %v9184 = vpop.f32.mrf.mxu0
        %v9185 = vadd.f32 0.0, %v9184
        %v9186 = vpop.f32.mrf.mxu0
        %v9187 = vpop.f32.mrf.mxu0
        %v9188 = vadd.f32 0.0, %v9187
        %v9189 = vpop.f32.mrf.mxu0
        %9190 = vdwg.mxu0
        %v9191 = vadd.f32 %v8966, %v9129
        %v9192 = vadd.f32 %v8967, %v9132
        %v9193 = vadd.f32 %v8968, %v9137
        %v9194 = vadd.f32 %v8969, %v9140
        %v9195 = vadd.f32 %v8970, %v9145
        %v9196 = vadd.f32 %v8971, %v9148
        %v9197 = vadd.f32 %v8972, %v9153
        %v9198 = vadd.f32 %v8973, %v9156
        %v9199 = vadd.f32 %v8974, %v9161
        %v9200 = vadd.f32 %v8975, %v9164
        %v9201 = vadd.f32 %v8976, %v9169
        %v9202 = vadd.f32 %v8977, %v9172
        %v9203 = vadd.f32 %v8978, %v9177
        %v9204 = vadd.f32 %v8979, %v9180
        %v9205 = vadd.f32 %v8980, %v9185
        %v9206 = vadd.f32 %v8981, %v9188
        %s9207 = smul.addr %s4749, 4
        %s9208 = scalar_lea.vmem [#allocation3], %s9207
        %v9209 = vld [vmem:[%s9208] sm:$0xf]
        %v9210 = vld [vmem:[%s9208 + $0x4] sm:$0xf]
        %v9211 = vld [vmem:[%s9208 + $0x8] sm:$0xf]
        %v9212 = vld [vmem:[%s9208 + $0xc] sm:$0xf]
        %v9213 = vld [vmem:[%s9208 + $0x10] sm:$0xf]
        %v9214 = vld [vmem:[%s9208 + $0x14] sm:$0xf]
        %v9215 = vld [vmem:[%s9208 + $0x18] sm:$0xf]
        %v9216 = vld [vmem:[%s9208 + $0x1c] sm:$0xf]
        %v9217 = vld [vmem:[%s9208 + $0x20] sm:$0xf]
        %v9218 = vld [vmem:[%s9208 + $0x24] sm:$0xf]
        %v9219 = vld [vmem:[%s9208 + $0x28] sm:$0xf]
        %v9220 = vld [vmem:[%s9208 + $0x2c] sm:$0xf]
        %v9221 = vld [vmem:[%s9208 + $0x30] sm:$0xf]
        %v9222 = vld [vmem:[%s9208 + $0x34] sm:$0xf]
        %v9223 = vld [vmem:[%s9208 + $0x38] sm:$0xf]
        %v9224 = vld [vmem:[%s9208 + $0x3c] sm:$0xf]
        %v9225 = vld [vmem:[%s7146] sm:$0xf]
        %v9226 = vld [vmem:[%s7146 + $0x4] sm:$0xf]
        %v9227 = vld [vmem:[%s7146 + $0x8] sm:$0xf]
        %v9228 = vld [vmem:[%s7146 + $0xc] sm:$0xf]
        %v9229 = vld [vmem:[%s7146 + $0x10] sm:$0xf]
        %v9230 = vld [vmem:[%s7146 + $0x14] sm:$0xf]
        %v9231 = vld [vmem:[%s7146 + $0x18] sm:$0xf]
        %v9232 = vld [vmem:[%s7146 + $0x1c] sm:$0xf]
        %v9249 = vunpack.c.l.b16 %v9209
        %v9250 = vunpack.c.l.b16 %v9210
        %v9251 = vunpack.c.l.b16 %v9211
        %v9252 = vunpack.c.l.b16 %v9212
        %v9253 = vunpack.c.l.b16 %v9213
        %v9254 = vunpack.c.l.b16 %v9214
        %v9255 = vunpack.c.l.b16 %v9215
        %v9256 = vunpack.c.l.b16 %v9216
        %v9257 = vunpack.c.l.b16 %v9217
        %v9258 = vunpack.c.l.b16 %v9218
        %v9259 = vunpack.c.l.b16 %v9219
        %v9260 = vunpack.c.l.b16 %v9220
        %v9261 = vunpack.c.l.b16 %v9221
        %v9262 = vunpack.c.l.b16 %v9222
        %v9263 = vunpack.c.l.b16 %v9223
        %v9264 = vunpack.c.l.b16 %v9224
        %v9265 = vpack.c.b16 %v9250, %v9249
        %v9266 = vpack.c.b16 %v9252, %v9251
        %v9267 = vpack.c.b16 %v9254, %v9253
        %v9268 = vpack.c.b16 %v9256, %v9255
        %v9269 = vpack.c.b16 %v9258, %v9257
        %v9270 = vpack.c.b16 %v9260, %v9259
        %v9271 = vpack.c.b16 %v9262, %v9261
        %v9272 = vpack.c.b16 %v9264, %v9263
        %v9281 = vunpack.c.l.b16 %v9225
        %v9282 = vunpack.c.l.b16 %v9226
        %v9283 = vunpack.c.l.b16 %v9227
        %v9284 = vunpack.c.l.b16 %v9228
        %v9285 = vunpack.c.l.b16 %v9229
        %v9286 = vunpack.c.l.b16 %v9230
        %v9287 = vunpack.c.l.b16 %v9231
        %v9288 = vunpack.c.l.b16 %v9232
        %v9289 = vpack.c.b16 %v9282, %v9281
        %v9290 = vpack.c.b16 %v9284, %v9283
        %v9291 = vpack.c.b16 %v9286, %v9285
        %v9292 = vpack.c.b16 %v9288, %v9287
        %v9298 = vsel %vm1147, %v9265, 0
        %v9301 = vsel %vm1147, %v9266, 0
        %v9304 = vsel %vm1147, %v9267, 0
        %v9307 = vsel %vm1147, %v9268, 0
        %v9310 = vsel %vm1147, %v9269, 0
        %v9313 = vsel %vm1147, %v9270, 0
        %v9316 = vsel %vm1147, %v9271, 0
        %v9319 = vsel %vm1147, %v9272, 0
        %9321 = vmatprep.subr.bf16.mxu0 0
        %9322 = vmatpush1.bf16.msra.mxu0 0
        %9323 = vmatprep.subr.bf16.mxu0 0
        %9324 = vmatpush1.bf16.msra.mxu0 0
        %9325 = vmatprep.subr.bf16.mxu0 0
        %9326 = vmatpush1.bf16.msra.mxu0 0
        %9327 = vmatprep.subr.bf16.mxu0 0
        %9328 = vmatpush1.bf16.msra.mxu0 0
        %9329 = vmatprep.subr.bf16.mxu0 0
        %9330 = vmatpush1.bf16.msra.mxu0 %v9292
        %9331 = vmatprep.subr.bf16.mxu0 0
        %9332 = vmatpush1.bf16.msra.mxu0 %v9291
        %9333 = vmatprep.subr.bf16.mxu0 0
        %9334 = vmatpush1.bf16.msra.mxu0 %v9290
        %9335 = vmatprep.subr.bf16.mxu0 0
        %9336 = vmatpush1.bf16.msra.mxu0 %v9289
        %9337 = vmatprep.subr.bf16.mxu0 0
        %9338 = vmatpush2.bf16.msra.mxu0 0
        %9339 = vmatprep.subr.bf16.mxu0 0
        %9340 = vmatpush2.bf16.msra.mxu0 0
        %9341 = vmatprep.subr.bf16.mxu0 0
        %9342 = vmatpush2.bf16.msra.mxu0 0
        %9343 = vmatprep.subr.bf16.mxu0 0
        %9344 = vmatpush2.bf16.msra.mxu0 0
        %9345 = vmatprep.subr.bf16.mxu0 0
        %9346 = vmatpush2.bf16.msra.mxu0 0
        %9347 = vmatprep.subr.bf16.mxu0 0
        %9348 = vmatpush2.bf16.msra.mxu0 0
        %9349 = vmatprep.subr.bf16.mxu0 0
        %9350 = vmatpush2.bf16.msra.mxu0 0
        %9351 = vmatprep.subr.bf16.mxu0 0
        %9352 = vmatpush2.bf16.msra.mxu0 0
        %9353 = vmatprep.mubr.bf16.mxu0 0
        %9354 = vmatmul.mubr.bf16.gmra.mxu0 %v9298
        %v9355 = vpop.f32.mrf.mxu0
        %v9356 = vadd.f32 0.0, %v9355
        %v9357 = vpop.f32.mrf.mxu0
        %v9358 = vpop.f32.mrf.mxu0
        %v9359 = vadd.f32 0.0, %v9358
        %v9360 = vpop.f32.mrf.mxu0
        %9361 = vmatprep.mubr.bf16.mxu0 0
        %9362 = vmatmul.mubr.bf16.gmra.mxu0 %v9301
        %v9363 = vpop.f32.mrf.mxu0
        %v9364 = vadd.f32 0.0, %v9363
        %v9365 = vpop.f32.mrf.mxu0
        %v9366 = vpop.f32.mrf.mxu0
        %v9367 = vadd.f32 0.0, %v9366
        %v9368 = vpop.f32.mrf.mxu0
        %9369 = vmatprep.mubr.bf16.mxu0 0
        %9370 = vmatmul.mubr.bf16.gmra.mxu0 %v9304
        %v9371 = vpop.f32.mrf.mxu0
        %v9372 = vadd.f32 0.0, %v9371
        %v9373 = vpop.f32.mrf.mxu0
        %v9374 = vpop.f32.mrf.mxu0
        %v9375 = vadd.f32 0.0, %v9374
        %v9376 = vpop.f32.mrf.mxu0
        %9377 = vmatprep.mubr.bf16.mxu0 0
        %9378 = vmatmul.mubr.bf16.gmra.mxu0 %v9307
        %v9379 = vpop.f32.mrf.mxu0
        %v9380 = vadd.f32 0.0, %v9379
        %v9381 = vpop.f32.mrf.mxu0
        %v9382 = vpop.f32.mrf.mxu0
        %v9383 = vadd.f32 0.0, %v9382
        %v9384 = vpop.f32.mrf.mxu0
        %9385 = vmatprep.mubr.bf16.mxu0 0
        %9386 = vmatmul.mubr.bf16.gmra.mxu0 %v9310
        %v9387 = vpop.f32.mrf.mxu0
        %v9388 = vadd.f32 0.0, %v9387
        %v9389 = vpop.f32.mrf.mxu0
        %v9390 = vpop.f32.mrf.mxu0
        %v9391 = vadd.f32 0.0, %v9390
        %v9392 = vpop.f32.mrf.mxu0
        %9393 = vmatprep.mubr.bf16.mxu0 0
        %9394 = vmatmul.mubr.bf16.gmra.mxu0 %v9313
        %v9395 = vpop.f32.mrf.mxu0
        %v9396 = vadd.f32 0.0, %v9395
        %v9397 = vpop.f32.mrf.mxu0
        %v9398 = vpop.f32.mrf.mxu0
        %v9399 = vadd.f32 0.0, %v9398
        %v9400 = vpop.f32.mrf.mxu0
        %9401 = vmatprep.mubr.bf16.mxu0 0
        %9402 = vmatmul.mubr.bf16.gmra.mxu0 %v9316
        %v9403 = vpop.f32.mrf.mxu0
        %v9404 = vadd.f32 0.0, %v9403
        %v9405 = vpop.f32.mrf.mxu0
        %v9406 = vpop.f32.mrf.mxu0
        %v9407 = vadd.f32 0.0, %v9406
        %v9408 = vpop.f32.mrf.mxu0
        %9409 = vmatprep.mubr.bf16.mxu0 0
        %9410 = vmatmul.mubr.bf16.gmra.mxu0 %v9319
        %v9411 = vpop.f32.mrf.mxu0
        %v9412 = vadd.f32 0.0, %v9411
        %v9413 = vpop.f32.mrf.mxu0
        %v9414 = vpop.f32.mrf.mxu0
        %v9415 = vadd.f32 0.0, %v9414
        %v9416 = vpop.f32.mrf.mxu0
        %9417 = vdwg.mxu0
        %v9418 = vadd.f32 %v9191, %v9356
        %v9419 = vadd.f32 %v9192, %v9359
        %v9420 = vadd.f32 %v9193, %v9364
        %v9421 = vadd.f32 %v9194, %v9367
        %v9422 = vadd.f32 %v9195, %v9372
        %v9423 = vadd.f32 %v9196, %v9375
        %v9424 = vadd.f32 %v9197, %v9380
        %v9425 = vadd.f32 %v9198, %v9383
        %v9426 = vadd.f32 %v9199, %v9388
        %v9427 = vadd.f32 %v9200, %v9391
        %v9428 = vadd.f32 %v9201, %v9396
        %v9429 = vadd.f32 %v9202, %v9399
        %v9430 = vadd.f32 %v9203, %v9404
        %v9431 = vadd.f32 %v9204, %v9407
        %v9432 = vadd.f32 %v9205, %v9412
        %v9433 = vadd.f32 %v9206, %v9415
        %s9434 = smul.addr %s4977, 4
        %s9435 = scalar_lea.vmem [#allocation3], %s9434
        %v9436 = vld [vmem:[%s9435] sm:$0xf]
        %v9437 = vld [vmem:[%s9435 + $0x4] sm:$0xf]
        %v9438 = vld [vmem:[%s9435 + $0x8] sm:$0xf]
        %v9439 = vld [vmem:[%s9435 + $0xc] sm:$0xf]
        %v9440 = vld [vmem:[%s9435 + $0x10] sm:$0xf]
        %v9441 = vld [vmem:[%s9435 + $0x14] sm:$0xf]
        %v9442 = vld [vmem:[%s9435 + $0x18] sm:$0xf]
        %v9443 = vld [vmem:[%s9435 + $0x1c] sm:$0xf]
        %v9444 = vld [vmem:[%s9435 + $0x20] sm:$0xf]
        %v9445 = vld [vmem:[%s9435 + $0x24] sm:$0xf]
        %v9446 = vld [vmem:[%s9435 + $0x28] sm:$0xf]
        %v9447 = vld [vmem:[%s9435 + $0x2c] sm:$0xf]
        %v9448 = vld [vmem:[%s9435 + $0x30] sm:$0xf]
        %v9449 = vld [vmem:[%s9435 + $0x34] sm:$0xf]
        %v9450 = vld [vmem:[%s9435 + $0x38] sm:$0xf]
        %v9451 = vld [vmem:[%s9435 + $0x3c] sm:$0xf]
        %v9452 = vld [vmem:[%s7374] sm:$0xf]
        %v9453 = vld [vmem:[%s7374 + $0x4] sm:$0xf]
        %v9454 = vld [vmem:[%s7374 + $0x8] sm:$0xf]
        %v9455 = vld [vmem:[%s7374 + $0xc] sm:$0xf]
        %v9456 = vld [vmem:[%s7374 + $0x10] sm:$0xf]
        %v9457 = vld [vmem:[%s7374 + $0x14] sm:$0xf]
        %v9458 = vld [vmem:[%s7374 + $0x18] sm:$0xf]
        %v9459 = vld [vmem:[%s7374 + $0x1c] sm:$0xf]
        %v9476 = vunpack.c.l.b16 %v9436
        %v9477 = vunpack.c.l.b16 %v9437
        %v9478 = vunpack.c.l.b16 %v9438
        %v9479 = vunpack.c.l.b16 %v9439
        %v9480 = vunpack.c.l.b16 %v9440
        %v9481 = vunpack.c.l.b16 %v9441
        %v9482 = vunpack.c.l.b16 %v9442
        %v9483 = vunpack.c.l.b16 %v9443
        %v9484 = vunpack.c.l.b16 %v9444
        %v9485 = vunpack.c.l.b16 %v9445
        %v9486 = vunpack.c.l.b16 %v9446
        %v9487 = vunpack.c.l.b16 %v9447
        %v9488 = vunpack.c.l.b16 %v9448
        %v9489 = vunpack.c.l.b16 %v9449
        %v9490 = vunpack.c.l.b16 %v9450
        %v9491 = vunpack.c.l.b16 %v9451
        %v9492 = vpack.c.b16 %v9477, %v9476
        %v9493 = vpack.c.b16 %v9479, %v9478
        %v9494 = vpack.c.b16 %v9481, %v9480
        %v9495 = vpack.c.b16 %v9483, %v9482
        %v9496 = vpack.c.b16 %v9485, %v9484
        %v9497 = vpack.c.b16 %v9487, %v9486
        %v9498 = vpack.c.b16 %v9489, %v9488
        %v9499 = vpack.c.b16 %v9491, %v9490
        %v9508 = vunpack.c.l.b16 %v9452
        %v9509 = vunpack.c.l.b16 %v9453
        %v9510 = vunpack.c.l.b16 %v9454
        %v9511 = vunpack.c.l.b16 %v9455
        %v9512 = vunpack.c.l.b16 %v9456
        %v9513 = vunpack.c.l.b16 %v9457
        %v9514 = vunpack.c.l.b16 %v9458
        %v9515 = vunpack.c.l.b16 %v9459
        %v9516 = vpack.c.b16 %v9509, %v9508
        %v9517 = vpack.c.b16 %v9511, %v9510
        %v9518 = vpack.c.b16 %v9513, %v9512
        %v9519 = vpack.c.b16 %v9515, %v9514
        %v9525 = vsel %vm1147, %v9492, 0
        %v9528 = vsel %vm1147, %v9493, 0
        %v9531 = vsel %vm1147, %v9494, 0
        %v9534 = vsel %vm1147, %v9495, 0
        %v9537 = vsel %vm1147, %v9496, 0
        %v9540 = vsel %vm1147, %v9497, 0
        %v9543 = vsel %vm1147, %v9498, 0
        %v9546 = vsel %vm1147, %v9499, 0
        %9548 = vmatprep.subr.bf16.mxu0 0
        %9549 = vmatpush1.bf16.msra.mxu0 0
        %9550 = vmatprep.subr.bf16.mxu0 0
        %9551 = vmatpush1.bf16.msra.mxu0 0
        %9552 = vmatprep.subr.bf16.mxu0 0
        %9553 = vmatpush1.bf16.msra.mxu0 0
        %9554 = vmatprep.subr.bf16.mxu0 0
        %9555 = vmatpush1.bf16.msra.mxu0 0
        %9556 = vmatprep.subr.bf16.mxu0 0
        %9557 = vmatpush1.bf16.msra.mxu0 %v9519
        %9558 = vmatprep.subr.bf16.mxu0 0
        %9559 = vmatpush1.bf16.msra.mxu0 %v9518
        %9560 = vmatprep.subr.bf16.mxu0 0
        %9561 = vmatpush1.bf16.msra.mxu0 %v9517
        %9562 = vmatprep.subr.bf16.mxu0 0
        %9563 = vmatpush1.bf16.msra.mxu0 %v9516
        %9564 = vmatprep.subr.bf16.mxu0 0
        %9565 = vmatpush2.bf16.msra.mxu0 0
        %9566 = vmatprep.subr.bf16.mxu0 0
        %9567 = vmatpush2.bf16.msra.mxu0 0
        %9568 = vmatprep.subr.bf16.mxu0 0
        %9569 = vmatpush2.bf16.msra.mxu0 0
        %9570 = vmatprep.subr.bf16.mxu0 0
        %9571 = vmatpush2.bf16.msra.mxu0 0
        %9572 = vmatprep.subr.bf16.mxu0 0
        %9573 = vmatpush2.bf16.msra.mxu0 0
        %9574 = vmatprep.subr.bf16.mxu0 0
        %9575 = vmatpush2.bf16.msra.mxu0 0
        %9576 = vmatprep.subr.bf16.mxu0 0
        %9577 = vmatpush2.bf16.msra.mxu0 0
        %9578 = vmatprep.subr.bf16.mxu0 0
        %9579 = vmatpush2.bf16.msra.mxu0 0
        %9580 = vmatprep.mubr.bf16.mxu0 0
        %9581 = vmatmul.mubr.bf16.gmra.mxu0 %v9525
        %v9582 = vpop.f32.mrf.mxu0
        %v9583 = vadd.f32 0.0, %v9582
        %v9584 = vpop.f32.mrf.mxu0
        %v9585 = vpop.f32.mrf.mxu0
        %v9586 = vadd.f32 0.0, %v9585
        %v9587 = vpop.f32.mrf.mxu0
        %9588 = vmatprep.mubr.bf16.mxu0 0
        %9589 = vmatmul.mubr.bf16.gmra.mxu0 %v9528
        %v9590 = vpop.f32.mrf.mxu0
        %v9591 = vadd.f32 0.0, %v9590
        %v9592 = vpop.f32.mrf.mxu0
        %v9593 = vpop.f32.mrf.mxu0
        %v9594 = vadd.f32 0.0, %v9593
        %v9595 = vpop.f32.mrf.mxu0
        %9596 = vmatprep.mubr.bf16.mxu0 0
        %9597 = vmatmul.mubr.bf16.gmra.mxu0 %v9531
        %v9598 = vpop.f32.mrf.mxu0
        %v9599 = vadd.f32 0.0, %v9598
        %v9600 = vpop.f32.mrf.mxu0
        %v9601 = vpop.f32.mrf.mxu0
        %v9602 = vadd.f32 0.0, %v9601
        %v9603 = vpop.f32.mrf.mxu0
        %9604 = vmatprep.mubr.bf16.mxu0 0
        %9605 = vmatmul.mubr.bf16.gmra.mxu0 %v9534
        %v9606 = vpop.f32.mrf.mxu0
        %v9607 = vadd.f32 0.0, %v9606
        %v9608 = vpop.f32.mrf.mxu0
        %v9609 = vpop.f32.mrf.mxu0
        %v9610 = vadd.f32 0.0, %v9609
        %v9611 = vpop.f32.mrf.mxu0
        %9612 = vmatprep.mubr.bf16.mxu0 0
        %9613 = vmatmul.mubr.bf16.gmra.mxu0 %v9537
        %v9614 = vpop.f32.mrf.mxu0
        %v9615 = vadd.f32 0.0, %v9614
        %v9616 = vpop.f32.mrf.mxu0
        %v9617 = vpop.f32.mrf.mxu0
        %v9618 = vadd.f32 0.0, %v9617
        %v9619 = vpop.f32.mrf.mxu0
        %9620 = vmatprep.mubr.bf16.mxu0 0
        %9621 = vmatmul.mubr.bf16.gmra.mxu0 %v9540
        %v9622 = vpop.f32.mrf.mxu0
        %v9623 = vadd.f32 0.0, %v9622
        %v9624 = vpop.f32.mrf.mxu0
        %v9625 = vpop.f32.mrf.mxu0
        %v9626 = vadd.f32 0.0, %v9625
        %v9627 = vpop.f32.mrf.mxu0
        %9628 = vmatprep.mubr.bf16.mxu0 0
        %9629 = vmatmul.mubr.bf16.gmra.mxu0 %v9543
        %v9630 = vpop.f32.mrf.mxu0
        %v9631 = vadd.f32 0.0, %v9630
        %v9632 = vpop.f32.mrf.mxu0
        %v9633 = vpop.f32.mrf.mxu0
        %v9634 = vadd.f32 0.0, %v9633
        %v9635 = vpop.f32.mrf.mxu0
        %9636 = vmatprep.mubr.bf16.mxu0 0
        %9637 = vmatmul.mubr.bf16.gmra.mxu0 %v9546
        %v9638 = vpop.f32.mrf.mxu0
        %v9639 = vadd.f32 0.0, %v9638
        %v9640 = vpop.f32.mrf.mxu0
        %v9641 = vpop.f32.mrf.mxu0
        %v9642 = vadd.f32 0.0, %v9641
        %v9643 = vpop.f32.mrf.mxu0
        %9644 = vdwg.mxu0
        %v9645 = vadd.f32 %v9418, %v9583
        %v9646 = vadd.f32 %v9419, %v9586
        %v9647 = vadd.f32 %v9420, %v9591
        %v9648 = vadd.f32 %v9421, %v9594
        %v9649 = vadd.f32 %v9422, %v9599
        %v9650 = vadd.f32 %v9423, %v9602
        %v9651 = vadd.f32 %v9424, %v9607
        %v9652 = vadd.f32 %v9425, %v9610
        %v9653 = vadd.f32 %v9426, %v9615
        %v9654 = vadd.f32 %v9427, %v9618
        %v9655 = vadd.f32 %v9428, %v9623
        %v9656 = vadd.f32 %v9429, %v9626
        %v9657 = vadd.f32 %v9430, %v9631
        %v9658 = vadd.f32 %v9431, %v9634
        %v9659 = vadd.f32 %v9432, %v9639
        %v9660 = vadd.f32 %v9433, %v9642
        %s9661 = smul.addr %s5205, 4
        %s9662 = scalar_lea.vmem [#allocation3], %s9661
        %v9663 = vld [vmem:[%s9662] sm:$0xf]
        %v9664 = vld [vmem:[%s9662 + $0x4] sm:$0xf]
        %v9665 = vld [vmem:[%s9662 + $0x8] sm:$0xf]
        %v9666 = vld [vmem:[%s9662 + $0xc] sm:$0xf]
        %v9667 = vld [vmem:[%s9662 + $0x10] sm:$0xf]
        %v9668 = vld [vmem:[%s9662 + $0x14] sm:$0xf]
        %v9669 = vld [vmem:[%s9662 + $0x18] sm:$0xf]
        %v9670 = vld [vmem:[%s9662 + $0x1c] sm:$0xf]
        %v9671 = vld [vmem:[%s9662 + $0x20] sm:$0xf]
        %v9672 = vld [vmem:[%s9662 + $0x24] sm:$0xf]
        %v9673 = vld [vmem:[%s9662 + $0x28] sm:$0xf]
        %v9674 = vld [vmem:[%s9662 + $0x2c] sm:$0xf]
        %v9675 = vld [vmem:[%s9662 + $0x30] sm:$0xf]
        %v9676 = vld [vmem:[%s9662 + $0x34] sm:$0xf]
        %v9677 = vld [vmem:[%s9662 + $0x38] sm:$0xf]
        %v9678 = vld [vmem:[%s9662 + $0x3c] sm:$0xf]
        %v9679 = vld [vmem:[%s7602] sm:$0xf]
        %v9680 = vld [vmem:[%s7602 + $0x4] sm:$0xf]
        %v9681 = vld [vmem:[%s7602 + $0x8] sm:$0xf]
        %v9682 = vld [vmem:[%s7602 + $0xc] sm:$0xf]
        %v9683 = vld [vmem:[%s7602 + $0x10] sm:$0xf]
        %v9684 = vld [vmem:[%s7602 + $0x14] sm:$0xf]
        %v9685 = vld [vmem:[%s7602 + $0x18] sm:$0xf]
        %v9686 = vld [vmem:[%s7602 + $0x1c] sm:$0xf]
        %v9703 = vunpack.c.l.b16 %v9663
        %v9704 = vunpack.c.l.b16 %v9664
        %v9705 = vunpack.c.l.b16 %v9665
        %v9706 = vunpack.c.l.b16 %v9666
        %v9707 = vunpack.c.l.b16 %v9667
        %v9708 = vunpack.c.l.b16 %v9668
        %v9709 = vunpack.c.l.b16 %v9669
        %v9710 = vunpack.c.l.b16 %v9670
        %v9711 = vunpack.c.l.b16 %v9671
        %v9712 = vunpack.c.l.b16 %v9672
        %v9713 = vunpack.c.l.b16 %v9673
        %v9714 = vunpack.c.l.b16 %v9674
        %v9715 = vunpack.c.l.b16 %v9675
        %v9716 = vunpack.c.l.b16 %v9676
        %v9717 = vunpack.c.l.b16 %v9677
        %v9718 = vunpack.c.l.b16 %v9678
        %v9719 = vpack.c.b16 %v9704, %v9703
        %v9720 = vpack.c.b16 %v9706, %v9705
        %v9721 = vpack.c.b16 %v9708, %v9707
        %v9722 = vpack.c.b16 %v9710, %v9709
        %v9723 = vpack.c.b16 %v9712, %v9711
        %v9724 = vpack.c.b16 %v9714, %v9713
        %v9725 = vpack.c.b16 %v9716, %v9715
        %v9726 = vpack.c.b16 %v9718, %v9717
        %v9735 = vunpack.c.l.b16 %v9679
        %v9736 = vunpack.c.l.b16 %v9680
        %v9737 = vunpack.c.l.b16 %v9681
        %v9738 = vunpack.c.l.b16 %v9682
        %v9739 = vunpack.c.l.b16 %v9683
        %v9740 = vunpack.c.l.b16 %v9684
        %v9741 = vunpack.c.l.b16 %v9685
        %v9742 = vunpack.c.l.b16 %v9686
        %v9743 = vpack.c.b16 %v9736, %v9735
        %v9744 = vpack.c.b16 %v9738, %v9737
        %v9745 = vpack.c.b16 %v9740, %v9739
        %v9746 = vpack.c.b16 %v9742, %v9741
        %v9752 = vsel %vm1147, %v9719, 0
        %v9755 = vsel %vm1147, %v9720, 0
        %v9758 = vsel %vm1147, %v9721, 0
        %v9761 = vsel %vm1147, %v9722, 0
        %v9764 = vsel %vm1147, %v9723, 0
        %v9767 = vsel %vm1147, %v9724, 0
        %v9770 = vsel %vm1147, %v9725, 0
        %v9773 = vsel %vm1147, %v9726, 0
        %9775 = vmatprep.subr.bf16.mxu0 0
        %9776 = vmatpush1.bf16.msra.mxu0 0
        %9777 = vmatprep.subr.bf16.mxu0 0
        %9778 = vmatpush1.bf16.msra.mxu0 0
        %9779 = vmatprep.subr.bf16.mxu0 0
        %9780 = vmatpush1.bf16.msra.mxu0 0
        %9781 = vmatprep.subr.bf16.mxu0 0
        %9782 = vmatpush1.bf16.msra.mxu0 0
        %9783 = vmatprep.subr.bf16.mxu0 0
        %9784 = vmatpush1.bf16.msra.mxu0 %v9746
        %9785 = vmatprep.subr.bf16.mxu0 0
        %9786 = vmatpush1.bf16.msra.mxu0 %v9745
        %9787 = vmatprep.subr.bf16.mxu0 0
        %9788 = vmatpush1.bf16.msra.mxu0 %v9744
        %9789 = vmatprep.subr.bf16.mxu0 0
        %9790 = vmatpush1.bf16.msra.mxu0 %v9743
        %9791 = vmatprep.subr.bf16.mxu0 0
        %9792 = vmatpush2.bf16.msra.mxu0 0
        %9793 = vmatprep.subr.bf16.mxu0 0
        %9794 = vmatpush2.bf16.msra.mxu0 0
        %9795 = vmatprep.subr.bf16.mxu0 0
        %9796 = vmatpush2.bf16.msra.mxu0 0
        %9797 = vmatprep.subr.bf16.mxu0 0
        %9798 = vmatpush2.bf16.msra.mxu0 0
        %9799 = vmatprep.subr.bf16.mxu0 0
        %9800 = vmatpush2.bf16.msra.mxu0 0
        %9801 = vmatprep.subr.bf16.mxu0 0
        %9802 = vmatpush2.bf16.msra.mxu0 0
        %9803 = vmatprep.subr.bf16.mxu0 0
        %9804 = vmatpush2.bf16.msra.mxu0 0
        %9805 = vmatprep.subr.bf16.mxu0 0
        %9806 = vmatpush2.bf16.msra.mxu0 0
        %9807 = vmatprep.mubr.bf16.mxu0 0
        %9808 = vmatmul.mubr.bf16.gmra.mxu0 %v9752
        %v9809 = vpop.f32.mrf.mxu0
        %v9810 = vadd.f32 0.0, %v9809
        %v9811 = vpop.f32.mrf.mxu0
        %v9812 = vpop.f32.mrf.mxu0
        %v9813 = vadd.f32 0.0, %v9812
        %v9814 = vpop.f32.mrf.mxu0
        %9815 = vmatprep.mubr.bf16.mxu0 0
        %9816 = vmatmul.mubr.bf16.gmra.mxu0 %v9755
        %v9817 = vpop.f32.mrf.mxu0
        %v9818 = vadd.f32 0.0, %v9817
        %v9819 = vpop.f32.mrf.mxu0
        %v9820 = vpop.f32.mrf.mxu0
        %v9821 = vadd.f32 0.0, %v9820
        %v9822 = vpop.f32.mrf.mxu0
        %9823 = vmatprep.mubr.bf16.mxu0 0
        %9824 = vmatmul.mubr.bf16.gmra.mxu0 %v9758
        %v9825 = vpop.f32.mrf.mxu0
        %v9826 = vadd.f32 0.0, %v9825
        %v9827 = vpop.f32.mrf.mxu0
        %v9828 = vpop.f32.mrf.mxu0
        %v9829 = vadd.f32 0.0, %v9828
        %v9830 = vpop.f32.mrf.mxu0
        %9831 = vmatprep.mubr.bf16.mxu0 0
        %9832 = vmatmul.mubr.bf16.gmra.mxu0 %v9761
        %v9833 = vpop.f32.mrf.mxu0
        %v9834 = vadd.f32 0.0, %v9833
        %v9835 = vpop.f32.mrf.mxu0
        %v9836 = vpop.f32.mrf.mxu0
        %v9837 = vadd.f32 0.0, %v9836
        %v9838 = vpop.f32.mrf.mxu0
        %9839 = vmatprep.mubr.bf16.mxu0 0
        %9840 = vmatmul.mubr.bf16.gmra.mxu0 %v9764
        %v9841 = vpop.f32.mrf.mxu0
        %v9842 = vadd.f32 0.0, %v9841
        %v9843 = vpop.f32.mrf.mxu0
        %v9844 = vpop.f32.mrf.mxu0
        %v9845 = vadd.f32 0.0, %v9844
        %v9846 = vpop.f32.mrf.mxu0
        %9847 = vmatprep.mubr.bf16.mxu0 0
        %9848 = vmatmul.mubr.bf16.gmra.mxu0 %v9767
        %v9849 = vpop.f32.mrf.mxu0
        %v9850 = vadd.f32 0.0, %v9849
        %v9851 = vpop.f32.mrf.mxu0
        %v9852 = vpop.f32.mrf.mxu0
        %v9853 = vadd.f32 0.0, %v9852
        %v9854 = vpop.f32.mrf.mxu0
        %9855 = vmatprep.mubr.bf16.mxu0 0
        %9856 = vmatmul.mubr.bf16.gmra.mxu0 %v9770
        %v9857 = vpop.f32.mrf.mxu0
        %v9858 = vadd.f32 0.0, %v9857
        %v9859 = vpop.f32.mrf.mxu0
        %v9860 = vpop.f32.mrf.mxu0
        %v9861 = vadd.f32 0.0, %v9860
        %v9862 = vpop.f32.mrf.mxu0
        %9863 = vmatprep.mubr.bf16.mxu0 0
        %9864 = vmatmul.mubr.bf16.gmra.mxu0 %v9773
        %v9865 = vpop.f32.mrf.mxu0
        %v9866 = vadd.f32 0.0, %v9865
        %v9867 = vpop.f32.mrf.mxu0
        %v9868 = vpop.f32.mrf.mxu0
        %v9869 = vadd.f32 0.0, %v9868
        %v9870 = vpop.f32.mrf.mxu0
        %9871 = vdwg.mxu0
        %v9872 = vadd.f32 %v9645, %v9810
        %v9873 = vadd.f32 %v9646, %v9813
        %v9874 = vadd.f32 %v9647, %v9818
        %v9875 = vadd.f32 %v9648, %v9821
        %v9876 = vadd.f32 %v9649, %v9826
        %v9877 = vadd.f32 %v9650, %v9829
        %v9878 = vadd.f32 %v9651, %v9834
        %v9879 = vadd.f32 %v9652, %v9837
        %v9880 = vadd.f32 %v9653, %v9842
        %v9881 = vadd.f32 %v9654, %v9845
        %v9882 = vadd.f32 %v9655, %v9850
        %v9883 = vadd.f32 %v9656, %v9853
        %v9884 = vadd.f32 %v9657, %v9858
        %v9885 = vadd.f32 %v9658, %v9861
        %v9886 = vadd.f32 %v9659, %v9866
        %v9887 = vadd.f32 %v9660, %v9869
        %v9888 = vadd.f32 %v9872, %v7816
        %v9889 = vadd.f32 %v9873, %v7816
        %v9890 = vadd.f32 %v9874, %v7816
        %v9891 = vadd.f32 %v9875, %v7816
        %v9892 = vadd.f32 %v9876, %v7816
        %v9893 = vadd.f32 %v9877, %v7816
        %v9894 = vadd.f32 %v9878, %v7816
        %v9895 = vadd.f32 %v9879, %v7816
        %v9896 = vadd.f32 %v9880, %v7816
        %v9897 = vadd.f32 %v9881, %v7816
        %v9898 = vadd.f32 %v9882, %v7816
        %v9899 = vadd.f32 %v9883, %v7816
        %v9900 = vadd.f32 %v9884, %v7816
        %v9901 = vadd.f32 %v9885, %v7816
        %v9902 = vadd.f32 %v9886, %v7816
        %v9903 = vadd.f32 %v9887, %v7816
        %v9904 = vld [vmem:[%s673] sm:$0xff]
        %v9905 = vld [vmem:[%s673 + $0x8] sm:$0xff]
        %v9906 = vld [vmem:[%s673 + $0x10] sm:$0xff]
        %v9907 = vld [vmem:[%s673 + $0x18] sm:$0xff]
        %v9908 = vld [vmem:[%s673 + $0x20] sm:$0xff]
        %v9909 = vld [vmem:[%s673 + $0x28] sm:$0xff]
        %v9910 = vld [vmem:[%s673 + $0x30] sm:$0xff]
        %v9911 = vld [vmem:[%s673 + $0x38] sm:$0xff]
        %v9912 = vld [vmem:[%s673 + $0x40] sm:$0xff]
        %v9913 = vld [vmem:[%s673 + $0x48] sm:$0xff]
        %v9914 = vld [vmem:[%s673 + $0x50] sm:$0xff]
        %v9915 = vld [vmem:[%s673 + $0x58] sm:$0xff]
        %v9916 = vld [vmem:[%s673 + $0x60] sm:$0xff]
        %v9917 = vld [vmem:[%s673 + $0x68] sm:$0xff]
        %v9918 = vld [vmem:[%s673 + $0x70] sm:$0xff]
        %v9919 = vld [vmem:[%s673 + $0x78] sm:$0xff]
        %v9920 = vadd.f32 %v9888, %v9904
        %v9921 = vadd.f32 %v9889, %v9905
        %v9922 = vadd.f32 %v9890, %v9906
        %v9923 = vadd.f32 %v9891, %v9907
        %v9924 = vadd.f32 %v9892, %v9908
        %v9925 = vadd.f32 %v9893, %v9909
        %v9926 = vadd.f32 %v9894, %v9910
        %v9927 = vadd.f32 %v9895, %v9911
        %v9928 = vadd.f32 %v9896, %v9912
        %v9929 = vadd.f32 %v9897, %v9913
        %v9930 = vadd.f32 %v9898, %v9914
        %v9931 = vadd.f32 %v9899, %v9915
        %v9932 = vadd.f32 %v9900, %v9916
        %v9933 = vadd.f32 %v9901, %v9917
        %v9934 = vadd.f32 %v9902, %v9918
        %v9935 = vadd.f32 %v9903, %v9919
        %s9936 = scalar_lea.vmem %s271, %s672 [#allocation10]
        %9937 = vst.msk [vmem:[%s9936] sm:$0xff] %vm1147, %v9920
        %9938 = vst.msk [vmem:[%s9936 + $0x8] sm:$0xff] %vm1147, %v9921
        %9939 = vst.msk [vmem:[%s9936 + $0x10] sm:$0xff] %vm1147, %v9922
        %9940 = vst.msk [vmem:[%s9936 + $0x18] sm:$0xff] %vm1147, %v9923
        %9941 = vst.msk [vmem:[%s9936 + $0x20] sm:$0xff] %vm1147, %v9924
        %9942 = vst.msk [vmem:[%s9936 + $0x28] sm:$0xff] %vm1147, %v9925
        %9943 = vst.msk [vmem:[%s9936 + $0x30] sm:$0xff] %vm1147, %v9926
        %9944 = vst.msk [vmem:[%s9936 + $0x38] sm:$0xff] %vm1147, %v9927
        %9945 = vst.msk [vmem:[%s9936 + $0x40] sm:$0xff] %vm1147, %v9928
        %9946 = vst.msk [vmem:[%s9936 + $0x48] sm:$0xff] %vm1147, %v9929
        %9947 = vst.msk [vmem:[%s9936 + $0x50] sm:$0xff] %vm1147, %v9930
        %9948 = vst.msk [vmem:[%s9936 + $0x58] sm:$0xff] %vm1147, %v9931
        %9949 = vst.msk [vmem:[%s9936 + $0x60] sm:$0xff] %vm1147, %v9932
        %9950 = vst.msk [vmem:[%s9936 + $0x68] sm:$0xff] %vm1147, %v9933
        %9951 = vst.msk [vmem:[%s9936 + $0x70] sm:$0xff] %vm1147, %v9934
        %9952 = vst.msk [vmem:[%s9936 + $0x78] sm:$0xff] %vm1147, %v9935
        %s9953 = sand.u32 %s141, 1
        %s9954 = scalar_lea.sflag [#allocation6], %s9953
        %s9955 = sand.u32 %s141, 1
        %s9956 = smul.addr %s9955, 256
        %s9957 = scalar_lea.vmem [#allocation10], %s9956
        // Predicated region
        $region53: #{tpu_custom_call.1} parent=39 // pred_check
          %p9958 = pneg %p151
        $region54: #{tpu_custom_call.1} parent=39 // pred_check_branch
          %9960 = sbr.rel (%p9958) target = $region56
        $region55: #{tpu_custom_call.1} parent=39 // pred_region
          %s9962 = ssub.s32 4096, 4096
          %9963 = vsyncadd %s9954, %s9962
          %s9964 = smul.addr %s23, 32
          %s9965 = smul.addr %s9964, 128
          %s9966 = scalar_lea.hbm %s5, %s9965
          %s9967 = sshll.u32 %s9957, 4
          %s9968 = int_to_ptr.vmem [resolvable:$true] %s9967
          %9973 = dma.vmem_to_hbm [thread:$0]  %s9968, 4096, %s9966, %s9954, 128, 128, 8
        $region56: #{tpu_custom_call.1} parent=39 // pred_fallthru
          _
      $region40: #{tpu_custom_call.1} parent=5 // pred_fallthru
        _
      %p9974 = scmp.le.s32.totalorder 2, %s18
      // Predicated region
      $region57: #{tpu_custom_call.1} parent=5 // pred_check
        %p9975 = pneg %p9974
      $region58: #{tpu_custom_call.1} parent=5 // pred_check_branch
        %9977 = sbr.rel (%p9975) target = $region60
      $region59: #{tpu_custom_call.1} parent=5 // pred_region
        %s9978 = ssub.s32 %s18, 2
        // Predicated region
        $region61: #{tpu_custom_call.1} parent=59 // pred_check
          %p9979 = pneg %p157
        $region62: #{tpu_custom_call.1} parent=59 // pred_check_branch
          %9981 = sbr.rel (%p9979) target = $region64
        $region63: #{tpu_custom_call.1} parent=59 // pred_region
          %s9982 = sand.u32 %s142, 1
          %s9983 = scalar_lea.sflag [#allocation6], %s9982
          %s9984 = sand.u32 %s142, 1
          %s9985 = smul.addr %s9984, 256
          %s9986 = scalar_lea.vmem [#allocation10], %s9985
          %9987 = dma.done %s9983, 4096
        $region64: #{tpu_custom_call.1} parent=59 // pred_fallthru
          _
      $region60: #{tpu_custom_call.1} parent=5 // pred_fallthru
        _
    $region6: #{tpu_custom_call.1} parent=1 // loop_footer
      %s22 = sadd.s32 1, %s18
    $region7: #{tpu_custom_call.1} parent=1 // loop_footer_branch
      %17 = sbr.rel target = $region3
    $region8: #{tpu_custom_call.1} parent=1 // loop_exit
      _
    %9988 = vsyncpa [#allocation5], 1
    %s9989 = scalar_lea.sflag [#allocation5], 1
    %9990 = vsyncpa %s9989, 1
    %9991 = vsyncpa [#allocation8], 1
    %9992 = vsyncpa [#allocation6], 1
    %s9993 = scalar_lea.sflag [#allocation6], 1
    %9994 = vsyncpa %s9993, 1

</llo_original>
